<compile_context>
chip_gen: v7x
topology: tpu7x:2x2x1
jax: 0.10.0
libtpu: 0.0.40
codegen_flags: <defaults>
</compile_context>

<pallas_src>
import functools

import jax
import jax.numpy as jnp
from jax.experimental import pallas as pl
from jax.experimental.pallas import tpu as pltpu


def _round_up(x, m):
    return ((x + m - 1) // m) * m


# ----------------------------------------------------------------------------
# Pallas kernel: out = maybe_relu(A @ B + bias), bf16 MXU, f32 epilogue
# ----------------------------------------------------------------------------
def _matmul_bias_kernel(a_ref, b_ref, bias_ref, o_ref, *, apply_relu):
    acc = jnp.dot(a_ref[...], b_ref[...], preferred_element_type=jnp.float32)
    acc = acc + bias_ref[...]                # (1, Np) broadcasts over rows
    if apply_relu:
        acc = jnp.maximum(acc, 0.0)
    o_ref[...] = acc.astype(o_ref.dtype)


def matmul_bias(a, w, bias, *, apply_relu, out_dtype=jnp.float32,
                rows_per_step=2048):
    """a: (M, K), w: (K, N), bias: (N,) -> (M, Np) with Np = round_up(N, 128).

    Columns >= N of the result are exactly zero (zero-padded weights + bias);
    the caller slices them off.  Matmul runs in bf16 on the MXU, accumulation,
    bias and ReLU in f32.
    """
    M, K = a.shape
    K2, N = w.shape
    assert K == K2, (K, K2)
    Np = _round_up(N, 128)

    w_p = jnp.pad(w.astype(jnp.float32), ((0, 0), (0, Np - N))).astype(jnp.bfloat16)
    bias_p = jnp.pad(bias.astype(jnp.float32), (0, Np - N)).reshape(1, Np)
    a = a.astype(jnp.bfloat16)

    # Few, large M tiles (per-grid-step overhead dominates at these sizes).
    # Keep an even number >= 2 of steps so both v7x TensorCores get work on the
    # 'parallel' axis.  No padding of A: the last ragged block is masked by
    # Pallas (garbage rows only land in discarded output rows).
    n_steps = max(2, pl.cdiv(M, rows_per_step))
    if n_steps % 2:
        n_steps += 1
    tm = max(8, _round_up(pl.cdiv(M, n_steps), 8))
    grid = pl.cdiv(M, tm)

    kernel = functools.partial(_matmul_bias_kernel, apply_relu=apply_relu)
    return pl.pallas_call(
        kernel,
        out_shape=jax.ShapeDtypeStruct((M, Np), out_dtype),
        grid=(grid,),
        in_specs=[
            pl.BlockSpec((tm, K), lambda i: (i, 0)),    # A tile over M
            pl.BlockSpec((K, Np), lambda i: (0, 0)),    # full weight resident
            pl.BlockSpec((1, Np), lambda i: (0, 0)),    # bias row
        ],
        out_specs=pl.BlockSpec((tm, Np), lambda i: (i, 0)),
        compiler_params=pltpu.CompilerParams(
            dimension_semantics=("parallel",)),
    )(a, w_p, bias_p)


# ----------------------------------------------------------------------------
# Conv2d (valid padding) via NHWC im2col + Pallas matmul kernel
# ----------------------------------------------------------------------------
def conv2d_relu_nhwc(x, w, b, stride):
    """x: (B, H, W, Cin) bf16; w: (Cout, Cin, kh, kw) PyTorch layout.
    Returns (B, OH, OW, Cout) bf16."""
    B, H, W, Cin = x.shape
    Cout, Cin2, kh, kw = w.shape
    assert Cin == Cin2
    OH = (H - kh) // stride + 1
    OW = (W - kw) // stride + 1

    # im2col without any python slice-loop or big transposes.  Output feature
    # ordering is input-channel-major then (kh, kw), matching PyTorch's
    # w.reshape(Cout, Cin*kh*kw).
    # TODO(synk): fold patch extraction into the Pallas kernel via strided DMA
    # so the (B*OH*OW, Cin*kh*kw) patches matrix never materializes in HBM.
    patches = jax.lax.conv_general_dilated_patches(
        x, filter_shape=(kh, kw), window_strides=(stride, stride),
        padding="VALID", dimension_numbers=("NHWC", "HWIO", "NHWC"))
    patches = patches.reshape(B * OH * OW, Cin * kh * kw)

    wm = w.reshape(Cout, Cin * kh * kw).T                     # (K, Cout)
    out = matmul_bias(patches, wm, b, apply_relu=True,
                      out_dtype=jnp.bfloat16)                 # (M, 128-padded)
    Np = out.shape[1]
    return out.reshape(B, OH, OW, Np)[..., :Cout]             # stay NHWC


# ----------------------------------------------------------------------------
# Fused FC head: 1152 -> 100 -> 50 -> 10 -> 5 in ONE pallas_call
# ----------------------------------------------------------------------------
def _fc_head_kernel(x_ref, w1_ref, b1_ref, w2_ref, b2_ref, w3_ref, b3_ref,
                    w4_ref, b4_ref, o_ref):
    h = jnp.dot(x_ref[...], w1_ref[...], preferred_element_type=jnp.float32)
    h = jnp.maximum(h + b1_ref[...], 0.0)
    h = jnp.dot(h.astype(jnp.bfloat16), w2_ref[...],
                preferred_element_type=jnp.float32)
    h = jnp.maximum(h + b2_ref[...], 0.0)
    h = jnp.dot(h.astype(jnp.bfloat16), w3_ref[...],
                preferred_element_type=jnp.float32)
    h = jnp.maximum(h + b3_ref[...], 0.0)
    h = jnp.dot(h.astype(jnp.bfloat16), w4_ref[...],
                preferred_element_type=jnp.float32)
    o_ref[...] = (h + b4_ref[...]).astype(o_ref.dtype)


def fc_head(x, params):
    """x: (B, 1152) flattened NHWC conv output.  Returns (B, 5) float32."""
    B, K = x.shape
    Bp = _round_up(max(B, 8), 8)
    x_p = jnp.pad(x.astype(jnp.bfloat16), ((0, Bp - B), (0, 0)))

    def pad_wb(w, b, k_pad, n_pad):
        # w: (fout, fin) PyTorch layout -> (k_pad, n_pad) zero-padded, bf16.
        fout, fin = w.shape
        wp = jnp.zeros((k_pad, n_pad), jnp.float32).at[:fin, :fout].set(w.T)
        bp = jnp.zeros((1, n_pad), jnp.float32).at[0, :fout].set(b)
        return wp.astype(jnp.bfloat16), bp

    w1, b1 = params["f1"]
    w2, b2 = params["f2"]
    w3, b3 = params["f3"]
    w4, b4 = params["f4"]

    # PyTorch flattens the (B, 64, 1, 18) NCHW conv output as (c, h, w); our
    # activations are NHWC so the flatten order is (h, w, c).  Permute the fc1
    # weight columns once to compensate (zero runtime cost).
    C5, FH, FW = 64, 1, 18
    w1 = (w1.reshape(w1.shape[0], C5, FH, FW)
             .transpose(0, 2, 3, 1)
             .reshape(w1.shape[0], C5 * FH * FW))

    w1p, b1p = pad_wb(w1, b1, K, 128)
    w2p, b2p = pad_wb(w2, b2, 128, 128)
    w3p, b3p = pad_wb(w3, b3, 128, 128)
    w4p, b4p = pad_wb(w4, b4, 128, 128)

    out = pl.pallas_call(
        _fc_head_kernel,
        out_shape=jax.ShapeDtypeStruct((Bp, 128), jnp.float32),
        grid=(1,),
        in_specs=[
            pl.BlockSpec((Bp, K), lambda i: (0, 0)),
            pl.BlockSpec((K, 128), lambda i: (0, 0)),
            pl.BlockSpec((1, 128), lambda i: (0, 0)),
            pl.BlockSpec((128, 128), lambda i: (0, 0)),
            pl.BlockSpec((1, 128), lambda i: (0, 0)),
            pl.BlockSpec((128, 128), lambda i: (0, 0)),
            pl.BlockSpec((1, 128), lambda i: (0, 0)),
            pl.BlockSpec((128, 128), lambda i: (0, 0)),
            pl.BlockSpec((1, 128), lambda i: (0, 0)),
        ],
        out_specs=pl.BlockSpec((Bp, 128), lambda i: (0, 0)),
        compiler_params=pltpu.CompilerParams(
            dimension_semantics=("arbitrary",)),
    )(x_p, w1p, b1p, w2p, b2p, w3p, b3p, w4p, b4p)
    return out[:B, :5]


# ----------------------------------------------------------------------------
# Deterministic parameter init (PyTorch-default-style uniform bounds)
# ----------------------------------------------------------------------------
def init_params(key):
    def conv_p(k, cout, cin, ks):
        k1, k2 = jax.random.split(k)
        bound = 1.0 / float(cin * ks * ks) ** 0.5
        w = jax.random.uniform(k1, (cout, cin, ks, ks), jnp.float32, -bound, bound)
        b = jax.random.uniform(k2, (cout,), jnp.float32, -bound, bound)
        return w, b

    def fc_p(k, fin, fout):
        k1, k2 = jax.random.split(k)
        bound = 1.0 / float(fin) ** 0.5
        w = jax.random.uniform(k1, (fout, fin), jnp.float32, -bound, bound)
        b = jax.random.uniform(k2, (fout,), jnp.float32, -bound, bound)
        return w, b

    ks = jax.random.split(key, 9)
    return {
        "c1": conv_p(ks[0], 24, 3, 5),
        "c2": conv_p(ks[1], 36, 24, 5),
        "c3": conv_p(ks[2], 48, 36, 5),
        "c4": conv_p(ks[3], 64, 48, 3),
        "c5": conv_p(ks[4], 64, 64, 3),
        "f1": fc_p(ks[5], 64 * 1 * 18, 100),
        "f2": fc_p(ks[6], 100, 50),
        "f3": fc_p(ks[7], 50, 10),
        "f4": fc_p(ks[8], 10, 5),
    }


# ----------------------------------------------------------------------------
# PilotNet forward (input NCHW like PyTorch, internally NHWC)
# ----------------------------------------------------------------------------
def pilotnet_forward(params, x):
    x = jnp.transpose(x, (0, 2, 3, 1)).astype(jnp.bfloat16)   # NCHW -> NHWC once
    x = conv2d_relu_nhwc(x, *params["c1"], stride=2)          # (B, 31, 98, 24)
    x = conv2d_relu_nhwc(x, *params["c2"], stride=2)          # (B, 14, 47, 36)
    x = conv2d_relu_nhwc(x, *params["c3"], stride=2)          # (B,  5, 22, 48)
    x = conv2d_relu_nhwc(x, *params["c4"], stride=1)          # (B,  3, 20, 64)
    x = conv2d_relu_nhwc(x, *params["c5"], stride=1)          # (B,  1, 18, 64)
    x = x.reshape(x.shape[0], -1)                             # NHWC flatten (fc1 cols permuted)
    return fc_head(x, params)                                 # (B, 5) float32


if __name__ == "__main__":
    key = jax.random.PRNGKey(0)
    pkey, xkey = jax.random.split(key)
    params = init_params(pkey)
    # Input spatial size 66x200 is forced by the fc head (64*1*18 features).
    x = jax.random.normal(xkey, (2, 3, 66, 200), dtype=jnp.float32)

    fwd = jax.jit(pilotnet_forward)
    out = jax.block_until_ready(fwd(params, x))
    assert out.shape == (2, 5), out.shape
    assert bool(jnp.all(jnp.isfinite(out)))
    print("KERNEL_OK")
</pallas_src>

<mosaic_0001>
module attributes {stable_mosaic.version = 11 : i64} {
  func.func @_matmul_bias_kernel(%arg0: i32, %arg1: memref<1520x75xbf16, #tpu.memory_space<vmem>>, %arg2: memref<75x128xbf16, #tpu.memory_space<vmem>>, %arg3: memref<1x128xf32, #tpu.memory_space<vmem>>, %arg4: memref<1520x128xbf16, #tpu.memory_space<vmem>>) attributes {dimension_semantics = [#tpu.dimension_semantics<parallel>], iteration_bounds = array<i64: 4>, scalar_prefetch = 0 : i64, scratch_operands = 0 : i64, tpu.core_type = #tpu.core_type<tc>, window_params = [{transform_indices = @transform_0, window_bounds = array<i64: 1520, 75>}, {pipeline_mode = #tpu.pipeline_mode<synchronous>, transform_indices = @transform_1, window_bounds = array<i64: 75, 128>}, {pipeline_mode = #tpu.pipeline_mode<synchronous>, transform_indices = @transform_2, window_bounds = array<i64: 1, 128>}, {transform_indices = @transform_3, window_bounds = array<i64: 1520, 128>}]} {
    %c0 = arith.constant 0 : index
    %c0_0 = arith.constant 0 : index
    %0 = vector.load %arg1[%c0, %c0_0] : memref<1520x75xbf16, #tpu.memory_space<vmem>>, vector<1520x75xbf16>
    %c0_1 = arith.constant 0 : index
    %c0_2 = arith.constant 0 : index
    %1 = vector.load %arg2[%c0_1, %c0_2] : memref<75x128xbf16, #tpu.memory_space<vmem>>, vector<75x128xbf16>
    %cst = arith.constant dense<0.000000e+00> : vector<1520x128xf32>
    %2 = tpu.matmul %0, %1, %cst {dimension_numbers = #tpu.dot_dimension_numbers<[1], [0], [0], [1], [0, 0, 1, 1], [], []>} : vector<1520x75xbf16>, vector<75x128xbf16>, vector<1520x128xf32> -> vector<1520x128xf32>
    %c0_3 = arith.constant 0 : index
    %c0_4 = arith.constant 0 : index
    %3 = vector.load %arg3[%c0_3, %c0_4] : memref<1x128xf32, #tpu.memory_space<vmem>>, vector<1x128xf32>
    %4 = vector.broadcast %3 : vector<1x128xf32> to vector<1520x128xf32>
    %5 = arith.addf %2, %4 : vector<1520x128xf32>
    %cst_5 = arith.constant 0.000000e+00 : f32
    %6 = vector.broadcast %cst_5 : f32 to vector<1520x128xf32>
    %7 = arith.maximumf %5, %6 : vector<1520x128xf32>
    %8 = arith.truncf %7 : vector<1520x128xf32> to vector<1520x128xbf16>
    %c0_6 = arith.constant 0 : index
    %c0_7 = arith.constant 0 : index
    %9 = vector.load %arg4[%c0_6, %c0_7] : memref<1520x128xbf16, #tpu.memory_space<vmem>>, vector<1520x128xbf16>
    tpu.vector_store %arg4[%c0_6, %c0_7], %8 {strides = array<i32>} : memref<1520x128xbf16, #tpu.memory_space<vmem>>, vector<1520x128xbf16>,
    return
  }
  func.func @transform_0(%arg0: i32) -> (i32, i32) {
    %c0_i32 = arith.constant 0 : i32
    %c0_i32_0 = arith.constant 0 : i32
    return %arg0, %c0_i32 : i32, i32
  }
  func.func @transform_1(%arg0: i32) -> (i32, i32) {
    %c0_i32 = arith.constant 0 : i32
    %c0_i32_0 = arith.constant 0 : i32
    %c0_i32_1 = arith.constant 0 : i32
    return %c0_i32, %c0_i32_0 : i32, i32
  }
  func.func @transform_2(%arg0: i32) -> (i32, i32) {
    %c0_i32 = arith.constant 0 : i32
    %c0_i32_0 = arith.constant 0 : i32
    %c0_i32_1 = arith.constant 0 : i32
    return %c0_i32, %c0_i32_0 : i32, i32
  }
  func.func @transform_3(%arg0: i32) -> (i32, i32) {
    %c0_i32 = arith.constant 0 : i32
    %c0_i32_0 = arith.constant 0 : i32
    return %arg0, %c0_i32 : i32, i32
  }
}

module attributes {stable_mosaic.version = 11 : i64} {
  func.func @_matmul_bias_kernel(%arg0: i32, %arg1: memref<664x600xbf16, #tpu.memory_space<vmem>>, %arg2: memref<600x128xbf16, #tpu.memory_space<vmem>>, %arg3: memref<1x128xf32, #tpu.memory_space<vmem>>, %arg4: memref<664x128xbf16, #tpu.memory_space<vmem>>) attributes {dimension_semantics = [#tpu.dimension_semantics<parallel>], iteration_bounds = array<i64: 2>, scalar_prefetch = 0 : i64, scratch_operands = 0 : i64, tpu.core_type = #tpu.core_type<tc>, window_params = [{transform_indices = @transform_0, window_bounds = array<i64: 664, 600>}, {pipeline_mode = #tpu.pipeline_mode<synchronous>, transform_indices = @transform_1, window_bounds = array<i64: 600, 128>}, {pipeline_mode = #tpu.pipeline_mode<synchronous>, transform_indices = @transform_2, window_bounds = array<i64: 1, 128>}, {transform_indices = @transform_3, window_bounds = array<i64: 664, 128>}]} {
    %c0 = arith.constant 0 : index
    %c0_0 = arith.constant 0 : index
    %0 = vector.load %arg1[%c0, %c0_0] : memref<664x600xbf16, #tpu.memory_space<vmem>>, vector<664x600xbf16>
    %c0_1 = arith.constant 0 : index
    %c0_2 = arith.constant 0 : index
    %1 = vector.load %arg2[%c0_1, %c0_2] : memref<600x128xbf16, #tpu.memory_space<vmem>>, vector<600x128xbf16>
    %cst = arith.constant dense<0.000000e+00> : vector<664x128xf32>
    %2 = tpu.matmul %0, %1, %cst {dimension_numbers = #tpu.dot_dimension_numbers<[1], [0], [0], [1], [0, 0, 1, 1], [], []>} : vector<664x600xbf16>, vector<600x128xbf16>, vector<664x128xf32> -> vector<664x128xf32>
    %c0_3 = arith.constant 0 : index
    %c0_4 = arith.constant 0 : index
    %3 = vector.load %arg3[%c0_3, %c0_4] : memref<1x128xf32, #tpu.memory_space<vmem>>, vector<1x128xf32>
    %4 = vector.broadcast %3 : vector<1x128xf32> to vector<664x128xf32>
    %5 = arith.addf %2, %4 : vector<664x128xf32>
    %cst_5 = arith.constant 0.000000e+00 : f32
    %6 = vector.broadcast %cst_5 : f32 to vector<664x128xf32>
    %7 = arith.maximumf %5, %6 : vector<664x128xf32>
    %8 = arith.truncf %7 : vector<664x128xf32> to vector<664x128xbf16>
    %c0_6 = arith.constant 0 : index
    %c0_7 = arith.constant 0 : index
    %9 = vector.load %arg4[%c0_6, %c0_7] : memref<664x128xbf16, #tpu.memory_space<vmem>>, vector<664x128xbf16>
    tpu.vector_store %arg4[%c0_6, %c0_7], %8 {strides = array<i32>} : memref<664x128xbf16, #tpu.memory_space<vmem>>, vector<664x128xbf16>,
    return
  }
  func.func @transform_0(%arg0: i32) -> (i32, i32) {
    %c0_i32 = arith.constant 0 : i32
    %c0_i32_0 = arith.constant 0 : i32
    return %arg0, %c0_i32 : i32, i32
  }
  func.func @transform_1(%arg0: i32) -> (i32, i32) {
    %c0_i32 = arith.constant 0 : i32
    %c0_i32_0 = arith.constant 0 : i32
    %c0_i32_1 = arith.constant 0 : i32
    return %c0_i32, %c0_i32_0 : i32, i32
  }
  func.func @transform_2(%arg0: i32) -> (i32, i32) {
    %c0_i32 = arith.constant 0 : i32
    %c0_i32_0 = arith.constant 0 : i32
    %c0_i32_1 = arith.constant 0 : i32
    return %c0_i32, %c0_i32_0 : i32, i32
  }
  func.func @transform_3(%arg0: i32) -> (i32, i32) {
    %c0_i32 = arith.constant 0 : i32
    %c0_i32_0 = arith.constant 0 : i32
    return %arg0, %c0_i32 : i32, i32
  }
}

module attributes {stable_mosaic.version = 11 : i64} {
  func.func @_matmul_bias_kernel(%arg0: i32, %arg1: memref<112x900xbf16, #tpu.memory_space<vmem>>, %arg2: memref<900x128xbf16, #tpu.memory_space<vmem>>, %arg3: memref<1x128xf32, #tpu.memory_space<vmem>>, %arg4: memref<112x128xbf16, #tpu.memory_space<vmem>>) attributes {dimension_semantics = [#tpu.dimension_semantics<parallel>], iteration_bounds = array<i64: 2>, scalar_prefetch = 0 : i64, scratch_operands = 0 : i64, tpu.core_type = #tpu.core_type<tc>, window_params = [{transform_indices = @transform_0, window_bounds = array<i64: 112, 900>}, {pipeline_mode = #tpu.pipeline_mode<synchronous>, transform_indices = @transform_1, window_bounds = array<i64: 900, 128>}, {pipeline_mode = #tpu.pipeline_mode<synchronous>, transform_indices = @transform_2, window_bounds = array<i64: 1, 128>}, {transform_indices = @transform_3, window_bounds = array<i64: 112, 128>}]} {
    %c0 = arith.constant 0 : index
    %c0_0 = arith.constant 0 : index
    %0 = vector.load %arg1[%c0, %c0_0] : memref<112x900xbf16, #tpu.memory_space<vmem>>, vector<112x900xbf16>
    %c0_1 = arith.constant 0 : index
    %c0_2 = arith.constant 0 : index
    %1 = vector.load %arg2[%c0_1, %c0_2] : memref<900x128xbf16, #tpu.memory_space<vmem>>, vector<900x128xbf16>
    %cst = arith.constant dense<0.000000e+00> : vector<112x128xf32>
    %2 = tpu.matmul %0, %1, %cst {dimension_numbers = #tpu.dot_dimension_numbers<[1], [0], [0], [1], [0, 0, 1, 1], [], []>} : vector<112x900xbf16>, vector<900x128xbf16>, vector<112x128xf32> -> vector<112x128xf32>
    %c0_3 = arith.constant 0 : index
    %c0_4 = arith.constant 0 : index
    %3 = vector.load %arg3[%c0_3, %c0_4] : memref<1x128xf32, #tpu.memory_space<vmem>>, vector<1x128xf32>
    %4 = vector.broadcast %3 : vector<1x128xf32> to vector<112x128xf32>
    %5 = arith.addf %2, %4 : vector<112x128xf32>
    %cst_5 = arith.constant 0.000000e+00 : f32
    %6 = vector.broadcast %cst_5 : f32 to vector<112x128xf32>
    %7 = arith.maximumf %5, %6 : vector<112x128xf32>
    %8 = arith.truncf %7 : vector<112x128xf32> to vector<112x128xbf16>
    %c0_6 = arith.constant 0 : index
    %c0_7 = arith.constant 0 : index
    %9 = vector.load %arg4[%c0_6, %c0_7] : memref<112x128xbf16, #tpu.memory_space<vmem>>, vector<112x128xbf16>
    tpu.vector_store %arg4[%c0_6, %c0_7], %8 {strides = array<i32>} : memref<112x128xbf16, #tpu.memory_space<vmem>>, vector<112x128xbf16>,
    return
  }
  func.func @transform_0(%arg0: i32) -> (i32, i32) {
    %c0_i32 = arith.constant 0 : i32
    %c0_i32_0 = arith.constant 0 : i32
    return %arg0, %c0_i32 : i32, i32
  }
  func.func @transform_1(%arg0: i32) -> (i32, i32) {
    %c0_i32 = arith.constant 0 : i32
    %c0_i32_0 = arith.constant 0 : i32
    %c0_i32_1 = arith.constant 0 : i32
    return %c0_i32, %c0_i32_0 : i32, i32
  }
  func.func @transform_2(%arg0: i32) -> (i32, i32) {
    %c0_i32 = arith.constant 0 : i32
    %c0_i32_0 = arith.constant 0 : i32
    %c0_i32_1 = arith.constant 0 : i32
    return %c0_i32, %c0_i32_0 : i32, i32
  }
  func.func @transform_3(%arg0: i32) -> (i32, i32) {
    %c0_i32 = arith.constant 0 : i32
    %c0_i32_0 = arith.constant 0 : i32
    return %arg0, %c0_i32 : i32, i32
  }
}

module attributes {stable_mosaic.version = 11 : i64} {
  func.func @_matmul_bias_kernel(%arg0: i32, %arg1: memref<64x432xbf16, #tpu.memory_space<vmem>>, %arg2: memref<432x128xbf16, #tpu.memory_space<vmem>>, %arg3: memref<1x128xf32, #tpu.memory_space<vmem>>, %arg4: memref<64x128xbf16, #tpu.memory_space<vmem>>) attributes {dimension_semantics = [#tpu.dimension_semantics<parallel>], iteration_bounds = array<i64: 2>, scalar_prefetch = 0 : i64, scratch_operands = 0 : i64, tpu.core_type = #tpu.core_type<tc>, window_params = [{transform_indices = @transform_0, window_bounds = array<i64: 64, 432>}, {pipeline_mode = #tpu.pipeline_mode<synchronous>, transform_indices = @transform_1, window_bounds = array<i64: 432, 128>}, {pipeline_mode = #tpu.pipeline_mode<synchronous>, transform_indices = @transform_2, window_bounds = array<i64: 1, 128>}, {transform_indices = @transform_3, window_bounds = array<i64: 64, 128>}]} {
    %c0 = arith.constant 0 : index
    %c0_0 = arith.constant 0 : index
    %0 = vector.load %arg1[%c0, %c0_0] : memref<64x432xbf16, #tpu.memory_space<vmem>>, vector<64x432xbf16>
    %c0_1 = arith.constant 0 : index
    %c0_2 = arith.constant 0 : index
    %1 = vector.load %arg2[%c0_1, %c0_2] : memref<432x128xbf16, #tpu.memory_space<vmem>>, vector<432x128xbf16>
    %cst = arith.constant dense<0.000000e+00> : vector<64x128xf32>
    %2 = tpu.matmul %0, %1, %cst {dimension_numbers = #tpu.dot_dimension_numbers<[1], [0], [0], [1], [0, 0, 1, 1], [], []>} : vector<64x432xbf16>, vector<432x128xbf16>, vector<64x128xf32> -> vector<64x128xf32>
    %c0_3 = arith.constant 0 : index
    %c0_4 = arith.constant 0 : index
    %3 = vector.load %arg3[%c0_3, %c0_4] : memref<1x128xf32, #tpu.memory_space<vmem>>, vector<1x128xf32>
    %4 = vector.broadcast %3 : vector<1x128xf32> to vector<64x128xf32>
    %5 = arith.addf %2, %4 : vector<64x128xf32>
    %cst_5 = arith.constant 0.000000e+00 : f32
    %6 = vector.broadcast %cst_5 : f32 to vector<64x128xf32>
    %7 = arith.maximumf %5, %6 : vector<64x128xf32>
    %8 = arith.truncf %7 : vector<64x128xf32> to vector<64x128xbf16>
    %c0_6 = arith.constant 0 : index
    %c0_7 = arith.constant 0 : index
    %9 = vector.load %arg4[%c0_6, %c0_7] : memref<64x128xbf16, #tpu.memory_space<vmem>>, vector<64x128xbf16>
    tpu.vector_store %arg4[%c0_6, %c0_7], %8 {strides = array<i32>} : memref<64x128xbf16, #tpu.memory_space<vmem>>, vector<64x128xbf16>,
    return
  }
  func.func @transform_0(%arg0: i32) -> (i32, i32) {
    %c0_i32 = arith.constant 0 : i32
    %c0_i32_0 = arith.constant 0 : i32
    return %arg0, %c0_i32 : i32, i32
  }
  func.func @transform_1(%arg0: i32) -> (i32, i32) {
    %c0_i32 = arith.constant 0 : i32
    %c0_i32_0 = arith.constant 0 : i32
    %c0_i32_1 = arith.constant 0 : i32
    return %c0_i32, %c0_i32_0 : i32, i32
  }
  func.func @transform_2(%arg0: i32) -> (i32, i32) {
    %c0_i32 = arith.constant 0 : i32
    %c0_i32_0 = arith.constant 0 : i32
    %c0_i32_1 = arith.constant 0 : i32
    return %c0_i32, %c0_i32_0 : i32, i32
  }
  func.func @transform_3(%arg0: i32) -> (i32, i32) {
    %c0_i32 = arith.constant 0 : i32
    %c0_i32_0 = arith.constant 0 : i32
    return %arg0, %c0_i32 : i32, i32
  }
}

module attributes {stable_mosaic.version = 11 : i64} {
  func.func @_matmul_bias_kernel(%arg0: i32, %arg1: memref<24x576xbf16, #tpu.memory_space<vmem>>, %arg2: memref<576x128xbf16, #tpu.memory_space<vmem>>, %arg3: memref<1x128xf32, #tpu.memory_space<vmem>>, %arg4: memref<24x128xbf16, #tpu.memory_space<vmem>>) attributes {dimension_semantics = [#tpu.dimension_semantics<parallel>], iteration_bounds = array<i64: 2>, scalar_prefetch = 0 : i64, scratch_operands = 0 : i64, tpu.core_type = #tpu.core_type<tc>, window_params = [{transform_indices = @transform_0, window_bounds = array<i64: 24, 576>}, {pipeline_mode = #tpu.pipeline_mode<synchronous>, transform_indices = @transform_1, window_bounds = array<i64: 576, 128>}, {pipeline_mode = #tpu.pipeline_mode<synchronous>, transform_indices = @transform_2, window_bounds = array<i64: 1, 128>}, {transform_indices = @transform_3, window_bounds = array<i64: 24, 128>}]} {
    %c0 = arith.constant 0 : index
    %c0_0 = arith.constant 0 : index
    %0 = vector.load %arg1[%c0, %c0_0] : memref<24x576xbf16, #tpu.memory_space<vmem>>, vector<24x576xbf16>
    %c0_1 = arith.constant 0 : index
    %c0_2 = arith.constant 0 : index
    %1 = vector.load %arg2[%c0_1, %c0_2] : memref<576x128xbf16, #tpu.memory_space<vmem>>, vector<576x128xbf16>
    %cst = arith.constant dense<0.000000e+00> : vector<24x128xf32>
    %2 = tpu.matmul %0, %1, %cst {dimension_numbers = #tpu.dot_dimension_numbers<[1], [0], [0], [1], [0, 0, 1, 1], [], []>} : vector<24x576xbf16>, vector<576x128xbf16>, vector<24x128xf32> -> vector<24x128xf32>
    %c0_3 = arith.constant 0 : index
    %c0_4 = arith.constant 0 : index
    %3 = vector.load %arg3[%c0_3, %c0_4] : memref<1x128xf32, #tpu.memory_space<vmem>>, vector<1x128xf32>
    %4 = vector.broadcast %3 : vector<1x128xf32> to vector<24x128xf32>
    %5 = arith.addf %2, %4 : vector<24x128xf32>
    %cst_5 = arith.constant 0.000000e+00 : f32
    %6 = vector.broadcast %cst_5 : f32 to vector<24x128xf32>
    %7 = arith.maximumf %5, %6 : vector<24x128xf32>
    %8 = arith.truncf %7 : vector<24x128xf32> to vector<24x128xbf16>
    %c0_6 = arith.constant 0 : index
    %c0_7 = arith.constant 0 : index
    %9 = vector.load %arg4[%c0_6, %c0_7] : memref<24x128xbf16, #tpu.memory_space<vmem>>, vector<24x128xbf16>
    tpu.vector_store %arg4[%c0_6, %c0_7], %8 {strides = array<i32>} : memref<24x128xbf16, #tpu.memory_space<vmem>>, vector<24x128xbf16>,
    return
  }
  func.func @transform_0(%arg0: i32) -> (i32, i32) {
    %c0_i32 = arith.constant 0 : i32
    %c0_i32_0 = arith.constant 0 : i32
    return %arg0, %c0_i32 : i32, i32
  }
  func.func @transform_1(%arg0: i32) -> (i32, i32) {
    %c0_i32 = arith.constant 0 : i32
    %c0_i32_0 = arith.constant 0 : i32
    %c0_i32_1 = arith.constant 0 : i32
    return %c0_i32, %c0_i32_0 : i32, i32
  }
  func.func @transform_2(%arg0: i32) -> (i32, i32) {
    %c0_i32 = arith.constant 0 : i32
    %c0_i32_0 = arith.constant 0 : i32
    %c0_i32_1 = arith.constant 0 : i32
    return %c0_i32, %c0_i32_0 : i32, i32
  }
  func.func @transform_3(%arg0: i32) -> (i32, i32) {
    %c0_i32 = arith.constant 0 : i32
    %c0_i32_0 = arith.constant 0 : i32
    return %arg0, %c0_i32 : i32, i32
  }
}

module attributes {stable_mosaic.version = 11 : i64} {
  func.func @_fc_head_kernel(%arg0: i32, %arg1: memref<8x1152xbf16, #tpu.memory_space<vmem>>, %arg2: memref<1152x128xbf16, #tpu.memory_space<vmem>>, %arg3: memref<1x128xf32, #tpu.memory_space<vmem>>, %arg4: memref<128x128xbf16, #tpu.memory_space<vmem>>, %arg5: memref<1x128xf32, #tpu.memory_space<vmem>>, %arg6: memref<128x128xbf16, #tpu.memory_space<vmem>>, %arg7: memref<1x128xf32, #tpu.memory_space<vmem>>, %arg8: memref<128x128xbf16, #tpu.memory_space<vmem>>, %arg9: memref<1x128xf32, #tpu.memory_space<vmem>>, %arg10: memref<8x128xf32, #tpu.memory_space<vmem>>) attributes {dimension_semantics = [#tpu.dimension_semantics<arbitrary>], iteration_bounds = array<i64: 1>, scalar_prefetch = 0 : i64, scratch_operands = 0 : i64, tpu.core_type = #tpu.core_type<tc>, window_params = [{pipeline_mode = #tpu.pipeline_mode<synchronous>, transform_indices = @transform_0, window_bounds = array<i64: 8, 1152>}, {pipeline_mode = #tpu.pipeline_mode<synchronous>, transform_indices = @transform_1, window_bounds = array<i64: 1152, 128>}, {pipeline_mode = #tpu.pipeline_mode<synchronous>, transform_indices = @transform_2, window_bounds = array<i64: 1, 128>}, {pipeline_mode = #tpu.pipeline_mode<synchronous>, transform_indices = @transform_3, window_bounds = array<i64: 128, 128>}, {pipeline_mode = #tpu.pipeline_mode<synchronous>, transform_indices = @transform_4, window_bounds = array<i64: 1, 128>}, {pipeline_mode = #tpu.pipeline_mode<synchronous>, transform_indices = @transform_5, window_bounds = array<i64: 128, 128>}, {pipeline_mode = #tpu.pipeline_mode<synchronous>, transform_indices = @transform_6, window_bounds = array<i64: 1, 128>}, {pipeline_mode = #tpu.pipeline_mode<synchronous>, transform_indices = @transform_7, window_bounds = array<i64: 128, 128>}, {pipeline_mode = #tpu.pipeline_mode<synchronous>, transform_indices = @transform_8, window_bounds = array<i64: 1, 128>}, {pipeline_mode = #tpu.pipeline_mode<synchronous>, transform_indices = @transform_9, window_bounds = array<i64: 8, 128>}]} {
    %c0 = arith.constant 0 : index
    %c0_0 = arith.constant 0 : index
    %0 = vector.load %arg1[%c0, %c0_0] : memref<8x1152xbf16, #tpu.memory_space<vmem>>, vector<8x1152xbf16>
    %c0_1 = arith.constant 0 : index
    %c0_2 = arith.constant 0 : index
    %1 = vector.load %arg2[%c0_1, %c0_2] : memref<1152x128xbf16, #tpu.memory_space<vmem>>, vector<1152x128xbf16>
    %cst = arith.constant dense<0.000000e+00> : vector<8x128xf32>
    %2 = tpu.matmul %0, %1, %cst {dimension_numbers = #tpu.dot_dimension_numbers<[1], [0], [0], [1], [0, 0, 1, 1], [], []>} : vector<8x1152xbf16>, vector<1152x128xbf16>, vector<8x128xf32> -> vector<8x128xf32>
    %c0_3 = arith.constant 0 : index
    %c0_4 = arith.constant 0 : index
    %3 = vector.load %arg3[%c0_3, %c0_4] : memref<1x128xf32, #tpu.memory_space<vmem>>, vector<1x128xf32>
    %4 = vector.broadcast %3 : vector<1x128xf32> to vector<8x128xf32>
    %5 = arith.addf %2, %4 : vector<8x128xf32>
    %cst_5 = arith.constant 0.000000e+00 : f32
    %6 = vector.broadcast %cst_5 : f32 to vector<8x128xf32>
    %7 = arith.maximumf %5, %6 : vector<8x128xf32>
    %8 = arith.truncf %7 : vector<8x128xf32> to vector<8x128xbf16>
    %c0_6 = arith.constant 0 : index
    %c0_7 = arith.constant 0 : index
    %9 = vector.load %arg4[%c0_6, %c0_7] : memref<128x128xbf16, #tpu.memory_space<vmem>>, vector<128x128xbf16>
    %cst_8 = arith.constant dense<0.000000e+00> : vector<8x128xf32>
    %10 = tpu.matmul %8, %9, %cst_8 {dimension_numbers = #tpu.dot_dimension_numbers<[1], [0], [0], [1], [0, 0, 1, 1], [], []>} : vector<8x128xbf16>, vector<128x128xbf16>, vector<8x128xf32> -> vector<8x128xf32>
    %c0_9 = arith.constant 0 : index
    %c0_10 = arith.constant 0 : index
    %11 = vector.load %arg5[%c0_9, %c0_10] : memref<1x128xf32, #tpu.memory_space<vmem>>, vector<1x128xf32>
    %12 = vector.broadcast %11 : vector<1x128xf32> to vector<8x128xf32>
    %13 = arith.addf %10, %12 : vector<8x128xf32>
    %cst_11 = arith.constant 0.000000e+00 : f32
    %14 = vector.broadcast %cst_11 : f32 to vector<8x128xf32>
    %15 = arith.maximumf %13, %14 : vector<8x128xf32>
    %16 = arith.truncf %15 : vector<8x128xf32> to vector<8x128xbf16>
    %c0_12 = arith.constant 0 : index
    %c0_13 = arith.constant 0 : index
    %17 = vector.load %arg6[%c0_12, %c0_13] : memref<128x128xbf16, #tpu.memory_space<vmem>>, vector<128x128xbf16>
    %cst_14 = arith.constant dense<0.000000e+00> : vector<8x128xf32>
    %18 = tpu.matmul %16, %17, %cst_14 {dimension_numbers = #tpu.dot_dimension_numbers<[1], [0], [0], [1], [0, 0, 1, 1], [], []>} : vector<8x128xbf16>, vector<128x128xbf16>, vector<8x128xf32> -> vector<8x128xf32>
    %c0_15 = arith.constant 0 : index
    %c0_16 = arith.constant 0 : index
    %19 = vector.load %arg7[%c0_15, %c0_16] : memref<1x128xf32, #tpu.memory_space<vmem>>, vector<1x128xf32>
    %20 = vector.broadcast %19 : vector<1x128xf32> to vector<8x128xf32>
    %21 = arith.addf %18, %20 : vector<8x128xf32>
    %cst_17 = arith.constant 0.000000e+00 : f32
    %22 = vector.broadcast %cst_17 : f32 to vector<8x128xf32>
    %23 = arith.maximumf %21, %22 : vector<8x128xf32>
    %24 = arith.truncf %23 : vector<8x128xf32> to vector<8x128xbf16>
    %c0_18 = arith.constant 0 : index
    %c0_19 = arith.constant 0 : index
    %25 = vector.load %arg8[%c0_18, %c0_19] : memref<128x128xbf16, #tpu.memory_space<vmem>>, vector<128x128xbf16>
    %cst_20 = arith.constant dense<0.000000e+00> : vector<8x128xf32>
    %26 = tpu.matmul %24, %25, %cst_20 {dimension_numbers = #tpu.dot_dimension_numbers<[1], [0], [0], [1], [0, 0, 1, 1], [], []>} : vector<8x128xbf16>, vector<128x128xbf16>, vector<8x128xf32> -> vector<8x128xf32>
    %c0_21 = arith.constant 0 : index
    %c0_22 = arith.constant 0 : index
    %27 = vector.load %arg9[%c0_21, %c0_22] : memref<1x128xf32, #tpu.memory_space<vmem>>, vector<1x128xf32>
    %28 = vector.broadcast %27 : vector<1x128xf32> to vector<8x128xf32>
    %29 = arith.addf %26, %28 : vector<8x128xf32>
    %c0_23 = arith.constant 0 : index
    %c0_24 = arith.constant 0 : index
    %30 = vector.load %arg10[%c0_23, %c0_24] : memref<8x128xf32, #tpu.memory_space<vmem>>, vector<8x128xf32>
    tpu.vector_store %arg10[%c0_23, %c0_24], %29 {strides = array<i32>} : memref<8x128xf32, #tpu.memory_space<vmem>>, vector<8x128xf32>,
    return
  }
  func.func @transform_0(%arg0: i32) -> (i32, i32) {
    %c0_i32 = arith.constant 0 : i32
    %c0_i32_0 = arith.constant 0 : i32
    %c0_i32_1 = arith.constant 0 : i32
    return %c0_i32, %c0_i32_0 : i32, i32
  }
  func.func @transform_1(%arg0: i32) -> (i32, i32) {
    %c0_i32 = arith.constant 0 : i32
    %c0_i32_0 = arith.constant 0 : i32
    %c0_i32_1 = arith.constant 0 : i32
    return %c0_i32, %c0_i32_0 : i32, i32
  }
  func.func @transform_2(%arg0: i32) -> (i32, i32) {
    %c0_i32 = arith.constant 0 : i32
    %c0_i32_0 = arith.constant 0 : i32
    %c0_i32_1 = arith.constant 0 : i32
    return %c0_i32, %c0_i32_0 : i32, i32
  }
  func.func @transform_3(%arg0: i32) -> (i32, i32) {
    %c0_i32 = arith.constant 0 : i32
    %c0_i32_0 = arith.constant 0 : i32
    %c0_i32_1 = arith.constant 0 : i32
    return %c0_i32, %c0_i32_0 : i32, i32
  }
  func.func @transform_4(%arg0: i32) -> (i32, i32) {
    %c0_i32 = arith.constant 0 : i32
    %c0_i32_0 = arith.constant 0 : i32
    %c0_i32_1 = arith.constant 0 : i32
    return %c0_i32, %c0_i32_0 : i32, i32
  }
  func.func @transform_5(%arg0: i32) -> (i32, i32) {
    %c0_i32 = arith.constant 0 : i32
    %c0_i32_0 = arith.constant 0 : i32
    %c0_i32_1 = arith.constant 0 : i32
    return %c0_i32, %c0_i32_0 : i32, i32
  }
  func.func @transform_6(%arg0: i32) -> (i32, i32) {
    %c0_i32 = arith.constant 0 : i32
    %c0_i32_0 = arith.constant 0 : i32
    %c0_i32_1 = arith.constant 0 : i32
    return %c0_i32, %c0_i32_0 : i32, i32
  }
  func.func @transform_7(%arg0: i32) -> (i32, i32) {
    %c0_i32 = arith.constant 0 : i32
    %c0_i32_0 = arith.constant 0 : i32
    %c0_i32_1 = arith.constant 0 : i32
    return %c0_i32, %c0_i32_0 : i32, i32
  }
  func.func @transform_8(%arg0: i32) -> (i32, i32) {
    %c0_i32 = arith.constant 0 : i32
    %c0_i32_0 = arith.constant 0 : i32
    %c0_i32_1 = arith.constant 0 : i32
    return %c0_i32, %c0_i32_0 : i32, i32
  }
  func.func @transform_9(%arg0: i32) -> (i32, i32) {
    %c0_i32 = arith.constant 0 : i32
    %c0_i32_0 = arith.constant 0 : i32
    %c0_i32_1 = arith.constant 0 : i32
    return %c0_i32, %c0_i32_0 : i32, i32
  }
}

</mosaic_0001>

<llo_original>
// kernel: pilotnet_forward.6
$region0: #{pilotnet_forward.6}
  #allocation0 [shape = 'u32[]', space=smem, size = 0x4, offset = 0x4, fixed_abs, tag = 'smem constant byte address 0x4 - core index']
  #allocation1 [shape = 'u32[144,128]{1,0:T(1,128)}', space=vmem, size = 0x12000, scoped, tag = 'internal scratch']
  %s0 = inlined_call_operand.vmem [shape: bf16[6076,75], index: 0, kind: input, shape index: {}]
  %s1 = inlined_call_operand.vmem [shape: bf16[75,128], index: 1, kind: input, shape index: {}]
  %s2 = inlined_call_operand.vmem [shape: f32[1,128], index: 2, kind: input, shape index: {}]
  %s3 = inlined_call_operand.vmem [shape: bf16[6076,128], index: 3, kind: output, shape index: {}]
  %s4 = sld [smem:[#allocation0]]
  $region45: #{pilotnet_forward.6} parent=0
    _
  %s6 = ssub.s32 1, %s4
  %s7 = scalar_select 0, %s6, %s4
  loop: start=0, step=1, limit=6
  $region2: #{pilotnet_forward.6} parent=0 // loop_pre_header
    _
  $region3: #{pilotnet_forward.6} parent=0 // loop_header
    %s9 = sphi 0, %s13
    %p10 = scmp.ge.s32.totalorder %s9, 6
    %s19 = sphi 0, %s21
    %s22 = sphi 0, %s19
    %s23 = sphi 0, %s22
    %s39 = sphi 0, %s23
    %s43 = sphi 0, %s43
    %s45 = sphi 0, %s43
    %s46 = sphi 0, %s45
    %s60 = sphi 0, %s46
    %s64 = sphi 0, %s64
    %s66 = sphi 0, %s64
    %s67 = sphi 0, %s66
    %s81 = sphi 0, %s67
    %s87 = sphi 0, %s89
    %s90 = sphi 0, %s87
    %s91 = sphi 0, %s90
    %s107 = sphi 0, %s91
  $region4: #{pilotnet_forward.6} parent=0 // loop_header_branch
    %12 = sbr.rel (%p10) target = $region8
  $region5: #{pilotnet_forward.6} parent=0 // loop_body
    %s14 = ssub.s32 %s9, 1
    %s15 = ssub.s32 %s9, 2
    %s16 = sadd.s32 %s9, 1
    %s17 = ssub.s32 %s9, %s16
    %p18 = scmp.eq.s32.totalorder %s17, 0
    %s20 = sadd.s32 %s19, 1
    %s21 = scalar_select %p18, %s19, %s20
    %p24 = pneg %p18
    %p25 = scmp.eq.s32.totalorder %s9, 3
    %p26 = por %p24, %p25
    %p27 = scmp.ne.s32.totalorder %s19, %s22
    %p28 = scmp.eq.s32.totalorder %s9, 0
    %p29 = por %p27, %p28
    %p30 = scmp.ne.s32.totalorder %s19, %s22
    %p31 = scmp.eq.s32.totalorder %s14, 3
    %p32 = por %p30, %p31
    %p33 = scmp.ne.s32.totalorder %s22, %s23
    %p34 = scmp.eq.s32.totalorder %s14, 0
    %p35 = por %p33, %p34
    %p36 = scmp.ne.s32.totalorder %s22, %s23
    %p37 = scmp.eq.s32.totalorder %s15, 3
    %p38 = por %p36, %p37
    %p40 = scmp.ne.s32.totalorder %s23, %s39
    %p41 = scmp.eq.s32.totalorder %s15, 0
    %p42 = por %p40, %p41
    %s44 = sadd.s32 %s43, 1
    %p47 = scmp.eq.s32.totalorder %s9, 3
    %p48 = scmp.ne.s32.totalorder %s43, %s45
    %p49 = scmp.eq.s32.totalorder %s9, 0
    %p50 = por %p48, %p49
    %p51 = scmp.ne.s32.totalorder %s43, %s45
    %p52 = scmp.eq.s32.totalorder %s14, 3
    %p53 = por %p51, %p52
    %p54 = scmp.ne.s32.totalorder %s45, %s46
    %p55 = scmp.eq.s32.totalorder %s14, 0
    %p56 = por %p54, %p55
    %p57 = scmp.ne.s32.totalorder %s45, %s46
    %p58 = scmp.eq.s32.totalorder %s15, 3
    %p59 = por %p57, %p58
    %p61 = scmp.ne.s32.totalorder %s46, %s60
    %p62 = scmp.eq.s32.totalorder %s15, 0
    %p63 = por %p61, %p62
    %s65 = sadd.s32 %s64, 1
    %p68 = scmp.eq.s32.totalorder %s9, 3
    %p69 = scmp.ne.s32.totalorder %s64, %s66
    %p70 = scmp.eq.s32.totalorder %s9, 0
    %p71 = por %p69, %p70
    %p72 = scmp.ne.s32.totalorder %s64, %s66
    %p73 = scmp.eq.s32.totalorder %s14, 3
    %p74 = por %p72, %p73
    %p75 = scmp.ne.s32.totalorder %s66, %s67
    %p76 = scmp.eq.s32.totalorder %s14, 0
    %p77 = por %p75, %p76
    %p78 = scmp.ne.s32.totalorder %s66, %s67
    %p79 = scmp.eq.s32.totalorder %s15, 3
    %p80 = por %p78, %p79
    %p82 = scmp.ne.s32.totalorder %s67, %s81
    %p83 = scmp.eq.s32.totalorder %s15, 0
    %p84 = por %p82, %p83
    %s85 = ssub.s32 %s9, %s16
    %p86 = scmp.eq.s32.totalorder %s85, 0
    %s88 = sadd.s32 %s87, 1
    %s89 = scalar_select %p86, %s87, %s88
    %p92 = pneg %p86
    %p93 = scmp.eq.s32.totalorder %s9, 3
    %p94 = por %p92, %p93
    %p95 = scmp.ne.s32.totalorder %s87, %s90
    %p96 = scmp.eq.s32.totalorder %s9, 0
    %p97 = por %p95, %p96
    %p98 = scmp.ne.s32.totalorder %s87, %s90
    %p99 = scmp.eq.s32.totalorder %s14, 3
    %p100 = por %p98, %p99
    %p101 = scmp.ne.s32.totalorder %s90, %s91
    %p102 = scmp.eq.s32.totalorder %s14, 0
    %p103 = por %p101, %p102
    %p104 = scmp.ne.s32.totalorder %s90, %s91
    %p105 = scmp.eq.s32.totalorder %s15, 3
    %p106 = por %p104, %p105
    %p108 = scmp.ne.s32.totalorder %s91, %s107
    %p109 = scmp.eq.s32.totalorder %s15, 0
    %p110 = por %p108, %p109
    %p111 = scmp.le.s32.totalorder 1, %s9
    %p112 = scmp.lt.s32.totalorder %s9, 5
    %p113 = pnand %p111, %p112
    %p114 = pneg %p113
    // Predicated region
    $region9: #{pilotnet_forward.6} parent=5 // pred_check
      _
    $region10: #{pilotnet_forward.6} parent=5 // pred_check_branch
      %116 = sbr.rel (%p113) target = $region12
    $region11: #{pilotnet_forward.6} parent=5 // pred_region
      %s117 = ssub.s32 %s9, 1
      // Predicated region
      $region13: #{pilotnet_forward.6} parent=11 // pred_check
        %p118 = pneg %p56
      $region14: #{pilotnet_forward.6} parent=11 // pred_check_branch
        %120 = sbr.rel (%p118) target = $region16
      $region15: #{pilotnet_forward.6} parent=11 // pred_region
        _
      $region16: #{pilotnet_forward.6} parent=11 // pred_fallthru
        _
      // Predicated region
      $region17: #{pilotnet_forward.6} parent=11 // pred_check
        %p121 = pneg %p77
      $region18: #{pilotnet_forward.6} parent=11 // pred_check_branch
        %123 = sbr.rel (%p121) target = $region20
      $region19: #{pilotnet_forward.6} parent=11 // pred_region
        _
      $region20: #{pilotnet_forward.6} parent=11 // pred_fallthru
        _
    $region12: #{pilotnet_forward.6} parent=5 // pred_fallthru
      _
    %p124 = scmp.lt.s32.totalorder %s9, 4
    // Predicated region
    $region21: #{pilotnet_forward.6} parent=5 // pred_check
      %p125 = pneg %p124
    $region22: #{pilotnet_forward.6} parent=5 // pred_check_branch
      %127 = sbr.rel (%p125) target = $region24
    $region23: #{pilotnet_forward.6} parent=5 // pred_region
      // Predicated region
      $region25: #{pilotnet_forward.6} parent=23 // pred_check
        %p128 = pneg %p29
      $region26: #{pilotnet_forward.6} parent=23 // pred_check_branch
        %130 = sbr.rel (%p128) target = $region28
      $region27: #{pilotnet_forward.6} parent=23 // pred_region
        %s131 = smul.u32 190, %s9
        %p132 = scmp.lt.s32.totalorder %s131, 759
        %s133 = scalar_select %p132, %s131, 759
        %s134 = smul.addr %s133, 4
        %s135 = scalar_lea.vmem %s0, %s134
        %s136 = smul.u32 190, %s9
      $region28: #{pilotnet_forward.6} parent=23 // pred_fallthru
        _
    $region24: #{pilotnet_forward.6} parent=5 // pred_fallthru
      _
    %p137 = scmp.le.s32.totalorder 1, %s9
    %p138 = scmp.lt.s32.totalorder %s9, 5
    %p139 = pnand %p137, %p138
    %p140 = pneg %p139
    // Predicated region
    $region29: #{pilotnet_forward.6} parent=5 // pred_check
      _
    $region30: #{pilotnet_forward.6} parent=5 // pred_check_branch
      %142 = sbr.rel (%p139) target = $region32
    $region31: #{pilotnet_forward.6} parent=5 // pred_region
      %s143 = ssub.s32 %s9, 1
      %s144 = smul.u32 190, %s14
      %p145 = scmp.lt.s32.totalorder %s144, 759
      %s146 = scalar_select %p145, %s144, 759
      %s147 = smul.addr %s146, 4
      %s148 = scalar_lea.vmem %s0, %s147
      %p149 = pneg %p35
      %p150 = pneg %p32
      %p151 = pneg %p56
      %p152 = pneg %p53
      %p153 = pneg %p77
      %p154 = pneg %p74
      %p155 = pneg %p103
      %p156 = pneg %p100
      %s157 = smul.u32 190, %s14
      %p158 = scmp.lt.s32.totalorder %s157, 759
      %s159 = scalar_select %p158, %s157, 759
      %s160 = smul.addr %s159, 4
      %s161 = scalar_lea.vmem %s3, %s160
      %s162 = smul.u32 190, %s14
      %p163 = scmp.lt.s32.totalorder %s162, 759
      %s164 = scalar_select %p163, %s162, 759
      %s165 = smul.addr %s164, 4
      %s166 = scalar_lea.vmem %s0, %s165
      %s167 = smul.u32 190, %s14
      %s168 = smul.u32 190, %s14
      %p169 = scmp.lt.s32.totalorder %s168, 759
      %s170 = scalar_select %p169, %s168, 759
      %s171 = smul.addr %s170, 4
      %s172 = scalar_lea.vmem %s3, %s171
      %s173 = smul.u32 190, %s14
      %v175 = vld [vmem:[%s166] sm:$0xf]
      %v176 = vld [vmem:[%s166 + $0x4] sm:$0xf]
      %v177 = vld [vmem:[%s166 + $0x8] sm:$0xf]
      %v178 = vld [vmem:[%s166 + $0xc] sm:$0xf]
      %v179 = vld [vmem:[%s166 + $0x10] sm:$0xf]
      %v180 = vld [vmem:[%s166 + $0x14] sm:$0xf]
      %v181 = vld [vmem:[%s166 + $0x18] sm:$0xf]
      %v182 = vld [vmem:[%s166 + $0x1c] sm:$0xf]
      %v183 = vld [vmem:[%s166 + $0x20] sm:$0xf]
      %v184 = vld [vmem:[%s166 + $0x24] sm:$0xf]
      %v185 = vld [vmem:[%s166 + $0x28] sm:$0xf]
      %v186 = vld [vmem:[%s166 + $0x2c] sm:$0xf]
      %v187 = vld [vmem:[%s166 + $0x30] sm:$0xf]
      %v188 = vld [vmem:[%s166 + $0x34] sm:$0xf]
      %v189 = vld [vmem:[%s166 + $0x38] sm:$0xf]
      %v190 = vld [vmem:[%s166 + $0x3c] sm:$0xf]
      %v191 = vld [vmem:[%s166 + $0x40] sm:$0xf]
      %v192 = vld [vmem:[%s166 + $0x44] sm:$0xf]
      %v193 = vld [vmem:[%s166 + $0x48] sm:$0xf]
      %v194 = vld [vmem:[%s166 + $0x4c] sm:$0xf]
      %v195 = vld [vmem:[%s166 + $0x50] sm:$0xf]
      %v196 = vld [vmem:[%s166 + $0x54] sm:$0xf]
      %v197 = vld [vmem:[%s166 + $0x58] sm:$0xf]
      %v198 = vld [vmem:[%s166 + $0x5c] sm:$0xf]
      %v199 = vld [vmem:[%s166 + $0x60] sm:$0xf]
      %v200 = vld [vmem:[%s166 + $0x64] sm:$0xf]
      %v201 = vld [vmem:[%s166 + $0x68] sm:$0xf]
      %v202 = vld [vmem:[%s166 + $0x6c] sm:$0xf]
      %v203 = vld [vmem:[%s166 + $0x70] sm:$0xf]
      %v204 = vld [vmem:[%s166 + $0x74] sm:$0xf]
      %v205 = vld [vmem:[%s166 + $0x78] sm:$0xf]
      %v206 = vld [vmem:[%s166 + $0x7c] sm:$0xf]
      %v207 = vld [vmem:[%s166 + $0x80] sm:$0xf]
      %v208 = vld [vmem:[%s166 + $0x84] sm:$0xf]
      %v209 = vld [vmem:[%s166 + $0x88] sm:$0xf]
      %v210 = vld [vmem:[%s166 + $0x8c] sm:$0xf]
      %v211 = vld [vmem:[%s166 + $0x90] sm:$0xf]
      %v212 = vld [vmem:[%s166 + $0x94] sm:$0xf]
      %v213 = vld [vmem:[%s166 + $0x98] sm:$0xf]
      %v214 = vld [vmem:[%s166 + $0x9c] sm:$0xf]
      %v215 = vld [vmem:[%s166 + $0xa0] sm:$0xf]
      %v216 = vld [vmem:[%s166 + $0xa4] sm:$0xf]
      %v217 = vld [vmem:[%s166 + $0xa8] sm:$0xf]
      %v218 = vld [vmem:[%s166 + $0xac] sm:$0xf]
      %v219 = vld [vmem:[%s166 + $0xb0] sm:$0xf]
      %v220 = vld [vmem:[%s166 + $0xb4] sm:$0xf]
      %v221 = vld [vmem:[%s166 + $0xb8] sm:$0xf]
      %v222 = vld [vmem:[%s166 + $0xbc] sm:$0xf]
      %v223 = vld [vmem:[%s166 + $0xc0] sm:$0xf]
      %v224 = vld [vmem:[%s166 + $0xc4] sm:$0xf]
      %v225 = vld [vmem:[%s166 + $0xc8] sm:$0xf]
      %v226 = vld [vmem:[%s166 + $0xcc] sm:$0xf]
      %v227 = vld [vmem:[%s166 + $0xd0] sm:$0xf]
      %v228 = vld [vmem:[%s166 + $0xd4] sm:$0xf]
      %v229 = vld [vmem:[%s166 + $0xd8] sm:$0xf]
      %v230 = vld [vmem:[%s166 + $0xdc] sm:$0xf]
      %v231 = vld [vmem:[%s166 + $0xe0] sm:$0xf]
      %v232 = vld [vmem:[%s166 + $0xe4] sm:$0xf]
      %v233 = vld [vmem:[%s166 + $0xe8] sm:$0xf]
      %v234 = vld [vmem:[%s166 + $0xec] sm:$0xf]
      %v235 = vld [vmem:[%s166 + $0xf0] sm:$0xf]
      %v236 = vld [vmem:[%s166 + $0xf4] sm:$0xf]
      %v237 = vld [vmem:[%s166 + $0xf8] sm:$0xf]
      %v238 = vld [vmem:[%s166 + $0xfc] sm:$0xf]
      %v239 = vld [vmem:[%s166 + $0x100] sm:$0xf]
      %v240 = vld [vmem:[%s166 + $0x104] sm:$0xf]
      %v241 = vld [vmem:[%s166 + $0x108] sm:$0xf]
      %v242 = vld [vmem:[%s166 + $0x10c] sm:$0xf]
      %v243 = vld [vmem:[%s166 + $0x110] sm:$0xf]
      %v244 = vld [vmem:[%s166 + $0x114] sm:$0xf]
      %v245 = vld [vmem:[%s166 + $0x118] sm:$0xf]
      %v246 = vld [vmem:[%s166 + $0x11c] sm:$0xf]
      %v247 = vld [vmem:[%s166 + $0x120] sm:$0xf]
      %v248 = vld [vmem:[%s166 + $0x124] sm:$0xf]
      %v249 = vld [vmem:[%s166 + $0x128] sm:$0xf]
      %v250 = vld [vmem:[%s166 + $0x12c] sm:$0xf]
      %v251 = vld [vmem:[%s166 + $0x130] sm:$0xf]
      %v252 = vld [vmem:[%s166 + $0x134] sm:$0xf]
      %v253 = vld [vmem:[%s166 + $0x138] sm:$0xf]
      %v254 = vld [vmem:[%s166 + $0x13c] sm:$0xf]
      %v255 = vld [vmem:[%s166 + $0x140] sm:$0xf]
      %v256 = vld [vmem:[%s166 + $0x144] sm:$0xf]
      %v257 = vld [vmem:[%s166 + $0x148] sm:$0xf]
      %v258 = vld [vmem:[%s166 + $0x14c] sm:$0xf]
      %v259 = vld [vmem:[%s166 + $0x150] sm:$0xf]
      %v260 = vld [vmem:[%s166 + $0x154] sm:$0xf]
      %v261 = vld [vmem:[%s166 + $0x158] sm:$0xf]
      %v262 = vld [vmem:[%s166 + $0x15c] sm:$0xf]
      %v263 = vld [vmem:[%s166 + $0x160] sm:$0xf]
      %v264 = vld [vmem:[%s166 + $0x164] sm:$0xf]
      %v265 = vld [vmem:[%s166 + $0x168] sm:$0xf]
      %v266 = vld [vmem:[%s166 + $0x16c] sm:$0xf]
      %v267 = vld [vmem:[%s166 + $0x170] sm:$0xf]
      %v268 = vld [vmem:[%s166 + $0x174] sm:$0xf]
      %v269 = vld [vmem:[%s166 + $0x178] sm:$0xf]
      %v270 = vld [vmem:[%s166 + $0x17c] sm:$0xf]
      %v271 = vld [vmem:[%s166 + $0x180] sm:$0xf]
      %v272 = vld [vmem:[%s166 + $0x184] sm:$0xf]
      %v273 = vld [vmem:[%s166 + $0x188] sm:$0xf]
      %v274 = vld [vmem:[%s166 + $0x18c] sm:$0xf]
      %v275 = vld [vmem:[%s166 + $0x190] sm:$0xf]
      %v276 = vld [vmem:[%s166 + $0x194] sm:$0xf]
      %v277 = vld [vmem:[%s166 + $0x198] sm:$0xf]
      %v278 = vld [vmem:[%s166 + $0x19c] sm:$0xf]
      %v279 = vld [vmem:[%s166 + $0x1a0] sm:$0xf]
      %v280 = vld [vmem:[%s166 + $0x1a4] sm:$0xf]
      %v281 = vld [vmem:[%s166 + $0x1a8] sm:$0xf]
      %v282 = vld [vmem:[%s166 + $0x1ac] sm:$0xf]
      %v283 = vld [vmem:[%s166 + $0x1b0] sm:$0xf]
      %v284 = vld [vmem:[%s166 + $0x1b4] sm:$0xf]
      %v285 = vld [vmem:[%s166 + $0x1b8] sm:$0xf]
      %v286 = vld [vmem:[%s166 + $0x1bc] sm:$0xf]
      %v287 = vld [vmem:[%s166 + $0x1c0] sm:$0xf]
      %v288 = vld [vmem:[%s166 + $0x1c4] sm:$0xf]
      %v289 = vld [vmem:[%s166 + $0x1c8] sm:$0xf]
      %v290 = vld [vmem:[%s166 + $0x1cc] sm:$0xf]
      %v291 = vld [vmem:[%s166 + $0x1d0] sm:$0xf]
      %v292 = vld [vmem:[%s166 + $0x1d4] sm:$0xf]
      %v293 = vld [vmem:[%s166 + $0x1d8] sm:$0xf]
      %v294 = vld [vmem:[%s166 + $0x1dc] sm:$0xf]
      %v295 = vld [vmem:[%s166 + $0x1e0] sm:$0xf]
      %v296 = vld [vmem:[%s166 + $0x1e4] sm:$0xf]
      %v297 = vld [vmem:[%s166 + $0x1e8] sm:$0xf]
      %v298 = vld [vmem:[%s166 + $0x1ec] sm:$0xf]
      %v299 = vld [vmem:[%s166 + $0x1f0] sm:$0xf]
      %v300 = vld [vmem:[%s166 + $0x1f4] sm:$0xf]
      %v301 = vld [vmem:[%s166 + $0x1f8] sm:$0xf]
      %v302 = vld [vmem:[%s166 + $0x1fc] sm:$0xf]
      %v303 = vld [vmem:[%s166 + $0x200] sm:$0xf]
      %v304 = vld [vmem:[%s166 + $0x204] sm:$0xf]
      %v305 = vld [vmem:[%s166 + $0x208] sm:$0xf]
      %v306 = vld [vmem:[%s166 + $0x20c] sm:$0xf]
      %v307 = vld [vmem:[%s166 + $0x210] sm:$0xf]
      %v308 = vld [vmem:[%s166 + $0x214] sm:$0xf]
      %v309 = vld [vmem:[%s166 + $0x218] sm:$0xf]
      %v310 = vld [vmem:[%s166 + $0x21c] sm:$0xf]
      %v311 = vld [vmem:[%s166 + $0x220] sm:$0xf]
      %v312 = vld [vmem:[%s166 + $0x224] sm:$0xf]
      %v313 = vld [vmem:[%s166 + $0x228] sm:$0xf]
      %v314 = vld [vmem:[%s166 + $0x22c] sm:$0xf]
      %v315 = vld [vmem:[%s166 + $0x230] sm:$0xf]
      %v316 = vld [vmem:[%s166 + $0x234] sm:$0xf]
      %v317 = vld [vmem:[%s166 + $0x238] sm:$0xf]
      %v318 = vld [vmem:[%s166 + $0x23c] sm:$0xf]
      %v319 = vld [vmem:[%s166 + $0x240] sm:$0xf]
      %v320 = vld [vmem:[%s166 + $0x244] sm:$0xf]
      %v321 = vld [vmem:[%s166 + $0x248] sm:$0xf]
      %v322 = vld [vmem:[%s166 + $0x24c] sm:$0xf]
      %v323 = vld [vmem:[%s166 + $0x250] sm:$0xf]
      %v324 = vld [vmem:[%s166 + $0x254] sm:$0xf]
      %v325 = vld [vmem:[%s166 + $0x258] sm:$0xf]
      %v326 = vld [vmem:[%s166 + $0x25c] sm:$0xf]
      %v327 = vld [vmem:[%s166 + $0x260] sm:$0xf]
      %v328 = vld [vmem:[%s166 + $0x264] sm:$0xf]
      %v329 = vld [vmem:[%s166 + $0x268] sm:$0xf]
      %v330 = vld [vmem:[%s166 + $0x26c] sm:$0xf]
      %v331 = vld [vmem:[%s166 + $0x270] sm:$0xf]
      %v332 = vld [vmem:[%s166 + $0x274] sm:$0xf]
      %v333 = vld [vmem:[%s166 + $0x278] sm:$0xf]
      %v334 = vld [vmem:[%s166 + $0x27c] sm:$0xf]
      %v335 = vld [vmem:[%s166 + $0x280] sm:$0xf]
      %v336 = vld [vmem:[%s166 + $0x284] sm:$0xf]
      %v337 = vld [vmem:[%s166 + $0x288] sm:$0xf]
      %v338 = vld [vmem:[%s166 + $0x28c] sm:$0xf]
      %v339 = vld [vmem:[%s166 + $0x290] sm:$0xf]
      %v340 = vld [vmem:[%s166 + $0x294] sm:$0xf]
      %v341 = vld [vmem:[%s166 + $0x298] sm:$0xf]
      %v342 = vld [vmem:[%s166 + $0x29c] sm:$0xf]
      %v343 = vld [vmem:[%s166 + $0x2a0] sm:$0xf]
      %v344 = vld [vmem:[%s166 + $0x2a4] sm:$0xf]
      %v345 = vld [vmem:[%s166 + $0x2a8] sm:$0xf]
      %v346 = vld [vmem:[%s166 + $0x2ac] sm:$0xf]
      %v347 = vld [vmem:[%s166 + $0x2b0] sm:$0xf]
      %v348 = vld [vmem:[%s166 + $0x2b4] sm:$0xf]
      %v349 = vld [vmem:[%s166 + $0x2b8] sm:$0xf]
      %v350 = vld [vmem:[%s166 + $0x2bc] sm:$0xf]
      %v351 = vld [vmem:[%s166 + $0x2c0] sm:$0xf]
      %v352 = vld [vmem:[%s166 + $0x2c4] sm:$0xf]
      %v353 = vld [vmem:[%s166 + $0x2c8] sm:$0xf]
      %v354 = vld [vmem:[%s166 + $0x2cc] sm:$0xf]
      %v355 = vld [vmem:[%s166 + $0x2d0] sm:$0xf]
      %v356 = vld [vmem:[%s166 + $0x2d4] sm:$0xf]
      %v357 = vld [vmem:[%s166 + $0x2d8] sm:$0xf]
      %v358 = vld [vmem:[%s166 + $0x2dc] sm:$0xf]
      %v359 = vld [vmem:[%s166 + $0x2e0] sm:$0xf]
      %v360 = vld [vmem:[%s166 + $0x2e4] sm:$0xf]
      %v361 = vld [vmem:[%s166 + $0x2e8] sm:$0xf]
      %v362 = vld [vmem:[%s166 + $0x2ec] sm:$0xf]
      %v363 = vld [vmem:[%s166 + $0x2f0] sm:$0xf]
      %v364 = vld [vmem:[%s166 + $0x2f4] sm:$0xf]
      %v365 = vld [vmem:[%s1] sm:$0xf]
      %v366 = vld [vmem:[%s1 + $0x4] sm:$0xf]
      %v367 = vld [vmem:[%s1 + $0x8] sm:$0xf]
      %v368 = vld [vmem:[%s1 + $0xc] sm:$0xf]
      %v369 = vld [vmem:[%s1 + $0x10] sm:$0xf]
      %v370 = vld [vmem:[%s1 + $0x14] sm:$0xf]
      %v371 = vld [vmem:[%s1 + $0x18] sm:$0xf]
      %v372 = vld [vmem:[%s1 + $0x1c] sm:$0xf]
      %v373 = vld [vmem:[%s1 + $0x20] sm:$0xf]
      %v374 = vld [vmem:[%s1 + $0x24] sm:$0x3]
      %v375 = vld [vmem:[%s2] sm:$0x1]
      %v377 = vlaneseq
      %v378 = vshrl.u32 %v377, 7
      %v379 = vsub.s32 0, %v378
      %v380 = vrot.slane %v375, %v379
      %v572 = vunpack.c.l.b16 %v175
      %v573 = vunpack.c.l.b16 %v176
      %v574 = vunpack.c.l.b16 %v177
      %v575 = vunpack.c.l.b16 %v178
      %v576 = vunpack.c.l.b16 %v179
      %v577 = vunpack.c.l.b16 %v180
      %v578 = vunpack.c.l.b16 %v181
      %v579 = vunpack.c.l.b16 %v182
      %v580 = vunpack.c.l.b16 %v183
      %v581 = vunpack.c.l.b16 %v184
      %v582 = vunpack.c.l.b16 %v185
      %v583 = vunpack.c.l.b16 %v186
      %v584 = vunpack.c.l.b16 %v187
      %v585 = vunpack.c.l.b16 %v188
      %v586 = vunpack.c.l.b16 %v189
      %v587 = vunpack.c.l.b16 %v190
      %v588 = vunpack.c.l.b16 %v191
      %v589 = vunpack.c.l.b16 %v192
      %v590 = vunpack.c.l.b16 %v193
      %v591 = vunpack.c.l.b16 %v194
      %v592 = vunpack.c.l.b16 %v195
      %v593 = vunpack.c.l.b16 %v196
      %v594 = vunpack.c.l.b16 %v197
      %v595 = vunpack.c.l.b16 %v198
      %v596 = vunpack.c.l.b16 %v199
      %v597 = vunpack.c.l.b16 %v200
      %v598 = vunpack.c.l.b16 %v201
      %v599 = vunpack.c.l.b16 %v202
      %v600 = vunpack.c.l.b16 %v203
      %v601 = vunpack.c.l.b16 %v204
      %v602 = vunpack.c.l.b16 %v205
      %v603 = vunpack.c.l.b16 %v206
      %v604 = vunpack.c.l.b16 %v207
      %v605 = vunpack.c.l.b16 %v208
      %v606 = vunpack.c.l.b16 %v209
      %v607 = vunpack.c.l.b16 %v210
      %v608 = vunpack.c.l.b16 %v211
      %v609 = vunpack.c.l.b16 %v212
      %v610 = vunpack.c.l.b16 %v213
      %v611 = vunpack.c.l.b16 %v214
      %v612 = vunpack.c.l.b16 %v215
      %v613 = vunpack.c.l.b16 %v216
      %v614 = vunpack.c.l.b16 %v217
      %v615 = vunpack.c.l.b16 %v218
      %v616 = vunpack.c.l.b16 %v219
      %v617 = vunpack.c.l.b16 %v220
      %v618 = vunpack.c.l.b16 %v221
      %v619 = vunpack.c.l.b16 %v222
      %v620 = vunpack.c.l.b16 %v223
      %v621 = vunpack.c.l.b16 %v224
      %v622 = vunpack.c.l.b16 %v225
      %v623 = vunpack.c.l.b16 %v226
      %v624 = vunpack.c.l.b16 %v227
      %v625 = vunpack.c.l.b16 %v228
      %v626 = vunpack.c.l.b16 %v229
      %v627 = vunpack.c.l.b16 %v230
      %v628 = vunpack.c.l.b16 %v231
      %v629 = vunpack.c.l.b16 %v232
      %v630 = vunpack.c.l.b16 %v233
      %v631 = vunpack.c.l.b16 %v234
      %v632 = vunpack.c.l.b16 %v235
      %v633 = vunpack.c.l.b16 %v236
      %v634 = vunpack.c.l.b16 %v237
      %v635 = vunpack.c.l.b16 %v238
      %v636 = vunpack.c.l.b16 %v239
      %v637 = vunpack.c.l.b16 %v240
      %v638 = vunpack.c.l.b16 %v241
      %v639 = vunpack.c.l.b16 %v242
      %v640 = vunpack.c.l.b16 %v243
      %v641 = vunpack.c.l.b16 %v244
      %v642 = vunpack.c.l.b16 %v245
      %v643 = vunpack.c.l.b16 %v246
      %v644 = vunpack.c.l.b16 %v247
      %v645 = vunpack.c.l.b16 %v248
      %v646 = vunpack.c.l.b16 %v249
      %v647 = vunpack.c.l.b16 %v250
      %v648 = vunpack.c.l.b16 %v251
      %v649 = vunpack.c.l.b16 %v252
      %v650 = vunpack.c.l.b16 %v253
      %v651 = vunpack.c.l.b16 %v254
      %v652 = vunpack.c.l.b16 %v255
      %v653 = vunpack.c.l.b16 %v256
      %v654 = vunpack.c.l.b16 %v257
      %v655 = vunpack.c.l.b16 %v258
      %v656 = vunpack.c.l.b16 %v259
      %v657 = vunpack.c.l.b16 %v260
      %v658 = vunpack.c.l.b16 %v261
      %v659 = vunpack.c.l.b16 %v262
      %v660 = vunpack.c.l.b16 %v263
      %v661 = vunpack.c.l.b16 %v264
      %v662 = vunpack.c.l.b16 %v265
      %v663 = vunpack.c.l.b16 %v266
      %v664 = vunpack.c.l.b16 %v267
      %v665 = vunpack.c.l.b16 %v268
      %v666 = vunpack.c.l.b16 %v269
      %v667 = vunpack.c.l.b16 %v270
      %v668 = vunpack.c.l.b16 %v271
      %v669 = vunpack.c.l.b16 %v272
      %v670 = vunpack.c.l.b16 %v273
      %v671 = vunpack.c.l.b16 %v274
      %v672 = vunpack.c.l.b16 %v275
      %v673 = vunpack.c.l.b16 %v276
      %v674 = vunpack.c.l.b16 %v277
      %v675 = vunpack.c.l.b16 %v278
      %v676 = vunpack.c.l.b16 %v279
      %v677 = vunpack.c.l.b16 %v280
      %v678 = vunpack.c.l.b16 %v281
      %v679 = vunpack.c.l.b16 %v282
      %v680 = vunpack.c.l.b16 %v283
      %v681 = vunpack.c.l.b16 %v284
      %v682 = vunpack.c.l.b16 %v285
      %v683 = vunpack.c.l.b16 %v286
      %v684 = vunpack.c.l.b16 %v287
      %v685 = vunpack.c.l.b16 %v288
      %v686 = vunpack.c.l.b16 %v289
      %v687 = vunpack.c.l.b16 %v290
      %v688 = vunpack.c.l.b16 %v291
      %v689 = vunpack.c.l.b16 %v292
      %v690 = vunpack.c.l.b16 %v293
      %v691 = vunpack.c.l.b16 %v294
      %v692 = vunpack.c.l.b16 %v295
      %v693 = vunpack.c.l.b16 %v296
      %v694 = vunpack.c.l.b16 %v297
      %v695 = vunpack.c.l.b16 %v298
      %v696 = vunpack.c.l.b16 %v299
      %v697 = vunpack.c.l.b16 %v300
      %v698 = vunpack.c.l.b16 %v301
      %v699 = vunpack.c.l.b16 %v302
      %v700 = vunpack.c.l.b16 %v303
      %v701 = vunpack.c.l.b16 %v304
      %v702 = vunpack.c.l.b16 %v305
      %v703 = vunpack.c.l.b16 %v306
      %v704 = vunpack.c.l.b16 %v307
      %v705 = vunpack.c.l.b16 %v308
      %v706 = vunpack.c.l.b16 %v309
      %v707 = vunpack.c.l.b16 %v310
      %v708 = vunpack.c.l.b16 %v311
      %v709 = vunpack.c.l.b16 %v312
      %v710 = vunpack.c.l.b16 %v313
      %v711 = vunpack.c.l.b16 %v314
      %v712 = vunpack.c.l.b16 %v315
      %v713 = vunpack.c.l.b16 %v316
      %v714 = vunpack.c.l.b16 %v317
      %v715 = vunpack.c.l.b16 %v318
      %v716 = vunpack.c.l.b16 %v319
      %v717 = vunpack.c.l.b16 %v320
      %v718 = vunpack.c.l.b16 %v321
      %v719 = vunpack.c.l.b16 %v322
      %v720 = vunpack.c.l.b16 %v323
      %v721 = vunpack.c.l.b16 %v324
      %v722 = vunpack.c.l.b16 %v325
      %v723 = vunpack.c.l.b16 %v326
      %v724 = vunpack.c.l.b16 %v327
      %v725 = vunpack.c.l.b16 %v328
      %v726 = vunpack.c.l.b16 %v329
      %v727 = vunpack.c.l.b16 %v330
      %v728 = vunpack.c.l.b16 %v331
      %v729 = vunpack.c.l.b16 %v332
      %v730 = vunpack.c.l.b16 %v333
      %v731 = vunpack.c.l.b16 %v334
      %v732 = vunpack.c.l.b16 %v335
      %v733 = vunpack.c.l.b16 %v336
      %v734 = vunpack.c.l.b16 %v337
      %v735 = vunpack.c.l.b16 %v338
      %v736 = vunpack.c.l.b16 %v339
      %v737 = vunpack.c.l.b16 %v340
      %v738 = vunpack.c.l.b16 %v341
      %v739 = vunpack.c.l.b16 %v342
      %v740 = vunpack.c.l.b16 %v343
      %v741 = vunpack.c.l.b16 %v344
      %v742 = vunpack.c.l.b16 %v345
      %v743 = vunpack.c.l.b16 %v346
      %v744 = vunpack.c.l.b16 %v347
      %v745 = vunpack.c.l.b16 %v348
      %v746 = vunpack.c.l.b16 %v349
      %v747 = vunpack.c.l.b16 %v350
      %v748 = vunpack.c.l.b16 %v351
      %v749 = vunpack.c.l.b16 %v352
      %v750 = vunpack.c.l.b16 %v353
      %v751 = vunpack.c.l.b16 %v354
      %v752 = vunpack.c.l.b16 %v355
      %v753 = vunpack.c.l.b16 %v356
      %v754 = vunpack.c.l.b16 %v357
      %v755 = vunpack.c.l.b16 %v358
      %v756 = vunpack.c.l.b16 %v359
      %v757 = vunpack.c.l.b16 %v360
      %v758 = vunpack.c.l.b16 %v361
      %v759 = vunpack.c.l.b16 %v362
      %v760 = vunpack.c.l.b16 %v363
      %v761 = vunpack.c.l.b16 %v364
      %v762 = vpack.c.b16 %v573, %v572
      %v763 = vpack.c.b16 %v575, %v574
      %v764 = vpack.c.b16 %v577, %v576
      %v765 = vpack.c.b16 %v579, %v578
      %v766 = vpack.c.b16 %v581, %v580
      %v767 = vpack.c.b16 %v583, %v582
      %v768 = vpack.c.b16 %v585, %v584
      %v769 = vpack.c.b16 %v587, %v586
      %v770 = vpack.c.b16 %v589, %v588
      %v771 = vpack.c.b16 %v591, %v590
      %v772 = vpack.c.b16 %v593, %v592
      %v773 = vpack.c.b16 %v595, %v594
      %v774 = vpack.c.b16 %v597, %v596
      %v775 = vpack.c.b16 %v599, %v598
      %v776 = vpack.c.b16 %v601, %v600
      %v777 = vpack.c.b16 %v603, %v602
      %v778 = vpack.c.b16 %v605, %v604
      %v779 = vpack.c.b16 %v607, %v606
      %v780 = vpack.c.b16 %v609, %v608
      %v781 = vpack.c.b16 %v611, %v610
      %v782 = vpack.c.b16 %v613, %v612
      %v783 = vpack.c.b16 %v615, %v614
      %v784 = vpack.c.b16 %v617, %v616
      %v785 = vpack.c.b16 %v619, %v618
      %v786 = vpack.c.b16 %v621, %v620
      %v787 = vpack.c.b16 %v623, %v622
      %v788 = vpack.c.b16 %v625, %v624
      %v789 = vpack.c.b16 %v627, %v626
      %v790 = vpack.c.b16 %v629, %v628
      %v791 = vpack.c.b16 %v631, %v630
      %v792 = vpack.c.b16 %v633, %v632
      %v793 = vpack.c.b16 %v635, %v634
      %v794 = vpack.c.b16 %v637, %v636
      %v795 = vpack.c.b16 %v639, %v638
      %v796 = vpack.c.b16 %v641, %v640
      %v797 = vpack.c.b16 %v643, %v642
      %v798 = vpack.c.b16 %v645, %v644
      %v799 = vpack.c.b16 %v647, %v646
      %v800 = vpack.c.b16 %v649, %v648
      %v801 = vpack.c.b16 %v651, %v650
      %v802 = vpack.c.b16 %v653, %v652
      %v803 = vpack.c.b16 %v655, %v654
      %v804 = vpack.c.b16 %v657, %v656
      %v805 = vpack.c.b16 %v659, %v658
      %v806 = vpack.c.b16 %v661, %v660
      %v807 = vpack.c.b16 %v663, %v662
      %v808 = vpack.c.b16 %v665, %v664
      %v809 = vpack.c.b16 %v667, %v666
      %v810 = vpack.c.b16 %v669, %v668
      %v811 = vpack.c.b16 %v671, %v670
      %v812 = vpack.c.b16 %v673, %v672
      %v813 = vpack.c.b16 %v675, %v674
      %v814 = vpack.c.b16 %v677, %v676
      %v815 = vpack.c.b16 %v679, %v678
      %v816 = vpack.c.b16 %v681, %v680
      %v817 = vpack.c.b16 %v683, %v682
      %v818 = vpack.c.b16 %v685, %v684
      %v819 = vpack.c.b16 %v687, %v686
      %v820 = vpack.c.b16 %v689, %v688
      %v821 = vpack.c.b16 %v691, %v690
      %v822 = vpack.c.b16 %v693, %v692
      %v823 = vpack.c.b16 %v695, %v694
      %v824 = vpack.c.b16 %v697, %v696
      %v825 = vpack.c.b16 %v699, %v698
      %v826 = vpack.c.b16 %v701, %v700
      %v827 = vpack.c.b16 %v703, %v702
      %v828 = vpack.c.b16 %v705, %v704
      %v829 = vpack.c.b16 %v707, %v706
      %v830 = vpack.c.b16 %v709, %v708
      %v831 = vpack.c.b16 %v711, %v710
      %v832 = vpack.c.b16 %v713, %v712
      %v833 = vpack.c.b16 %v715, %v714
      %v834 = vpack.c.b16 %v717, %v716
      %v835 = vpack.c.b16 %v719, %v718
      %v836 = vpack.c.b16 %v721, %v720
      %v837 = vpack.c.b16 %v723, %v722
      %v838 = vpack.c.b16 %v725, %v724
      %v839 = vpack.c.b16 %v727, %v726
      %v840 = vpack.c.b16 %v729, %v728
      %v841 = vpack.c.b16 %v731, %v730
      %v842 = vpack.c.b16 %v733, %v732
      %v843 = vpack.c.b16 %v735, %v734
      %v844 = vpack.c.b16 %v737, %v736
      %v845 = vpack.c.b16 %v739, %v738
      %v846 = vpack.c.b16 %v741, %v740
      %v847 = vpack.c.b16 %v743, %v742
      %v848 = vpack.c.b16 %v745, %v744
      %v849 = vpack.c.b16 %v747, %v746
      %v850 = vpack.c.b16 %v749, %v748
      %v851 = vpack.c.b16 %v751, %v750
      %v852 = vpack.c.b16 %v753, %v752
      %v853 = vpack.c.b16 %v755, %v754
      %v854 = vpack.c.b16 %v757, %v756
      %v855 = vpack.c.b16 %v759, %v758
      %v856 = vpack.c.b16 %v761, %v760
      %v867 = vunpack.c.l.b16 %v365
      %v868 = vunpack.c.l.b16 %v366
      %v869 = vunpack.c.l.b16 %v367
      %v870 = vunpack.c.l.b16 %v368
      %v871 = vunpack.c.l.b16 %v369
      %v872 = vunpack.c.l.b16 %v370
      %v873 = vunpack.c.l.b16 %v371
      %v874 = vunpack.c.l.b16 %v372
      %v875 = vunpack.c.l.b16 %v373
      %v876 = vunpack.c.l.b16 %v374
      %v877 = vpack.c.b16 %v868, %v867
      %v878 = vpack.c.b16 %v870, %v869
      %v879 = vpack.c.b16 %v872, %v871
      %v880 = vpack.c.b16 %v874, %v873
      %v881 = vpack.c.b16 %v876, %v875
      %vm886 = vcmask 613376
      %v888 = vsel %vm886, %v762, 0
      %v891 = vsel %vm886, %v763, 0
      %v894 = vsel %vm886, %v764, 0
      %v897 = vsel %vm886, %v765, 0
      %v900 = vsel %vm886, %v766, 0
      %v903 = vsel %vm886, %v767, 0
      %v906 = vsel %vm886, %v768, 0
      %v909 = vsel %vm886, %v769, 0
      %v912 = vsel %vm886, %v770, 0
      %v915 = vsel %vm886, %v771, 0
      %v918 = vsel %vm886, %v772, 0
      %v921 = vsel %vm886, %v773, 0
      %v924 = vsel %vm886, %v774, 0
      %v927 = vsel %vm886, %v775, 0
      %v930 = vsel %vm886, %v776, 0
      %v933 = vsel %vm886, %v777, 0
      %v936 = vsel %vm886, %v778, 0
      %v939 = vsel %vm886, %v779, 0
      %v942 = vsel %vm886, %v780, 0
      %v945 = vsel %vm886, %v781, 0
      %v948 = vsel %vm886, %v782, 0
      %v951 = vsel %vm886, %v783, 0
      %v954 = vsel %vm886, %v784, 0
      %v957 = vsel %vm886, %v785, 0
      %v960 = vsel %vm886, %v786, 0
      %v963 = vsel %vm886, %v787, 0
      %v966 = vsel %vm886, %v788, 0
      %v969 = vsel %vm886, %v789, 0
      %v972 = vsel %vm886, %v790, 0
      %v975 = vsel %vm886, %v791, 0
      %v978 = vsel %vm886, %v792, 0
      %v981 = vsel %vm886, %v793, 0
      %v984 = vsel %vm886, %v794, 0
      %v987 = vsel %vm886, %v795, 0
      %v990 = vsel %vm886, %v796, 0
      %v993 = vsel %vm886, %v797, 0
      %v996 = vsel %vm886, %v798, 0
      %v999 = vsel %vm886, %v799, 0
      %v1002 = vsel %vm886, %v800, 0
      %v1005 = vsel %vm886, %v801, 0
      %v1008 = vsel %vm886, %v802, 0
      %v1011 = vsel %vm886, %v803, 0
      %v1014 = vsel %vm886, %v804, 0
      %v1017 = vsel %vm886, %v805, 0
      %v1020 = vsel %vm886, %v806, 0
      %v1023 = vsel %vm886, %v807, 0
      %v1026 = vsel %vm886, %v808, 0
      %v1029 = vsel %vm886, %v809, 0
      %v1032 = vsel %vm886, %v810, 0
      %v1035 = vsel %vm886, %v811, 0
      %v1038 = vsel %vm886, %v812, 0
      %v1041 = vsel %vm886, %v813, 0
      %v1044 = vsel %vm886, %v814, 0
      %v1047 = vsel %vm886, %v815, 0
      %v1050 = vsel %vm886, %v816, 0
      %v1053 = vsel %vm886, %v817, 0
      %v1056 = vsel %vm886, %v818, 0
      %v1059 = vsel %vm886, %v819, 0
      %v1062 = vsel %vm886, %v820, 0
      %v1065 = vsel %vm886, %v821, 0
      %v1068 = vsel %vm886, %v822, 0
      %v1071 = vsel %vm886, %v823, 0
      %v1074 = vsel %vm886, %v824, 0
      %v1077 = vsel %vm886, %v825, 0
      %v1080 = vsel %vm886, %v826, 0
      %v1083 = vsel %vm886, %v827, 0
      %v1086 = vsel %vm886, %v828, 0
      %v1089 = vsel %vm886, %v829, 0
      %v1092 = vsel %vm886, %v830, 0
      %v1095 = vsel %vm886, %v831, 0
      %v1098 = vsel %vm886, %v832, 0
      %v1101 = vsel %vm886, %v833, 0
      %v1104 = vsel %vm886, %v834, 0
      %v1107 = vsel %vm886, %v835, 0
      %v1110 = vsel %vm886, %v836, 0
      %v1113 = vsel %vm886, %v837, 0
      %v1116 = vsel %vm886, %v838, 0
      %v1119 = vsel %vm886, %v839, 0
      %v1122 = vsel %vm886, %v840, 0
      %v1125 = vsel %vm886, %v841, 0
      %v1128 = vsel %vm886, %v842, 0
      %v1131 = vsel %vm886, %v843, 0
      %v1134 = vsel %vm886, %v844, 0
      %v1137 = vsel %vm886, %v845, 0
      %v1140 = vsel %vm886, %v846, 0
      %v1143 = vsel %vm886, %v847, 0
      %v1146 = vsel %vm886, %v848, 0
      %v1149 = vsel %vm886, %v849, 0
      %v1152 = vsel %vm886, %v850, 0
      %v1155 = vsel %vm886, %v851, 0
      %v1158 = vsel %vm886, %v852, 0
      %v1161 = vsel %vm886, %v853, 0
      %v1164 = vsel %vm886, %v854, 0
      %v1167 = vsel %vm886, %v855, 0
      %v1170 = vsel %vm886, %v856, 0
      %vm1172 = vcmask 1044480
      %vm1173 = vcmask 1045504
      %v1174 = vsel %vm1172, 4294967295, 65535
      %v1175 = vsel %vm1173, %v1174, 0
      %v1177 = vand.u32 %v881, %v1175
      %1179 = vmatprep.subr.bf16.mxu0 0
      %1180 = vmatpush1.bf16.msra.mxu0 %v877
      %1181 = vmatprep.subr.bf16.mxu0 0
      %1182 = vmatpush1.bf16.msra.mxu0 %v878
      %1183 = vmatprep.subr.bf16.mxu0 0
      %1184 = vmatpush1.bf16.msra.mxu0 %v879
      %1185 = vmatprep.subr.bf16.mxu0 0
      %1186 = vmatpush1.bf16.msra.mxu0 %v880
      %1187 = vmatprep.subr.bf16.mxu0 0
      %1188 = vmatpush1.bf16.msra.mxu0 %v1177
      %1189 = vmatprep.subr.bf16.mxu0 0
      %1190 = vmatpush1.bf16.msra.mxu0 0
      %1191 = vmatprep.subr.bf16.mxu0 0
      %1192 = vmatpush1.bf16.msra.mxu0 0
      %1193 = vmatprep.subr.bf16.mxu0 0
      %1194 = vmatpush1.bf16.msra.mxu0 0
      %1195 = vmatprep.subr.bf16.mxu0 0
      %1196 = vmatpush1.bf16.msra.mxu0 0
      %1197 = vmatprep.subr.bf16.mxu0 0
      %1198 = vmatpush1.bf16.msra.mxu0 0
      %1199 = vmatprep.subr.bf16.mxu0 0
      %1200 = vmatpush1.bf16.msra.mxu0 0
      %1201 = vmatprep.subr.bf16.mxu0 0
      %1202 = vmatpush1.bf16.msra.mxu0 0
      %1203 = vmatprep.subr.bf16.mxu0 0
      %1204 = vmatpush1.bf16.msra.mxu0 0
      %1205 = vmatprep.subr.bf16.mxu0 0
      %1206 = vmatpush1.bf16.msra.mxu0 0
      %1207 = vmatprep.subr.bf16.mxu0 0
      %1208 = vmatpush1.bf16.msra.mxu0 0
      %1209 = vmatprep.subr.bf16.mxu0 0
      %1210 = vmatpush1.bf16.msra.mxu0 0
      %1211 = vmatprep.mubr.bf16.mxu0 0
      %1212 = vmatmul.mubr.bf16.gmra.mrb[0].mxu0 %v888
      %v1213 = vpop.f32.mrb[0].mxu0
      %v1214 = vadd.f32 %v380, %v1213
      %v1215 = vpop.f32.mrb[0].mxu0
      %v1216 = vpop.f32.mrb[0].mxu0
      %v1217 = vadd.f32 %v380, %v1216
      %v1218 = vpop.f32.mrb[0].mxu0
      %1219 = vmatprep.mubr.bf16.mxu0 0
      %1220 = vmatmul.mubr.bf16.gmra.mrb[0].mxu0 %v891
      %v1221 = vpop.f32.mrb[0].mxu0
      %v1222 = vadd.f32 %v380, %v1221
      %v1223 = vpop.f32.mrb[0].mxu0
      %v1224 = vpop.f32.mrb[0].mxu0
      %v1225 = vadd.f32 %v380, %v1224
      %v1226 = vpop.f32.mrb[0].mxu0
      %1227 = vmatprep.mubr.bf16.mxu0 0
      %1228 = vmatmul.mubr.bf16.gmra.mrb[0].mxu0 %v894
      %v1229 = vpop.f32.mrb[0].mxu0
      %v1230 = vadd.f32 %v380, %v1229
      %v1231 = vpop.f32.mrb[0].mxu0
      %v1232 = vpop.f32.mrb[0].mxu0
      %v1233 = vadd.f32 %v380, %v1232
      %v1234 = vpop.f32.mrb[0].mxu0
      %1235 = vmatprep.mubr.bf16.mxu0 0
      %1236 = vmatmul.mubr.bf16.gmra.mrb[0].mxu0 %v897
      %v1237 = vpop.f32.mrb[0].mxu0
      %v1238 = vadd.f32 %v380, %v1237
      %v1239 = vpop.f32.mrb[0].mxu0
      %v1240 = vpop.f32.mrb[0].mxu0
      %v1241 = vadd.f32 %v380, %v1240
      %v1242 = vpop.f32.mrb[0].mxu0
      %1243 = vmatprep.mubr.bf16.mxu0 0
      %1244 = vmatmul.mubr.bf16.gmra.mrb[0].mxu0 %v900
      %v1245 = vpop.f32.mrb[0].mxu0
      %v1246 = vadd.f32 %v380, %v1245
      %v1247 = vpop.f32.mrb[0].mxu0
      %v1248 = vpop.f32.mrb[0].mxu0
      %v1249 = vadd.f32 %v380, %v1248
      %v1250 = vpop.f32.mrb[0].mxu0
      %1251 = vmatprep.mubr.bf16.mxu0 0
      %1252 = vmatmul.mubr.bf16.gmra.mrb[0].mxu0 %v903
      %v1253 = vpop.f32.mrb[0].mxu0
      %v1254 = vadd.f32 %v380, %v1253
      %v1255 = vpop.f32.mrb[0].mxu0
      %v1256 = vpop.f32.mrb[0].mxu0
      %v1257 = vadd.f32 %v380, %v1256
      %v1258 = vpop.f32.mrb[0].mxu0
      %1259 = vmatprep.mubr.bf16.mxu0 0
      %1260 = vmatmul.mubr.bf16.gmra.mrb[0].mxu0 %v906
      %v1261 = vpop.f32.mrb[0].mxu0
      %v1262 = vadd.f32 %v380, %v1261
      %v1263 = vpop.f32.mrb[0].mxu0
      %v1264 = vpop.f32.mrb[0].mxu0
      %v1265 = vadd.f32 %v380, %v1264
      %v1266 = vpop.f32.mrb[0].mxu0
      %1267 = vmatprep.mubr.bf16.mxu0 0
      %1268 = vmatmul.mubr.bf16.gmra.mrb[0].mxu0 %v909
      %v1269 = vpop.f32.mrb[0].mxu0
      %v1270 = vadd.f32 %v380, %v1269
      %v1271 = vpop.f32.mrb[0].mxu0
      %v1272 = vpop.f32.mrb[0].mxu0
      %v1273 = vadd.f32 %v380, %v1272
      %v1274 = vpop.f32.mrb[0].mxu0
      %1275 = vmatprep.mubr.bf16.mxu0 0
      %1276 = vmatmul.mubr.bf16.gmra.mrb[0].mxu0 %v912
      %v1277 = vpop.f32.mrb[0].mxu0
      %v1278 = vadd.f32 %v380, %v1277
      %v1279 = vpop.f32.mrb[0].mxu0
      %v1280 = vpop.f32.mrb[0].mxu0
      %v1281 = vadd.f32 %v380, %v1280
      %v1282 = vpop.f32.mrb[0].mxu0
      %1283 = vmatprep.mubr.bf16.mxu0 0
      %1284 = vmatmul.mubr.bf16.gmra.mrb[0].mxu0 %v915
      %v1285 = vpop.f32.mrb[0].mxu0
      %v1286 = vadd.f32 %v380, %v1285
      %v1287 = vpop.f32.mrb[0].mxu0
      %v1288 = vpop.f32.mrb[0].mxu0
      %v1289 = vadd.f32 %v380, %v1288
      %v1290 = vpop.f32.mrb[0].mxu0
      %1291 = vmatprep.mubr.bf16.mxu0 0
      %1292 = vmatmul.mubr.bf16.gmra.mrb[0].mxu0 %v918
      %v1293 = vpop.f32.mrb[0].mxu0
      %v1294 = vadd.f32 %v380, %v1293
      %v1295 = vpop.f32.mrb[0].mxu0
      %v1296 = vpop.f32.mrb[0].mxu0
      %v1297 = vadd.f32 %v380, %v1296
      %v1298 = vpop.f32.mrb[0].mxu0
      %1299 = vmatprep.mubr.bf16.mxu0 0
      %1300 = vmatmul.mubr.bf16.gmra.mrb[0].mxu0 %v921
      %v1301 = vpop.f32.mrb[0].mxu0
      %v1302 = vadd.f32 %v380, %v1301
      %v1303 = vpop.f32.mrb[0].mxu0
      %v1304 = vpop.f32.mrb[0].mxu0
      %v1305 = vadd.f32 %v380, %v1304
      %v1306 = vpop.f32.mrb[0].mxu0
      %1307 = vmatprep.mubr.bf16.mxu0 0
      %1308 = vmatmul.mubr.bf16.gmra.mrb[0].mxu0 %v924
      %v1309 = vpop.f32.mrb[0].mxu0
      %v1310 = vadd.f32 %v380, %v1309
      %v1311 = vpop.f32.mrb[0].mxu0
      %v1312 = vpop.f32.mrb[0].mxu0
      %v1313 = vadd.f32 %v380, %v1312
      %v1314 = vpop.f32.mrb[0].mxu0
      %1315 = vmatprep.mubr.bf16.mxu0 0
      %1316 = vmatmul.mubr.bf16.gmra.mrb[0].mxu0 %v927
      %v1317 = vpop.f32.mrb[0].mxu0
      %v1318 = vadd.f32 %v380, %v1317
      %v1319 = vpop.f32.mrb[0].mxu0
      %v1320 = vpop.f32.mrb[0].mxu0
      %v1321 = vadd.f32 %v380, %v1320
      %v1322 = vpop.f32.mrb[0].mxu0
      %1323 = vmatprep.mubr.bf16.mxu0 0
      %1324 = vmatmul.mubr.bf16.gmra.mrb[0].mxu0 %v930
      %v1325 = vpop.f32.mrb[0].mxu0
      %v1326 = vadd.f32 %v380, %v1325
      %v1327 = vpop.f32.mrb[0].mxu0
      %v1328 = vpop.f32.mrb[0].mxu0
      %v1329 = vadd.f32 %v380, %v1328
      %v1330 = vpop.f32.mrb[0].mxu0
      %1331 = vmatprep.mubr.bf16.mxu0 0
      %1332 = vmatmul.mubr.bf16.gmra.mrb[0].mxu0 %v933
      %v1333 = vpop.f32.mrb[0].mxu0
      %v1334 = vadd.f32 %v380, %v1333
      %v1335 = vpop.f32.mrb[0].mxu0
      %v1336 = vpop.f32.mrb[0].mxu0
      %v1337 = vadd.f32 %v380, %v1336
      %v1338 = vpop.f32.mrb[0].mxu0
      %1339 = vmatprep.mubr.bf16.mxu0 0
      %1340 = vmatmul.mubr.bf16.gmra.mrb[0].mxu0 %v936
      %v1341 = vpop.f32.mrb[0].mxu0
      %v1342 = vadd.f32 %v380, %v1341
      %v1343 = vpop.f32.mrb[0].mxu0
      %v1344 = vpop.f32.mrb[0].mxu0
      %v1345 = vadd.f32 %v380, %v1344
      %v1346 = vpop.f32.mrb[0].mxu0
      %1347 = vmatprep.mubr.bf16.mxu0 0
      %1348 = vmatmul.mubr.bf16.gmra.mrb[0].mxu0 %v939
      %v1349 = vpop.f32.mrb[0].mxu0
      %v1350 = vadd.f32 %v380, %v1349
      %v1351 = vpop.f32.mrb[0].mxu0
      %v1352 = vpop.f32.mrb[0].mxu0
      %v1353 = vadd.f32 %v380, %v1352
      %v1354 = vpop.f32.mrb[0].mxu0
      %1355 = vmatprep.mubr.bf16.mxu0 0
      %1356 = vmatmul.mubr.bf16.gmra.mrb[0].mxu0 %v942
      %v1357 = vpop.f32.mrb[0].mxu0
      %v1358 = vadd.f32 %v380, %v1357
      %v1359 = vpop.f32.mrb[0].mxu0
      %v1360 = vpop.f32.mrb[0].mxu0
      %v1361 = vadd.f32 %v380, %v1360
      %v1362 = vpop.f32.mrb[0].mxu0
      %1363 = vmatprep.mubr.bf16.mxu0 0
      %1364 = vmatmul.mubr.bf16.gmra.mrb[0].mxu0 %v945
      %v1365 = vpop.f32.mrb[0].mxu0
      %v1366 = vadd.f32 %v380, %v1365
      %v1367 = vpop.f32.mrb[0].mxu0
      %v1368 = vpop.f32.mrb[0].mxu0
      %v1369 = vadd.f32 %v380, %v1368
      %v1370 = vpop.f32.mrb[0].mxu0
      %1371 = vmatprep.mubr.bf16.mxu0 0
      %1372 = vmatmul.mubr.bf16.gmra.mrb[0].mxu0 %v948
      %v1373 = vpop.f32.mrb[0].mxu0
      %v1374 = vadd.f32 %v380, %v1373
      %v1375 = vpop.f32.mrb[0].mxu0
      %v1376 = vpop.f32.mrb[0].mxu0
      %v1377 = vadd.f32 %v380, %v1376
      %v1378 = vpop.f32.mrb[0].mxu0
      %1379 = vmatprep.mubr.bf16.mxu0 0
      %1380 = vmatmul.mubr.bf16.gmra.mrb[0].mxu0 %v951
      %v1381 = vpop.f32.mrb[0].mxu0
      %v1382 = vadd.f32 %v380, %v1381
      %v1383 = vpop.f32.mrb[0].mxu0
      %v1384 = vpop.f32.mrb[0].mxu0
      %v1385 = vadd.f32 %v380, %v1384
      %v1386 = vpop.f32.mrb[0].mxu0
      %1387 = vmatprep.mubr.bf16.mxu0 0
      %1388 = vmatmul.mubr.bf16.gmra.mrb[0].mxu0 %v954
      %v1389 = vpop.f32.mrb[0].mxu0
      %v1390 = vadd.f32 %v380, %v1389
      %v1391 = vpop.f32.mrb[0].mxu0
      %v1392 = vpop.f32.mrb[0].mxu0
      %v1393 = vadd.f32 %v380, %v1392
      %v1394 = vpop.f32.mrb[0].mxu0
      %1395 = vmatprep.mubr.bf16.mxu0 0
      %1396 = vmatmul.mubr.bf16.gmra.mrb[0].mxu0 %v957
      %v1397 = vpop.f32.mrb[0].mxu0
      %v1398 = vadd.f32 %v380, %v1397
      %v1399 = vpop.f32.mrb[0].mxu0
      %v1400 = vpop.f32.mrb[0].mxu0
      %v1401 = vadd.f32 %v380, %v1400
      %v1402 = vpop.f32.mrb[0].mxu0
      %1403 = vmatprep.mubr.bf16.mxu0 0
      %1404 = vmatmul.mubr.bf16.gmra.mrb[0].mxu0 %v960
      %v1405 = vpop.f32.mrb[0].mxu0
      %v1406 = vadd.f32 %v380, %v1405
      %v1407 = vpop.f32.mrb[0].mxu0
      %v1408 = vpop.f32.mrb[0].mxu0
      %v1409 = vadd.f32 %v380, %v1408
      %v1410 = vpop.f32.mrb[0].mxu0
      %1411 = vmatprep.mubr.bf16.mxu0 0
      %1412 = vmatmul.mubr.bf16.gmra.mrb[0].mxu0 %v963
      %v1413 = vpop.f32.mrb[0].mxu0
      %v1414 = vadd.f32 %v380, %v1413
      %v1415 = vpop.f32.mrb[0].mxu0
      %v1416 = vpop.f32.mrb[0].mxu0
      %v1417 = vadd.f32 %v380, %v1416
      %v1418 = vpop.f32.mrb[0].mxu0
      %1419 = vmatprep.mubr.bf16.mxu0 0
      %1420 = vmatmul.mubr.bf16.gmra.mrb[0].mxu0 %v966
      %v1421 = vpop.f32.mrb[0].mxu0
      %v1422 = vadd.f32 %v380, %v1421
      %v1423 = vpop.f32.mrb[0].mxu0
      %v1424 = vpop.f32.mrb[0].mxu0
      %v1425 = vadd.f32 %v380, %v1424
      %v1426 = vpop.f32.mrb[0].mxu0
      %1427 = vmatprep.mubr.bf16.mxu0 0
      %1428 = vmatmul.mubr.bf16.gmra.mrb[0].mxu0 %v969
      %v1429 = vpop.f32.mrb[0].mxu0
      %v1430 = vadd.f32 %v380, %v1429
      %v1431 = vpop.f32.mrb[0].mxu0
      %v1432 = vpop.f32.mrb[0].mxu0
      %v1433 = vadd.f32 %v380, %v1432
      %v1434 = vpop.f32.mrb[0].mxu0
      %1435 = vmatprep.mubr.bf16.mxu0 0
      %1436 = vmatmul.mubr.bf16.gmra.mrb[0].mxu0 %v972
      %v1437 = vpop.f32.mrb[0].mxu0
      %v1438 = vadd.f32 %v380, %v1437
      %v1439 = vpop.f32.mrb[0].mxu0
      %v1440 = vpop.f32.mrb[0].mxu0
      %v1441 = vadd.f32 %v380, %v1440
      %v1442 = vpop.f32.mrb[0].mxu0
      %1443 = vmatprep.mubr.bf16.mxu0 0
      %1444 = vmatmul.mubr.bf16.gmra.mrb[0].mxu0 %v975
      %v1445 = vpop.f32.mrb[0].mxu0
      %v1446 = vadd.f32 %v380, %v1445
      %v1447 = vpop.f32.mrb[0].mxu0
      %v1448 = vpop.f32.mrb[0].mxu0
      %v1449 = vadd.f32 %v380, %v1448
      %v1450 = vpop.f32.mrb[0].mxu0
      %1451 = vmatprep.mubr.bf16.mxu0 0
      %1452 = vmatmul.mubr.bf16.gmra.mrb[0].mxu0 %v978
      %v1453 = vpop.f32.mrb[0].mxu0
      %v1454 = vadd.f32 %v380, %v1453
      %v1455 = vpop.f32.mrb[0].mxu0
      %v1456 = vpop.f32.mrb[0].mxu0
      %v1457 = vadd.f32 %v380, %v1456
      %v1458 = vpop.f32.mrb[0].mxu0
      %1459 = vmatprep.mubr.bf16.mxu0 0
      %1460 = vmatmul.mubr.bf16.gmra.mrb[0].mxu0 %v981
      %v1461 = vpop.f32.mrb[0].mxu0
      %v1462 = vadd.f32 %v380, %v1461
      %v1463 = vpop.f32.mrb[0].mxu0
      %v1464 = vpop.f32.mrb[0].mxu0
      %v1465 = vadd.f32 %v380, %v1464
      %v1466 = vpop.f32.mrb[0].mxu0
      %1467 = vmatprep.mubr.bf16.mxu0 0
      %1468 = vmatmul.mubr.bf16.gmra.mrb[0].mxu0 %v984
      %v1469 = vpop.f32.mrb[0].mxu0
      %v1470 = vadd.f32 %v380, %v1469
      %v1471 = vpop.f32.mrb[0].mxu0
      %v1472 = vpop.f32.mrb[0].mxu0
      %v1473 = vadd.f32 %v380, %v1472
      %v1474 = vpop.f32.mrb[0].mxu0
      %1475 = vmatprep.mubr.bf16.mxu0 0
      %1476 = vmatmul.mubr.bf16.gmra.mrb[0].mxu0 %v987
      %v1477 = vpop.f32.mrb[0].mxu0
      %v1478 = vadd.f32 %v380, %v1477
      %v1479 = vpop.f32.mrb[0].mxu0
      %v1480 = vpop.f32.mrb[0].mxu0
      %v1481 = vadd.f32 %v380, %v1480
      %v1482 = vpop.f32.mrb[0].mxu0
      %1483 = vmatprep.mubr.bf16.mxu0 0
      %1484 = vmatmul.mubr.bf16.gmra.mrb[0].mxu0 %v990
      %v1485 = vpop.f32.mrb[0].mxu0
      %v1486 = vadd.f32 %v380, %v1485
      %v1487 = vpop.f32.mrb[0].mxu0
      %v1488 = vpop.f32.mrb[0].mxu0
      %v1489 = vadd.f32 %v380, %v1488
      %v1490 = vpop.f32.mrb[0].mxu0
      %1491 = vmatprep.mubr.bf16.mxu0 0
      %1492 = vmatmul.mubr.bf16.gmra.mrb[0].mxu0 %v993
      %v1493 = vpop.f32.mrb[0].mxu0
      %v1494 = vadd.f32 %v380, %v1493
      %v1495 = vpop.f32.mrb[0].mxu0
      %v1496 = vpop.f32.mrb[0].mxu0
      %v1497 = vadd.f32 %v380, %v1496
      %v1498 = vpop.f32.mrb[0].mxu0
      %1499 = vmatprep.mubr.bf16.mxu0 0
      %1500 = vmatmul.mubr.bf16.gmra.mrb[0].mxu0 %v996
      %v1501 = vpop.f32.mrb[0].mxu0
      %v1502 = vadd.f32 %v380, %v1501
      %v1503 = vpop.f32.mrb[0].mxu0
      %v1504 = vpop.f32.mrb[0].mxu0
      %v1505 = vadd.f32 %v380, %v1504
      %v1506 = vpop.f32.mrb[0].mxu0
      %1507 = vmatprep.mubr.bf16.mxu0 0
      %1508 = vmatmul.mubr.bf16.gmra.mrb[0].mxu0 %v999
      %v1509 = vpop.f32.mrb[0].mxu0
      %v1510 = vadd.f32 %v380, %v1509
      %v1511 = vpop.f32.mrb[0].mxu0
      %v1512 = vpop.f32.mrb[0].mxu0
      %v1513 = vadd.f32 %v380, %v1512
      %v1514 = vpop.f32.mrb[0].mxu0
      %1515 = vmatprep.mubr.bf16.mxu0 0
      %1516 = vmatmul.mubr.bf16.gmra.mrb[0].mxu0 %v1002
      %v1517 = vpop.f32.mrb[0].mxu0
      %v1518 = vadd.f32 %v380, %v1517
      %v1519 = vpop.f32.mrb[0].mxu0
      %v1520 = vpop.f32.mrb[0].mxu0
      %v1521 = vadd.f32 %v380, %v1520
      %v1522 = vpop.f32.mrb[0].mxu0
      %1523 = vmatprep.mubr.bf16.mxu0 0
      %1524 = vmatmul.mubr.bf16.gmra.mrb[0].mxu0 %v1005
      %v1525 = vpop.f32.mrb[0].mxu0
      %v1526 = vadd.f32 %v380, %v1525
      %v1527 = vpop.f32.mrb[0].mxu0
      %v1528 = vpop.f32.mrb[0].mxu0
      %v1529 = vadd.f32 %v380, %v1528
      %v1530 = vpop.f32.mrb[0].mxu0
      %1531 = vmatprep.mubr.bf16.mxu0 0
      %1532 = vmatmul.mubr.bf16.gmra.mrb[0].mxu0 %v1008
      %v1533 = vpop.f32.mrb[0].mxu0
      %v1534 = vadd.f32 %v380, %v1533
      %v1535 = vpop.f32.mrb[0].mxu0
      %v1536 = vpop.f32.mrb[0].mxu0
      %v1537 = vadd.f32 %v380, %v1536
      %v1538 = vpop.f32.mrb[0].mxu0
      %1539 = vmatprep.mubr.bf16.mxu0 0
      %1540 = vmatmul.mubr.bf16.gmra.mrb[0].mxu0 %v1011
      %v1541 = vpop.f32.mrb[0].mxu0
      %v1542 = vadd.f32 %v380, %v1541
      %v1543 = vpop.f32.mrb[0].mxu0
      %v1544 = vpop.f32.mrb[0].mxu0
      %v1545 = vadd.f32 %v380, %v1544
      %v1546 = vpop.f32.mrb[0].mxu0
      %1547 = vmatprep.mubr.bf16.mxu0 0
      %1548 = vmatmul.mubr.bf16.gmra.mrb[0].mxu0 %v1014
      %v1549 = vpop.f32.mrb[0].mxu0
      %v1550 = vadd.f32 %v380, %v1549
      %v1551 = vpop.f32.mrb[0].mxu0
      %v1552 = vpop.f32.mrb[0].mxu0
      %v1553 = vadd.f32 %v380, %v1552
      %v1554 = vpop.f32.mrb[0].mxu0
      %1555 = vmatprep.mubr.bf16.mxu0 0
      %1556 = vmatmul.mubr.bf16.gmra.mrb[0].mxu0 %v1017
      %v1557 = vpop.f32.mrb[0].mxu0
      %v1558 = vadd.f32 %v380, %v1557
      %v1559 = vpop.f32.mrb[0].mxu0
      %v1560 = vpop.f32.mrb[0].mxu0
      %v1561 = vadd.f32 %v380, %v1560
      %v1562 = vpop.f32.mrb[0].mxu0
      %1563 = vmatprep.mubr.bf16.mxu0 0
      %1564 = vmatmul.mubr.bf16.gmra.mrb[0].mxu0 %v1020
      %v1565 = vpop.f32.mrb[0].mxu0
      %v1566 = vadd.f32 %v380, %v1565
      %v1567 = vpop.f32.mrb[0].mxu0
      %v1568 = vpop.f32.mrb[0].mxu0
      %v1569 = vadd.f32 %v380, %v1568
      %v1570 = vpop.f32.mrb[0].mxu0
      %1571 = vmatprep.mubr.bf16.mxu0 0
      %1572 = vmatmul.mubr.bf16.gmra.mrb[0].mxu0 %v1023
      %v1573 = vpop.f32.mrb[0].mxu0
      %v1574 = vadd.f32 %v380, %v1573
      %v1575 = vpop.f32.mrb[0].mxu0
      %v1576 = vpop.f32.mrb[0].mxu0
      %v1577 = vadd.f32 %v380, %v1576
      %v1578 = vpop.f32.mrb[0].mxu0
      %1579 = vmatprep.mubr.bf16.mxu0 0
      %1580 = vmatmul.mubr.bf16.gmra.mrb[0].mxu0 %v1026
      %v1581 = vpop.f32.mrb[0].mxu0
      %v1582 = vadd.f32 %v380, %v1581
      %v1583 = vpop.f32.mrb[0].mxu0
      %v1584 = vpop.f32.mrb[0].mxu0
      %v1585 = vadd.f32 %v380, %v1584
      %v1586 = vpop.f32.mrb[0].mxu0
      %1587 = vmatprep.mubr.bf16.mxu0 0
      %1588 = vmatmul.mubr.bf16.gmra.mrb[0].mxu0 %v1029
      %v1589 = vpop.f32.mrb[0].mxu0
      %v1590 = vadd.f32 %v380, %v1589
      %v1591 = vpop.f32.mrb[0].mxu0
      %v1592 = vpop.f32.mrb[0].mxu0
      %v1593 = vadd.f32 %v380, %v1592
      %v1594 = vpop.f32.mrb[0].mxu0
      %1595 = vmatprep.mubr.bf16.mxu0 0
      %1596 = vmatmul.mubr.bf16.gmra.mrb[0].mxu0 %v1032
      %v1597 = vpop.f32.mrb[0].mxu0
      %v1598 = vadd.f32 %v380, %v1597
      %v1599 = vpop.f32.mrb[0].mxu0
      %v1600 = vpop.f32.mrb[0].mxu0
      %v1601 = vadd.f32 %v380, %v1600
      %v1602 = vpop.f32.mrb[0].mxu0
      %1603 = vmatprep.mubr.bf16.mxu0 0
      %1604 = vmatmul.mubr.bf16.gmra.mrb[0].mxu0 %v1035
      %v1605 = vpop.f32.mrb[0].mxu0
      %v1606 = vadd.f32 %v380, %v1605
      %v1607 = vpop.f32.mrb[0].mxu0
      %v1608 = vpop.f32.mrb[0].mxu0
      %v1609 = vadd.f32 %v380, %v1608
      %v1610 = vpop.f32.mrb[0].mxu0
      %1611 = vmatprep.mubr.bf16.mxu0 0
      %1612 = vmatmul.mubr.bf16.gmra.mrb[0].mxu0 %v1038
      %v1613 = vpop.f32.mrb[0].mxu0
      %v1614 = vadd.f32 %v380, %v1613
      %v1615 = vpop.f32.mrb[0].mxu0
      %v1616 = vpop.f32.mrb[0].mxu0
      %v1617 = vadd.f32 %v380, %v1616
      %v1618 = vpop.f32.mrb[0].mxu0
      %1619 = vmatprep.mubr.bf16.mxu0 0
      %1620 = vmatmul.mubr.bf16.gmra.mrb[0].mxu0 %v1041
      %v1621 = vpop.f32.mrb[0].mxu0
      %v1622 = vadd.f32 %v380, %v1621
      %v1623 = vpop.f32.mrb[0].mxu0
      %v1624 = vpop.f32.mrb[0].mxu0
      %v1625 = vadd.f32 %v380, %v1624
      %v1626 = vpop.f32.mrb[0].mxu0
      %1627 = vmatprep.mubr.bf16.mxu0 0
      %1628 = vmatmul.mubr.bf16.gmra.mrb[0].mxu0 %v1044
      %v1629 = vpop.f32.mrb[0].mxu0
      %v1630 = vadd.f32 %v380, %v1629
      %v1631 = vpop.f32.mrb[0].mxu0
      %v1632 = vpop.f32.mrb[0].mxu0
      %v1633 = vadd.f32 %v380, %v1632
      %v1634 = vpop.f32.mrb[0].mxu0
      %1635 = vmatprep.mubr.bf16.mxu0 0
      %1636 = vmatmul.mubr.bf16.gmra.mrb[0].mxu0 %v1047
      %v1637 = vpop.f32.mrb[0].mxu0
      %v1638 = vadd.f32 %v380, %v1637
      %v1639 = vpop.f32.mrb[0].mxu0
      %v1640 = vpop.f32.mrb[0].mxu0
      %v1641 = vadd.f32 %v380, %v1640
      %v1642 = vpop.f32.mrb[0].mxu0
      %1643 = vmatprep.mubr.bf16.mxu0 0
      %1644 = vmatmul.mubr.bf16.gmra.mrb[0].mxu0 %v1050
      %v1645 = vpop.f32.mrb[0].mxu0
      %v1646 = vadd.f32 %v380, %v1645
      %v1647 = vpop.f32.mrb[0].mxu0
      %v1648 = vpop.f32.mrb[0].mxu0
      %v1649 = vadd.f32 %v380, %v1648
      %v1650 = vpop.f32.mrb[0].mxu0
      %1651 = vmatprep.mubr.bf16.mxu0 0
      %1652 = vmatmul.mubr.bf16.gmra.mrb[0].mxu0 %v1053
      %v1653 = vpop.f32.mrb[0].mxu0
      %v1654 = vadd.f32 %v380, %v1653
      %v1655 = vpop.f32.mrb[0].mxu0
      %v1656 = vpop.f32.mrb[0].mxu0
      %v1657 = vadd.f32 %v380, %v1656
      %v1658 = vpop.f32.mrb[0].mxu0
      %1659 = vmatprep.mubr.bf16.mxu0 0
      %1660 = vmatmul.mubr.bf16.gmra.mrb[0].mxu0 %v1056
      %v1661 = vpop.f32.mrb[0].mxu0
      %v1662 = vadd.f32 %v380, %v1661
      %v1663 = vpop.f32.mrb[0].mxu0
      %v1664 = vpop.f32.mrb[0].mxu0
      %v1665 = vadd.f32 %v380, %v1664
      %v1666 = vpop.f32.mrb[0].mxu0
      %1667 = vmatprep.mubr.bf16.mxu0 0
      %1668 = vmatmul.mubr.bf16.gmra.mrb[0].mxu0 %v1059
      %v1669 = vpop.f32.mrb[0].mxu0
      %v1670 = vadd.f32 %v380, %v1669
      %v1671 = vpop.f32.mrb[0].mxu0
      %v1672 = vpop.f32.mrb[0].mxu0
      %v1673 = vadd.f32 %v380, %v1672
      %v1674 = vpop.f32.mrb[0].mxu0
      %1675 = vmatprep.mubr.bf16.mxu0 0
      %1676 = vmatmul.mubr.bf16.gmra.mrb[0].mxu0 %v1062
      %v1677 = vpop.f32.mrb[0].mxu0
      %v1678 = vadd.f32 %v380, %v1677
      %v1679 = vpop.f32.mrb[0].mxu0
      %v1680 = vpop.f32.mrb[0].mxu0
      %v1681 = vadd.f32 %v380, %v1680
      %v1682 = vpop.f32.mrb[0].mxu0
      %1683 = vmatprep.mubr.bf16.mxu0 0
      %1684 = vmatmul.mubr.bf16.gmra.mrb[0].mxu0 %v1065
      %v1685 = vpop.f32.mrb[0].mxu0
      %v1686 = vadd.f32 %v380, %v1685
      %v1687 = vpop.f32.mrb[0].mxu0
      %v1688 = vpop.f32.mrb[0].mxu0
      %v1689 = vadd.f32 %v380, %v1688
      %v1690 = vpop.f32.mrb[0].mxu0
      %1691 = vmatprep.mubr.bf16.mxu0 0
      %1692 = vmatmul.mubr.bf16.gmra.mrb[0].mxu0 %v1068
      %v1693 = vpop.f32.mrb[0].mxu0
      %v1694 = vadd.f32 %v380, %v1693
      %v1695 = vpop.f32.mrb[0].mxu0
      %v1696 = vpop.f32.mrb[0].mxu0
      %v1697 = vadd.f32 %v380, %v1696
      %v1698 = vpop.f32.mrb[0].mxu0
      %1699 = vmatprep.mubr.bf16.mxu0 0
      %1700 = vmatmul.mubr.bf16.gmra.mrb[0].mxu0 %v1071
      %v1701 = vpop.f32.mrb[0].mxu0
      %v1702 = vadd.f32 %v380, %v1701
      %v1703 = vpop.f32.mrb[0].mxu0
      %v1704 = vpop.f32.mrb[0].mxu0
      %v1705 = vadd.f32 %v380, %v1704
      %v1706 = vpop.f32.mrb[0].mxu0
      %1707 = vmatprep.mubr.bf16.mxu0 0
      %1708 = vmatmul.mubr.bf16.gmra.mrb[0].mxu0 %v1074
      %v1709 = vpop.f32.mrb[0].mxu0
      %v1710 = vadd.f32 %v380, %v1709
      %v1711 = vpop.f32.mrb[0].mxu0
      %v1712 = vpop.f32.mrb[0].mxu0
      %v1713 = vadd.f32 %v380, %v1712
      %v1714 = vpop.f32.mrb[0].mxu0
      %1715 = vmatprep.mubr.bf16.mxu0 0
      %1716 = vmatmul.mubr.bf16.gmra.mrb[0].mxu0 %v1077
      %v1717 = vpop.f32.mrb[0].mxu0
      %v1718 = vadd.f32 %v380, %v1717
      %v1719 = vpop.f32.mrb[0].mxu0
      %v1720 = vpop.f32.mrb[0].mxu0
      %v1721 = vadd.f32 %v380, %v1720
      %v1722 = vpop.f32.mrb[0].mxu0
      %1723 = vmatprep.mubr.bf16.mxu0 0
      %1724 = vmatmul.mubr.bf16.gmra.mrb[0].mxu0 %v1080
      %v1725 = vpop.f32.mrb[0].mxu0
      %v1726 = vadd.f32 %v380, %v1725
      %v1727 = vpop.f32.mrb[0].mxu0
      %v1728 = vpop.f32.mrb[0].mxu0
      %v1729 = vadd.f32 %v380, %v1728
      %v1730 = vpop.f32.mrb[0].mxu0
      %1731 = vmatprep.mubr.bf16.mxu0 0
      %1732 = vmatmul.mubr.bf16.gmra.mrb[0].mxu0 %v1083
      %v1733 = vpop.f32.mrb[0].mxu0
      %v1734 = vadd.f32 %v380, %v1733
      %v1735 = vpop.f32.mrb[0].mxu0
      %v1736 = vpop.f32.mrb[0].mxu0
      %v1737 = vadd.f32 %v380, %v1736
      %v1738 = vpop.f32.mrb[0].mxu0
      %1739 = vmatprep.mubr.bf16.mxu0 0
      %1740 = vmatmul.mubr.bf16.gmra.mrb[0].mxu0 %v1086
      %v1741 = vpop.f32.mrb[0].mxu0
      %v1742 = vadd.f32 %v380, %v1741
      %v1743 = vpop.f32.mrb[0].mxu0
      %v1744 = vpop.f32.mrb[0].mxu0
      %v1745 = vadd.f32 %v380, %v1744
      %v1746 = vpop.f32.mrb[0].mxu0
      %1747 = vmatprep.mubr.bf16.mxu0 0
      %1748 = vmatmul.mubr.bf16.gmra.mrb[0].mxu0 %v1089
      %v1749 = vpop.f32.mrb[0].mxu0
      %v1750 = vadd.f32 %v380, %v1749
      %v1751 = vpop.f32.mrb[0].mxu0
      %v1752 = vpop.f32.mrb[0].mxu0
      %v1753 = vadd.f32 %v380, %v1752
      %v1754 = vpop.f32.mrb[0].mxu0
      %1755 = vmatprep.mubr.bf16.mxu0 0
      %1756 = vmatmul.mubr.bf16.gmra.mrb[0].mxu0 %v1092
      %v1757 = vpop.f32.mrb[0].mxu0
      %v1758 = vadd.f32 %v380, %v1757
      %v1759 = vpop.f32.mrb[0].mxu0
      %v1760 = vpop.f32.mrb[0].mxu0
      %v1761 = vadd.f32 %v380, %v1760
      %v1762 = vpop.f32.mrb[0].mxu0
      %1763 = vmatprep.mubr.bf16.mxu0 0
      %1764 = vmatmul.mubr.bf16.gmra.mrb[0].mxu0 %v1095
      %v1765 = vpop.f32.mrb[0].mxu0
      %v1766 = vadd.f32 %v380, %v1765
      %v1767 = vpop.f32.mrb[0].mxu0
      %v1768 = vpop.f32.mrb[0].mxu0
      %v1769 = vadd.f32 %v380, %v1768
      %v1770 = vpop.f32.mrb[0].mxu0
      %1771 = vmatprep.mubr.bf16.mxu0 0
      %1772 = vmatmul.mubr.bf16.gmra.mrb[0].mxu0 %v1098
      %v1773 = vpop.f32.mrb[0].mxu0
      %v1774 = vadd.f32 %v380, %v1773
      %v1775 = vpop.f32.mrb[0].mxu0
      %v1776 = vpop.f32.mrb[0].mxu0
      %v1777 = vadd.f32 %v380, %v1776
      %v1778 = vpop.f32.mrb[0].mxu0
      %1779 = vmatprep.mubr.bf16.mxu0 0
      %1780 = vmatmul.mubr.bf16.gmra.mrb[0].mxu0 %v1101
      %v1781 = vpop.f32.mrb[0].mxu0
      %v1782 = vadd.f32 %v380, %v1781
      %v1783 = vpop.f32.mrb[0].mxu0
      %v1784 = vpop.f32.mrb[0].mxu0
      %v1785 = vadd.f32 %v380, %v1784
      %v1786 = vpop.f32.mrb[0].mxu0
      %1787 = vmatprep.mubr.bf16.mxu0 0
      %1788 = vmatmul.mubr.bf16.gmra.mrb[0].mxu0 %v1104
      %v1789 = vpop.f32.mrb[0].mxu0
      %v1790 = vadd.f32 %v380, %v1789
      %v1791 = vpop.f32.mrb[0].mxu0
      %v1792 = vpop.f32.mrb[0].mxu0
      %v1793 = vadd.f32 %v380, %v1792
      %v1794 = vpop.f32.mrb[0].mxu0
      %1795 = vmatprep.mubr.bf16.mxu0 0
      %1796 = vmatmul.mubr.bf16.gmra.mrb[0].mxu0 %v1107
      %v1797 = vpop.f32.mrb[0].mxu0
      %v1798 = vadd.f32 %v380, %v1797
      %v1799 = vpop.f32.mrb[0].mxu0
      %v1800 = vpop.f32.mrb[0].mxu0
      %v1801 = vadd.f32 %v380, %v1800
      %v1802 = vpop.f32.mrb[0].mxu0
      %1803 = vmatprep.mubr.bf16.mxu0 0
      %1804 = vmatmul.mubr.bf16.gmra.mrb[0].mxu0 %v1110
      %v1805 = vpop.f32.mrb[0].mxu0
      %v1806 = vadd.f32 %v380, %v1805
      %v1807 = vpop.f32.mrb[0].mxu0
      %v1808 = vpop.f32.mrb[0].mxu0
      %v1809 = vadd.f32 %v380, %v1808
      %v1810 = vpop.f32.mrb[0].mxu0
      %1811 = vmatprep.mubr.bf16.mxu0 0
      %1812 = vmatmul.mubr.bf16.gmra.mrb[0].mxu0 %v1113
      %v1813 = vpop.f32.mrb[0].mxu0
      %v1814 = vadd.f32 %v380, %v1813
      %v1815 = vpop.f32.mrb[0].mxu0
      %v1816 = vpop.f32.mrb[0].mxu0
      %v1817 = vadd.f32 %v380, %v1816
      %v1818 = vpop.f32.mrb[0].mxu0
      %1819 = vmatprep.mubr.bf16.mxu0 0
      %1820 = vmatmul.mubr.bf16.gmra.mrb[0].mxu0 %v1116
      %v1821 = vpop.f32.mrb[0].mxu0
      %v1822 = vadd.f32 %v380, %v1821
      %v1823 = vpop.f32.mrb[0].mxu0
      %v1824 = vpop.f32.mrb[0].mxu0
      %v1825 = vadd.f32 %v380, %v1824
      %v1826 = vpop.f32.mrb[0].mxu0
      %1827 = vmatprep.mubr.bf16.mxu0 0
      %1828 = vmatmul.mubr.bf16.gmra.mrb[0].mxu0 %v1119
      %v1829 = vpop.f32.mrb[0].mxu0
      %v1830 = vadd.f32 %v380, %v1829
      %v1831 = vpop.f32.mrb[0].mxu0
      %v1832 = vpop.f32.mrb[0].mxu0
      %v1833 = vadd.f32 %v380, %v1832
      %v1834 = vpop.f32.mrb[0].mxu0
      %1835 = vmatprep.mubr.bf16.mxu0 0
      %1836 = vmatmul.mubr.bf16.gmra.mrb[0].mxu0 %v1122
      %v1837 = vpop.f32.mrb[0].mxu0
      %v1838 = vadd.f32 %v380, %v1837
      %v1839 = vpop.f32.mrb[0].mxu0
      %v1840 = vpop.f32.mrb[0].mxu0
      %v1841 = vadd.f32 %v380, %v1840
      %v1842 = vpop.f32.mrb[0].mxu0
      %1843 = vmatprep.mubr.bf16.mxu0 0
      %1844 = vmatmul.mubr.bf16.gmra.mrb[0].mxu0 %v1125
      %v1845 = vpop.f32.mrb[0].mxu0
      %v1846 = vadd.f32 %v380, %v1845
      %v1847 = vpop.f32.mrb[0].mxu0
      %v1848 = vpop.f32.mrb[0].mxu0
      %v1849 = vadd.f32 %v380, %v1848
      %v1850 = vpop.f32.mrb[0].mxu0
      %1851 = vmatprep.mubr.bf16.mxu0 0
      %1852 = vmatmul.mubr.bf16.gmra.mrb[0].mxu0 %v1128
      %v1853 = vpop.f32.mrb[0].mxu0
      %v1854 = vadd.f32 %v380, %v1853
      %v1855 = vpop.f32.mrb[0].mxu0
      %v1856 = vpop.f32.mrb[0].mxu0
      %v1857 = vadd.f32 %v380, %v1856
      %v1858 = vpop.f32.mrb[0].mxu0
      %1859 = vmatprep.mubr.bf16.mxu0 0
      %1860 = vmatmul.mubr.bf16.gmra.mrb[0].mxu0 %v1131
      %v1861 = vpop.f32.mrb[0].mxu0
      %v1862 = vadd.f32 %v380, %v1861
      %v1863 = vpop.f32.mrb[0].mxu0
      %v1864 = vpop.f32.mrb[0].mxu0
      %v1865 = vadd.f32 %v380, %v1864
      %v1866 = vpop.f32.mrb[0].mxu0
      %1867 = vmatprep.mubr.bf16.mxu0 0
      %1868 = vmatmul.mubr.bf16.gmra.mrb[0].mxu0 %v1134
      %v1869 = vpop.f32.mrb[0].mxu0
      %v1870 = vadd.f32 %v380, %v1869
      %v1871 = vpop.f32.mrb[0].mxu0
      %v1872 = vpop.f32.mrb[0].mxu0
      %v1873 = vadd.f32 %v380, %v1872
      %v1874 = vpop.f32.mrb[0].mxu0
      %1875 = vmatprep.mubr.bf16.mxu0 0
      %1876 = vmatmul.mubr.bf16.gmra.mrb[0].mxu0 %v1137
      %v1877 = vpop.f32.mrb[0].mxu0
      %v1878 = vadd.f32 %v380, %v1877
      %v1879 = vpop.f32.mrb[0].mxu0
      %v1880 = vpop.f32.mrb[0].mxu0
      %v1881 = vadd.f32 %v380, %v1880
      %v1882 = vpop.f32.mrb[0].mxu0
      %1883 = vmatprep.mubr.bf16.mxu0 0
      %1884 = vmatmul.mubr.bf16.gmra.mrb[0].mxu0 %v1140
      %v1885 = vpop.f32.mrb[0].mxu0
      %v1886 = vadd.f32 %v380, %v1885
      %v1887 = vpop.f32.mrb[0].mxu0
      %v1888 = vpop.f32.mrb[0].mxu0
      %v1889 = vadd.f32 %v380, %v1888
      %v1890 = vpop.f32.mrb[0].mxu0
      %1891 = vmatprep.mubr.bf16.mxu0 0
      %1892 = vmatmul.mubr.bf16.gmra.mrb[0].mxu0 %v1143
      %v1893 = vpop.f32.mrb[0].mxu0
      %v1894 = vadd.f32 %v380, %v1893
      %v1895 = vpop.f32.mrb[0].mxu0
      %v1896 = vpop.f32.mrb[0].mxu0
      %v1897 = vadd.f32 %v380, %v1896
      %v1898 = vpop.f32.mrb[0].mxu0
      %1899 = vmatprep.mubr.bf16.mxu0 0
      %1900 = vmatmul.mubr.bf16.gmra.mrb[0].mxu0 %v1146
      %v1901 = vpop.f32.mrb[0].mxu0
      %v1902 = vadd.f32 %v380, %v1901
      %v1903 = vpop.f32.mrb[0].mxu0
      %v1904 = vpop.f32.mrb[0].mxu0
      %v1905 = vadd.f32 %v380, %v1904
      %v1906 = vpop.f32.mrb[0].mxu0
      %1907 = vmatprep.mubr.bf16.mxu0 0
      %1908 = vmatmul.mubr.bf16.gmra.mrb[0].mxu0 %v1149
      %v1909 = vpop.f32.mrb[0].mxu0
      %v1910 = vadd.f32 %v380, %v1909
      %v1911 = vpop.f32.mrb[0].mxu0
      %v1912 = vpop.f32.mrb[0].mxu0
      %v1913 = vadd.f32 %v380, %v1912
      %v1914 = vpop.f32.mrb[0].mxu0
      %1915 = vmatprep.mubr.bf16.mxu0 0
      %1916 = vmatmul.mubr.bf16.gmra.mrb[0].mxu0 %v1152
      %v1917 = vpop.f32.mrb[0].mxu0
      %v1918 = vadd.f32 %v380, %v1917
      %v1919 = vpop.f32.mrb[0].mxu0
      %v1920 = vpop.f32.mrb[0].mxu0
      %v1921 = vadd.f32 %v380, %v1920
      %v1922 = vpop.f32.mrb[0].mxu0
      %1923 = vmatprep.mubr.bf16.mxu0 0
      %1924 = vmatmul.mubr.bf16.gmra.mrb[0].mxu0 %v1155
      %v1925 = vpop.f32.mrb[0].mxu0
      %v1926 = vadd.f32 %v380, %v1925
      %v1927 = vpop.f32.mrb[0].mxu0
      %v1928 = vpop.f32.mrb[0].mxu0
      %v1929 = vadd.f32 %v380, %v1928
      %v1930 = vpop.f32.mrb[0].mxu0
      %1931 = vmatprep.mubr.bf16.mxu0 0
      %1932 = vmatmul.mubr.bf16.gmra.mrb[0].mxu0 %v1158
      %v1933 = vpop.f32.mrb[0].mxu0
      %v1934 = vadd.f32 %v380, %v1933
      %v1935 = vpop.f32.mrb[0].mxu0
      %v1936 = vpop.f32.mrb[0].mxu0
      %v1937 = vadd.f32 %v380, %v1936
      %v1938 = vpop.f32.mrb[0].mxu0
      %1939 = vmatprep.mubr.bf16.mxu0 0
      %1940 = vmatmul.mubr.bf16.gmra.mrb[0].mxu0 %v1161
      %v1941 = vpop.f32.mrb[0].mxu0
      %v1942 = vadd.f32 %v380, %v1941
      %v1943 = vpop.f32.mrb[0].mxu0
      %v1944 = vpop.f32.mrb[0].mxu0
      %v1945 = vadd.f32 %v380, %v1944
      %v1946 = vpop.f32.mrb[0].mxu0
      %1947 = vmatprep.mubr.bf16.mxu0 0
      %1948 = vmatmul.mubr.bf16.gmra.mrb[0].mxu0 %v1164
      %v1949 = vpop.f32.mrb[0].mxu0
      %v1950 = vadd.f32 %v380, %v1949
      %v1951 = vpop.f32.mrb[0].mxu0
      %v1952 = vpop.f32.mrb[0].mxu0
      %v1953 = vadd.f32 %v380, %v1952
      %v1954 = vpop.f32.mrb[0].mxu0
      %1955 = vmatprep.mubr.bf16.mxu0 0
      %1956 = vmatmul.mubr.bf16.gmra.mrb[0].mxu0 %v1167
      %v1957 = vpop.f32.mrb[0].mxu0
      %v1958 = vadd.f32 %v380, %v1957
      %v1959 = vpop.f32.mrb[0].mxu0
      %v1960 = vpop.f32.mrb[0].mxu0
      %v1961 = vadd.f32 %v380, %v1960
      %v1962 = vpop.f32.mrb[0].mxu0
      %1963 = vmatprep.mubr.bf16.mxu0 0
      %1964 = vmatmul.mubr.bf16.gmra.mrb[0].mxu0 %v1170
      %v1965 = vpop.f32.mrb[0].mxu0
      %v1966 = vadd.f32 %v380, %v1965
      %v1967 = vpop.f32.mrb[0].mxu0
      %v1968 = vpop.f32.mrb[0].mxu0
      %v1969 = vadd.f32 %v380, %v1968
      %v1970 = vpop.f32.mrb[0].mxu0
      %1971 = vdwg.mxu0
      %v1972 = vmax.f32 %v1214, 0.0
      %v1973 = vmax.f32 %v1217, 0.0
      %v1974 = vmax.f32 %v1222, 0.0
      %v1975 = vmax.f32 %v1225, 0.0
      %v1976 = vmax.f32 %v1230, 0.0
      %v1977 = vmax.f32 %v1233, 0.0
      %v1978 = vmax.f32 %v1238, 0.0
      %v1979 = vmax.f32 %v1241, 0.0
      %v1980 = vmax.f32 %v1246, 0.0
      %v1981 = vmax.f32 %v1249, 0.0
      %v1982 = vmax.f32 %v1254, 0.0
      %v1983 = vmax.f32 %v1257, 0.0
      %v1984 = vmax.f32 %v1262, 0.0
      %v1985 = vmax.f32 %v1265, 0.0
      %v1986 = vmax.f32 %v1270, 0.0
      %v1987 = vmax.f32 %v1273, 0.0
      %v1988 = vmax.f32 %v1278, 0.0
      %v1989 = vmax.f32 %v1281, 0.0
      %v1990 = vmax.f32 %v1286, 0.0
      %v1991 = vmax.f32 %v1289, 0.0
      %v1992 = vmax.f32 %v1294, 0.0
      %v1993 = vmax.f32 %v1297, 0.0
      %v1994 = vmax.f32 %v1302, 0.0
      %v1995 = vmax.f32 %v1305, 0.0
      %v1996 = vmax.f32 %v1310, 0.0
      %v1997 = vmax.f32 %v1313, 0.0
      %v1998 = vmax.f32 %v1318, 0.0
      %v1999 = vmax.f32 %v1321, 0.0
      %v2000 = vmax.f32 %v1326, 0.0
      %v2001 = vmax.f32 %v1329, 0.0
      %v2002 = vmax.f32 %v1334, 0.0
      %v2003 = vmax.f32 %v1337, 0.0
      %v2004 = vmax.f32 %v1342, 0.0
      %v2005 = vmax.f32 %v1345, 0.0
      %v2006 = vmax.f32 %v1350, 0.0
      %v2007 = vmax.f32 %v1353, 0.0
      %v2008 = vmax.f32 %v1358, 0.0
      %v2009 = vmax.f32 %v1361, 0.0
      %v2010 = vmax.f32 %v1366, 0.0
      %v2011 = vmax.f32 %v1369, 0.0
      %v2012 = vmax.f32 %v1374, 0.0
      %v2013 = vmax.f32 %v1377, 0.0
      %v2014 = vmax.f32 %v1382, 0.0
      %v2015 = vmax.f32 %v1385, 0.0
      %v2016 = vmax.f32 %v1390, 0.0
      %v2017 = vmax.f32 %v1393, 0.0
      %v2018 = vmax.f32 %v1398, 0.0
      %v2019 = vmax.f32 %v1401, 0.0
      %v2020 = vmax.f32 %v1406, 0.0
      %v2021 = vmax.f32 %v1409, 0.0
      %v2022 = vmax.f32 %v1414, 0.0
      %v2023 = vmax.f32 %v1417, 0.0
      %v2024 = vmax.f32 %v1422, 0.0
      %v2025 = vmax.f32 %v1425, 0.0
      %v2026 = vmax.f32 %v1430, 0.0
      %v2027 = vmax.f32 %v1433, 0.0
      %v2028 = vmax.f32 %v1438, 0.0
      %v2029 = vmax.f32 %v1441, 0.0
      %v2030 = vmax.f32 %v1446, 0.0
      %v2031 = vmax.f32 %v1449, 0.0
      %v2032 = vmax.f32 %v1454, 0.0
      %v2033 = vmax.f32 %v1457, 0.0
      %v2034 = vmax.f32 %v1462, 0.0
      %v2035 = vmax.f32 %v1465, 0.0
      %v2036 = vmax.f32 %v1470, 0.0
      %v2037 = vmax.f32 %v1473, 0.0
      %v2038 = vmax.f32 %v1478, 0.0
      %v2039 = vmax.f32 %v1481, 0.0
      %v2040 = vmax.f32 %v1486, 0.0
      %v2041 = vmax.f32 %v1489, 0.0
      %v2042 = vmax.f32 %v1494, 0.0
      %v2043 = vmax.f32 %v1497, 0.0
      %v2044 = vmax.f32 %v1502, 0.0
      %v2045 = vmax.f32 %v1505, 0.0
      %v2046 = vmax.f32 %v1510, 0.0
      %v2047 = vmax.f32 %v1513, 0.0
      %v2048 = vmax.f32 %v1518, 0.0
      %v2049 = vmax.f32 %v1521, 0.0
      %v2050 = vmax.f32 %v1526, 0.0
      %v2051 = vmax.f32 %v1529, 0.0
      %v2052 = vmax.f32 %v1534, 0.0
      %v2053 = vmax.f32 %v1537, 0.0
      %v2054 = vmax.f32 %v1542, 0.0
      %v2055 = vmax.f32 %v1545, 0.0
      %v2056 = vmax.f32 %v1550, 0.0
      %v2057 = vmax.f32 %v1553, 0.0
      %v2058 = vmax.f32 %v1558, 0.0
      %v2059 = vmax.f32 %v1561, 0.0
      %v2060 = vmax.f32 %v1566, 0.0
      %v2061 = vmax.f32 %v1569, 0.0
      %v2062 = vmax.f32 %v1574, 0.0
      %v2063 = vmax.f32 %v1577, 0.0
      %v2064 = vmax.f32 %v1582, 0.0
      %v2065 = vmax.f32 %v1585, 0.0
      %v2066 = vmax.f32 %v1590, 0.0
      %v2067 = vmax.f32 %v1593, 0.0
      %v2068 = vmax.f32 %v1598, 0.0
      %v2069 = vmax.f32 %v1601, 0.0
      %v2070 = vmax.f32 %v1606, 0.0
      %v2071 = vmax.f32 %v1609, 0.0
      %v2072 = vmax.f32 %v1614, 0.0
      %v2073 = vmax.f32 %v1617, 0.0
      %v2074 = vmax.f32 %v1622, 0.0
      %v2075 = vmax.f32 %v1625, 0.0
      %v2076 = vmax.f32 %v1630, 0.0
      %v2077 = vmax.f32 %v1633, 0.0
      %v2078 = vmax.f32 %v1638, 0.0
      %v2079 = vmax.f32 %v1641, 0.0
      %v2080 = vmax.f32 %v1646, 0.0
      %v2081 = vmax.f32 %v1649, 0.0
      %v2082 = vmax.f32 %v1654, 0.0
      %v2083 = vmax.f32 %v1657, 0.0
      %v2084 = vmax.f32 %v1662, 0.0
      %v2085 = vmax.f32 %v1665, 0.0
      %v2086 = vmax.f32 %v1670, 0.0
      %v2087 = vmax.f32 %v1673, 0.0
      %v2088 = vmax.f32 %v1678, 0.0
      %v2089 = vmax.f32 %v1681, 0.0
      %v2090 = vmax.f32 %v1686, 0.0
      %v2091 = vmax.f32 %v1689, 0.0
      %v2092 = vmax.f32 %v1694, 0.0
      %v2093 = vmax.f32 %v1697, 0.0
      %v2094 = vmax.f32 %v1702, 0.0
      %v2095 = vmax.f32 %v1705, 0.0
      %v2096 = vmax.f32 %v1710, 0.0
      %v2097 = vmax.f32 %v1713, 0.0
      %v2098 = vmax.f32 %v1718, 0.0
      %v2099 = vmax.f32 %v1721, 0.0
      %v2100 = vmax.f32 %v1726, 0.0
      %v2101 = vmax.f32 %v1729, 0.0
      %v2102 = vmax.f32 %v1734, 0.0
      %v2103 = vmax.f32 %v1737, 0.0
      %v2104 = vmax.f32 %v1742, 0.0
      %v2105 = vmax.f32 %v1745, 0.0
      %v2106 = vmax.f32 %v1750, 0.0
      %v2107 = vmax.f32 %v1753, 0.0
      %v2108 = vmax.f32 %v1758, 0.0
      %v2109 = vmax.f32 %v1761, 0.0
      %v2110 = vmax.f32 %v1766, 0.0
      %v2111 = vmax.f32 %v1769, 0.0
      %v2112 = vmax.f32 %v1774, 0.0
      %v2113 = vmax.f32 %v1777, 0.0
      %v2114 = vmax.f32 %v1782, 0.0
      %v2115 = vmax.f32 %v1785, 0.0
      %v2116 = vmax.f32 %v1790, 0.0
      %v2117 = vmax.f32 %v1793, 0.0
      %v2118 = vmax.f32 %v1798, 0.0
      %v2119 = vmax.f32 %v1801, 0.0
      %v2120 = vmax.f32 %v1806, 0.0
      %v2121 = vmax.f32 %v1809, 0.0
      %v2122 = vmax.f32 %v1814, 0.0
      %v2123 = vmax.f32 %v1817, 0.0
      %v2124 = vmax.f32 %v1822, 0.0
      %v2125 = vmax.f32 %v1825, 0.0
      %v2126 = vmax.f32 %v1830, 0.0
      %v2127 = vmax.f32 %v1833, 0.0
      %v2128 = vmax.f32 %v1838, 0.0
      %v2129 = vmax.f32 %v1841, 0.0
      %v2130 = vmax.f32 %v1846, 0.0
      %v2131 = vmax.f32 %v1849, 0.0
      %v2132 = vmax.f32 %v1854, 0.0
      %v2133 = vmax.f32 %v1857, 0.0
      %v2134 = vmax.f32 %v1862, 0.0
      %v2135 = vmax.f32 %v1865, 0.0
      %v2136 = vmax.f32 %v1870, 0.0
      %v2137 = vmax.f32 %v1873, 0.0
      %v2138 = vmax.f32 %v1878, 0.0
      %v2139 = vmax.f32 %v1881, 0.0
      %v2140 = vmax.f32 %v1886, 0.0
      %v2141 = vmax.f32 %v1889, 0.0
      %v2142 = vmax.f32 %v1894, 0.0
      %v2143 = vmax.f32 %v1897, 0.0
      %v2144 = vmax.f32 %v1902, 0.0
      %v2145 = vmax.f32 %v1905, 0.0
      %v2146 = vmax.f32 %v1910, 0.0
      %v2147 = vmax.f32 %v1913, 0.0
      %v2148 = vmax.f32 %v1918, 0.0
      %v2149 = vmax.f32 %v1921, 0.0
      %v2150 = vmax.f32 %v1926, 0.0
      %v2151 = vmax.f32 %v1929, 0.0
      %v2152 = vmax.f32 %v1934, 0.0
      %v2153 = vmax.f32 %v1937, 0.0
      %v2154 = vmax.f32 %v1942, 0.0
      %v2155 = vmax.f32 %v1945, 0.0
      %v2156 = vmax.f32 %v1950, 0.0
      %v2157 = vmax.f32 %v1953, 0.0
      %v2158 = vmax.f32 %v1958, 0.0
      %v2159 = vmax.f32 %v1961, 0.0
      %v2160 = vmax.f32 %v1966, 0.0
      %v2161 = vmax.f32 %v1969, 0.0
      %v2162 = vpack.c.bf16 %v1973, %v1972
      %v2163 = vpack.c.bf16 %v1975, %v1974
      %v2164 = vpack.c.bf16 %v1977, %v1976
      %v2165 = vpack.c.bf16 %v1979, %v1978
      %v2166 = vpack.c.bf16 %v1981, %v1980
      %v2167 = vpack.c.bf16 %v1983, %v1982
      %v2168 = vpack.c.bf16 %v1985, %v1984
      %v2169 = vpack.c.bf16 %v1987, %v1986
      %v2170 = vpack.c.bf16 %v1989, %v1988
      %v2171 = vpack.c.bf16 %v1991, %v1990
      %v2172 = vpack.c.bf16 %v1993, %v1992
      %v2173 = vpack.c.bf16 %v1995, %v1994
      %v2174 = vpack.c.bf16 %v1997, %v1996
      %v2175 = vpack.c.bf16 %v1999, %v1998
      %v2176 = vpack.c.bf16 %v2001, %v2000
      %v2177 = vpack.c.bf16 %v2003, %v2002
      %v2178 = vpack.c.bf16 %v2005, %v2004
      %v2179 = vpack.c.bf16 %v2007, %v2006
      %v2180 = vpack.c.bf16 %v2009, %v2008
      %v2181 = vpack.c.bf16 %v2011, %v2010
      %v2182 = vpack.c.bf16 %v2013, %v2012
      %v2183 = vpack.c.bf16 %v2015, %v2014
      %v2184 = vpack.c.bf16 %v2017, %v2016
      %v2185 = vpack.c.bf16 %v2019, %v2018
      %v2186 = vpack.c.bf16 %v2021, %v2020
      %v2187 = vpack.c.bf16 %v2023, %v2022
      %v2188 = vpack.c.bf16 %v2025, %v2024
      %v2189 = vpack.c.bf16 %v2027, %v2026
      %v2190 = vpack.c.bf16 %v2029, %v2028
      %v2191 = vpack.c.bf16 %v2031, %v2030
      %v2192 = vpack.c.bf16 %v2033, %v2032
      %v2193 = vpack.c.bf16 %v2035, %v2034
      %v2194 = vpack.c.bf16 %v2037, %v2036
      %v2195 = vpack.c.bf16 %v2039, %v2038
      %v2196 = vpack.c.bf16 %v2041, %v2040
      %v2197 = vpack.c.bf16 %v2043, %v2042
      %v2198 = vpack.c.bf16 %v2045, %v2044
      %v2199 = vpack.c.bf16 %v2047, %v2046
      %v2200 = vpack.c.bf16 %v2049, %v2048
      %v2201 = vpack.c.bf16 %v2051, %v2050
      %v2202 = vpack.c.bf16 %v2053, %v2052
      %v2203 = vpack.c.bf16 %v2055, %v2054
      %v2204 = vpack.c.bf16 %v2057, %v2056
      %v2205 = vpack.c.bf16 %v2059, %v2058
      %v2206 = vpack.c.bf16 %v2061, %v2060
      %v2207 = vpack.c.bf16 %v2063, %v2062
      %v2208 = vpack.c.bf16 %v2065, %v2064
      %v2209 = vpack.c.bf16 %v2067, %v2066
      %v2210 = vpack.c.bf16 %v2069, %v2068
      %v2211 = vpack.c.bf16 %v2071, %v2070
      %v2212 = vpack.c.bf16 %v2073, %v2072
      %v2213 = vpack.c.bf16 %v2075, %v2074
      %v2214 = vpack.c.bf16 %v2077, %v2076
      %v2215 = vpack.c.bf16 %v2079, %v2078
      %v2216 = vpack.c.bf16 %v2081, %v2080
      %v2217 = vpack.c.bf16 %v2083, %v2082
      %v2218 = vpack.c.bf16 %v2085, %v2084
      %v2219 = vpack.c.bf16 %v2087, %v2086
      %v2220 = vpack.c.bf16 %v2089, %v2088
      %v2221 = vpack.c.bf16 %v2091, %v2090
      %v2222 = vpack.c.bf16 %v2093, %v2092
      %v2223 = vpack.c.bf16 %v2095, %v2094
      %v2224 = vpack.c.bf16 %v2097, %v2096
      %v2225 = vpack.c.bf16 %v2099, %v2098
      %v2226 = vpack.c.bf16 %v2101, %v2100
      %v2227 = vpack.c.bf16 %v2103, %v2102
      %v2228 = vpack.c.bf16 %v2105, %v2104
      %v2229 = vpack.c.bf16 %v2107, %v2106
      %v2230 = vpack.c.bf16 %v2109, %v2108
      %v2231 = vpack.c.bf16 %v2111, %v2110
      %v2232 = vpack.c.bf16 %v2113, %v2112
      %v2233 = vpack.c.bf16 %v2115, %v2114
      %v2234 = vpack.c.bf16 %v2117, %v2116
      %v2235 = vpack.c.bf16 %v2119, %v2118
      %v2236 = vpack.c.bf16 %v2121, %v2120
      %v2237 = vpack.c.bf16 %v2123, %v2122
      %v2238 = vpack.c.bf16 %v2125, %v2124
      %v2239 = vpack.c.bf16 %v2127, %v2126
      %v2240 = vpack.c.bf16 %v2129, %v2128
      %v2241 = vpack.c.bf16 %v2131, %v2130
      %v2242 = vpack.c.bf16 %v2133, %v2132
      %v2243 = vpack.c.bf16 %v2135, %v2134
      %v2244 = vpack.c.bf16 %v2137, %v2136
      %v2245 = vpack.c.bf16 %v2139, %v2138
      %v2246 = vpack.c.bf16 %v2141, %v2140
      %v2247 = vpack.c.bf16 %v2143, %v2142
      %v2248 = vpack.c.bf16 %v2145, %v2144
      %v2249 = vpack.c.bf16 %v2147, %v2146
      %v2250 = vpack.c.bf16 %v2149, %v2148
      %v2251 = vpack.c.bf16 %v2151, %v2150
      %v2252 = vpack.c.bf16 %v2153, %v2152
      %v2253 = vpack.c.bf16 %v2155, %v2154
      %v2254 = vpack.c.bf16 %v2157, %v2156
      %v2255 = vpack.c.bf16 %v2159, %v2158
      %v2256 = vpack.c.bf16 %v2161, %v2160
      %v2352 = vunpack.c.l.b16 %v2162
      %v2353 = vunpack.c.h.b16 %v2162
      %v2354 = vunpack.c.l.b16 %v2163
      %v2355 = vunpack.c.h.b16 %v2163
      %v2356 = vunpack.c.l.b16 %v2164
      %v2357 = vunpack.c.h.b16 %v2164
      %v2358 = vunpack.c.l.b16 %v2165
      %v2359 = vunpack.c.h.b16 %v2165
      %v2360 = vunpack.c.l.b16 %v2166
      %v2361 = vunpack.c.h.b16 %v2166
      %v2362 = vunpack.c.l.b16 %v2167
      %v2363 = vunpack.c.h.b16 %v2167
      %v2364 = vunpack.c.l.b16 %v2168
      %v2365 = vunpack.c.h.b16 %v2168
      %v2366 = vunpack.c.l.b16 %v2169
      %v2367 = vunpack.c.h.b16 %v2169
      %v2368 = vunpack.c.l.b16 %v2170
      %v2369 = vunpack.c.h.b16 %v2170
      %v2370 = vunpack.c.l.b16 %v2171
      %v2371 = vunpack.c.h.b16 %v2171
      %v2372 = vunpack.c.l.b16 %v2172
      %v2373 = vunpack.c.h.b16 %v2172
      %v2374 = vunpack.c.l.b16 %v2173
      %v2375 = vunpack.c.h.b16 %v2173
      %v2376 = vunpack.c.l.b16 %v2174
      %v2377 = vunpack.c.h.b16 %v2174
      %v2378 = vunpack.c.l.b16 %v2175
      %v2379 = vunpack.c.h.b16 %v2175
      %v2380 = vunpack.c.l.b16 %v2176
      %v2381 = vunpack.c.h.b16 %v2176
      %v2382 = vunpack.c.l.b16 %v2177
      %v2383 = vunpack.c.h.b16 %v2177
      %v2384 = vunpack.c.l.b16 %v2178
      %v2385 = vunpack.c.h.b16 %v2178
      %v2386 = vunpack.c.l.b16 %v2179
      %v2387 = vunpack.c.h.b16 %v2179
      %v2388 = vunpack.c.l.b16 %v2180
      %v2389 = vunpack.c.h.b16 %v2180
      %v2390 = vunpack.c.l.b16 %v2181
      %v2391 = vunpack.c.h.b16 %v2181
      %v2392 = vunpack.c.l.b16 %v2182
      %v2393 = vunpack.c.h.b16 %v2182
      %v2394 = vunpack.c.l.b16 %v2183
      %v2395 = vunpack.c.h.b16 %v2183
      %v2396 = vunpack.c.l.b16 %v2184
      %v2397 = vunpack.c.h.b16 %v2184
      %v2398 = vunpack.c.l.b16 %v2185
      %v2399 = vunpack.c.h.b16 %v2185
      %v2400 = vunpack.c.l.b16 %v2186
      %v2401 = vunpack.c.h.b16 %v2186
      %v2402 = vunpack.c.l.b16 %v2187
      %v2403 = vunpack.c.h.b16 %v2187
      %v2404 = vunpack.c.l.b16 %v2188
      %v2405 = vunpack.c.h.b16 %v2188
      %v2406 = vunpack.c.l.b16 %v2189
      %v2407 = vunpack.c.h.b16 %v2189
      %v2408 = vunpack.c.l.b16 %v2190
      %v2409 = vunpack.c.h.b16 %v2190
      %v2410 = vunpack.c.l.b16 %v2191
      %v2411 = vunpack.c.h.b16 %v2191
      %v2412 = vunpack.c.l.b16 %v2192
      %v2413 = vunpack.c.h.b16 %v2192
      %v2414 = vunpack.c.l.b16 %v2193
      %v2415 = vunpack.c.h.b16 %v2193
      %v2416 = vunpack.c.l.b16 %v2194
      %v2417 = vunpack.c.h.b16 %v2194
      %v2418 = vunpack.c.l.b16 %v2195
      %v2419 = vunpack.c.h.b16 %v2195
      %v2420 = vunpack.c.l.b16 %v2196
      %v2421 = vunpack.c.h.b16 %v2196
      %v2422 = vunpack.c.l.b16 %v2197
      %v2423 = vunpack.c.h.b16 %v2197
      %v2424 = vunpack.c.l.b16 %v2198
      %v2425 = vunpack.c.h.b16 %v2198
      %v2426 = vunpack.c.l.b16 %v2199
      %v2427 = vunpack.c.h.b16 %v2199
      %v2428 = vunpack.c.l.b16 %v2200
      %v2429 = vunpack.c.h.b16 %v2200
      %v2430 = vunpack.c.l.b16 %v2201
      %v2431 = vunpack.c.h.b16 %v2201
      %v2432 = vunpack.c.l.b16 %v2202
      %v2433 = vunpack.c.h.b16 %v2202
      %v2434 = vunpack.c.l.b16 %v2203
      %v2435 = vunpack.c.h.b16 %v2203
      %v2436 = vunpack.c.l.b16 %v2204
      %v2437 = vunpack.c.h.b16 %v2204
      %v2438 = vunpack.c.l.b16 %v2205
      %v2439 = vunpack.c.h.b16 %v2205
      %v2440 = vunpack.c.l.b16 %v2206
      %v2441 = vunpack.c.h.b16 %v2206
      %v2442 = vunpack.c.l.b16 %v2207
      %v2443 = vunpack.c.h.b16 %v2207
      %v2444 = vunpack.c.l.b16 %v2208
      %v2445 = vunpack.c.h.b16 %v2208
      %v2446 = vunpack.c.l.b16 %v2209
      %v2447 = vunpack.c.h.b16 %v2209
      %v2448 = vunpack.c.l.b16 %v2210
      %v2449 = vunpack.c.h.b16 %v2210
      %v2450 = vunpack.c.l.b16 %v2211
      %v2451 = vunpack.c.h.b16 %v2211
      %v2452 = vunpack.c.l.b16 %v2212
      %v2453 = vunpack.c.h.b16 %v2212
      %v2454 = vunpack.c.l.b16 %v2213
      %v2455 = vunpack.c.h.b16 %v2213
      %v2456 = vunpack.c.l.b16 %v2214
      %v2457 = vunpack.c.h.b16 %v2214
      %v2458 = vunpack.c.l.b16 %v2215
      %v2459 = vunpack.c.h.b16 %v2215
      %v2460 = vunpack.c.l.b16 %v2216
      %v2461 = vunpack.c.h.b16 %v2216
      %v2462 = vunpack.c.l.b16 %v2217
      %v2463 = vunpack.c.h.b16 %v2217
      %v2464 = vunpack.c.l.b16 %v2218
      %v2465 = vunpack.c.h.b16 %v2218
      %v2466 = vunpack.c.l.b16 %v2219
      %v2467 = vunpack.c.h.b16 %v2219
      %v2468 = vunpack.c.l.b16 %v2220
      %v2469 = vunpack.c.h.b16 %v2220
      %v2470 = vunpack.c.l.b16 %v2221
      %v2471 = vunpack.c.h.b16 %v2221
      %v2472 = vunpack.c.l.b16 %v2222
      %v2473 = vunpack.c.h.b16 %v2222
      %v2474 = vunpack.c.l.b16 %v2223
      %v2475 = vunpack.c.h.b16 %v2223
      %v2476 = vunpack.c.l.b16 %v2224
      %v2477 = vunpack.c.h.b16 %v2224
      %v2478 = vunpack.c.l.b16 %v2225
      %v2479 = vunpack.c.h.b16 %v2225
      %v2480 = vunpack.c.l.b16 %v2226
      %v2481 = vunpack.c.h.b16 %v2226
      %v2482 = vunpack.c.l.b16 %v2227
      %v2483 = vunpack.c.h.b16 %v2227
      %v2484 = vunpack.c.l.b16 %v2228
      %v2485 = vunpack.c.h.b16 %v2228
      %v2486 = vunpack.c.l.b16 %v2229
      %v2487 = vunpack.c.h.b16 %v2229
      %v2488 = vunpack.c.l.b16 %v2230
      %v2489 = vunpack.c.h.b16 %v2230
      %v2490 = vunpack.c.l.b16 %v2231
      %v2491 = vunpack.c.h.b16 %v2231
      %v2492 = vunpack.c.l.b16 %v2232
      %v2493 = vunpack.c.h.b16 %v2232
      %v2494 = vunpack.c.l.b16 %v2233
      %v2495 = vunpack.c.h.b16 %v2233
      %v2496 = vunpack.c.l.b16 %v2234
      %v2497 = vunpack.c.h.b16 %v2234
      %v2498 = vunpack.c.l.b16 %v2235
      %v2499 = vunpack.c.h.b16 %v2235
      %v2500 = vunpack.c.l.b16 %v2236
      %v2501 = vunpack.c.h.b16 %v2236
      %v2502 = vunpack.c.l.b16 %v2237
      %v2503 = vunpack.c.h.b16 %v2237
      %v2504 = vunpack.c.l.b16 %v2238
      %v2505 = vunpack.c.h.b16 %v2238
      %v2506 = vunpack.c.l.b16 %v2239
      %v2507 = vunpack.c.h.b16 %v2239
      %v2508 = vunpack.c.l.b16 %v2240
      %v2509 = vunpack.c.h.b16 %v2240
      %v2510 = vunpack.c.l.b16 %v2241
      %v2511 = vunpack.c.h.b16 %v2241
      %v2512 = vunpack.c.l.b16 %v2242
      %v2513 = vunpack.c.h.b16 %v2242
      %v2514 = vunpack.c.l.b16 %v2243
      %v2515 = vunpack.c.h.b16 %v2243
      %v2516 = vunpack.c.l.b16 %v2244
      %v2517 = vunpack.c.h.b16 %v2244
      %v2518 = vunpack.c.l.b16 %v2245
      %v2519 = vunpack.c.h.b16 %v2245
      %v2520 = vunpack.c.l.b16 %v2246
      %v2521 = vunpack.c.h.b16 %v2246
      %v2522 = vunpack.c.l.b16 %v2247
      %v2523 = vunpack.c.h.b16 %v2247
      %v2524 = vunpack.c.l.b16 %v2248
      %v2525 = vunpack.c.h.b16 %v2248
      %v2526 = vunpack.c.l.b16 %v2249
      %v2527 = vunpack.c.h.b16 %v2249
      %v2528 = vunpack.c.l.b16 %v2250
      %v2529 = vunpack.c.h.b16 %v2250
      %v2530 = vunpack.c.l.b16 %v2251
      %v2531 = vunpack.c.h.b16 %v2251
      %v2532 = vunpack.c.l.b16 %v2252
      %v2533 = vunpack.c.h.b16 %v2252
      %v2534 = vunpack.c.l.b16 %v2253
      %v2535 = vunpack.c.h.b16 %v2253
      %v2536 = vunpack.c.l.b16 %v2254
      %v2537 = vunpack.c.h.b16 %v2254
      %v2538 = vunpack.c.l.b16 %v2255
      %v2539 = vunpack.c.h.b16 %v2255
      %v2540 = vunpack.c.l.b16 %v2256
      %v2541 = vunpack.c.h.b16 %v2256
      %v2542 = vpack.c.b16 %v2352, %v2352
      %v2543 = vpack.c.b16 %v2353, %v2353
      %v2544 = vpack.c.b16 %v2354, %v2354
      %v2545 = vpack.c.b16 %v2355, %v2355
      %v2546 = vpack.c.b16 %v2356, %v2356
      %v2547 = vpack.c.b16 %v2357, %v2357
      %v2548 = vpack.c.b16 %v2358, %v2358
      %v2549 = vpack.c.b16 %v2359, %v2359
      %v2550 = vpack.c.b16 %v2360, %v2360
      %v2551 = vpack.c.b16 %v2361, %v2361
      %v2552 = vpack.c.b16 %v2362, %v2362
      %v2553 = vpack.c.b16 %v2363, %v2363
      %v2554 = vpack.c.b16 %v2364, %v2364
      %v2555 = vpack.c.b16 %v2365, %v2365
      %v2556 = vpack.c.b16 %v2366, %v2366
      %v2557 = vpack.c.b16 %v2367, %v2367
      %v2558 = vpack.c.b16 %v2368, %v2368
      %v2559 = vpack.c.b16 %v2369, %v2369
      %v2560 = vpack.c.b16 %v2370, %v2370
      %v2561 = vpack.c.b16 %v2371, %v2371
      %v2562 = vpack.c.b16 %v2372, %v2372
      %v2563 = vpack.c.b16 %v2373, %v2373
      %v2564 = vpack.c.b16 %v2374, %v2374
      %v2565 = vpack.c.b16 %v2375, %v2375
      %v2566 = vpack.c.b16 %v2376, %v2376
      %v2567 = vpack.c.b16 %v2377, %v2377
      %v2568 = vpack.c.b16 %v2378, %v2378
      %v2569 = vpack.c.b16 %v2379, %v2379
      %v2570 = vpack.c.b16 %v2380, %v2380
      %v2571 = vpack.c.b16 %v2381, %v2381
      %v2572 = vpack.c.b16 %v2382, %v2382
      %v2573 = vpack.c.b16 %v2383, %v2383
      %v2574 = vpack.c.b16 %v2384, %v2384
      %v2575 = vpack.c.b16 %v2385, %v2385
      %v2576 = vpack.c.b16 %v2386, %v2386
      %v2577 = vpack.c.b16 %v2387, %v2387
      %v2578 = vpack.c.b16 %v2388, %v2388
      %v2579 = vpack.c.b16 %v2389, %v2389
      %v2580 = vpack.c.b16 %v2390, %v2390
      %v2581 = vpack.c.b16 %v2391, %v2391
      %v2582 = vpack.c.b16 %v2392, %v2392
      %v2583 = vpack.c.b16 %v2393, %v2393
      %v2584 = vpack.c.b16 %v2394, %v2394
      %v2585 = vpack.c.b16 %v2395, %v2395
      %v2586 = vpack.c.b16 %v2396, %v2396
      %v2587 = vpack.c.b16 %v2397, %v2397
      %v2588 = vpack.c.b16 %v2398, %v2398
      %v2589 = vpack.c.b16 %v2399, %v2399
      %v2590 = vpack.c.b16 %v2400, %v2400
      %v2591 = vpack.c.b16 %v2401, %v2401
      %v2592 = vpack.c.b16 %v2402, %v2402
      %v2593 = vpack.c.b16 %v2403, %v2403
      %v2594 = vpack.c.b16 %v2404, %v2404
      %v2595 = vpack.c.b16 %v2405, %v2405
      %v2596 = vpack.c.b16 %v2406, %v2406
      %v2597 = vpack.c.b16 %v2407, %v2407
      %v2598 = vpack.c.b16 %v2408, %v2408
      %v2599 = vpack.c.b16 %v2409, %v2409
      %v2600 = vpack.c.b16 %v2410, %v2410
      %v2601 = vpack.c.b16 %v2411, %v2411
      %v2602 = vpack.c.b16 %v2412, %v2412
      %v2603 = vpack.c.b16 %v2413, %v2413
      %v2604 = vpack.c.b16 %v2414, %v2414
      %v2605 = vpack.c.b16 %v2415, %v2415
      %v2606 = vpack.c.b16 %v2416, %v2416
      %v2607 = vpack.c.b16 %v2417, %v2417
      %v2608 = vpack.c.b16 %v2418, %v2418
      %v2609 = vpack.c.b16 %v2419, %v2419
      %v2610 = vpack.c.b16 %v2420, %v2420
      %v2611 = vpack.c.b16 %v2421, %v2421
      %v2612 = vpack.c.b16 %v2422, %v2422
      %v2613 = vpack.c.b16 %v2423, %v2423
      %v2614 = vpack.c.b16 %v2424, %v2424
      %v2615 = vpack.c.b16 %v2425, %v2425
      %v2616 = vpack.c.b16 %v2426, %v2426
      %v2617 = vpack.c.b16 %v2427, %v2427
      %v2618 = vpack.c.b16 %v2428, %v2428
      %v2619 = vpack.c.b16 %v2429, %v2429
      %v2620 = vpack.c.b16 %v2430, %v2430
      %v2621 = vpack.c.b16 %v2431, %v2431
      %v2622 = vpack.c.b16 %v2432, %v2432
      %v2623 = vpack.c.b16 %v2433, %v2433
      %v2624 = vpack.c.b16 %v2434, %v2434
      %v2625 = vpack.c.b16 %v2435, %v2435
      %v2626 = vpack.c.b16 %v2436, %v2436
      %v2627 = vpack.c.b16 %v2437, %v2437
      %v2628 = vpack.c.b16 %v2438, %v2438
      %v2629 = vpack.c.b16 %v2439, %v2439
      %v2630 = vpack.c.b16 %v2440, %v2440
      %v2631 = vpack.c.b16 %v2441, %v2441
      %v2632 = vpack.c.b16 %v2442, %v2442
      %v2633 = vpack.c.b16 %v2443, %v2443
      %v2634 = vpack.c.b16 %v2444, %v2444
      %v2635 = vpack.c.b16 %v2445, %v2445
      %v2636 = vpack.c.b16 %v2446, %v2446
      %v2637 = vpack.c.b16 %v2447, %v2447
      %v2638 = vpack.c.b16 %v2448, %v2448
      %v2639 = vpack.c.b16 %v2449, %v2449
      %v2640 = vpack.c.b16 %v2450, %v2450
      %v2641 = vpack.c.b16 %v2451, %v2451
      %v2642 = vpack.c.b16 %v2452, %v2452
      %v2643 = vpack.c.b16 %v2453, %v2453
      %v2644 = vpack.c.b16 %v2454, %v2454
      %v2645 = vpack.c.b16 %v2455, %v2455
      %v2646 = vpack.c.b16 %v2456, %v2456
      %v2647 = vpack.c.b16 %v2457, %v2457
      %v2648 = vpack.c.b16 %v2458, %v2458
      %v2649 = vpack.c.b16 %v2459, %v2459
      %v2650 = vpack.c.b16 %v2460, %v2460
      %v2651 = vpack.c.b16 %v2461, %v2461
      %v2652 = vpack.c.b16 %v2462, %v2462
      %v2653 = vpack.c.b16 %v2463, %v2463
      %v2654 = vpack.c.b16 %v2464, %v2464
      %v2655 = vpack.c.b16 %v2465, %v2465
      %v2656 = vpack.c.b16 %v2466, %v2466
      %v2657 = vpack.c.b16 %v2467, %v2467
      %v2658 = vpack.c.b16 %v2468, %v2468
      %v2659 = vpack.c.b16 %v2469, %v2469
      %v2660 = vpack.c.b16 %v2470, %v2470
      %v2661 = vpack.c.b16 %v2471, %v2471
      %v2662 = vpack.c.b16 %v2472, %v2472
      %v2663 = vpack.c.b16 %v2473, %v2473
      %v2664 = vpack.c.b16 %v2474, %v2474
      %v2665 = vpack.c.b16 %v2475, %v2475
      %v2666 = vpack.c.b16 %v2476, %v2476
      %v2667 = vpack.c.b16 %v2477, %v2477
      %v2668 = vpack.c.b16 %v2478, %v2478
      %v2669 = vpack.c.b16 %v2479, %v2479
      %v2670 = vpack.c.b16 %v2480, %v2480
      %v2671 = vpack.c.b16 %v2481, %v2481
      %v2672 = vpack.c.b16 %v2482, %v2482
      %v2673 = vpack.c.b16 %v2483, %v2483
      %v2674 = vpack.c.b16 %v2484, %v2484
      %v2675 = vpack.c.b16 %v2485, %v2485
      %v2676 = vpack.c.b16 %v2486, %v2486
      %v2677 = vpack.c.b16 %v2487, %v2487
      %v2678 = vpack.c.b16 %v2488, %v2488
      %v2679 = vpack.c.b16 %v2489, %v2489
      %v2680 = vpack.c.b16 %v2490, %v2490
      %v2681 = vpack.c.b16 %v2491, %v2491
      %v2682 = vpack.c.b16 %v2492, %v2492
      %v2683 = vpack.c.b16 %v2493, %v2493
      %v2684 = vpack.c.b16 %v2494, %v2494
      %v2685 = vpack.c.b16 %v2495, %v2495
      %v2686 = vpack.c.b16 %v2496, %v2496
      %v2687 = vpack.c.b16 %v2497, %v2497
      %v2688 = vpack.c.b16 %v2498, %v2498
      %v2689 = vpack.c.b16 %v2499, %v2499
      %v2690 = vpack.c.b16 %v2500, %v2500
      %v2691 = vpack.c.b16 %v2501, %v2501
      %v2692 = vpack.c.b16 %v2502, %v2502
      %v2693 = vpack.c.b16 %v2503, %v2503
      %v2694 = vpack.c.b16 %v2504, %v2504
      %v2695 = vpack.c.b16 %v2505, %v2505
      %v2696 = vpack.c.b16 %v2506, %v2506
      %v2697 = vpack.c.b16 %v2507, %v2507
      %v2698 = vpack.c.b16 %v2508, %v2508
      %v2699 = vpack.c.b16 %v2509, %v2509
      %v2700 = vpack.c.b16 %v2510, %v2510
      %v2701 = vpack.c.b16 %v2511, %v2511
      %v2702 = vpack.c.b16 %v2512, %v2512
      %v2703 = vpack.c.b16 %v2513, %v2513
      %v2704 = vpack.c.b16 %v2514, %v2514
      %v2705 = vpack.c.b16 %v2515, %v2515
      %v2706 = vpack.c.b16 %v2516, %v2516
      %v2707 = vpack.c.b16 %v2517, %v2517
      %v2708 = vpack.c.b16 %v2518, %v2518
      %v2709 = vpack.c.b16 %v2519, %v2519
      %v2710 = vpack.c.b16 %v2520, %v2520
      %v2711 = vpack.c.b16 %v2521, %v2521
      %v2712 = vpack.c.b16 %v2522, %v2522
      %v2713 = vpack.c.b16 %v2523, %v2523
      %v2714 = vpack.c.b16 %v2524, %v2524
      %v2715 = vpack.c.b16 %v2525, %v2525
      %v2716 = vpack.c.b16 %v2526, %v2526
      %v2717 = vpack.c.b16 %v2527, %v2527
      %v2718 = vpack.c.b16 %v2528, %v2528
      %v2719 = vpack.c.b16 %v2529, %v2529
      %v2720 = vpack.c.b16 %v2530, %v2530
      %v2721 = vpack.c.b16 %v2531, %v2531
      %v2722 = vpack.c.b16 %v2532, %v2532
      %v2723 = vpack.c.b16 %v2533, %v2533
      %v2724 = vpack.c.b16 %v2534, %v2534
      %v2725 = vpack.c.b16 %v2535, %v2535
      %v2726 = vpack.c.b16 %v2536, %v2536
      %v2727 = vpack.c.b16 %v2537, %v2537
      %v2728 = vpack.c.b16 %v2538, %v2538
      %v2729 = vpack.c.b16 %v2539, %v2539
      %v2730 = vpack.c.b16 %v2540, %v2540
      %v2731 = vpack.c.b16 %v2541, %v2541
      %2922 = vst [vmem:[%s172] sm:$0xf] %v2542
      %2923 = vst [vmem:[%s172 + $0x4] sm:$0xf] %v2543
      %2924 = vst [vmem:[%s172 + $0x8] sm:$0xf] %v2544
      %2925 = vst [vmem:[%s172 + $0xc] sm:$0xf] %v2545
      %2926 = vst [vmem:[%s172 + $0x10] sm:$0xf] %v2546
      %2927 = vst [vmem:[%s172 + $0x14] sm:$0xf] %v2547
      %2928 = vst [vmem:[%s172 + $0x18] sm:$0xf] %v2548
      %2929 = vst [vmem:[%s172 + $0x1c] sm:$0xf] %v2549
      %2930 = vst [vmem:[%s172 + $0x20] sm:$0xf] %v2550
      %2931 = vst [vmem:[%s172 + $0x24] sm:$0xf] %v2551
      %2932 = vst [vmem:[%s172 + $0x28] sm:$0xf] %v2552
      %2933 = vst [vmem:[%s172 + $0x2c] sm:$0xf] %v2553
      %2934 = vst [vmem:[%s172 + $0x30] sm:$0xf] %v2554
      %2935 = vst [vmem:[%s172 + $0x34] sm:$0xf] %v2555
      %2936 = vst [vmem:[%s172 + $0x38] sm:$0xf] %v2556
      %2937 = vst [vmem:[%s172 + $0x3c] sm:$0xf] %v2557
      %2938 = vst [vmem:[%s172 + $0x40] sm:$0xf] %v2558
      %2939 = vst [vmem:[%s172 + $0x44] sm:$0xf] %v2559
      %2940 = vst [vmem:[%s172 + $0x48] sm:$0xf] %v2560
      %2941 = vst [vmem:[%s172 + $0x4c] sm:$0xf] %v2561
      %2942 = vst [vmem:[%s172 + $0x50] sm:$0xf] %v2562
      %2943 = vst [vmem:[%s172 + $0x54] sm:$0xf] %v2563
      %2944 = vst [vmem:[%s172 + $0x58] sm:$0xf] %v2564
      %2945 = vst [vmem:[%s172 + $0x5c] sm:$0xf] %v2565
      %2946 = vst [vmem:[%s172 + $0x60] sm:$0xf] %v2566
      %2947 = vst [vmem:[%s172 + $0x64] sm:$0xf] %v2567
      %2948 = vst [vmem:[%s172 + $0x68] sm:$0xf] %v2568
      %2949 = vst [vmem:[%s172 + $0x6c] sm:$0xf] %v2569
      %2950 = vst [vmem:[%s172 + $0x70] sm:$0xf] %v2570
      %2951 = vst [vmem:[%s172 + $0x74] sm:$0xf] %v2571
      %2952 = vst [vmem:[%s172 + $0x78] sm:$0xf] %v2572
      %2953 = vst [vmem:[%s172 + $0x7c] sm:$0xf] %v2573
      %2954 = vst [vmem:[%s172 + $0x80] sm:$0xf] %v2574
      %2955 = vst [vmem:[%s172 + $0x84] sm:$0xf] %v2575
      %2956 = vst [vmem:[%s172 + $0x88] sm:$0xf] %v2576
      %2957 = vst [vmem:[%s172 + $0x8c] sm:$0xf] %v2577
      %2958 = vst [vmem:[%s172 + $0x90] sm:$0xf] %v2578
      %2959 = vst [vmem:[%s172 + $0x94] sm:$0xf] %v2579
      %2960 = vst [vmem:[%s172 + $0x98] sm:$0xf] %v2580
      %2961 = vst [vmem:[%s172 + $0x9c] sm:$0xf] %v2581
      %2962 = vst [vmem:[%s172 + $0xa0] sm:$0xf] %v2582
      %2963 = vst [vmem:[%s172 + $0xa4] sm:$0xf] %v2583
      %2964 = vst [vmem:[%s172 + $0xa8] sm:$0xf] %v2584
      %2965 = vst [vmem:[%s172 + $0xac] sm:$0xf] %v2585
      %2966 = vst [vmem:[%s172 + $0xb0] sm:$0xf] %v2586
      %2967 = vst [vmem:[%s172 + $0xb4] sm:$0xf] %v2587
      %2968 = vst [vmem:[%s172 + $0xb8] sm:$0xf] %v2588
      %2969 = vst [vmem:[%s172 + $0xbc] sm:$0xf] %v2589
      %2970 = vst [vmem:[%s172 + $0xc0] sm:$0xf] %v2590
      %2971 = vst [vmem:[%s172 + $0xc4] sm:$0xf] %v2591
      %2972 = vst [vmem:[%s172 + $0xc8] sm:$0xf] %v2592
      %2973 = vst [vmem:[%s172 + $0xcc] sm:$0xf] %v2593
      %2974 = vst [vmem:[%s172 + $0xd0] sm:$0xf] %v2594
      %2975 = vst [vmem:[%s172 + $0xd4] sm:$0xf] %v2595
      %2976 = vst [vmem:[%s172 + $0xd8] sm:$0xf] %v2596
      %2977 = vst [vmem:[%s172 + $0xdc] sm:$0xf] %v2597
      %2978 = vst [vmem:[%s172 + $0xe0] sm:$0xf] %v2598
      %2979 = vst [vmem:[%s172 + $0xe4] sm:$0xf] %v2599
      %2980 = vst [vmem:[%s172 + $0xe8] sm:$0xf] %v2600
      %2981 = vst [vmem:[%s172 + $0xec] sm:$0xf] %v2601
      %2982 = vst [vmem:[%s172 + $0xf0] sm:$0xf] %v2602
      %2983 = vst [vmem:[%s172 + $0xf4] sm:$0xf] %v2603
      %2984 = vst [vmem:[%s172 + $0xf8] sm:$0xf] %v2604
      %2985 = vst [vmem:[%s172 + $0xfc] sm:$0xf] %v2605
      %2986 = vst [vmem:[%s172 + $0x100] sm:$0xf] %v2606
      %2987 = vst [vmem:[%s172 + $0x104] sm:$0xf] %v2607
      %2988 = vst [vmem:[%s172 + $0x108] sm:$0xf] %v2608
      %2989 = vst [vmem:[%s172 + $0x10c] sm:$0xf] %v2609
      %2990 = vst [vmem:[%s172 + $0x110] sm:$0xf] %v2610
      %2991 = vst [vmem:[%s172 + $0x114] sm:$0xf] %v2611
      %2992 = vst [vmem:[%s172 + $0x118] sm:$0xf] %v2612
      %2993 = vst [vmem:[%s172 + $0x11c] sm:$0xf] %v2613
      %2994 = vst [vmem:[%s172 + $0x120] sm:$0xf] %v2614
      %2995 = vst [vmem:[%s172 + $0x124] sm:$0xf] %v2615
      %2996 = vst [vmem:[%s172 + $0x128] sm:$0xf] %v2616
      %2997 = vst [vmem:[%s172 + $0x12c] sm:$0xf] %v2617
      %2998 = vst [vmem:[%s172 + $0x130] sm:$0xf] %v2618
      %2999 = vst [vmem:[%s172 + $0x134] sm:$0xf] %v2619
      %3000 = vst [vmem:[%s172 + $0x138] sm:$0xf] %v2620
      %3001 = vst [vmem:[%s172 + $0x13c] sm:$0xf] %v2621
      %3002 = vst [vmem:[%s172 + $0x140] sm:$0xf] %v2622
      %3003 = vst [vmem:[%s172 + $0x144] sm:$0xf] %v2623
      %3004 = vst [vmem:[%s172 + $0x148] sm:$0xf] %v2624
      %3005 = vst [vmem:[%s172 + $0x14c] sm:$0xf] %v2625
      %3006 = vst [vmem:[%s172 + $0x150] sm:$0xf] %v2626
      %3007 = vst [vmem:[%s172 + $0x154] sm:$0xf] %v2627
      %3008 = vst [vmem:[%s172 + $0x158] sm:$0xf] %v2628
      %3009 = vst [vmem:[%s172 + $0x15c] sm:$0xf] %v2629
      %3010 = vst [vmem:[%s172 + $0x160] sm:$0xf] %v2630
      %3011 = vst [vmem:[%s172 + $0x164] sm:$0xf] %v2631
      %3012 = vst [vmem:[%s172 + $0x168] sm:$0xf] %v2632
      %3013 = vst [vmem:[%s172 + $0x16c] sm:$0xf] %v2633
      %3014 = vst [vmem:[%s172 + $0x170] sm:$0xf] %v2634
      %3015 = vst [vmem:[%s172 + $0x174] sm:$0xf] %v2635
      %3016 = vst [vmem:[%s172 + $0x178] sm:$0xf] %v2636
      %3017 = vst [vmem:[%s172 + $0x17c] sm:$0xf] %v2637
      %3018 = vst [vmem:[%s172 + $0x180] sm:$0xf] %v2638
      %3019 = vst [vmem:[%s172 + $0x184] sm:$0xf] %v2639
      %3020 = vst [vmem:[%s172 + $0x188] sm:$0xf] %v2640
      %3021 = vst [vmem:[%s172 + $0x18c] sm:$0xf] %v2641
      %3022 = vst [vmem:[%s172 + $0x190] sm:$0xf] %v2642
      %3023 = vst [vmem:[%s172 + $0x194] sm:$0xf] %v2643
      %3024 = vst [vmem:[%s172 + $0x198] sm:$0xf] %v2644
      %3025 = vst [vmem:[%s172 + $0x19c] sm:$0xf] %v2645
      %3026 = vst [vmem:[%s172 + $0x1a0] sm:$0xf] %v2646
      %3027 = vst [vmem:[%s172 + $0x1a4] sm:$0xf] %v2647
      %3028 = vst [vmem:[%s172 + $0x1a8] sm:$0xf] %v2648
      %3029 = vst [vmem:[%s172 + $0x1ac] sm:$0xf] %v2649
      %3030 = vst [vmem:[%s172 + $0x1b0] sm:$0xf] %v2650
      %3031 = vst [vmem:[%s172 + $0x1b4] sm:$0xf] %v2651
      %3032 = vst [vmem:[%s172 + $0x1b8] sm:$0xf] %v2652
      %3033 = vst [vmem:[%s172 + $0x1bc] sm:$0xf] %v2653
      %3034 = vst [vmem:[%s172 + $0x1c0] sm:$0xf] %v2654
      %3035 = vst [vmem:[%s172 + $0x1c4] sm:$0xf] %v2655
      %3036 = vst [vmem:[%s172 + $0x1c8] sm:$0xf] %v2656
      %3037 = vst [vmem:[%s172 + $0x1cc] sm:$0xf] %v2657
      %3038 = vst [vmem:[%s172 + $0x1d0] sm:$0xf] %v2658
      %3039 = vst [vmem:[%s172 + $0x1d4] sm:$0xf] %v2659
      %3040 = vst [vmem:[%s172 + $0x1d8] sm:$0xf] %v2660
      %3041 = vst [vmem:[%s172 + $0x1dc] sm:$0xf] %v2661
      %3042 = vst [vmem:[%s172 + $0x1e0] sm:$0xf] %v2662
      %3043 = vst [vmem:[%s172 + $0x1e4] sm:$0xf] %v2663
      %3044 = vst [vmem:[%s172 + $0x1e8] sm:$0xf] %v2664
      %3045 = vst [vmem:[%s172 + $0x1ec] sm:$0xf] %v2665
      %3046 = vst [vmem:[%s172 + $0x1f0] sm:$0xf] %v2666
      %3047 = vst [vmem:[%s172 + $0x1f4] sm:$0xf] %v2667
      %3048 = vst [vmem:[%s172 + $0x1f8] sm:$0xf] %v2668
      %3049 = vst [vmem:[%s172 + $0x1fc] sm:$0xf] %v2669
      %3050 = vst [vmem:[%s172 + $0x200] sm:$0xf] %v2670
      %3051 = vst [vmem:[%s172 + $0x204] sm:$0xf] %v2671
      %3052 = vst [vmem:[%s172 + $0x208] sm:$0xf] %v2672
      %3053 = vst [vmem:[%s172 + $0x20c] sm:$0xf] %v2673
      %3054 = vst [vmem:[%s172 + $0x210] sm:$0xf] %v2674
      %3055 = vst [vmem:[%s172 + $0x214] sm:$0xf] %v2675
      %3056 = vst [vmem:[%s172 + $0x218] sm:$0xf] %v2676
      %3057 = vst [vmem:[%s172 + $0x21c] sm:$0xf] %v2677
      %3058 = vst [vmem:[%s172 + $0x220] sm:$0xf] %v2678
      %3059 = vst [vmem:[%s172 + $0x224] sm:$0xf] %v2679
      %3060 = vst [vmem:[%s172 + $0x228] sm:$0xf] %v2680
      %3061 = vst [vmem:[%s172 + $0x22c] sm:$0xf] %v2681
      %3062 = vst [vmem:[%s172 + $0x230] sm:$0xf] %v2682
      %3063 = vst [vmem:[%s172 + $0x234] sm:$0xf] %v2683
      %3064 = vst [vmem:[%s172 + $0x238] sm:$0xf] %v2684
      %3065 = vst [vmem:[%s172 + $0x23c] sm:$0xf] %v2685
      %3066 = vst [vmem:[%s172 + $0x240] sm:$0xf] %v2686
      %3067 = vst [vmem:[%s172 + $0x244] sm:$0xf] %v2687
      %3068 = vst [vmem:[%s172 + $0x248] sm:$0xf] %v2688
      %3069 = vst [vmem:[%s172 + $0x24c] sm:$0xf] %v2689
      %3070 = vst [vmem:[%s172 + $0x250] sm:$0xf] %v2690
      %3071 = vst [vmem:[%s172 + $0x254] sm:$0xf] %v2691
      %3072 = vst [vmem:[%s172 + $0x258] sm:$0xf] %v2692
      %3073 = vst [vmem:[%s172 + $0x25c] sm:$0xf] %v2693
      %3074 = vst [vmem:[%s172 + $0x260] sm:$0xf] %v2694
      %3075 = vst [vmem:[%s172 + $0x264] sm:$0xf] %v2695
      %3076 = vst [vmem:[%s172 + $0x268] sm:$0xf] %v2696
      %3077 = vst [vmem:[%s172 + $0x26c] sm:$0xf] %v2697
      %3078 = vst [vmem:[%s172 + $0x270] sm:$0xf] %v2698
      %3079 = vst [vmem:[%s172 + $0x274] sm:$0xf] %v2699
      %3080 = vst [vmem:[%s172 + $0x278] sm:$0xf] %v2700
      %3081 = vst [vmem:[%s172 + $0x27c] sm:$0xf] %v2701
      %3082 = vst [vmem:[%s172 + $0x280] sm:$0xf] %v2702
      %3083 = vst [vmem:[%s172 + $0x284] sm:$0xf] %v2703
      %3084 = vst [vmem:[%s172 + $0x288] sm:$0xf] %v2704
      %3085 = vst [vmem:[%s172 + $0x28c] sm:$0xf] %v2705
      %3086 = vst [vmem:[%s172 + $0x290] sm:$0xf] %v2706
      %3087 = vst [vmem:[%s172 + $0x294] sm:$0xf] %v2707
      %3088 = vst [vmem:[%s172 + $0x298] sm:$0xf] %v2708
      %3089 = vst [vmem:[%s172 + $0x29c] sm:$0xf] %v2709
      %3090 = vst [vmem:[%s172 + $0x2a0] sm:$0xf] %v2710
      %3091 = vst [vmem:[%s172 + $0x2a4] sm:$0xf] %v2711
      %3092 = vst [vmem:[%s172 + $0x2a8] sm:$0xf] %v2712
      %3093 = vst [vmem:[%s172 + $0x2ac] sm:$0xf] %v2713
      %3094 = vst [vmem:[%s172 + $0x2b0] sm:$0xf] %v2714
      %3095 = vst [vmem:[%s172 + $0x2b4] sm:$0xf] %v2715
      %3096 = vst [vmem:[%s172 + $0x2b8] sm:$0xf] %v2716
      %3097 = vst [vmem:[%s172 + $0x2bc] sm:$0xf] %v2717
      %3098 = vst [vmem:[%s172 + $0x2c0] sm:$0xf] %v2718
      %3099 = vst [vmem:[%s172 + $0x2c4] sm:$0xf] %v2719
      %3100 = vst [vmem:[%s172 + $0x2c8] sm:$0xf] %v2720
      %3101 = vst [vmem:[%s172 + $0x2cc] sm:$0xf] %v2721
      %3102 = vst [vmem:[%s172 + $0x2d0] sm:$0xf] %v2722
      %3103 = vst [vmem:[%s172 + $0x2d4] sm:$0xf] %v2723
      %3104 = vst [vmem:[%s172 + $0x2d8] sm:$0xf] %v2724
      %3105 = vst [vmem:[%s172 + $0x2dc] sm:$0xf] %v2725
      %3106 = vst [vmem:[%s172 + $0x2e0] sm:$0xf] %v2726
      %3107 = vst [vmem:[%s172 + $0x2e4] sm:$0xf] %v2727
      %3108 = vst [vmem:[%s172 + $0x2e8] sm:$0xf] %v2728
      %3109 = vst [vmem:[%s172 + $0x2ec] sm:$0xf] %v2729
      %3110 = vst [vmem:[%s172 + $0x2f0] sm:$0xf] %v2730
      %3111 = vst [vmem:[%s172 + $0x2f4] sm:$0xf] %v2731
      %s3112 = smul.u32 190, %s14
      %p3113 = scmp.lt.s32.totalorder %s3112, 759
      %s3114 = scalar_select %p3113, %s3112, 759
      %s3115 = smul.addr %s3114, 4
      %s3116 = scalar_lea.vmem %s3, %s3115
      // Predicated region
      $region33: #{pilotnet_forward.6} parent=31 // pred_check
        %p3117 = pneg %p100
      $region34: #{pilotnet_forward.6} parent=31 // pred_check_branch
        %3119 = sbr.rel (%p3117) target = $region36
      $region35: #{pilotnet_forward.6} parent=31 // pred_region
        %s3120 = smul.u32 190, %s14
      $region36: #{pilotnet_forward.6} parent=31 // pred_fallthru
        _
    $region32: #{pilotnet_forward.6} parent=5 // pred_fallthru
      _
    %p3121 = scmp.le.s32.totalorder 2, %s9
    // Predicated region
    $region37: #{pilotnet_forward.6} parent=5 // pred_check
      %p3122 = pneg %p3121
    $region38: #{pilotnet_forward.6} parent=5 // pred_check_branch
      %3124 = sbr.rel (%p3122) target = $region40
    $region39: #{pilotnet_forward.6} parent=5 // pred_region
      %s3125 = ssub.s32 %s9, 2
      // Predicated region
      $region41: #{pilotnet_forward.6} parent=39 // pred_check
        %p3126 = pneg %p106
      $region42: #{pilotnet_forward.6} parent=39 // pred_check_branch
        %3128 = sbr.rel (%p3126) target = $region44
      $region43: #{pilotnet_forward.6} parent=39 // pred_region
        %s3129 = smul.u32 190, %s15
        %p3130 = scmp.lt.s32.totalorder %s3129, 759
        %s3131 = scalar_select %p3130, %s3129, 759
        %s3132 = smul.addr %s3131, 4
        %s3133 = scalar_lea.vmem %s3, %s3132
      $region44: #{pilotnet_forward.6} parent=39 // pred_fallthru
        _
    $region40: #{pilotnet_forward.6} parent=5 // pred_fallthru
      _
  $region6: #{pilotnet_forward.6} parent=0 // loop_footer
    %s13 = sadd.s32 1, %s9
  $region7: #{pilotnet_forward.6} parent=0 // loop_footer_branch
    %8 = sbr.rel target = $region3
  $region8: #{pilotnet_forward.6} parent=0 // loop_exit
    _

// kernel: pilotnet_forward.7
$region0: #{pilotnet_forward.7}
  #allocation0 [shape = 'u32[]', space=smem, size = 0x4, offset = 0x4, fixed_abs, tag = 'smem constant byte address 0x4 - core index']
  #allocation1 [shape = 'u32[144,128]{1,0:T(1,128)}', space=vmem, size = 0x12000, scoped, tag = 'internal scratch']
  %s0 = inlined_call_operand.vmem [shape: bf16[1316,600], index: 0, kind: input, shape index: {}]
  %s1 = inlined_call_operand.vmem [shape: bf16[600,128], index: 1, kind: input, shape index: {}]
  %s2 = inlined_call_operand.vmem [shape: f32[1,128], index: 2, kind: input, shape index: {}]
  %s3 = inlined_call_operand.vmem [shape: bf16[1316,128], index: 3, kind: output, shape index: {}]
  %s4 = sld [smem:[#allocation0]]
  $region89: #{pilotnet_forward.7} parent=0
    _
  %s6 = ssub.s32 1, %s4
  %s7 = scalar_select 0, %s6, %s4
  $region1: #{pilotnet_forward.7} parent=0
    #allocation2 [shape = 'u8[339968]{0}', space=vmem, size = 0x53000, scoped, tag = 'output window, operand 0']
    loop: start=0, step=1, limit=4
    $region2: #{pilotnet_forward.7} parent=1 // loop_pre_header
      _
    $region3: #{pilotnet_forward.7} parent=1 // loop_header
      %s9 = sphi 0, %s13
      %p10 = scmp.ge.s32.totalorder %s9, 4
      %s19 = sphi 0, %s21
      %s22 = sphi 0, %s19
      %s23 = sphi 0, %s22
      %s39 = sphi 0, %s23
      %s43 = sphi 0, %s43
      %s45 = sphi 0, %s43
      %s46 = sphi 0, %s45
      %s60 = sphi 0, %s46
      %s64 = sphi 0, %s64
      %s66 = sphi 0, %s64
      %s67 = sphi 0, %s66
      %s81 = sphi 0, %s67
      %s87 = sphi 0, %s89
      %s90 = sphi 0, %s87
      %s91 = sphi 0, %s90
      %s107 = sphi 0, %s91
    $region4: #{pilotnet_forward.7} parent=1 // loop_header_branch
      %12 = sbr.rel (%p10) target = $region8
    $region5: #{pilotnet_forward.7} parent=1 // loop_body
      %s14 = ssub.s32 %s9, 1
      %s15 = ssub.s32 %s9, 2
      %s16 = sadd.s32 %s9, 1
      %s17 = ssub.s32 %s9, %s16
      %p18 = scmp.eq.s32.totalorder %s17, 0
      %s20 = sadd.s32 %s19, 1
      %s21 = scalar_select %p18, %s19, %s20
      %p24 = pneg %p18
      %p25 = scmp.eq.s32.totalorder %s9, 1
      %p26 = por %p24, %p25
      %p27 = scmp.ne.s32.totalorder %s19, %s22
      %p28 = scmp.eq.s32.totalorder %s9, 0
      %p29 = por %p27, %p28
      %p30 = scmp.ne.s32.totalorder %s19, %s22
      %p31 = scmp.eq.s32.totalorder %s14, 1
      %p32 = por %p30, %p31
      %p33 = scmp.ne.s32.totalorder %s22, %s23
      %p34 = scmp.eq.s32.totalorder %s14, 0
      %p35 = por %p33, %p34
      %p36 = scmp.ne.s32.totalorder %s22, %s23
      %p37 = scmp.eq.s32.totalorder %s15, 1
      %p38 = por %p36, %p37
      %p40 = scmp.ne.s32.totalorder %s23, %s39
      %p41 = scmp.eq.s32.totalorder %s15, 0
      %p42 = por %p40, %p41
      %s44 = sadd.s32 %s43, 1
      %p47 = scmp.eq.s32.totalorder %s9, 1
      %p48 = scmp.ne.s32.totalorder %s43, %s45
      %p49 = scmp.eq.s32.totalorder %s9, 0
      %p50 = por %p48, %p49
      %p51 = scmp.ne.s32.totalorder %s43, %s45
      %p52 = scmp.eq.s32.totalorder %s14, 1
      %p53 = por %p51, %p52
      %p54 = scmp.ne.s32.totalorder %s45, %s46
      %p55 = scmp.eq.s32.totalorder %s14, 0
      %p56 = por %p54, %p55
      %p57 = scmp.ne.s32.totalorder %s45, %s46
      %p58 = scmp.eq.s32.totalorder %s15, 1
      %p59 = por %p57, %p58
      %p61 = scmp.ne.s32.totalorder %s46, %s60
      %p62 = scmp.eq.s32.totalorder %s15, 0
      %p63 = por %p61, %p62
      %s65 = sadd.s32 %s64, 1
      %p68 = scmp.eq.s32.totalorder %s9, 1
      %p69 = scmp.ne.s32.totalorder %s64, %s66
      %p70 = scmp.eq.s32.totalorder %s9, 0
      %p71 = por %p69, %p70
      %p72 = scmp.ne.s32.totalorder %s64, %s66
      %p73 = scmp.eq.s32.totalorder %s14, 1
      %p74 = por %p72, %p73
      %p75 = scmp.ne.s32.totalorder %s66, %s67
      %p76 = scmp.eq.s32.totalorder %s14, 0
      %p77 = por %p75, %p76
      %p78 = scmp.ne.s32.totalorder %s66, %s67
      %p79 = scmp.eq.s32.totalorder %s15, 1
      %p80 = por %p78, %p79
      %p82 = scmp.ne.s32.totalorder %s67, %s81
      %p83 = scmp.eq.s32.totalorder %s15, 0
      %p84 = por %p82, %p83
      %s85 = ssub.s32 %s9, %s16
      %p86 = scmp.eq.s32.totalorder %s85, 0
      %s88 = sadd.s32 %s87, 1
      %s89 = scalar_select %p86, %s87, %s88
      %p92 = pneg %p86
      %p93 = scmp.eq.s32.totalorder %s9, 1
      %p94 = por %p92, %p93
      %p95 = scmp.ne.s32.totalorder %s87, %s90
      %p96 = scmp.eq.s32.totalorder %s9, 0
      %p97 = por %p95, %p96
      %p98 = scmp.ne.s32.totalorder %s87, %s90
      %p99 = scmp.eq.s32.totalorder %s14, 1
      %p100 = por %p98, %p99
      %p101 = scmp.ne.s32.totalorder %s90, %s91
      %p102 = scmp.eq.s32.totalorder %s14, 0
      %p103 = por %p101, %p102
      %p104 = scmp.ne.s32.totalorder %s90, %s91
      %p105 = scmp.eq.s32.totalorder %s15, 1
      %p106 = por %p104, %p105
      %p108 = scmp.ne.s32.totalorder %s91, %s107
      %p109 = scmp.eq.s32.totalorder %s15, 0
      %p110 = por %p108, %p109
      %p111 = scmp.le.s32.totalorder 1, %s9
      %p112 = scmp.lt.s32.totalorder %s9, 3
      %p113 = pnand %p111, %p112
      %p114 = pneg %p113
      // Predicated region
      $region9: #{pilotnet_forward.7} parent=5 // pred_check
        _
      $region10: #{pilotnet_forward.7} parent=5 // pred_check_branch
        %116 = sbr.rel (%p113) target = $region12
      $region11: #{pilotnet_forward.7} parent=5 // pred_region
        %s117 = ssub.s32 %s9, 1
        // Predicated region
        $region13: #{pilotnet_forward.7} parent=11 // pred_check
          %p118 = pneg %p56
        $region14: #{pilotnet_forward.7} parent=11 // pred_check_branch
          %120 = sbr.rel (%p118) target = $region16
        $region15: #{pilotnet_forward.7} parent=11 // pred_region
          _
        $region16: #{pilotnet_forward.7} parent=11 // pred_fallthru
          _
        // Predicated region
        $region17: #{pilotnet_forward.7} parent=11 // pred_check
          %p121 = pneg %p77
        $region18: #{pilotnet_forward.7} parent=11 // pred_check_branch
          %123 = sbr.rel (%p121) target = $region20
        $region19: #{pilotnet_forward.7} parent=11 // pred_region
          _
        $region20: #{pilotnet_forward.7} parent=11 // pred_fallthru
          _
      $region12: #{pilotnet_forward.7} parent=5 // pred_fallthru
        _
      %p124 = scmp.lt.s32.totalorder %s9, 2
      // Predicated region
      $region21: #{pilotnet_forward.7} parent=5 // pred_check
        %p125 = pneg %p124
      $region22: #{pilotnet_forward.7} parent=5 // pred_check_branch
        %127 = sbr.rel (%p125) target = $region24
      $region23: #{pilotnet_forward.7} parent=5 // pred_region
        // Predicated region
        $region25: #{pilotnet_forward.7} parent=23 // pred_check
          %p128 = pneg %p29
        $region26: #{pilotnet_forward.7} parent=23 // pred_check_branch
          %130 = sbr.rel (%p128) target = $region28
        $region27: #{pilotnet_forward.7} parent=23 // pred_region
          %s131 = smul.u32 83, %s9
          %s132 = ssub.s32 165, %s131
          %p133 = scmp.lt.s32.totalorder %s132, 83
          %s134 = scalar_select %p133, %s132, 83
          %s135 = smul.u32 64, %s134
          %s136 = smul.u32 %s135, 5
          %p137 = scmp.lt.s32.totalorder %s131, 164
          %s138 = scalar_select %p137, %s131, 164
          %s139 = smul.addr %s138, 5
          %s140 = smul.addr %s139, 4
          %s141 = scalar_lea.vmem %s0, %s140
          %s142 = smul.u32 83, %s9
          %s143 = ssub.s32 165, %s142
          %p144 = scmp.lt.s32.totalorder %s143, 83
          %s145 = scalar_select %p144, %s143, 83
          %s146 = smul.u32 64, %s145
          %s147 = smul.u32 %s146, 5
        $region28: #{pilotnet_forward.7} parent=23 // pred_fallthru
          _
      $region24: #{pilotnet_forward.7} parent=5 // pred_fallthru
        _
      %p148 = scmp.le.s32.totalorder 1, %s9
      %p149 = scmp.lt.s32.totalorder %s9, 3
      %p150 = pnand %p148, %p149
      %p151 = pneg %p150
      // Predicated region
      $region29: #{pilotnet_forward.7} parent=5 // pred_check
        _
      $region30: #{pilotnet_forward.7} parent=5 // pred_check_branch
        %153 = sbr.rel (%p150) target = $region32
      $region31: #{pilotnet_forward.7} parent=5 // pred_region
        %s154 = ssub.s32 %s9, 1
        %s155 = smul.u32 83, %s14
        %s156 = ssub.s32 165, %s155
        %p157 = scmp.lt.s32.totalorder %s156, 83
        %s158 = scalar_select %p157, %s156, 83
        %s159 = smul.u32 64, %s158
        %s160 = smul.u32 %s159, 5
        %p161 = scmp.lt.s32.totalorder %s155, 164
        %s162 = scalar_select %p161, %s155, 164
        %s163 = smul.addr %s162, 5
        %s164 = smul.addr %s163, 4
        %s165 = scalar_lea.vmem %s0, %s164
        %p166 = pneg %p35
        %p167 = pneg %p32
        %p168 = pneg %p56
        %p169 = pneg %p53
        %p170 = pneg %p77
        %p171 = pneg %p74
        %p172 = pneg %p103
        %p173 = pneg %p100
        %s174 = sand.u32 %s90, 1
        %s175 = sand.u32 %s90, 1
        %s176 = smul.addr %s175, 332
        %s177 = scalar_lea.vmem [#allocation2], %s176
        %s178 = smul.u32 83, %s14
        %s179 = ssub.s32 165, %s178
        %p180 = scmp.lt.s32.totalorder %s179, 83
        %s181 = scalar_select %p180, %s179, 83
        %s182 = smul.u32 64, %s181
        %s183 = smul.u32 %s182, 5
        %p184 = scmp.lt.s32.totalorder %s178, 164
        %s185 = scalar_select %p184, %s178, 164
        %s186 = smul.addr %s185, 5
        %s187 = smul.addr %s186, 4
        %s188 = scalar_lea.vmem %s0, %s187
        %s189 = smul.u32 83, %s14
        %s190 = ssub.s32 165, %s189
        %p191 = scmp.lt.s32.totalorder %s190, 83
        %s192 = scalar_select %p191, %s190, 83
        %s193 = smul.u32 64, %s192
        %s194 = smul.u32 %s193, 5
        %s195 = smul.u32 83, %s14
        %s196 = ssub.s32 165, %s195
        %p197 = scmp.lt.s32.totalorder %s196, 83
        %s198 = scalar_select %p197, %s196, 83
        %s199 = smul.u32 64, %s198
        %v201 = vld [vmem:[%s188] sm:$0xff]
        %v202 = vld [vmem:[%s188 + $0x8] sm:$0xff]
        %v203 = vld [vmem:[%s188 + $0x10] sm:$0xf]
        %v204 = vld [vmem:[%s188 + $0x14] sm:$0xff]
        %v205 = vld [vmem:[%s188 + $0x1c] sm:$0xff]
        %v206 = vld [vmem:[%s188 + $0x24] sm:$0xf]
        %v207 = vld [vmem:[%s188 + $0x28] sm:$0xff]
        %v208 = vld [vmem:[%s188 + $0x30] sm:$0xff]
        %v209 = vld [vmem:[%s188 + $0x38] sm:$0xf]
        %v210 = vld [vmem:[%s188 + $0x3c] sm:$0xff]
        %v211 = vld [vmem:[%s188 + $0x44] sm:$0xff]
        %v212 = vld [vmem:[%s188 + $0x4c] sm:$0xf]
        %v213 = vld [vmem:[%s188 + $0x50] sm:$0xff]
        %v214 = vld [vmem:[%s188 + $0x58] sm:$0xff]
        %v215 = vld [vmem:[%s188 + $0x60] sm:$0xf]
        %v216 = vld [vmem:[%s188 + $0x64] sm:$0xff]
        %v217 = vld [vmem:[%s188 + $0x6c] sm:$0xff]
        %v218 = vld [vmem:[%s188 + $0x74] sm:$0xf]
        %v219 = vld [vmem:[%s188 + $0x78] sm:$0xff]
        %v220 = vld [vmem:[%s188 + $0x80] sm:$0xff]
        %v221 = vld [vmem:[%s188 + $0x88] sm:$0xf]
        %v222 = vld [vmem:[%s188 + $0x8c] sm:$0xff]
        %v223 = vld [vmem:[%s188 + $0x94] sm:$0xff]
        %v224 = vld [vmem:[%s188 + $0x9c] sm:$0xf]
        %v225 = vld [vmem:[%s188 + $0xa0] sm:$0xff]
        %v226 = vld [vmem:[%s188 + $0xa8] sm:$0xff]
        %v227 = vld [vmem:[%s188 + $0xb0] sm:$0xf]
        %v228 = vld [vmem:[%s188 + $0xb4] sm:$0xff]
        %v229 = vld [vmem:[%s188 + $0xbc] sm:$0xff]
        %v230 = vld [vmem:[%s188 + $0xc4] sm:$0xf]
        %v231 = vld [vmem:[%s188 + $0xc8] sm:$0xff]
        %v232 = vld [vmem:[%s188 + $0xd0] sm:$0xff]
        %v233 = vld [vmem:[%s188 + $0xd8] sm:$0xf]
        %v234 = vld [vmem:[%s188 + $0xdc] sm:$0xff]
        %v235 = vld [vmem:[%s188 + $0xe4] sm:$0xff]
        %v236 = vld [vmem:[%s188 + $0xec] sm:$0xf]
        %v237 = vld [vmem:[%s188 + $0xf0] sm:$0xff]
        %v238 = vld [vmem:[%s188 + $0xf8] sm:$0xff]
        %v239 = vld [vmem:[%s188 + $0x100] sm:$0xf]
        %v240 = vld [vmem:[%s188 + $0x104] sm:$0xff]
        %v241 = vld [vmem:[%s188 + $0x10c] sm:$0xff]
        %v242 = vld [vmem:[%s188 + $0x114] sm:$0xf]
        %v243 = vld [vmem:[%s188 + $0x118] sm:$0xff]
        %v244 = vld [vmem:[%s188 + $0x120] sm:$0xff]
        %v245 = vld [vmem:[%s188 + $0x128] sm:$0xf]
        %v246 = vld [vmem:[%s188 + $0x12c] sm:$0xff]
        %v247 = vld [vmem:[%s188 + $0x134] sm:$0xff]
        %v248 = vld [vmem:[%s188 + $0x13c] sm:$0xf]
        %v249 = vld [vmem:[%s188 + $0x140] sm:$0xff]
        %v250 = vld [vmem:[%s188 + $0x148] sm:$0xff]
        %v251 = vld [vmem:[%s188 + $0x150] sm:$0xf]
        %v252 = vld [vmem:[%s188 + $0x154] sm:$0xff]
        %v253 = vld [vmem:[%s188 + $0x15c] sm:$0xff]
        %v254 = vld [vmem:[%s188 + $0x164] sm:$0xf]
        %v255 = vld [vmem:[%s188 + $0x168] sm:$0xff]
        %v256 = vld [vmem:[%s188 + $0x170] sm:$0xff]
        %v257 = vld [vmem:[%s188 + $0x178] sm:$0xf]
        %v258 = vld [vmem:[%s188 + $0x17c] sm:$0xff]
        %v259 = vld [vmem:[%s188 + $0x184] sm:$0xff]
        %v260 = vld [vmem:[%s188 + $0x18c] sm:$0xf]
        %v261 = vld [vmem:[%s188 + $0x190] sm:$0xff]
        %v262 = vld [vmem:[%s188 + $0x198] sm:$0xff]
        %v263 = vld [vmem:[%s188 + $0x1a0] sm:$0xf]
        %v264 = vld [vmem:[%s188 + $0x1a4] sm:$0xff]
        %v265 = vld [vmem:[%s188 + $0x1ac] sm:$0xff]
        %v266 = vld [vmem:[%s188 + $0x1b4] sm:$0xf]
        %v267 = vld [vmem:[%s188 + $0x1b8] sm:$0xff]
        %v268 = vld [vmem:[%s188 + $0x1c0] sm:$0xff]
        %v269 = vld [vmem:[%s188 + $0x1c8] sm:$0xf]
        %v270 = vld [vmem:[%s188 + $0x1cc] sm:$0xff]
        %v271 = vld [vmem:[%s188 + $0x1d4] sm:$0xff]
        %v272 = vld [vmem:[%s188 + $0x1dc] sm:$0xf]
        %v273 = vld [vmem:[%s188 + $0x1e0] sm:$0xff]
        %v274 = vld [vmem:[%s188 + $0x1e8] sm:$0xff]
        %v275 = vld [vmem:[%s188 + $0x1f0] sm:$0xf]
        %v276 = vld [vmem:[%s188 + $0x1f4] sm:$0xff]
        %v277 = vld [vmem:[%s188 + $0x1fc] sm:$0xff]
        %v278 = vld [vmem:[%s188 + $0x204] sm:$0xf]
        %v279 = vld [vmem:[%s188 + $0x208] sm:$0xff]
        %v280 = vld [vmem:[%s188 + $0x210] sm:$0xff]
        %v281 = vld [vmem:[%s188 + $0x218] sm:$0xf]
        %v282 = vld [vmem:[%s188 + $0x21c] sm:$0xff]
        %v283 = vld [vmem:[%s188 + $0x224] sm:$0xff]
        %v284 = vld [vmem:[%s188 + $0x22c] sm:$0xf]
        %v285 = vld [vmem:[%s188 + $0x230] sm:$0xff]
        %v286 = vld [vmem:[%s188 + $0x238] sm:$0xff]
        %v287 = vld [vmem:[%s188 + $0x240] sm:$0xf]
        %v288 = vld [vmem:[%s188 + $0x244] sm:$0xff]
        %v289 = vld [vmem:[%s188 + $0x24c] sm:$0xff]
        %v290 = vld [vmem:[%s188 + $0x254] sm:$0xf]
        %v291 = vld [vmem:[%s188 + $0x258] sm:$0xff]
        %v292 = vld [vmem:[%s188 + $0x260] sm:$0xff]
        %v293 = vld [vmem:[%s188 + $0x268] sm:$0xf]
        %v294 = vld [vmem:[%s188 + $0x26c] sm:$0xff]
        %v295 = vld [vmem:[%s188 + $0x274] sm:$0xff]
        %v296 = vld [vmem:[%s188 + $0x27c] sm:$0xf]
        %v297 = vld [vmem:[%s188 + $0x280] sm:$0xff]
        %v298 = vld [vmem:[%s188 + $0x288] sm:$0xff]
        %v299 = vld [vmem:[%s188 + $0x290] sm:$0xf]
        %v300 = vld [vmem:[%s188 + $0x294] sm:$0xff]
        %v301 = vld [vmem:[%s188 + $0x29c] sm:$0xff]
        %v302 = vld [vmem:[%s188 + $0x2a4] sm:$0xf]
        %v303 = vld [vmem:[%s188 + $0x2a8] sm:$0xff]
        %v304 = vld [vmem:[%s188 + $0x2b0] sm:$0xff]
        %v305 = vld [vmem:[%s188 + $0x2b8] sm:$0xf]
        %v306 = vld [vmem:[%s188 + $0x2bc] sm:$0xff]
        %v307 = vld [vmem:[%s188 + $0x2c4] sm:$0xff]
        %v308 = vld [vmem:[%s188 + $0x2cc] sm:$0xf]
        %v309 = vld [vmem:[%s188 + $0x2d0] sm:$0xff]
        %v310 = vld [vmem:[%s188 + $0x2d8] sm:$0xff]
        %v311 = vld [vmem:[%s188 + $0x2e0] sm:$0xf]
        %v312 = vld [vmem:[%s188 + $0x2e4] sm:$0xff]
        %v313 = vld [vmem:[%s188 + $0x2ec] sm:$0xff]
        %v314 = vld [vmem:[%s188 + $0x2f4] sm:$0xf]
        %v315 = vld [vmem:[%s188 + $0x2f8] sm:$0xff]
        %v316 = vld [vmem:[%s188 + $0x300] sm:$0xff]
        %v317 = vld [vmem:[%s188 + $0x308] sm:$0xf]
        %v318 = vld [vmem:[%s188 + $0x30c] sm:$0xff]
        %v319 = vld [vmem:[%s188 + $0x314] sm:$0xff]
        %v320 = vld [vmem:[%s188 + $0x31c] sm:$0xf]
        %v321 = vld [vmem:[%s188 + $0x320] sm:$0xff]
        %v322 = vld [vmem:[%s188 + $0x328] sm:$0xff]
        %v323 = vld [vmem:[%s188 + $0x330] sm:$0xf]
        %v324 = vld [vmem:[%s188 + $0x334] sm:$0xff]
        %v325 = vld [vmem:[%s188 + $0x33c] sm:$0xff]
        %v326 = vld [vmem:[%s188 + $0x344] sm:$0xf]
        %v327 = vld [vmem:[%s188 + $0x348] sm:$0xff]
        %v328 = vld [vmem:[%s188 + $0x350] sm:$0xff]
        %v329 = vld [vmem:[%s188 + $0x358] sm:$0xf]
        %v330 = vld [vmem:[%s188 + $0x35c] sm:$0xff]
        %v331 = vld [vmem:[%s188 + $0x364] sm:$0xff]
        %v332 = vld [vmem:[%s188 + $0x36c] sm:$0xf]
        %v333 = vld [vmem:[%s188 + $0x370] sm:$0xff]
        %v334 = vld [vmem:[%s188 + $0x378] sm:$0xff]
        %v335 = vld [vmem:[%s188 + $0x380] sm:$0xf]
        %v336 = vld [vmem:[%s188 + $0x384] sm:$0xff]
        %v337 = vld [vmem:[%s188 + $0x38c] sm:$0xff]
        %v338 = vld [vmem:[%s188 + $0x394] sm:$0xf]
        %v339 = vld [vmem:[%s188 + $0x398] sm:$0xff]
        %v340 = vld [vmem:[%s188 + $0x3a0] sm:$0xff]
        %v341 = vld [vmem:[%s188 + $0x3a8] sm:$0xf]
        %v342 = vld [vmem:[%s188 + $0x3ac] sm:$0xff]
        %v343 = vld [vmem:[%s188 + $0x3b4] sm:$0xff]
        %v344 = vld [vmem:[%s188 + $0x3bc] sm:$0xf]
        %v345 = vld [vmem:[%s188 + $0x3c0] sm:$0xff]
        %v346 = vld [vmem:[%s188 + $0x3c8] sm:$0xff]
        %v347 = vld [vmem:[%s188 + $0x3d0] sm:$0xf]
        %v348 = vld [vmem:[%s188 + $0x3d4] sm:$0xff]
        %v349 = vld [vmem:[%s188 + $0x3dc] sm:$0xff]
        %v350 = vld [vmem:[%s188 + $0x3e4] sm:$0xf]
        %v351 = vld [vmem:[%s188 + $0x3e8] sm:$0xff]
        %v352 = vld [vmem:[%s188 + $0x3f0] sm:$0xff]
        %v353 = vld [vmem:[%s188 + $0x3f8] sm:$0xf]
        %v354 = vld [vmem:[%s188 + $0x3fc] sm:$0xff]
        %v355 = vld [vmem:[%s188 + $0x404] sm:$0xff]
        %v356 = vld [vmem:[%s188 + $0x40c] sm:$0xf]
        %v357 = vld [vmem:[%s188 + $0x410] sm:$0xff]
        %v358 = vld [vmem:[%s188 + $0x418] sm:$0xff]
        %v359 = vld [vmem:[%s188 + $0x420] sm:$0xf]
        %v360 = vld [vmem:[%s188 + $0x424] sm:$0xff]
        %v361 = vld [vmem:[%s188 + $0x42c] sm:$0xff]
        %v362 = vld [vmem:[%s188 + $0x434] sm:$0xf]
        %v363 = vld [vmem:[%s188 + $0x438] sm:$0xff]
        %v364 = vld [vmem:[%s188 + $0x440] sm:$0xff]
        %v365 = vld [vmem:[%s188 + $0x448] sm:$0xf]
        %v366 = vld [vmem:[%s188 + $0x44c] sm:$0xff]
        %v367 = vld [vmem:[%s188 + $0x454] sm:$0xff]
        %v368 = vld [vmem:[%s188 + $0x45c] sm:$0xf]
        %v369 = vld [vmem:[%s188 + $0x460] sm:$0xff]
        %v370 = vld [vmem:[%s188 + $0x468] sm:$0xff]
        %v371 = vld [vmem:[%s188 + $0x470] sm:$0xf]
        %v372 = vld [vmem:[%s188 + $0x474] sm:$0xff]
        %v373 = vld [vmem:[%s188 + $0x47c] sm:$0xff]
        %v374 = vld [vmem:[%s188 + $0x484] sm:$0xf]
        %v375 = vld [vmem:[%s188 + $0x488] sm:$0xff]
        %v376 = vld [vmem:[%s188 + $0x490] sm:$0xff]
        %v377 = vld [vmem:[%s188 + $0x498] sm:$0xf]
        %v378 = vld [vmem:[%s188 + $0x49c] sm:$0xff]
        %v379 = vld [vmem:[%s188 + $0x4a4] sm:$0xff]
        %v380 = vld [vmem:[%s188 + $0x4ac] sm:$0xf]
        %v381 = vld [vmem:[%s188 + $0x4b0] sm:$0xff]
        %v382 = vld [vmem:[%s188 + $0x4b8] sm:$0xff]
        %v383 = vld [vmem:[%s188 + $0x4c0] sm:$0xf]
        %v384 = vld [vmem:[%s188 + $0x4c4] sm:$0xff]
        %v385 = vld [vmem:[%s188 + $0x4cc] sm:$0xff]
        %v386 = vld [vmem:[%s188 + $0x4d4] sm:$0xf]
        %v387 = vld [vmem:[%s188 + $0x4d8] sm:$0xff]
        %v388 = vld [vmem:[%s188 + $0x4e0] sm:$0xff]
        %v389 = vld [vmem:[%s188 + $0x4e8] sm:$0xf]
        %v390 = vld [vmem:[%s188 + $0x4ec] sm:$0xff]
        %v391 = vld [vmem:[%s188 + $0x4f4] sm:$0xff]
        %v392 = vld [vmem:[%s188 + $0x4fc] sm:$0xf]
        %v393 = vld [vmem:[%s188 + $0x500] sm:$0xff]
        %v394 = vld [vmem:[%s188 + $0x508] sm:$0xff]
        %v395 = vld [vmem:[%s188 + $0x510] sm:$0xf]
        %v396 = vld [vmem:[%s188 + $0x514] sm:$0xff]
        %v397 = vld [vmem:[%s188 + $0x51c] sm:$0xff]
        %v398 = vld [vmem:[%s188 + $0x524] sm:$0xf]
        %v399 = vld [vmem:[%s188 + $0x528] sm:$0xff]
        %v400 = vld [vmem:[%s188 + $0x530] sm:$0xff]
        %v401 = vld [vmem:[%s188 + $0x538] sm:$0xf]
        %v402 = vld [vmem:[%s188 + $0x53c] sm:$0xff]
        %v403 = vld [vmem:[%s188 + $0x544] sm:$0xff]
        %v404 = vld [vmem:[%s188 + $0x54c] sm:$0xf]
        %v405 = vld [vmem:[%s188 + $0x550] sm:$0xff]
        %v406 = vld [vmem:[%s188 + $0x558] sm:$0xff]
        %v407 = vld [vmem:[%s188 + $0x560] sm:$0xf]
        %v408 = vld [vmem:[%s188 + $0x564] sm:$0xff]
        %v409 = vld [vmem:[%s188 + $0x56c] sm:$0xff]
        %v410 = vld [vmem:[%s188 + $0x574] sm:$0xf]
        %v411 = vld [vmem:[%s188 + $0x578] sm:$0xff]
        %v412 = vld [vmem:[%s188 + $0x580] sm:$0xff]
        %v413 = vld [vmem:[%s188 + $0x588] sm:$0xf]
        %v414 = vld [vmem:[%s188 + $0x58c] sm:$0xff]
        %v415 = vld [vmem:[%s188 + $0x594] sm:$0xff]
        %v416 = vld [vmem:[%s188 + $0x59c] sm:$0xf]
        %v417 = vld [vmem:[%s188 + $0x5a0] sm:$0xff]
        %v418 = vld [vmem:[%s188 + $0x5a8] sm:$0xff]
        %v419 = vld [vmem:[%s188 + $0x5b0] sm:$0xf]
        %v420 = vld [vmem:[%s188 + $0x5b4] sm:$0xff]
        %v421 = vld [vmem:[%s188 + $0x5bc] sm:$0xff]
        %v422 = vld [vmem:[%s188 + $0x5c4] sm:$0xf]
        %v423 = vld [vmem:[%s188 + $0x5c8] sm:$0xff]
        %v424 = vld [vmem:[%s188 + $0x5d0] sm:$0xff]
        %v425 = vld [vmem:[%s188 + $0x5d8] sm:$0xf]
        %v426 = vld [vmem:[%s188 + $0x5dc] sm:$0xff]
        %v427 = vld [vmem:[%s188 + $0x5e4] sm:$0xff]
        %v428 = vld [vmem:[%s188 + $0x5ec] sm:$0xf]
        %v429 = vld [vmem:[%s188 + $0x5f0] sm:$0xff]
        %v430 = vld [vmem:[%s188 + $0x5f8] sm:$0xff]
        %v431 = vld [vmem:[%s188 + $0x600] sm:$0xf]
        %v432 = vld [vmem:[%s188 + $0x604] sm:$0xff]
        %v433 = vld [vmem:[%s188 + $0x60c] sm:$0xff]
        %v434 = vld [vmem:[%s188 + $0x614] sm:$0xf]
        %v435 = vld [vmem:[%s188 + $0x618] sm:$0xff]
        %v436 = vld [vmem:[%s188 + $0x620] sm:$0xff]
        %v437 = vld [vmem:[%s188 + $0x628] sm:$0xf]
        %v438 = vld [vmem:[%s188 + $0x62c] sm:$0xff]
        %v439 = vld [vmem:[%s188 + $0x634] sm:$0xff]
        %v440 = vld [vmem:[%s188 + $0x63c] sm:$0xf]
        %v441 = vld [vmem:[%s188 + $0x640] sm:$0xff]
        %v442 = vld [vmem:[%s188 + $0x648] sm:$0xff]
        %v443 = vld [vmem:[%s188 + $0x650] sm:$0xf]
        %v444 = vld [vmem:[%s188 + $0x654] sm:$0xff]
        %v445 = vld [vmem:[%s188 + $0x65c] sm:$0xff]
        %v446 = vld [vmem:[%s188 + $0x664] sm:$0xf]
        %v447 = vld [vmem:[%s188 + $0x668] sm:$0xff]
        %v448 = vld [vmem:[%s188 + $0x670] sm:$0xff]
        %v449 = vld [vmem:[%s188 + $0x678] sm:$0xf]
        %v450 = vld [vmem:[%s1] sm:$0xf]
        %v451 = vld [vmem:[%s1 + $0x4] sm:$0xf]
        %v452 = vld [vmem:[%s1 + $0x8] sm:$0xf]
        %v453 = vld [vmem:[%s1 + $0xc] sm:$0xf]
        %v454 = vld [vmem:[%s1 + $0x10] sm:$0xf]
        %v455 = vld [vmem:[%s1 + $0x14] sm:$0xf]
        %v456 = vld [vmem:[%s1 + $0x18] sm:$0xf]
        %v457 = vld [vmem:[%s1 + $0x1c] sm:$0xf]
        %v458 = vld [vmem:[%s1 + $0x20] sm:$0xf]
        %v459 = vld [vmem:[%s1 + $0x24] sm:$0xf]
        %v460 = vld [vmem:[%s1 + $0x28] sm:$0xf]
        %v461 = vld [vmem:[%s1 + $0x2c] sm:$0xf]
        %v462 = vld [vmem:[%s1 + $0x30] sm:$0xf]
        %v463 = vld [vmem:[%s1 + $0x34] sm:$0xf]
        %v464 = vld [vmem:[%s1 + $0x38] sm:$0xf]
        %v465 = vld [vmem:[%s1 + $0x3c] sm:$0xf]
        %v466 = vld [vmem:[%s1 + $0x40] sm:$0xf]
        %v467 = vld [vmem:[%s1 + $0x44] sm:$0xf]
        %v468 = vld [vmem:[%s1 + $0x48] sm:$0xf]
        %v469 = vld [vmem:[%s1 + $0x4c] sm:$0xf]
        %v470 = vld [vmem:[%s1 + $0x50] sm:$0xf]
        %v471 = vld [vmem:[%s1 + $0x54] sm:$0xf]
        %v472 = vld [vmem:[%s1 + $0x58] sm:$0xf]
        %v473 = vld [vmem:[%s1 + $0x5c] sm:$0xf]
        %v474 = vld [vmem:[%s1 + $0x60] sm:$0xf]
        %v475 = vld [vmem:[%s1 + $0x64] sm:$0xf]
        %v476 = vld [vmem:[%s1 + $0x68] sm:$0xf]
        %v477 = vld [vmem:[%s1 + $0x6c] sm:$0xf]
        %v478 = vld [vmem:[%s1 + $0x70] sm:$0xf]
        %v479 = vld [vmem:[%s1 + $0x74] sm:$0xf]
        %v480 = vld [vmem:[%s1 + $0x78] sm:$0xf]
        %v481 = vld [vmem:[%s1 + $0x7c] sm:$0xf]
        %v482 = vld [vmem:[%s1 + $0x80] sm:$0xf]
        %v483 = vld [vmem:[%s1 + $0x84] sm:$0xf]
        %v484 = vld [vmem:[%s1 + $0x88] sm:$0xf]
        %v485 = vld [vmem:[%s1 + $0x8c] sm:$0xf]
        %v486 = vld [vmem:[%s1 + $0x90] sm:$0xf]
        %v487 = vld [vmem:[%s1 + $0x94] sm:$0xf]
        %v488 = vld [vmem:[%s1 + $0x98] sm:$0xf]
        %v489 = vld [vmem:[%s1 + $0x9c] sm:$0xf]
        %v490 = vld [vmem:[%s1 + $0xa0] sm:$0xf]
        %v491 = vld [vmem:[%s1 + $0xa4] sm:$0xf]
        %v492 = vld [vmem:[%s1 + $0xa8] sm:$0xf]
        %v493 = vld [vmem:[%s1 + $0xac] sm:$0xf]
        %v494 = vld [vmem:[%s1 + $0xb0] sm:$0xf]
        %v495 = vld [vmem:[%s1 + $0xb4] sm:$0xf]
        %v496 = vld [vmem:[%s1 + $0xb8] sm:$0xf]
        %v497 = vld [vmem:[%s1 + $0xbc] sm:$0xf]
        %v498 = vld [vmem:[%s1 + $0xc0] sm:$0xf]
        %v499 = vld [vmem:[%s1 + $0xc4] sm:$0xf]
        %v500 = vld [vmem:[%s1 + $0xc8] sm:$0xf]
        %v501 = vld [vmem:[%s1 + $0xcc] sm:$0xf]
        %v502 = vld [vmem:[%s1 + $0xd0] sm:$0xf]
        %v503 = vld [vmem:[%s1 + $0xd4] sm:$0xf]
        %v504 = vld [vmem:[%s1 + $0xd8] sm:$0xf]
        %v505 = vld [vmem:[%s1 + $0xdc] sm:$0xf]
        %v506 = vld [vmem:[%s1 + $0xe0] sm:$0xf]
        %v507 = vld [vmem:[%s1 + $0xe4] sm:$0xf]
        %v508 = vld [vmem:[%s1 + $0xe8] sm:$0xf]
        %v509 = vld [vmem:[%s1 + $0xec] sm:$0xf]
        %v510 = vld [vmem:[%s1 + $0xf0] sm:$0xf]
        %v511 = vld [vmem:[%s1 + $0xf4] sm:$0xf]
        %v512 = vld [vmem:[%s1 + $0xf8] sm:$0xf]
        %v513 = vld [vmem:[%s1 + $0xfc] sm:$0xf]
        %v514 = vld [vmem:[%s1 + $0x100] sm:$0xf]
        %v515 = vld [vmem:[%s1 + $0x104] sm:$0xf]
        %v516 = vld [vmem:[%s1 + $0x108] sm:$0xf]
        %v517 = vld [vmem:[%s1 + $0x10c] sm:$0xf]
        %v518 = vld [vmem:[%s1 + $0x110] sm:$0xf]
        %v519 = vld [vmem:[%s1 + $0x114] sm:$0xf]
        %v520 = vld [vmem:[%s1 + $0x118] sm:$0xf]
        %v521 = vld [vmem:[%s1 + $0x11c] sm:$0xf]
        %v522 = vld [vmem:[%s1 + $0x120] sm:$0xf]
        %v523 = vld [vmem:[%s1 + $0x124] sm:$0xf]
        %v524 = vld [vmem:[%s1 + $0x128] sm:$0xf]
        %v525 = vld [vmem:[%s2] sm:$0x1]
        %v527 = vlaneseq
        %v528 = vshrl.u32 %v527, 7
        %v529 = vsub.s32 0, %v528
        %v530 = vrot.slane %v525, %v529
        %v781 = vunpack.c.l.b16 %v201
        %v782 = vunpack.c.h.b16 %v201
        %v783 = vunpack.c.l.b16 %v202
        %v784 = vunpack.c.h.b16 %v202
        %v785 = vunpack.c.l.b16 %v203
        %v786 = vunpack.c.l.b16 %v204
        %v787 = vunpack.c.h.b16 %v204
        %v788 = vunpack.c.l.b16 %v205
        %v789 = vunpack.c.h.b16 %v205
        %v790 = vunpack.c.l.b16 %v206
        %v791 = vunpack.c.l.b16 %v207
        %v792 = vunpack.c.h.b16 %v207
        %v793 = vunpack.c.l.b16 %v208
        %v794 = vunpack.c.h.b16 %v208
        %v795 = vunpack.c.l.b16 %v209
        %v796 = vunpack.c.l.b16 %v210
        %v797 = vunpack.c.h.b16 %v210
        %v798 = vunpack.c.l.b16 %v211
        %v799 = vunpack.c.h.b16 %v211
        %v800 = vunpack.c.l.b16 %v212
        %v801 = vunpack.c.l.b16 %v213
        %v802 = vunpack.c.h.b16 %v213
        %v803 = vunpack.c.l.b16 %v214
        %v804 = vunpack.c.h.b16 %v214
        %v805 = vunpack.c.l.b16 %v215
        %v806 = vunpack.c.l.b16 %v216
        %v807 = vunpack.c.h.b16 %v216
        %v808 = vunpack.c.l.b16 %v217
        %v809 = vunpack.c.h.b16 %v217
        %v810 = vunpack.c.l.b16 %v218
        %v811 = vunpack.c.l.b16 %v219
        %v812 = vunpack.c.h.b16 %v219
        %v813 = vunpack.c.l.b16 %v220
        %v814 = vunpack.c.h.b16 %v220
        %v815 = vunpack.c.l.b16 %v221
        %v816 = vunpack.c.l.b16 %v222
        %v817 = vunpack.c.h.b16 %v222
        %v818 = vunpack.c.l.b16 %v223
        %v819 = vunpack.c.h.b16 %v223
        %v820 = vunpack.c.l.b16 %v224
        %v821 = vunpack.c.l.b16 %v225
        %v822 = vunpack.c.h.b16 %v225
        %v823 = vunpack.c.l.b16 %v226
        %v824 = vunpack.c.h.b16 %v226
        %v825 = vunpack.c.l.b16 %v227
        %v826 = vunpack.c.l.b16 %v228
        %v827 = vunpack.c.h.b16 %v228
        %v828 = vunpack.c.l.b16 %v229
        %v829 = vunpack.c.h.b16 %v229
        %v830 = vunpack.c.l.b16 %v230
        %v831 = vunpack.c.l.b16 %v231
        %v832 = vunpack.c.h.b16 %v231
        %v833 = vunpack.c.l.b16 %v232
        %v834 = vunpack.c.h.b16 %v232
        %v835 = vunpack.c.l.b16 %v233
        %v836 = vunpack.c.l.b16 %v234
        %v837 = vunpack.c.h.b16 %v234
        %v838 = vunpack.c.l.b16 %v235
        %v839 = vunpack.c.h.b16 %v235
        %v840 = vunpack.c.l.b16 %v236
        %v841 = vunpack.c.l.b16 %v237
        %v842 = vunpack.c.h.b16 %v237
        %v843 = vunpack.c.l.b16 %v238
        %v844 = vunpack.c.h.b16 %v238
        %v845 = vunpack.c.l.b16 %v239
        %v846 = vunpack.c.l.b16 %v240
        %v847 = vunpack.c.h.b16 %v240
        %v848 = vunpack.c.l.b16 %v241
        %v849 = vunpack.c.h.b16 %v241
        %v850 = vunpack.c.l.b16 %v242
        %v851 = vunpack.c.l.b16 %v243
        %v852 = vunpack.c.h.b16 %v243
        %v853 = vunpack.c.l.b16 %v244
        %v854 = vunpack.c.h.b16 %v244
        %v855 = vunpack.c.l.b16 %v245
        %v856 = vunpack.c.l.b16 %v246
        %v857 = vunpack.c.h.b16 %v246
        %v858 = vunpack.c.l.b16 %v247
        %v859 = vunpack.c.h.b16 %v247
        %v860 = vunpack.c.l.b16 %v248
        %v861 = vunpack.c.l.b16 %v249
        %v862 = vunpack.c.h.b16 %v249
        %v863 = vunpack.c.l.b16 %v250
        %v864 = vunpack.c.h.b16 %v250
        %v865 = vunpack.c.l.b16 %v251
        %v866 = vunpack.c.l.b16 %v252
        %v867 = vunpack.c.h.b16 %v252
        %v868 = vunpack.c.l.b16 %v253
        %v869 = vunpack.c.h.b16 %v253
        %v870 = vunpack.c.l.b16 %v254
        %v871 = vunpack.c.l.b16 %v255
        %v872 = vunpack.c.h.b16 %v255
        %v873 = vunpack.c.l.b16 %v256
        %v874 = vunpack.c.h.b16 %v256
        %v875 = vunpack.c.l.b16 %v257
        %v876 = vunpack.c.l.b16 %v258
        %v877 = vunpack.c.h.b16 %v258
        %v878 = vunpack.c.l.b16 %v259
        %v879 = vunpack.c.h.b16 %v259
        %v880 = vunpack.c.l.b16 %v260
        %v881 = vunpack.c.l.b16 %v261
        %v882 = vunpack.c.h.b16 %v261
        %v883 = vunpack.c.l.b16 %v262
        %v884 = vunpack.c.h.b16 %v262
        %v885 = vunpack.c.l.b16 %v263
        %v886 = vunpack.c.l.b16 %v264
        %v887 = vunpack.c.h.b16 %v264
        %v888 = vunpack.c.l.b16 %v265
        %v889 = vunpack.c.h.b16 %v265
        %v890 = vunpack.c.l.b16 %v266
        %v891 = vunpack.c.l.b16 %v267
        %v892 = vunpack.c.h.b16 %v267
        %v893 = vunpack.c.l.b16 %v268
        %v894 = vunpack.c.h.b16 %v268
        %v895 = vunpack.c.l.b16 %v269
        %v896 = vunpack.c.l.b16 %v270
        %v897 = vunpack.c.h.b16 %v270
        %v898 = vunpack.c.l.b16 %v271
        %v899 = vunpack.c.h.b16 %v271
        %v900 = vunpack.c.l.b16 %v272
        %v901 = vunpack.c.l.b16 %v273
        %v902 = vunpack.c.h.b16 %v273
        %v903 = vunpack.c.l.b16 %v274
        %v904 = vunpack.c.h.b16 %v274
        %v905 = vunpack.c.l.b16 %v275
        %v906 = vunpack.c.l.b16 %v276
        %v907 = vunpack.c.h.b16 %v276
        %v908 = vunpack.c.l.b16 %v277
        %v909 = vunpack.c.h.b16 %v277
        %v910 = vunpack.c.l.b16 %v278
        %v911 = vunpack.c.l.b16 %v279
        %v912 = vunpack.c.h.b16 %v279
        %v913 = vunpack.c.l.b16 %v280
        %v914 = vunpack.c.h.b16 %v280
        %v915 = vunpack.c.l.b16 %v281
        %v916 = vunpack.c.l.b16 %v282
        %v917 = vunpack.c.h.b16 %v282
        %v918 = vunpack.c.l.b16 %v283
        %v919 = vunpack.c.h.b16 %v283
        %v920 = vunpack.c.l.b16 %v284
        %v921 = vunpack.c.l.b16 %v285
        %v922 = vunpack.c.h.b16 %v285
        %v923 = vunpack.c.l.b16 %v286
        %v924 = vunpack.c.h.b16 %v286
        %v925 = vunpack.c.l.b16 %v287
        %v926 = vunpack.c.l.b16 %v288
        %v927 = vunpack.c.h.b16 %v288
        %v928 = vunpack.c.l.b16 %v289
        %v929 = vunpack.c.h.b16 %v289
        %v930 = vunpack.c.l.b16 %v290
        %v931 = vunpack.c.l.b16 %v291
        %v932 = vunpack.c.h.b16 %v291
        %v933 = vunpack.c.l.b16 %v292
        %v934 = vunpack.c.h.b16 %v292
        %v935 = vunpack.c.l.b16 %v293
        %v936 = vunpack.c.l.b16 %v294
        %v937 = vunpack.c.h.b16 %v294
        %v938 = vunpack.c.l.b16 %v295
        %v939 = vunpack.c.h.b16 %v295
        %v940 = vunpack.c.l.b16 %v296
        %v941 = vunpack.c.l.b16 %v297
        %v942 = vunpack.c.h.b16 %v297
        %v943 = vunpack.c.l.b16 %v298
        %v944 = vunpack.c.h.b16 %v298
        %v945 = vunpack.c.l.b16 %v299
        %v946 = vunpack.c.l.b16 %v300
        %v947 = vunpack.c.h.b16 %v300
        %v948 = vunpack.c.l.b16 %v301
        %v949 = vunpack.c.h.b16 %v301
        %v950 = vunpack.c.l.b16 %v302
        %v951 = vunpack.c.l.b16 %v303
        %v952 = vunpack.c.h.b16 %v303
        %v953 = vunpack.c.l.b16 %v304
        %v954 = vunpack.c.h.b16 %v304
        %v955 = vunpack.c.l.b16 %v305
        %v956 = vunpack.c.l.b16 %v306
        %v957 = vunpack.c.h.b16 %v306
        %v958 = vunpack.c.l.b16 %v307
        %v959 = vunpack.c.h.b16 %v307
        %v960 = vunpack.c.l.b16 %v308
        %v961 = vunpack.c.l.b16 %v309
        %v962 = vunpack.c.h.b16 %v309
        %v963 = vunpack.c.l.b16 %v310
        %v964 = vunpack.c.h.b16 %v310
        %v965 = vunpack.c.l.b16 %v311
        %v966 = vunpack.c.l.b16 %v312
        %v967 = vunpack.c.h.b16 %v312
        %v968 = vunpack.c.l.b16 %v313
        %v969 = vunpack.c.h.b16 %v313
        %v970 = vunpack.c.l.b16 %v314
        %v971 = vunpack.c.l.b16 %v315
        %v972 = vunpack.c.h.b16 %v315
        %v973 = vunpack.c.l.b16 %v316
        %v974 = vunpack.c.h.b16 %v316
        %v975 = vunpack.c.l.b16 %v317
        %v976 = vunpack.c.l.b16 %v318
        %v977 = vunpack.c.h.b16 %v318
        %v978 = vunpack.c.l.b16 %v319
        %v979 = vunpack.c.h.b16 %v319
        %v980 = vunpack.c.l.b16 %v320
        %v981 = vunpack.c.l.b16 %v321
        %v982 = vunpack.c.h.b16 %v321
        %v983 = vunpack.c.l.b16 %v322
        %v984 = vunpack.c.h.b16 %v322
        %v985 = vunpack.c.l.b16 %v323
        %v986 = vunpack.c.l.b16 %v324
        %v987 = vunpack.c.h.b16 %v324
        %v988 = vunpack.c.l.b16 %v325
        %v989 = vunpack.c.h.b16 %v325
        %v990 = vunpack.c.l.b16 %v326
        %v991 = vunpack.c.l.b16 %v327
        %v992 = vunpack.c.h.b16 %v327
        %v993 = vunpack.c.l.b16 %v328
        %v994 = vunpack.c.h.b16 %v328
        %v995 = vunpack.c.l.b16 %v329
        %v996 = vunpack.c.l.b16 %v330
        %v997 = vunpack.c.h.b16 %v330
        %v998 = vunpack.c.l.b16 %v331
        %v999 = vunpack.c.h.b16 %v331
        %v1000 = vunpack.c.l.b16 %v332
        %v1001 = vunpack.c.l.b16 %v333
        %v1002 = vunpack.c.h.b16 %v333
        %v1003 = vunpack.c.l.b16 %v334
        %v1004 = vunpack.c.h.b16 %v334
        %v1005 = vunpack.c.l.b16 %v335
        %v1006 = vunpack.c.l.b16 %v336
        %v1007 = vunpack.c.h.b16 %v336
        %v1008 = vunpack.c.l.b16 %v337
        %v1009 = vunpack.c.h.b16 %v337
        %v1010 = vunpack.c.l.b16 %v338
        %v1011 = vunpack.c.l.b16 %v339
        %v1012 = vunpack.c.h.b16 %v339
        %v1013 = vunpack.c.l.b16 %v340
        %v1014 = vunpack.c.h.b16 %v340
        %v1015 = vunpack.c.l.b16 %v341
        %v1016 = vunpack.c.l.b16 %v342
        %v1017 = vunpack.c.h.b16 %v342
        %v1018 = vunpack.c.l.b16 %v343
        %v1019 = vunpack.c.h.b16 %v343
        %v1020 = vunpack.c.l.b16 %v344
        %v1021 = vunpack.c.l.b16 %v345
        %v1022 = vunpack.c.h.b16 %v345
        %v1023 = vunpack.c.l.b16 %v346
        %v1024 = vunpack.c.h.b16 %v346
        %v1025 = vunpack.c.l.b16 %v347
        %v1026 = vunpack.c.l.b16 %v348
        %v1027 = vunpack.c.h.b16 %v348
        %v1028 = vunpack.c.l.b16 %v349
        %v1029 = vunpack.c.h.b16 %v349
        %v1030 = vunpack.c.l.b16 %v350
        %v1031 = vunpack.c.l.b16 %v351
        %v1032 = vunpack.c.h.b16 %v351
        %v1033 = vunpack.c.l.b16 %v352
        %v1034 = vunpack.c.h.b16 %v352
        %v1035 = vunpack.c.l.b16 %v353
        %v1036 = vunpack.c.l.b16 %v354
        %v1037 = vunpack.c.h.b16 %v354
        %v1038 = vunpack.c.l.b16 %v355
        %v1039 = vunpack.c.h.b16 %v355
        %v1040 = vunpack.c.l.b16 %v356
        %v1041 = vunpack.c.l.b16 %v357
        %v1042 = vunpack.c.h.b16 %v357
        %v1043 = vunpack.c.l.b16 %v358
        %v1044 = vunpack.c.h.b16 %v358
        %v1045 = vunpack.c.l.b16 %v359
        %v1046 = vunpack.c.l.b16 %v360
        %v1047 = vunpack.c.h.b16 %v360
        %v1048 = vunpack.c.l.b16 %v361
        %v1049 = vunpack.c.h.b16 %v361
        %v1050 = vunpack.c.l.b16 %v362
        %v1051 = vunpack.c.l.b16 %v363
        %v1052 = vunpack.c.h.b16 %v363
        %v1053 = vunpack.c.l.b16 %v364
        %v1054 = vunpack.c.h.b16 %v364
        %v1055 = vunpack.c.l.b16 %v365
        %v1056 = vunpack.c.l.b16 %v366
        %v1057 = vunpack.c.h.b16 %v366
        %v1058 = vunpack.c.l.b16 %v367
        %v1059 = vunpack.c.h.b16 %v367
        %v1060 = vunpack.c.l.b16 %v368
        %v1061 = vunpack.c.l.b16 %v369
        %v1062 = vunpack.c.h.b16 %v369
        %v1063 = vunpack.c.l.b16 %v370
        %v1064 = vunpack.c.h.b16 %v370
        %v1065 = vunpack.c.l.b16 %v371
        %v1066 = vunpack.c.l.b16 %v372
        %v1067 = vunpack.c.h.b16 %v372
        %v1068 = vunpack.c.l.b16 %v373
        %v1069 = vunpack.c.h.b16 %v373
        %v1070 = vunpack.c.l.b16 %v374
        %v1071 = vunpack.c.l.b16 %v375
        %v1072 = vunpack.c.h.b16 %v375
        %v1073 = vunpack.c.l.b16 %v376
        %v1074 = vunpack.c.h.b16 %v376
        %v1075 = vunpack.c.l.b16 %v377
        %v1076 = vunpack.c.l.b16 %v378
        %v1077 = vunpack.c.h.b16 %v378
        %v1078 = vunpack.c.l.b16 %v379
        %v1079 = vunpack.c.h.b16 %v379
        %v1080 = vunpack.c.l.b16 %v380
        %v1081 = vunpack.c.l.b16 %v381
        %v1082 = vunpack.c.h.b16 %v381
        %v1083 = vunpack.c.l.b16 %v382
        %v1084 = vunpack.c.h.b16 %v382
        %v1085 = vunpack.c.l.b16 %v383
        %v1086 = vunpack.c.l.b16 %v384
        %v1087 = vunpack.c.h.b16 %v384
        %v1088 = vunpack.c.l.b16 %v385
        %v1089 = vunpack.c.h.b16 %v385
        %v1090 = vunpack.c.l.b16 %v386
        %v1091 = vunpack.c.l.b16 %v387
        %v1092 = vunpack.c.h.b16 %v387
        %v1093 = vunpack.c.l.b16 %v388
        %v1094 = vunpack.c.h.b16 %v388
        %v1095 = vunpack.c.l.b16 %v389
        %v1096 = vunpack.c.l.b16 %v390
        %v1097 = vunpack.c.h.b16 %v390
        %v1098 = vunpack.c.l.b16 %v391
        %v1099 = vunpack.c.h.b16 %v391
        %v1100 = vunpack.c.l.b16 %v392
        %v1101 = vunpack.c.l.b16 %v393
        %v1102 = vunpack.c.h.b16 %v393
        %v1103 = vunpack.c.l.b16 %v394
        %v1104 = vunpack.c.h.b16 %v394
        %v1105 = vunpack.c.l.b16 %v395
        %v1106 = vunpack.c.l.b16 %v396
        %v1107 = vunpack.c.h.b16 %v396
        %v1108 = vunpack.c.l.b16 %v397
        %v1109 = vunpack.c.h.b16 %v397
        %v1110 = vunpack.c.l.b16 %v398
        %v1111 = vunpack.c.l.b16 %v399
        %v1112 = vunpack.c.h.b16 %v399
        %v1113 = vunpack.c.l.b16 %v400
        %v1114 = vunpack.c.h.b16 %v400
        %v1115 = vunpack.c.l.b16 %v401
        %v1116 = vunpack.c.l.b16 %v402
        %v1117 = vunpack.c.h.b16 %v402
        %v1118 = vunpack.c.l.b16 %v403
        %v1119 = vunpack.c.h.b16 %v403
        %v1120 = vunpack.c.l.b16 %v404
        %v1121 = vunpack.c.l.b16 %v405
        %v1122 = vunpack.c.h.b16 %v405
        %v1123 = vunpack.c.l.b16 %v406
        %v1124 = vunpack.c.h.b16 %v406
        %v1125 = vunpack.c.l.b16 %v407
        %v1126 = vunpack.c.l.b16 %v408
        %v1127 = vunpack.c.h.b16 %v408
        %v1128 = vunpack.c.l.b16 %v409
        %v1129 = vunpack.c.h.b16 %v409
        %v1130 = vunpack.c.l.b16 %v410
        %v1131 = vunpack.c.l.b16 %v411
        %v1132 = vunpack.c.h.b16 %v411
        %v1133 = vunpack.c.l.b16 %v412
        %v1134 = vunpack.c.h.b16 %v412
        %v1135 = vunpack.c.l.b16 %v413
        %v1136 = vunpack.c.l.b16 %v414
        %v1137 = vunpack.c.h.b16 %v414
        %v1138 = vunpack.c.l.b16 %v415
        %v1139 = vunpack.c.h.b16 %v415
        %v1140 = vunpack.c.l.b16 %v416
        %v1141 = vunpack.c.l.b16 %v417
        %v1142 = vunpack.c.h.b16 %v417
        %v1143 = vunpack.c.l.b16 %v418
        %v1144 = vunpack.c.h.b16 %v418
        %v1145 = vunpack.c.l.b16 %v419
        %v1146 = vunpack.c.l.b16 %v420
        %v1147 = vunpack.c.h.b16 %v420
        %v1148 = vunpack.c.l.b16 %v421
        %v1149 = vunpack.c.h.b16 %v421
        %v1150 = vunpack.c.l.b16 %v422
        %v1151 = vunpack.c.l.b16 %v423
        %v1152 = vunpack.c.h.b16 %v423
        %v1153 = vunpack.c.l.b16 %v424
        %v1154 = vunpack.c.h.b16 %v424
        %v1155 = vunpack.c.l.b16 %v425
        %v1156 = vunpack.c.l.b16 %v426
        %v1157 = vunpack.c.h.b16 %v426
        %v1158 = vunpack.c.l.b16 %v427
        %v1159 = vunpack.c.h.b16 %v427
        %v1160 = vunpack.c.l.b16 %v428
        %v1161 = vunpack.c.l.b16 %v429
        %v1162 = vunpack.c.h.b16 %v429
        %v1163 = vunpack.c.l.b16 %v430
        %v1164 = vunpack.c.h.b16 %v430
        %v1165 = vunpack.c.l.b16 %v431
        %v1166 = vunpack.c.l.b16 %v432
        %v1167 = vunpack.c.h.b16 %v432
        %v1168 = vunpack.c.l.b16 %v433
        %v1169 = vunpack.c.h.b16 %v433
        %v1170 = vunpack.c.l.b16 %v434
        %v1171 = vunpack.c.l.b16 %v435
        %v1172 = vunpack.c.h.b16 %v435
        %v1173 = vunpack.c.l.b16 %v436
        %v1174 = vunpack.c.h.b16 %v436
        %v1175 = vunpack.c.l.b16 %v437
        %v1176 = vunpack.c.l.b16 %v438
        %v1177 = vunpack.c.h.b16 %v438
        %v1178 = vunpack.c.l.b16 %v439
        %v1179 = vunpack.c.h.b16 %v439
        %v1180 = vunpack.c.l.b16 %v440
        %v1181 = vunpack.c.l.b16 %v441
        %v1182 = vunpack.c.h.b16 %v441
        %v1183 = vunpack.c.l.b16 %v442
        %v1184 = vunpack.c.h.b16 %v442
        %v1185 = vunpack.c.l.b16 %v443
        %v1186 = vunpack.c.l.b16 %v444
        %v1187 = vunpack.c.h.b16 %v444
        %v1188 = vunpack.c.l.b16 %v445
        %v1189 = vunpack.c.h.b16 %v445
        %v1190 = vunpack.c.l.b16 %v446
        %v1191 = vunpack.c.l.b16 %v447
        %v1192 = vunpack.c.h.b16 %v447
        %v1193 = vunpack.c.l.b16 %v448
        %v1194 = vunpack.c.h.b16 %v448
        %v1195 = vunpack.c.l.b16 %v449
        %v1196 = vpack.c.b16 %v786, %v781
        %v1197 = vpack.c.b16 %v787, %v782
        %v1198 = vpack.c.b16 %v788, %v783
        %v1199 = vpack.c.b16 %v789, %v784
        %v1200 = vpack.c.b16 %v790, %v785
        %v1201 = vpack.c.b16 %v796, %v791
        %v1202 = vpack.c.b16 %v797, %v792
        %v1203 = vpack.c.b16 %v798, %v793
        %v1204 = vpack.c.b16 %v799, %v794
        %v1205 = vpack.c.b16 %v800, %v795
        %v1206 = vpack.c.b16 %v806, %v801
        %v1207 = vpack.c.b16 %v807, %v802
        %v1208 = vpack.c.b16 %v808, %v803
        %v1209 = vpack.c.b16 %v809, %v804
        %v1210 = vpack.c.b16 %v810, %v805
        %v1211 = vpack.c.b16 %v816, %v811
        %v1212 = vpack.c.b16 %v817, %v812
        %v1213 = vpack.c.b16 %v818, %v813
        %v1214 = vpack.c.b16 %v819, %v814
        %v1215 = vpack.c.b16 %v820, %v815
        %v1216 = vpack.c.b16 %v826, %v821
        %v1217 = vpack.c.b16 %v827, %v822
        %v1218 = vpack.c.b16 %v828, %v823
        %v1219 = vpack.c.b16 %v829, %v824
        %v1220 = vpack.c.b16 %v830, %v825
        %v1221 = vpack.c.b16 %v836, %v831
        %v1222 = vpack.c.b16 %v837, %v832
        %v1223 = vpack.c.b16 %v838, %v833
        %v1224 = vpack.c.b16 %v839, %v834
        %v1225 = vpack.c.b16 %v840, %v835
        %v1226 = vpack.c.b16 %v846, %v841
        %v1227 = vpack.c.b16 %v847, %v842
        %v1228 = vpack.c.b16 %v848, %v843
        %v1229 = vpack.c.b16 %v849, %v844
        %v1230 = vpack.c.b16 %v850, %v845
        %v1231 = vpack.c.b16 %v856, %v851
        %v1232 = vpack.c.b16 %v857, %v852
        %v1233 = vpack.c.b16 %v858, %v853
        %v1234 = vpack.c.b16 %v859, %v854
        %v1235 = vpack.c.b16 %v860, %v855
        %v1236 = vpack.c.b16 %v866, %v861
        %v1237 = vpack.c.b16 %v867, %v862
        %v1238 = vpack.c.b16 %v868, %v863
        %v1239 = vpack.c.b16 %v869, %v864
        %v1240 = vpack.c.b16 %v870, %v865
        %v1241 = vpack.c.b16 %v876, %v871
        %v1242 = vpack.c.b16 %v877, %v872
        %v1243 = vpack.c.b16 %v878, %v873
        %v1244 = vpack.c.b16 %v879, %v874
        %v1245 = vpack.c.b16 %v880, %v875
        %v1246 = vpack.c.b16 %v886, %v881
        %v1247 = vpack.c.b16 %v887, %v882
        %v1248 = vpack.c.b16 %v888, %v883
        %v1249 = vpack.c.b16 %v889, %v884
        %v1250 = vpack.c.b16 %v890, %v885
        %v1251 = vpack.c.b16 %v896, %v891
        %v1252 = vpack.c.b16 %v897, %v892
        %v1253 = vpack.c.b16 %v898, %v893
        %v1254 = vpack.c.b16 %v899, %v894
        %v1255 = vpack.c.b16 %v900, %v895
        %v1256 = vpack.c.b16 %v906, %v901
        %v1257 = vpack.c.b16 %v907, %v902
        %v1258 = vpack.c.b16 %v908, %v903
        %v1259 = vpack.c.b16 %v909, %v904
        %v1260 = vpack.c.b16 %v910, %v905
        %v1261 = vpack.c.b16 %v916, %v911
        %v1262 = vpack.c.b16 %v917, %v912
        %v1263 = vpack.c.b16 %v918, %v913
        %v1264 = vpack.c.b16 %v919, %v914
        %v1265 = vpack.c.b16 %v920, %v915
        %v1266 = vpack.c.b16 %v926, %v921
        %v1267 = vpack.c.b16 %v927, %v922
        %v1268 = vpack.c.b16 %v928, %v923
        %v1269 = vpack.c.b16 %v929, %v924
        %v1270 = vpack.c.b16 %v930, %v925
        %v1271 = vpack.c.b16 %v936, %v931
        %v1272 = vpack.c.b16 %v937, %v932
        %v1273 = vpack.c.b16 %v938, %v933
        %v1274 = vpack.c.b16 %v939, %v934
        %v1275 = vpack.c.b16 %v940, %v935
        %v1276 = vpack.c.b16 %v946, %v941
        %v1277 = vpack.c.b16 %v947, %v942
        %v1278 = vpack.c.b16 %v948, %v943
        %v1279 = vpack.c.b16 %v949, %v944
        %v1280 = vpack.c.b16 %v950, %v945
        %v1281 = vpack.c.b16 %v956, %v951
        %v1282 = vpack.c.b16 %v957, %v952
        %v1283 = vpack.c.b16 %v958, %v953
        %v1284 = vpack.c.b16 %v959, %v954
        %v1285 = vpack.c.b16 %v960, %v955
        %v1286 = vpack.c.b16 %v966, %v961
        %v1287 = vpack.c.b16 %v967, %v962
        %v1288 = vpack.c.b16 %v968, %v963
        %v1289 = vpack.c.b16 %v969, %v964
        %v1290 = vpack.c.b16 %v970, %v965
        %v1291 = vpack.c.b16 %v976, %v971
        %v1292 = vpack.c.b16 %v977, %v972
        %v1293 = vpack.c.b16 %v978, %v973
        %v1294 = vpack.c.b16 %v979, %v974
        %v1295 = vpack.c.b16 %v980, %v975
        %v1296 = vpack.c.b16 %v986, %v981
        %v1297 = vpack.c.b16 %v987, %v982
        %v1298 = vpack.c.b16 %v988, %v983
        %v1299 = vpack.c.b16 %v989, %v984
        %v1300 = vpack.c.b16 %v990, %v985
        %v1301 = vpack.c.b16 %v996, %v991
        %v1302 = vpack.c.b16 %v997, %v992
        %v1303 = vpack.c.b16 %v998, %v993
        %v1304 = vpack.c.b16 %v999, %v994
        %v1305 = vpack.c.b16 %v1000, %v995
        %v1306 = vpack.c.b16 %v1006, %v1001
        %v1307 = vpack.c.b16 %v1007, %v1002
        %v1308 = vpack.c.b16 %v1008, %v1003
        %v1309 = vpack.c.b16 %v1009, %v1004
        %v1310 = vpack.c.b16 %v1010, %v1005
        %v1311 = vpack.c.b16 %v1016, %v1011
        %v1312 = vpack.c.b16 %v1017, %v1012
        %v1313 = vpack.c.b16 %v1018, %v1013
        %v1314 = vpack.c.b16 %v1019, %v1014
        %v1315 = vpack.c.b16 %v1020, %v1015
        %v1316 = vpack.c.b16 %v1026, %v1021
        %v1317 = vpack.c.b16 %v1027, %v1022
        %v1318 = vpack.c.b16 %v1028, %v1023
        %v1319 = vpack.c.b16 %v1029, %v1024
        %v1320 = vpack.c.b16 %v1030, %v1025
        %v1321 = vpack.c.b16 %v1036, %v1031
        %v1322 = vpack.c.b16 %v1037, %v1032
        %v1323 = vpack.c.b16 %v1038, %v1033
        %v1324 = vpack.c.b16 %v1039, %v1034
        %v1325 = vpack.c.b16 %v1040, %v1035
        %v1326 = vpack.c.b16 %v1046, %v1041
        %v1327 = vpack.c.b16 %v1047, %v1042
        %v1328 = vpack.c.b16 %v1048, %v1043
        %v1329 = vpack.c.b16 %v1049, %v1044
        %v1330 = vpack.c.b16 %v1050, %v1045
        %v1331 = vpack.c.b16 %v1056, %v1051
        %v1332 = vpack.c.b16 %v1057, %v1052
        %v1333 = vpack.c.b16 %v1058, %v1053
        %v1334 = vpack.c.b16 %v1059, %v1054
        %v1335 = vpack.c.b16 %v1060, %v1055
        %v1336 = vpack.c.b16 %v1066, %v1061
        %v1337 = vpack.c.b16 %v1067, %v1062
        %v1338 = vpack.c.b16 %v1068, %v1063
        %v1339 = vpack.c.b16 %v1069, %v1064
        %v1340 = vpack.c.b16 %v1070, %v1065
        %v1341 = vpack.c.b16 %v1076, %v1071
        %v1342 = vpack.c.b16 %v1077, %v1072
        %v1343 = vpack.c.b16 %v1078, %v1073
        %v1344 = vpack.c.b16 %v1079, %v1074
        %v1345 = vpack.c.b16 %v1080, %v1075
        %v1346 = vpack.c.b16 %v1086, %v1081
        %v1347 = vpack.c.b16 %v1087, %v1082
        %v1348 = vpack.c.b16 %v1088, %v1083
        %v1349 = vpack.c.b16 %v1089, %v1084
        %v1350 = vpack.c.b16 %v1090, %v1085
        %v1351 = vpack.c.b16 %v1096, %v1091
        %v1352 = vpack.c.b16 %v1097, %v1092
        %v1353 = vpack.c.b16 %v1098, %v1093
        %v1354 = vpack.c.b16 %v1099, %v1094
        %v1355 = vpack.c.b16 %v1100, %v1095
        %v1356 = vpack.c.b16 %v1106, %v1101
        %v1357 = vpack.c.b16 %v1107, %v1102
        %v1358 = vpack.c.b16 %v1108, %v1103
        %v1359 = vpack.c.b16 %v1109, %v1104
        %v1360 = vpack.c.b16 %v1110, %v1105
        %v1361 = vpack.c.b16 %v1116, %v1111
        %v1362 = vpack.c.b16 %v1117, %v1112
        %v1363 = vpack.c.b16 %v1118, %v1113
        %v1364 = vpack.c.b16 %v1119, %v1114
        %v1365 = vpack.c.b16 %v1120, %v1115
        %v1366 = vpack.c.b16 %v1126, %v1121
        %v1367 = vpack.c.b16 %v1127, %v1122
        %v1368 = vpack.c.b16 %v1128, %v1123
        %v1369 = vpack.c.b16 %v1129, %v1124
        %v1370 = vpack.c.b16 %v1130, %v1125
        %v1371 = vpack.c.b16 %v1136, %v1131
        %v1372 = vpack.c.b16 %v1137, %v1132
        %v1373 = vpack.c.b16 %v1138, %v1133
        %v1374 = vpack.c.b16 %v1139, %v1134
        %v1375 = vpack.c.b16 %v1140, %v1135
        %v1376 = vpack.c.b16 %v1146, %v1141
        %v1377 = vpack.c.b16 %v1147, %v1142
        %v1378 = vpack.c.b16 %v1148, %v1143
        %v1379 = vpack.c.b16 %v1149, %v1144
        %v1380 = vpack.c.b16 %v1150, %v1145
        %v1381 = vpack.c.b16 %v1156, %v1151
        %v1382 = vpack.c.b16 %v1157, %v1152
        %v1383 = vpack.c.b16 %v1158, %v1153
        %v1384 = vpack.c.b16 %v1159, %v1154
        %v1385 = vpack.c.b16 %v1160, %v1155
        %v1386 = vpack.c.b16 %v1166, %v1161
        %v1387 = vpack.c.b16 %v1167, %v1162
        %v1388 = vpack.c.b16 %v1168, %v1163
        %v1389 = vpack.c.b16 %v1169, %v1164
        %v1390 = vpack.c.b16 %v1170, %v1165
        %v1391 = vpack.c.b16 %v1176, %v1171
        %v1392 = vpack.c.b16 %v1177, %v1172
        %v1393 = vpack.c.b16 %v1178, %v1173
        %v1394 = vpack.c.b16 %v1179, %v1174
        %v1395 = vpack.c.b16 %v1180, %v1175
        %v1396 = vpack.c.b16 %v1186, %v1181
        %v1397 = vpack.c.b16 %v1187, %v1182
        %v1398 = vpack.c.b16 %v1188, %v1183
        %v1399 = vpack.c.b16 %v1189, %v1184
        %v1400 = vpack.c.b16 %v1190, %v1185
        %v1401 = vpack.c.b16 %v1191, %v1191
        %v1402 = vpack.c.b16 %v1192, %v1192
        %v1403 = vpack.c.b16 %v1193, %v1193
        %v1404 = vpack.c.b16 %v1194, %v1194
        %v1405 = vpack.c.b16 %v1195, %v1195
        %v1649 = vunpack.c.l.b16 %v450
        %v1650 = vunpack.c.l.b16 %v451
        %v1651 = vunpack.c.l.b16 %v452
        %v1652 = vunpack.c.l.b16 %v453
        %v1653 = vunpack.c.l.b16 %v454
        %v1654 = vunpack.c.l.b16 %v455
        %v1655 = vunpack.c.l.b16 %v456
        %v1656 = vunpack.c.l.b16 %v457
        %v1657 = vunpack.c.l.b16 %v458
        %v1658 = vunpack.c.l.b16 %v459
        %v1659 = vunpack.c.l.b16 %v460
        %v1660 = vunpack.c.l.b16 %v461
        %v1661 = vunpack.c.l.b16 %v462
        %v1662 = vunpack.c.l.b16 %v463
        %v1663 = vunpack.c.l.b16 %v464
        %v1664 = vunpack.c.l.b16 %v465
        %v1665 = vunpack.c.l.b16 %v466
        %v1666 = vunpack.c.l.b16 %v467
        %v1667 = vunpack.c.l.b16 %v468
        %v1668 = vunpack.c.l.b16 %v469
        %v1669 = vunpack.c.l.b16 %v470
        %v1670 = vunpack.c.l.b16 %v471
        %v1671 = vunpack.c.l.b16 %v472
        %v1672 = vunpack.c.l.b16 %v473
        %v1673 = vunpack.c.l.b16 %v474
        %v1674 = vunpack.c.l.b16 %v475
        %v1675 = vunpack.c.l.b16 %v476
        %v1676 = vunpack.c.l.b16 %v477
        %v1677 = vunpack.c.l.b16 %v478
        %v1678 = vunpack.c.l.b16 %v479
        %v1679 = vunpack.c.l.b16 %v480
        %v1680 = vunpack.c.l.b16 %v481
        %v1681 = vunpack.c.l.b16 %v482
        %v1682 = vunpack.c.l.b16 %v483
        %v1683 = vunpack.c.l.b16 %v484
        %v1684 = vunpack.c.l.b16 %v485
        %v1685 = vunpack.c.l.b16 %v486
        %v1686 = vunpack.c.l.b16 %v487
        %v1687 = vunpack.c.l.b16 %v488
        %v1688 = vunpack.c.l.b16 %v489
        %v1689 = vunpack.c.l.b16 %v490
        %v1690 = vunpack.c.l.b16 %v491
        %v1691 = vunpack.c.l.b16 %v492
        %v1692 = vunpack.c.l.b16 %v493
        %v1693 = vunpack.c.l.b16 %v494
        %v1694 = vunpack.c.l.b16 %v495
        %v1695 = vunpack.c.l.b16 %v496
        %v1696 = vunpack.c.l.b16 %v497
        %v1697 = vunpack.c.l.b16 %v498
        %v1698 = vunpack.c.l.b16 %v499
        %v1699 = vunpack.c.l.b16 %v500
        %v1700 = vunpack.c.l.b16 %v501
        %v1701 = vunpack.c.l.b16 %v502
        %v1702 = vunpack.c.l.b16 %v503
        %v1703 = vunpack.c.l.b16 %v504
        %v1704 = vunpack.c.l.b16 %v505
        %v1705 = vunpack.c.l.b16 %v506
        %v1706 = vunpack.c.l.b16 %v507
        %v1707 = vunpack.c.l.b16 %v508
        %v1708 = vunpack.c.l.b16 %v509
        %v1709 = vunpack.c.l.b16 %v510
        %v1710 = vunpack.c.l.b16 %v511
        %v1711 = vunpack.c.l.b16 %v512
        %v1712 = vunpack.c.l.b16 %v513
        %v1713 = vunpack.c.l.b16 %v514
        %v1714 = vunpack.c.l.b16 %v515
        %v1715 = vunpack.c.l.b16 %v516
        %v1716 = vunpack.c.l.b16 %v517
        %v1717 = vunpack.c.l.b16 %v518
        %v1718 = vunpack.c.l.b16 %v519
        %v1719 = vunpack.c.l.b16 %v520
        %v1720 = vunpack.c.l.b16 %v521
        %v1721 = vunpack.c.l.b16 %v522
        %v1722 = vunpack.c.l.b16 %v523
        %v1723 = vunpack.c.l.b16 %v524
        %v1724 = vpack.c.b16 %v1650, %v1649
        %v1725 = vpack.c.b16 %v1652, %v1651
        %v1726 = vpack.c.b16 %v1654, %v1653
        %v1727 = vpack.c.b16 %v1656, %v1655
        %v1728 = vpack.c.b16 %v1658, %v1657
        %v1729 = vpack.c.b16 %v1660, %v1659
        %v1730 = vpack.c.b16 %v1662, %v1661
        %v1731 = vpack.c.b16 %v1664, %v1663
        %v1732 = vpack.c.b16 %v1666, %v1665
        %v1733 = vpack.c.b16 %v1668, %v1667
        %v1734 = vpack.c.b16 %v1670, %v1669
        %v1735 = vpack.c.b16 %v1672, %v1671
        %v1736 = vpack.c.b16 %v1674, %v1673
        %v1737 = vpack.c.b16 %v1676, %v1675
        %v1738 = vpack.c.b16 %v1678, %v1677
        %v1739 = vpack.c.b16 %v1680, %v1679
        %v1740 = vpack.c.b16 %v1682, %v1681
        %v1741 = vpack.c.b16 %v1684, %v1683
        %v1742 = vpack.c.b16 %v1686, %v1685
        %v1743 = vpack.c.b16 %v1688, %v1687
        %v1744 = vpack.c.b16 %v1690, %v1689
        %v1745 = vpack.c.b16 %v1692, %v1691
        %v1746 = vpack.c.b16 %v1694, %v1693
        %v1747 = vpack.c.b16 %v1696, %v1695
        %v1748 = vpack.c.b16 %v1698, %v1697
        %v1749 = vpack.c.b16 %v1700, %v1699
        %v1750 = vpack.c.b16 %v1702, %v1701
        %v1751 = vpack.c.b16 %v1704, %v1703
        %v1752 = vpack.c.b16 %v1706, %v1705
        %v1753 = vpack.c.b16 %v1708, %v1707
        %v1754 = vpack.c.b16 %v1710, %v1709
        %v1755 = vpack.c.b16 %v1712, %v1711
        %v1756 = vpack.c.b16 %v1714, %v1713
        %v1757 = vpack.c.b16 %v1716, %v1715
        %v1758 = vpack.c.b16 %v1718, %v1717
        %v1759 = vpack.c.b16 %v1720, %v1719
        %v1760 = vpack.c.b16 %v1722, %v1721
        %v1761 = vpack.c.b16 %v1723, %v1723
        %vm1799 = vcmask 719872
        %v1801 = vsel %vm1799, %v1200, 0
        %v1804 = vsel %vm1799, %v1205, 0
        %v1807 = vsel %vm1799, %v1210, 0
        %v1810 = vsel %vm1799, %v1215, 0
        %v1813 = vsel %vm1799, %v1220, 0
        %v1816 = vsel %vm1799, %v1225, 0
        %v1819 = vsel %vm1799, %v1230, 0
        %v1822 = vsel %vm1799, %v1235, 0
        %v1825 = vsel %vm1799, %v1240, 0
        %v1828 = vsel %vm1799, %v1245, 0
        %v1831 = vsel %vm1799, %v1250, 0
        %v1834 = vsel %vm1799, %v1255, 0
        %v1837 = vsel %vm1799, %v1260, 0
        %v1840 = vsel %vm1799, %v1265, 0
        %v1843 = vsel %vm1799, %v1270, 0
        %v1846 = vsel %vm1799, %v1275, 0
        %v1849 = vsel %vm1799, %v1280, 0
        %v1852 = vsel %vm1799, %v1285, 0
        %v1855 = vsel %vm1799, %v1290, 0
        %v1858 = vsel %vm1799, %v1295, 0
        %v1861 = vsel %vm1799, %v1300, 0
        %v1864 = vsel %vm1799, %v1305, 0
        %v1867 = vsel %vm1799, %v1310, 0
        %v1870 = vsel %vm1799, %v1315, 0
        %v1873 = vsel %vm1799, %v1320, 0
        %v1876 = vsel %vm1799, %v1325, 0
        %v1879 = vsel %vm1799, %v1330, 0
        %v1882 = vsel %vm1799, %v1335, 0
        %v1885 = vsel %vm1799, %v1340, 0
        %v1888 = vsel %vm1799, %v1345, 0
        %v1891 = vsel %vm1799, %v1350, 0
        %v1894 = vsel %vm1799, %v1355, 0
        %v1897 = vsel %vm1799, %v1360, 0
        %v1900 = vsel %vm1799, %v1365, 0
        %v1903 = vsel %vm1799, %v1370, 0
        %v1906 = vsel %vm1799, %v1375, 0
        %v1909 = vsel %vm1799, %v1380, 0
        %v1912 = vsel %vm1799, %v1385, 0
        %v1915 = vsel %vm1799, %v1390, 0
        %v1918 = vsel %vm1799, %v1395, 0
        %v1921 = vsel %vm1799, %v1400, 0
        %v1924 = vsel %vm1799, %v1405, 0
        %vm1926 = vcmask 1043456
        %v1928 = vsel %vm1926, %v1761, 0
        %1930 = vmatprep.subr.bf16.mxu0 0
        %1931 = vmatpush1.bf16.msra.mxu0 %v1724
        %1932 = vmatprep.subr.bf16.mxu0 0
        %1933 = vmatpush1.bf16.msra.mxu0 %v1725
        %1934 = vmatprep.subr.bf16.mxu0 0
        %1935 = vmatpush1.bf16.msra.mxu0 %v1726
        %1936 = vmatprep.subr.bf16.mxu0 0
        %1937 = vmatpush1.bf16.msra.mxu0 %v1727
        %1938 = vmatprep.subr.bf16.mxu0 0
        %1939 = vmatpush1.bf16.msra.mxu0 %v1728
        %1940 = vmatprep.subr.bf16.mxu0 0
        %1941 = vmatpush1.bf16.msra.mxu0 %v1729
        %1942 = vmatprep.subr.bf16.mxu0 0
        %1943 = vmatpush1.bf16.msra.mxu0 %v1730
        %1944 = vmatprep.subr.bf16.mxu0 0
        %1945 = vmatpush1.bf16.msra.mxu0 %v1731
        %1946 = vmatprep.subr.bf16.mxu0 0
        %1947 = vmatpush1.bf16.msra.mxu0 %v1732
        %1948 = vmatprep.subr.bf16.mxu0 0
        %1949 = vmatpush1.bf16.msra.mxu0 %v1733
        %1950 = vmatprep.subr.bf16.mxu0 0
        %1951 = vmatpush1.bf16.msra.mxu0 %v1734
        %1952 = vmatprep.subr.bf16.mxu0 0
        %1953 = vmatpush1.bf16.msra.mxu0 %v1735
        %1954 = vmatprep.subr.bf16.mxu0 0
        %1955 = vmatpush1.bf16.msra.mxu0 %v1736
        %1956 = vmatprep.subr.bf16.mxu0 0
        %1957 = vmatpush1.bf16.msra.mxu0 %v1737
        %1958 = vmatprep.subr.bf16.mxu0 0
        %1959 = vmatpush1.bf16.msra.mxu0 %v1738
        %1960 = vmatprep.subr.bf16.mxu0 0
        %1961 = vmatpush1.bf16.msra.mxu0 %v1739
        %1962 = vmatprep.mubr.bf16.mxu0 %v1197
        %1963 = vmatmul.mubr.bf16.gmra.mrb[0].mxu0 %v1196
        %v1964 = vpop.f32.mrb[0].mxu0
        %v1965 = vadd.f32 %v530, %v1964
        %v1966 = vpop.f32.mrb[0].mxu0
        %v1967 = vpop.f32.mrb[0].mxu0
        %v1968 = vadd.f32 %v530, %v1967
        %v1969 = vpop.f32.mrb[0].mxu0
        %1970 = vmatprep.mubr.bf16.mxu0 %v1202
        %1971 = vmatmul.mubr.bf16.gmra.mrb[0].mxu0 %v1201
        %v1972 = vpop.f32.mrb[0].mxu0
        %v1973 = vadd.f32 %v530, %v1972
        %v1974 = vpop.f32.mrb[0].mxu0
        %v1975 = vpop.f32.mrb[0].mxu0
        %v1976 = vadd.f32 %v530, %v1975
        %v1977 = vpop.f32.mrb[0].mxu0
        %1978 = vmatprep.mubr.bf16.mxu0 %v1207
        %1979 = vmatmul.mubr.bf16.gmra.mrb[0].mxu0 %v1206
        %v1980 = vpop.f32.mrb[0].mxu0
        %v1981 = vadd.f32 %v530, %v1980
        %v1982 = vpop.f32.mrb[0].mxu0
        %v1983 = vpop.f32.mrb[0].mxu0
        %v1984 = vadd.f32 %v530, %v1983
        %v1985 = vpop.f32.mrb[0].mxu0
        %1986 = vmatprep.mubr.bf16.mxu0 %v1212
        %1987 = vmatmul.mubr.bf16.gmra.mrb[0].mxu0 %v1211
        %v1988 = vpop.f32.mrb[0].mxu0
        %v1989 = vadd.f32 %v530, %v1988
        %v1990 = vpop.f32.mrb[0].mxu0
        %v1991 = vpop.f32.mrb[0].mxu0
        %v1992 = vadd.f32 %v530, %v1991
        %v1993 = vpop.f32.mrb[0].mxu0
        %1994 = vmatprep.mubr.bf16.mxu0 %v1217
        %1995 = vmatmul.mubr.bf16.gmra.mrb[0].mxu0 %v1216
        %v1996 = vpop.f32.mrb[0].mxu0
        %v1997 = vadd.f32 %v530, %v1996
        %v1998 = vpop.f32.mrb[0].mxu0
        %v1999 = vpop.f32.mrb[0].mxu0
        %v2000 = vadd.f32 %v530, %v1999
        %v2001 = vpop.f32.mrb[0].mxu0
        %2002 = vmatprep.mubr.bf16.mxu0 %v1222
        %2003 = vmatmul.mubr.bf16.gmra.mrb[0].mxu0 %v1221
        %v2004 = vpop.f32.mrb[0].mxu0
        %v2005 = vadd.f32 %v530, %v2004
        %v2006 = vpop.f32.mrb[0].mxu0
        %v2007 = vpop.f32.mrb[0].mxu0
        %v2008 = vadd.f32 %v530, %v2007
        %v2009 = vpop.f32.mrb[0].mxu0
        %2010 = vmatprep.mubr.bf16.mxu0 %v1227
        %2011 = vmatmul.mubr.bf16.gmra.mrb[0].mxu0 %v1226
        %v2012 = vpop.f32.mrb[0].mxu0
        %v2013 = vadd.f32 %v530, %v2012
        %v2014 = vpop.f32.mrb[0].mxu0
        %v2015 = vpop.f32.mrb[0].mxu0
        %v2016 = vadd.f32 %v530, %v2015
        %v2017 = vpop.f32.mrb[0].mxu0
        %2018 = vmatprep.mubr.bf16.mxu0 %v1232
        %2019 = vmatmul.mubr.bf16.gmra.mrb[0].mxu0 %v1231
        %v2020 = vpop.f32.mrb[0].mxu0
        %v2021 = vadd.f32 %v530, %v2020
        %v2022 = vpop.f32.mrb[0].mxu0
        %v2023 = vpop.f32.mrb[0].mxu0
        %v2024 = vadd.f32 %v530, %v2023
        %v2025 = vpop.f32.mrb[0].mxu0
        %2026 = vmatprep.mubr.bf16.mxu0 %v1237
        %2027 = vmatmul.mubr.bf16.gmra.mrb[0].mxu0 %v1236
        %v2028 = vpop.f32.mrb[0].mxu0
        %v2029 = vadd.f32 %v530, %v2028
        %v2030 = vpop.f32.mrb[0].mxu0
        %v2031 = vpop.f32.mrb[0].mxu0
        %v2032 = vadd.f32 %v530, %v2031
        %v2033 = vpop.f32.mrb[0].mxu0
        %2034 = vmatprep.mubr.bf16.mxu0 %v1242
        %2035 = vmatmul.mubr.bf16.gmra.mrb[0].mxu0 %v1241
        %v2036 = vpop.f32.mrb[0].mxu0
        %v2037 = vadd.f32 %v530, %v2036
        %v2038 = vpop.f32.mrb[0].mxu0
        %v2039 = vpop.f32.mrb[0].mxu0
        %v2040 = vadd.f32 %v530, %v2039
        %v2041 = vpop.f32.mrb[0].mxu0
        %2042 = vmatprep.mubr.bf16.mxu0 %v1247
        %2043 = vmatmul.mubr.bf16.gmra.mrb[0].mxu0 %v1246
        %v2044 = vpop.f32.mrb[0].mxu0
        %v2045 = vadd.f32 %v530, %v2044
        %v2046 = vpop.f32.mrb[0].mxu0
        %v2047 = vpop.f32.mrb[0].mxu0
        %v2048 = vadd.f32 %v530, %v2047
        %v2049 = vpop.f32.mrb[0].mxu0
        %2050 = vmatprep.mubr.bf16.mxu0 %v1252
        %2051 = vmatmul.mubr.bf16.gmra.mrb[0].mxu0 %v1251
        %v2052 = vpop.f32.mrb[0].mxu0
        %v2053 = vadd.f32 %v530, %v2052
        %v2054 = vpop.f32.mrb[0].mxu0
        %v2055 = vpop.f32.mrb[0].mxu0
        %v2056 = vadd.f32 %v530, %v2055
        %v2057 = vpop.f32.mrb[0].mxu0
        %2058 = vmatprep.mubr.bf16.mxu0 %v1257
        %2059 = vmatmul.mubr.bf16.gmra.mrb[0].mxu0 %v1256
        %v2060 = vpop.f32.mrb[0].mxu0
        %v2061 = vadd.f32 %v530, %v2060
        %v2062 = vpop.f32.mrb[0].mxu0
        %v2063 = vpop.f32.mrb[0].mxu0
        %v2064 = vadd.f32 %v530, %v2063
        %v2065 = vpop.f32.mrb[0].mxu0
        %2066 = vmatprep.mubr.bf16.mxu0 %v1262
        %2067 = vmatmul.mubr.bf16.gmra.mrb[0].mxu0 %v1261
        %v2068 = vpop.f32.mrb[0].mxu0
        %v2069 = vadd.f32 %v530, %v2068
        %v2070 = vpop.f32.mrb[0].mxu0
        %v2071 = vpop.f32.mrb[0].mxu0
        %v2072 = vadd.f32 %v530, %v2071
        %v2073 = vpop.f32.mrb[0].mxu0
        %2074 = vmatprep.mubr.bf16.mxu0 %v1267
        %2075 = vmatmul.mubr.bf16.gmra.mrb[0].mxu0 %v1266
        %v2076 = vpop.f32.mrb[0].mxu0
        %v2077 = vadd.f32 %v530, %v2076
        %v2078 = vpop.f32.mrb[0].mxu0
        %v2079 = vpop.f32.mrb[0].mxu0
        %v2080 = vadd.f32 %v530, %v2079
        %v2081 = vpop.f32.mrb[0].mxu0
        %2082 = vmatprep.mubr.bf16.mxu0 %v1272
        %2083 = vmatmul.mubr.bf16.gmra.mrb[0].mxu0 %v1271
        %v2084 = vpop.f32.mrb[0].mxu0
        %v2085 = vadd.f32 %v530, %v2084
        %v2086 = vpop.f32.mrb[0].mxu0
        %v2087 = vpop.f32.mrb[0].mxu0
        %v2088 = vadd.f32 %v530, %v2087
        %v2089 = vpop.f32.mrb[0].mxu0
        %2090 = vmatprep.mubr.bf16.mxu0 %v1277
        %2091 = vmatmul.mubr.bf16.gmra.mrb[0].mxu0 %v1276
        %v2092 = vpop.f32.mrb[0].mxu0
        %v2093 = vadd.f32 %v530, %v2092
        %v2094 = vpop.f32.mrb[0].mxu0
        %v2095 = vpop.f32.mrb[0].mxu0
        %v2096 = vadd.f32 %v530, %v2095
        %v2097 = vpop.f32.mrb[0].mxu0
        %2098 = vmatprep.mubr.bf16.mxu0 %v1282
        %2099 = vmatmul.mubr.bf16.gmra.mrb[0].mxu0 %v1281
        %v2100 = vpop.f32.mrb[0].mxu0
        %v2101 = vadd.f32 %v530, %v2100
        %v2102 = vpop.f32.mrb[0].mxu0
        %v2103 = vpop.f32.mrb[0].mxu0
        %v2104 = vadd.f32 %v530, %v2103
        %v2105 = vpop.f32.mrb[0].mxu0
        %2106 = vmatprep.mubr.bf16.mxu0 %v1287
        %2107 = vmatmul.mubr.bf16.gmra.mrb[0].mxu0 %v1286
        %v2108 = vpop.f32.mrb[0].mxu0
        %v2109 = vadd.f32 %v530, %v2108
        %v2110 = vpop.f32.mrb[0].mxu0
        %v2111 = vpop.f32.mrb[0].mxu0
        %v2112 = vadd.f32 %v530, %v2111
        %v2113 = vpop.f32.mrb[0].mxu0
        %2114 = vmatprep.mubr.bf16.mxu0 %v1292
        %2115 = vmatmul.mubr.bf16.gmra.mrb[0].mxu0 %v1291
        %v2116 = vpop.f32.mrb[0].mxu0
        %v2117 = vadd.f32 %v530, %v2116
        %v2118 = vpop.f32.mrb[0].mxu0
        %v2119 = vpop.f32.mrb[0].mxu0
        %v2120 = vadd.f32 %v530, %v2119
        %v2121 = vpop.f32.mrb[0].mxu0
        %2122 = vmatprep.mubr.bf16.mxu0 %v1297
        %2123 = vmatmul.mubr.bf16.gmra.mrb[0].mxu0 %v1296
        %v2124 = vpop.f32.mrb[0].mxu0
        %v2125 = vadd.f32 %v530, %v2124
        %v2126 = vpop.f32.mrb[0].mxu0
        %v2127 = vpop.f32.mrb[0].mxu0
        %v2128 = vadd.f32 %v530, %v2127
        %v2129 = vpop.f32.mrb[0].mxu0
        %2130 = vmatprep.mubr.bf16.mxu0 %v1302
        %2131 = vmatmul.mubr.bf16.gmra.mrb[0].mxu0 %v1301
        %v2132 = vpop.f32.mrb[0].mxu0
        %v2133 = vadd.f32 %v530, %v2132
        %v2134 = vpop.f32.mrb[0].mxu0
        %v2135 = vpop.f32.mrb[0].mxu0
        %v2136 = vadd.f32 %v530, %v2135
        %v2137 = vpop.f32.mrb[0].mxu0
        %2138 = vmatprep.mubr.bf16.mxu0 %v1307
        %2139 = vmatmul.mubr.bf16.gmra.mrb[0].mxu0 %v1306
        %v2140 = vpop.f32.mrb[0].mxu0
        %v2141 = vadd.f32 %v530, %v2140
        %v2142 = vpop.f32.mrb[0].mxu0
        %v2143 = vpop.f32.mrb[0].mxu0
        %v2144 = vadd.f32 %v530, %v2143
        %v2145 = vpop.f32.mrb[0].mxu0
        %2146 = vmatprep.mubr.bf16.mxu0 %v1312
        %2147 = vmatmul.mubr.bf16.gmra.mrb[0].mxu0 %v1311
        %v2148 = vpop.f32.mrb[0].mxu0
        %v2149 = vadd.f32 %v530, %v2148
        %v2150 = vpop.f32.mrb[0].mxu0
        %v2151 = vpop.f32.mrb[0].mxu0
        %v2152 = vadd.f32 %v530, %v2151
        %v2153 = vpop.f32.mrb[0].mxu0
        %2154 = vmatprep.mubr.bf16.mxu0 %v1317
        %2155 = vmatmul.mubr.bf16.gmra.mrb[0].mxu0 %v1316
        %v2156 = vpop.f32.mrb[0].mxu0
        %v2157 = vadd.f32 %v530, %v2156
        %v2158 = vpop.f32.mrb[0].mxu0
        %v2159 = vpop.f32.mrb[0].mxu0
        %v2160 = vadd.f32 %v530, %v2159
        %v2161 = vpop.f32.mrb[0].mxu0
        %2162 = vmatprep.mubr.bf16.mxu0 %v1322
        %2163 = vmatmul.mubr.bf16.gmra.mrb[0].mxu0 %v1321
        %v2164 = vpop.f32.mrb[0].mxu0
        %v2165 = vadd.f32 %v530, %v2164
        %v2166 = vpop.f32.mrb[0].mxu0
        %v2167 = vpop.f32.mrb[0].mxu0
        %v2168 = vadd.f32 %v530, %v2167
        %v2169 = vpop.f32.mrb[0].mxu0
        %2170 = vmatprep.mubr.bf16.mxu0 %v1327
        %2171 = vmatmul.mubr.bf16.gmra.mrb[0].mxu0 %v1326
        %v2172 = vpop.f32.mrb[0].mxu0
        %v2173 = vadd.f32 %v530, %v2172
        %v2174 = vpop.f32.mrb[0].mxu0
        %v2175 = vpop.f32.mrb[0].mxu0
        %v2176 = vadd.f32 %v530, %v2175
        %v2177 = vpop.f32.mrb[0].mxu0
        %2178 = vmatprep.mubr.bf16.mxu0 %v1332
        %2179 = vmatmul.mubr.bf16.gmra.mrb[0].mxu0 %v1331
        %v2180 = vpop.f32.mrb[0].mxu0
        %v2181 = vadd.f32 %v530, %v2180
        %v2182 = vpop.f32.mrb[0].mxu0
        %v2183 = vpop.f32.mrb[0].mxu0
        %v2184 = vadd.f32 %v530, %v2183
        %v2185 = vpop.f32.mrb[0].mxu0
        %2186 = vmatprep.mubr.bf16.mxu0 %v1337
        %2187 = vmatmul.mubr.bf16.gmra.mrb[0].mxu0 %v1336
        %v2188 = vpop.f32.mrb[0].mxu0
        %v2189 = vadd.f32 %v530, %v2188
        %v2190 = vpop.f32.mrb[0].mxu0
        %v2191 = vpop.f32.mrb[0].mxu0
        %v2192 = vadd.f32 %v530, %v2191
        %v2193 = vpop.f32.mrb[0].mxu0
        %2194 = vmatprep.mubr.bf16.mxu0 %v1342
        %2195 = vmatmul.mubr.bf16.gmra.mrb[0].mxu0 %v1341
        %v2196 = vpop.f32.mrb[0].mxu0
        %v2197 = vadd.f32 %v530, %v2196
        %v2198 = vpop.f32.mrb[0].mxu0
        %v2199 = vpop.f32.mrb[0].mxu0
        %v2200 = vadd.f32 %v530, %v2199
        %v2201 = vpop.f32.mrb[0].mxu0
        %2202 = vmatprep.mubr.bf16.mxu0 %v1347
        %2203 = vmatmul.mubr.bf16.gmra.mrb[0].mxu0 %v1346
        %v2204 = vpop.f32.mrb[0].mxu0
        %v2205 = vadd.f32 %v530, %v2204
        %v2206 = vpop.f32.mrb[0].mxu0
        %v2207 = vpop.f32.mrb[0].mxu0
        %v2208 = vadd.f32 %v530, %v2207
        %v2209 = vpop.f32.mrb[0].mxu0
        %2210 = vmatprep.mubr.bf16.mxu0 %v1352
        %2211 = vmatmul.mubr.bf16.gmra.mrb[0].mxu0 %v1351
        %v2212 = vpop.f32.mrb[0].mxu0
        %v2213 = vadd.f32 %v530, %v2212
        %v2214 = vpop.f32.mrb[0].mxu0
        %v2215 = vpop.f32.mrb[0].mxu0
        %v2216 = vadd.f32 %v530, %v2215
        %v2217 = vpop.f32.mrb[0].mxu0
        %2218 = vmatprep.mubr.bf16.mxu0 %v1357
        %2219 = vmatmul.mubr.bf16.gmra.mrb[0].mxu0 %v1356
        %v2220 = vpop.f32.mrb[0].mxu0
        %v2221 = vadd.f32 %v530, %v2220
        %v2222 = vpop.f32.mrb[0].mxu0
        %v2223 = vpop.f32.mrb[0].mxu0
        %v2224 = vadd.f32 %v530, %v2223
        %v2225 = vpop.f32.mrb[0].mxu0
        %2226 = vmatprep.mubr.bf16.mxu0 %v1362
        %2227 = vmatmul.mubr.bf16.gmra.mrb[0].mxu0 %v1361
        %v2228 = vpop.f32.mrb[0].mxu0
        %v2229 = vadd.f32 %v530, %v2228
        %v2230 = vpop.f32.mrb[0].mxu0
        %v2231 = vpop.f32.mrb[0].mxu0
        %v2232 = vadd.f32 %v530, %v2231
        %v2233 = vpop.f32.mrb[0].mxu0
        %2234 = vmatprep.mubr.bf16.mxu0 %v1367
        %2235 = vmatmul.mubr.bf16.gmra.mrb[0].mxu0 %v1366
        %v2236 = vpop.f32.mrb[0].mxu0
        %v2237 = vadd.f32 %v530, %v2236
        %v2238 = vpop.f32.mrb[0].mxu0
        %v2239 = vpop.f32.mrb[0].mxu0
        %v2240 = vadd.f32 %v530, %v2239
        %v2241 = vpop.f32.mrb[0].mxu0
        %2242 = vmatprep.mubr.bf16.mxu0 %v1372
        %2243 = vmatmul.mubr.bf16.gmra.mrb[0].mxu0 %v1371
        %v2244 = vpop.f32.mrb[0].mxu0
        %v2245 = vadd.f32 %v530, %v2244
        %v2246 = vpop.f32.mrb[0].mxu0
        %v2247 = vpop.f32.mrb[0].mxu0
        %v2248 = vadd.f32 %v530, %v2247
        %v2249 = vpop.f32.mrb[0].mxu0
        %2250 = vmatprep.mubr.bf16.mxu0 %v1377
        %2251 = vmatmul.mubr.bf16.gmra.mrb[0].mxu0 %v1376
        %v2252 = vpop.f32.mrb[0].mxu0
        %v2253 = vadd.f32 %v530, %v2252
        %v2254 = vpop.f32.mrb[0].mxu0
        %v2255 = vpop.f32.mrb[0].mxu0
        %v2256 = vadd.f32 %v530, %v2255
        %v2257 = vpop.f32.mrb[0].mxu0
        %2258 = vmatprep.mubr.bf16.mxu0 %v1382
        %2259 = vmatmul.mubr.bf16.gmra.mrb[0].mxu0 %v1381
        %v2260 = vpop.f32.mrb[0].mxu0
        %v2261 = vadd.f32 %v530, %v2260
        %v2262 = vpop.f32.mrb[0].mxu0
        %v2263 = vpop.f32.mrb[0].mxu0
        %v2264 = vadd.f32 %v530, %v2263
        %v2265 = vpop.f32.mrb[0].mxu0
        %2266 = vmatprep.mubr.bf16.mxu0 %v1387
        %2267 = vmatmul.mubr.bf16.gmra.mrb[0].mxu0 %v1386
        %v2268 = vpop.f32.mrb[0].mxu0
        %v2269 = vadd.f32 %v530, %v2268
        %v2270 = vpop.f32.mrb[0].mxu0
        %v2271 = vpop.f32.mrb[0].mxu0
        %v2272 = vadd.f32 %v530, %v2271
        %v2273 = vpop.f32.mrb[0].mxu0
        %2274 = vmatprep.mubr.bf16.mxu0 %v1392
        %2275 = vmatmul.mubr.bf16.gmra.mrb[0].mxu0 %v1391
        %v2276 = vpop.f32.mrb[0].mxu0
        %v2277 = vadd.f32 %v530, %v2276
        %v2278 = vpop.f32.mrb[0].mxu0
        %v2279 = vpop.f32.mrb[0].mxu0
        %v2280 = vadd.f32 %v530, %v2279
        %v2281 = vpop.f32.mrb[0].mxu0
        %2282 = vmatprep.mubr.bf16.mxu0 %v1397
        %2283 = vmatmul.mubr.bf16.gmra.mrb[0].mxu0 %v1396
        %v2284 = vpop.f32.mrb[0].mxu0
        %v2285 = vadd.f32 %v530, %v2284
        %v2286 = vpop.f32.mrb[0].mxu0
        %v2287 = vpop.f32.mrb[0].mxu0
        %v2288 = vadd.f32 %v530, %v2287
        %v2289 = vpop.f32.mrb[0].mxu0
        %2290 = vmatprep.mubr.bf16.mxu0 %v1402
        %2291 = vmatmul.mubr.bf16.gmra.mrb[0].mxu0 %v1401
        %v2292 = vpop.f32.mrb[0].mxu0
        %v2293 = vadd.f32 %v530, %v2292
        %v2294 = vpop.f32.mrb[0].mxu0
        %v2295 = vpop.f32.mrb[0].mxu0
        %v2296 = vpop.f32.mrb[0].mxu0
        %2297 = vdwg.mxu0
        %2298 = vmatprep.subr.bf16.mxu0 0
        %2299 = vmatpush1.bf16.msra.mxu0 %v1740
        %2300 = vmatprep.subr.bf16.mxu0 0
        %2301 = vmatpush1.bf16.msra.mxu0 %v1741
        %2302 = vmatprep.subr.bf16.mxu0 0
        %2303 = vmatpush1.bf16.msra.mxu0 %v1742
        %2304 = vmatprep.subr.bf16.mxu0 0
        %2305 = vmatpush1.bf16.msra.mxu0 %v1743
        %2306 = vmatprep.subr.bf16.mxu0 0
        %2307 = vmatpush1.bf16.msra.mxu0 %v1744
        %2308 = vmatprep.subr.bf16.mxu0 0
        %2309 = vmatpush1.bf16.msra.mxu0 %v1745
        %2310 = vmatprep.subr.bf16.mxu0 0
        %2311 = vmatpush1.bf16.msra.mxu0 %v1746
        %2312 = vmatprep.subr.bf16.mxu0 0
        %2313 = vmatpush1.bf16.msra.mxu0 %v1747
        %2314 = vmatprep.subr.bf16.mxu0 0
        %2315 = vmatpush1.bf16.msra.mxu0 %v1748
        %2316 = vmatprep.subr.bf16.mxu0 0
        %2317 = vmatpush1.bf16.msra.mxu0 %v1749
        %2318 = vmatprep.subr.bf16.mxu0 0
        %2319 = vmatpush1.bf16.msra.mxu0 %v1750
        %2320 = vmatprep.subr.bf16.mxu0 0
        %2321 = vmatpush1.bf16.msra.mxu0 %v1751
        %2322 = vmatprep.subr.bf16.mxu0 0
        %2323 = vmatpush1.bf16.msra.mxu0 %v1752
        %2324 = vmatprep.subr.bf16.mxu0 0
        %2325 = vmatpush1.bf16.msra.mxu0 %v1753
        %2326 = vmatprep.subr.bf16.mxu0 0
        %2327 = vmatpush1.bf16.msra.mxu0 %v1754
        %2328 = vmatprep.subr.bf16.mxu0 0
        %2329 = vmatpush1.bf16.msra.mxu0 %v1755
        %2330 = vmatprep.mubr.bf16.mxu0 %v1199
        %2331 = vmatmul.mubr.bf16.gmra.mrb[0].mxu0 %v1198
        %v2332 = vpop.f32.mrb[0].mxu0
        %v2333 = vadd.f32 %v1965, %v2332
        %v2334 = vpop.f32.mrb[0].mxu0
        %v2335 = vpop.f32.mrb[0].mxu0
        %v2336 = vadd.f32 %v1968, %v2335
        %v2337 = vpop.f32.mrb[0].mxu0
        %2338 = vmatprep.mubr.bf16.mxu0 %v1204
        %2339 = vmatmul.mubr.bf16.gmra.mrb[0].mxu0 %v1203
        %v2340 = vpop.f32.mrb[0].mxu0
        %v2341 = vadd.f32 %v1973, %v2340
        %v2342 = vpop.f32.mrb[0].mxu0
        %v2343 = vpop.f32.mrb[0].mxu0
        %v2344 = vadd.f32 %v1976, %v2343
        %v2345 = vpop.f32.mrb[0].mxu0
        %2346 = vmatprep.mubr.bf16.mxu0 %v1209
        %2347 = vmatmul.mubr.bf16.gmra.mrb[0].mxu0 %v1208
        %v2348 = vpop.f32.mrb[0].mxu0
        %v2349 = vadd.f32 %v1981, %v2348
        %v2350 = vpop.f32.mrb[0].mxu0
        %v2351 = vpop.f32.mrb[0].mxu0
        %v2352 = vadd.f32 %v1984, %v2351
        %v2353 = vpop.f32.mrb[0].mxu0
        %2354 = vmatprep.mubr.bf16.mxu0 %v1214
        %2355 = vmatmul.mubr.bf16.gmra.mrb[0].mxu0 %v1213
        %v2356 = vpop.f32.mrb[0].mxu0
        %v2357 = vadd.f32 %v1989, %v2356
        %v2358 = vpop.f32.mrb[0].mxu0
        %v2359 = vpop.f32.mrb[0].mxu0
        %v2360 = vadd.f32 %v1992, %v2359
        %v2361 = vpop.f32.mrb[0].mxu0
        %2362 = vmatprep.mubr.bf16.mxu0 %v1219
        %2363 = vmatmul.mubr.bf16.gmra.mrb[0].mxu0 %v1218
        %v2364 = vpop.f32.mrb[0].mxu0
        %v2365 = vadd.f32 %v1997, %v2364
        %v2366 = vpop.f32.mrb[0].mxu0
        %v2367 = vpop.f32.mrb[0].mxu0
        %v2368 = vadd.f32 %v2000, %v2367
        %v2369 = vpop.f32.mrb[0].mxu0
        %2370 = vmatprep.mubr.bf16.mxu0 %v1224
        %2371 = vmatmul.mubr.bf16.gmra.mrb[0].mxu0 %v1223
        %v2372 = vpop.f32.mrb[0].mxu0
        %v2373 = vadd.f32 %v2005, %v2372
        %v2374 = vpop.f32.mrb[0].mxu0
        %v2375 = vpop.f32.mrb[0].mxu0
        %v2376 = vadd.f32 %v2008, %v2375
        %v2377 = vpop.f32.mrb[0].mxu0
        %2378 = vmatprep.mubr.bf16.mxu0 %v1229
        %2379 = vmatmul.mubr.bf16.gmra.mrb[0].mxu0 %v1228
        %v2380 = vpop.f32.mrb[0].mxu0
        %v2381 = vadd.f32 %v2013, %v2380
        %v2382 = vpop.f32.mrb[0].mxu0
        %v2383 = vpop.f32.mrb[0].mxu0
        %v2384 = vadd.f32 %v2016, %v2383
        %v2385 = vpop.f32.mrb[0].mxu0
        %2386 = vmatprep.mubr.bf16.mxu0 %v1234
        %2387 = vmatmul.mubr.bf16.gmra.mrb[0].mxu0 %v1233
        %v2388 = vpop.f32.mrb[0].mxu0
        %v2389 = vadd.f32 %v2021, %v2388
        %v2390 = vpop.f32.mrb[0].mxu0
        %v2391 = vpop.f32.mrb[0].mxu0
        %v2392 = vadd.f32 %v2024, %v2391
        %v2393 = vpop.f32.mrb[0].mxu0
        %2394 = vmatprep.mubr.bf16.mxu0 %v1239
        %2395 = vmatmul.mubr.bf16.gmra.mrb[0].mxu0 %v1238
        %v2396 = vpop.f32.mrb[0].mxu0
        %v2397 = vadd.f32 %v2029, %v2396
        %v2398 = vpop.f32.mrb[0].mxu0
        %v2399 = vpop.f32.mrb[0].mxu0
        %v2400 = vadd.f32 %v2032, %v2399
        %v2401 = vpop.f32.mrb[0].mxu0
        %2402 = vmatprep.mubr.bf16.mxu0 %v1244
        %2403 = vmatmul.mubr.bf16.gmra.mrb[0].mxu0 %v1243
        %v2404 = vpop.f32.mrb[0].mxu0
        %v2405 = vadd.f32 %v2037, %v2404
        %v2406 = vpop.f32.mrb[0].mxu0
        %v2407 = vpop.f32.mrb[0].mxu0
        %v2408 = vadd.f32 %v2040, %v2407
        %v2409 = vpop.f32.mrb[0].mxu0
        %2410 = vmatprep.mubr.bf16.mxu0 %v1249
        %2411 = vmatmul.mubr.bf16.gmra.mrb[0].mxu0 %v1248
        %v2412 = vpop.f32.mrb[0].mxu0
        %v2413 = vadd.f32 %v2045, %v2412
        %v2414 = vpop.f32.mrb[0].mxu0
        %v2415 = vpop.f32.mrb[0].mxu0
        %v2416 = vadd.f32 %v2048, %v2415
        %v2417 = vpop.f32.mrb[0].mxu0
        %2418 = vmatprep.mubr.bf16.mxu0 %v1254
        %2419 = vmatmul.mubr.bf16.gmra.mrb[0].mxu0 %v1253
        %v2420 = vpop.f32.mrb[0].mxu0
        %v2421 = vadd.f32 %v2053, %v2420
        %v2422 = vpop.f32.mrb[0].mxu0
        %v2423 = vpop.f32.mrb[0].mxu0
        %v2424 = vadd.f32 %v2056, %v2423
        %v2425 = vpop.f32.mrb[0].mxu0
        %2426 = vmatprep.mubr.bf16.mxu0 %v1259
        %2427 = vmatmul.mubr.bf16.gmra.mrb[0].mxu0 %v1258
        %v2428 = vpop.f32.mrb[0].mxu0
        %v2429 = vadd.f32 %v2061, %v2428
        %v2430 = vpop.f32.mrb[0].mxu0
        %v2431 = vpop.f32.mrb[0].mxu0
        %v2432 = vadd.f32 %v2064, %v2431
        %v2433 = vpop.f32.mrb[0].mxu0
        %2434 = vmatprep.mubr.bf16.mxu0 %v1264
        %2435 = vmatmul.mubr.bf16.gmra.mrb[0].mxu0 %v1263
        %v2436 = vpop.f32.mrb[0].mxu0
        %v2437 = vadd.f32 %v2069, %v2436
        %v2438 = vpop.f32.mrb[0].mxu0
        %v2439 = vpop.f32.mrb[0].mxu0
        %v2440 = vadd.f32 %v2072, %v2439
        %v2441 = vpop.f32.mrb[0].mxu0
        %2442 = vmatprep.mubr.bf16.mxu0 %v1269
        %2443 = vmatmul.mubr.bf16.gmra.mrb[0].mxu0 %v1268
        %v2444 = vpop.f32.mrb[0].mxu0
        %v2445 = vadd.f32 %v2077, %v2444
        %v2446 = vpop.f32.mrb[0].mxu0
        %v2447 = vpop.f32.mrb[0].mxu0
        %v2448 = vadd.f32 %v2080, %v2447
        %v2449 = vpop.f32.mrb[0].mxu0
        %2450 = vmatprep.mubr.bf16.mxu0 %v1274
        %2451 = vmatmul.mubr.bf16.gmra.mrb[0].mxu0 %v1273
        %v2452 = vpop.f32.mrb[0].mxu0
        %v2453 = vadd.f32 %v2085, %v2452
        %v2454 = vpop.f32.mrb[0].mxu0
        %v2455 = vpop.f32.mrb[0].mxu0
        %v2456 = vadd.f32 %v2088, %v2455
        %v2457 = vpop.f32.mrb[0].mxu0
        %2458 = vmatprep.mubr.bf16.mxu0 %v1279
        %2459 = vmatmul.mubr.bf16.gmra.mrb[0].mxu0 %v1278
        %v2460 = vpop.f32.mrb[0].mxu0
        %v2461 = vadd.f32 %v2093, %v2460
        %v2462 = vpop.f32.mrb[0].mxu0
        %v2463 = vpop.f32.mrb[0].mxu0
        %v2464 = vadd.f32 %v2096, %v2463
        %v2465 = vpop.f32.mrb[0].mxu0
        %2466 = vmatprep.mubr.bf16.mxu0 %v1284
        %2467 = vmatmul.mubr.bf16.gmra.mrb[0].mxu0 %v1283
        %v2468 = vpop.f32.mrb[0].mxu0
        %v2469 = vadd.f32 %v2101, %v2468
        %v2470 = vpop.f32.mrb[0].mxu0
        %v2471 = vpop.f32.mrb[0].mxu0
        %v2472 = vadd.f32 %v2104, %v2471
        %v2473 = vpop.f32.mrb[0].mxu0
        %2474 = vmatprep.mubr.bf16.mxu0 %v1289
        %2475 = vmatmul.mubr.bf16.gmra.mrb[0].mxu0 %v1288
        %v2476 = vpop.f32.mrb[0].mxu0
        %v2477 = vadd.f32 %v2109, %v2476
        %v2478 = vpop.f32.mrb[0].mxu0
        %v2479 = vpop.f32.mrb[0].mxu0
        %v2480 = vadd.f32 %v2112, %v2479
        %v2481 = vpop.f32.mrb[0].mxu0
        %2482 = vmatprep.mubr.bf16.mxu0 %v1294
        %2483 = vmatmul.mubr.bf16.gmra.mrb[0].mxu0 %v1293
        %v2484 = vpop.f32.mrb[0].mxu0
        %v2485 = vadd.f32 %v2117, %v2484
        %v2486 = vpop.f32.mrb[0].mxu0
        %v2487 = vpop.f32.mrb[0].mxu0
        %v2488 = vadd.f32 %v2120, %v2487
        %v2489 = vpop.f32.mrb[0].mxu0
        %2490 = vmatprep.mubr.bf16.mxu0 %v1299
        %2491 = vmatmul.mubr.bf16.gmra.mrb[0].mxu0 %v1298
        %v2492 = vpop.f32.mrb[0].mxu0
        %v2493 = vadd.f32 %v2125, %v2492
        %v2494 = vpop.f32.mrb[0].mxu0
        %v2495 = vpop.f32.mrb[0].mxu0
        %v2496 = vadd.f32 %v2128, %v2495
        %v2497 = vpop.f32.mrb[0].mxu0
        %2498 = vmatprep.mubr.bf16.mxu0 %v1304
        %2499 = vmatmul.mubr.bf16.gmra.mrb[0].mxu0 %v1303
        %v2500 = vpop.f32.mrb[0].mxu0
        %v2501 = vadd.f32 %v2133, %v2500
        %v2502 = vpop.f32.mrb[0].mxu0
        %v2503 = vpop.f32.mrb[0].mxu0
        %v2504 = vadd.f32 %v2136, %v2503
        %v2505 = vpop.f32.mrb[0].mxu0
        %2506 = vmatprep.mubr.bf16.mxu0 %v1309
        %2507 = vmatmul.mubr.bf16.gmra.mrb[0].mxu0 %v1308
        %v2508 = vpop.f32.mrb[0].mxu0
        %v2509 = vadd.f32 %v2141, %v2508
        %v2510 = vpop.f32.mrb[0].mxu0
        %v2511 = vpop.f32.mrb[0].mxu0
        %v2512 = vadd.f32 %v2144, %v2511
        %v2513 = vpop.f32.mrb[0].mxu0
        %2514 = vmatprep.mubr.bf16.mxu0 %v1314
        %2515 = vmatmul.mubr.bf16.gmra.mrb[0].mxu0 %v1313
        %v2516 = vpop.f32.mrb[0].mxu0
        %v2517 = vadd.f32 %v2149, %v2516
        %v2518 = vpop.f32.mrb[0].mxu0
        %v2519 = vpop.f32.mrb[0].mxu0
        %v2520 = vadd.f32 %v2152, %v2519
        %v2521 = vpop.f32.mrb[0].mxu0
        %2522 = vmatprep.mubr.bf16.mxu0 %v1319
        %2523 = vmatmul.mubr.bf16.gmra.mrb[0].mxu0 %v1318
        %v2524 = vpop.f32.mrb[0].mxu0
        %v2525 = vadd.f32 %v2157, %v2524
        %v2526 = vpop.f32.mrb[0].mxu0
        %v2527 = vpop.f32.mrb[0].mxu0
        %v2528 = vadd.f32 %v2160, %v2527
        %v2529 = vpop.f32.mrb[0].mxu0
        %2530 = vmatprep.mubr.bf16.mxu0 %v1324
        %2531 = vmatmul.mubr.bf16.gmra.mrb[0].mxu0 %v1323
        %v2532 = vpop.f32.mrb[0].mxu0
        %v2533 = vadd.f32 %v2165, %v2532
        %v2534 = vpop.f32.mrb[0].mxu0
        %v2535 = vpop.f32.mrb[0].mxu0
        %v2536 = vadd.f32 %v2168, %v2535
        %v2537 = vpop.f32.mrb[0].mxu0
        %2538 = vmatprep.mubr.bf16.mxu0 %v1329
        %2539 = vmatmul.mubr.bf16.gmra.mrb[0].mxu0 %v1328
        %v2540 = vpop.f32.mrb[0].mxu0
        %v2541 = vadd.f32 %v2173, %v2540
        %v2542 = vpop.f32.mrb[0].mxu0
        %v2543 = vpop.f32.mrb[0].mxu0
        %v2544 = vadd.f32 %v2176, %v2543
        %v2545 = vpop.f32.mrb[0].mxu0
        %2546 = vmatprep.mubr.bf16.mxu0 %v1334
        %2547 = vmatmul.mubr.bf16.gmra.mrb[0].mxu0 %v1333
        %v2548 = vpop.f32.mrb[0].mxu0
        %v2549 = vadd.f32 %v2181, %v2548
        %v2550 = vpop.f32.mrb[0].mxu0
        %v2551 = vpop.f32.mrb[0].mxu0
        %v2552 = vadd.f32 %v2184, %v2551
        %v2553 = vpop.f32.mrb[0].mxu0
        %2554 = vmatprep.mubr.bf16.mxu0 %v1339
        %2555 = vmatmul.mubr.bf16.gmra.mrb[0].mxu0 %v1338
        %v2556 = vpop.f32.mrb[0].mxu0
        %v2557 = vadd.f32 %v2189, %v2556
        %v2558 = vpop.f32.mrb[0].mxu0
        %v2559 = vpop.f32.mrb[0].mxu0
        %v2560 = vadd.f32 %v2192, %v2559
        %v2561 = vpop.f32.mrb[0].mxu0
        %2562 = vmatprep.mubr.bf16.mxu0 %v1344
        %2563 = vmatmul.mubr.bf16.gmra.mrb[0].mxu0 %v1343
        %v2564 = vpop.f32.mrb[0].mxu0
        %v2565 = vadd.f32 %v2197, %v2564
        %v2566 = vpop.f32.mrb[0].mxu0
        %v2567 = vpop.f32.mrb[0].mxu0
        %v2568 = vadd.f32 %v2200, %v2567
        %v2569 = vpop.f32.mrb[0].mxu0
        %2570 = vmatprep.mubr.bf16.mxu0 %v1349
        %2571 = vmatmul.mubr.bf16.gmra.mrb[0].mxu0 %v1348
        %v2572 = vpop.f32.mrb[0].mxu0
        %v2573 = vadd.f32 %v2205, %v2572
        %v2574 = vpop.f32.mrb[0].mxu0
        %v2575 = vpop.f32.mrb[0].mxu0
        %v2576 = vadd.f32 %v2208, %v2575
        %v2577 = vpop.f32.mrb[0].mxu0
        %2578 = vmatprep.mubr.bf16.mxu0 %v1354
        %2579 = vmatmul.mubr.bf16.gmra.mrb[0].mxu0 %v1353
        %v2580 = vpop.f32.mrb[0].mxu0
        %v2581 = vadd.f32 %v2213, %v2580
        %v2582 = vpop.f32.mrb[0].mxu0
        %v2583 = vpop.f32.mrb[0].mxu0
        %v2584 = vadd.f32 %v2216, %v2583
        %v2585 = vpop.f32.mrb[0].mxu0
        %2586 = vmatprep.mubr.bf16.mxu0 %v1359
        %2587 = vmatmul.mubr.bf16.gmra.mrb[0].mxu0 %v1358
        %v2588 = vpop.f32.mrb[0].mxu0
        %v2589 = vadd.f32 %v2221, %v2588
        %v2590 = vpop.f32.mrb[0].mxu0
        %v2591 = vpop.f32.mrb[0].mxu0
        %v2592 = vadd.f32 %v2224, %v2591
        %v2593 = vpop.f32.mrb[0].mxu0
        %2594 = vmatprep.mubr.bf16.mxu0 %v1364
        %2595 = vmatmul.mubr.bf16.gmra.mrb[0].mxu0 %v1363
        %v2596 = vpop.f32.mrb[0].mxu0
        %v2597 = vadd.f32 %v2229, %v2596
        %v2598 = vpop.f32.mrb[0].mxu0
        %v2599 = vpop.f32.mrb[0].mxu0
        %v2600 = vadd.f32 %v2232, %v2599
        %v2601 = vpop.f32.mrb[0].mxu0
        %2602 = vmatprep.mubr.bf16.mxu0 %v1369
        %2603 = vmatmul.mubr.bf16.gmra.mrb[0].mxu0 %v1368
        %v2604 = vpop.f32.mrb[0].mxu0
        %v2605 = vadd.f32 %v2237, %v2604
        %v2606 = vpop.f32.mrb[0].mxu0
        %v2607 = vpop.f32.mrb[0].mxu0
        %v2608 = vadd.f32 %v2240, %v2607
        %v2609 = vpop.f32.mrb[0].mxu0
        %2610 = vmatprep.mubr.bf16.mxu0 %v1374
        %2611 = vmatmul.mubr.bf16.gmra.mrb[0].mxu0 %v1373
        %v2612 = vpop.f32.mrb[0].mxu0
        %v2613 = vadd.f32 %v2245, %v2612
        %v2614 = vpop.f32.mrb[0].mxu0
        %v2615 = vpop.f32.mrb[0].mxu0
        %v2616 = vadd.f32 %v2248, %v2615
        %v2617 = vpop.f32.mrb[0].mxu0
        %2618 = vmatprep.mubr.bf16.mxu0 %v1379
        %2619 = vmatmul.mubr.bf16.gmra.mrb[0].mxu0 %v1378
        %v2620 = vpop.f32.mrb[0].mxu0
        %v2621 = vadd.f32 %v2253, %v2620
        %v2622 = vpop.f32.mrb[0].mxu0
        %v2623 = vpop.f32.mrb[0].mxu0
        %v2624 = vadd.f32 %v2256, %v2623
        %v2625 = vpop.f32.mrb[0].mxu0
        %2626 = vmatprep.mubr.bf16.mxu0 %v1384
        %2627 = vmatmul.mubr.bf16.gmra.mrb[0].mxu0 %v1383
        %v2628 = vpop.f32.mrb[0].mxu0
        %v2629 = vadd.f32 %v2261, %v2628
        %v2630 = vpop.f32.mrb[0].mxu0
        %v2631 = vpop.f32.mrb[0].mxu0
        %v2632 = vadd.f32 %v2264, %v2631
        %v2633 = vpop.f32.mrb[0].mxu0
        %2634 = vmatprep.mubr.bf16.mxu0 %v1389
        %2635 = vmatmul.mubr.bf16.gmra.mrb[0].mxu0 %v1388
        %v2636 = vpop.f32.mrb[0].mxu0
        %v2637 = vadd.f32 %v2269, %v2636
        %v2638 = vpop.f32.mrb[0].mxu0
        %v2639 = vpop.f32.mrb[0].mxu0
        %v2640 = vadd.f32 %v2272, %v2639
        %v2641 = vpop.f32.mrb[0].mxu0
        %2642 = vmatprep.mubr.bf16.mxu0 %v1394
        %2643 = vmatmul.mubr.bf16.gmra.mrb[0].mxu0 %v1393
        %v2644 = vpop.f32.mrb[0].mxu0
        %v2645 = vadd.f32 %v2277, %v2644
        %v2646 = vpop.f32.mrb[0].mxu0
        %v2647 = vpop.f32.mrb[0].mxu0
        %v2648 = vadd.f32 %v2280, %v2647
        %v2649 = vpop.f32.mrb[0].mxu0
        %2650 = vmatprep.mubr.bf16.mxu0 %v1399
        %2651 = vmatmul.mubr.bf16.gmra.mrb[0].mxu0 %v1398
        %v2652 = vpop.f32.mrb[0].mxu0
        %v2653 = vadd.f32 %v2285, %v2652
        %v2654 = vpop.f32.mrb[0].mxu0
        %v2655 = vpop.f32.mrb[0].mxu0
        %v2656 = vadd.f32 %v2288, %v2655
        %v2657 = vpop.f32.mrb[0].mxu0
        %2658 = vmatprep.mubr.bf16.mxu0 %v1404
        %2659 = vmatmul.mubr.bf16.gmra.mrb[0].mxu0 %v1403
        %v2660 = vpop.f32.mrb[0].mxu0
        %v2661 = vadd.f32 %v2293, %v2660
        %v2662 = vpop.f32.mrb[0].mxu0
        %v2663 = vpop.f32.mrb[0].mxu0
        %v2664 = vpop.f32.mrb[0].mxu0
        %2665 = vdwg.mxu0
        %2666 = vmatprep.subr.bf16.mxu0 0
        %2667 = vmatpush1.bf16.msra.mxu0 %v1756
        %2668 = vmatprep.subr.bf16.mxu0 0
        %2669 = vmatpush1.bf16.msra.mxu0 %v1757
        %2670 = vmatprep.subr.bf16.mxu0 0
        %2671 = vmatpush1.bf16.msra.mxu0 %v1758
        %2672 = vmatprep.subr.bf16.mxu0 0
        %2673 = vmatpush1.bf16.msra.mxu0 %v1759
        %2674 = vmatprep.subr.bf16.mxu0 0
        %2675 = vmatpush1.bf16.msra.mxu0 %v1760
        %2676 = vmatprep.subr.bf16.mxu0 0
        %2677 = vmatpush1.bf16.msra.mxu0 %v1928
        %2678 = vmatprep.subr.bf16.mxu0 0
        %2679 = vmatpush1.bf16.msra.mxu0 0
        %2680 = vmatprep.subr.bf16.mxu0 0
        %2681 = vmatpush1.bf16.msra.mxu0 0
        %2682 = vmatprep.subr.bf16.mxu0 0
        %2683 = vmatpush1.bf16.msra.mxu0 0
        %2684 = vmatprep.subr.bf16.mxu0 0
        %2685 = vmatpush1.bf16.msra.mxu0 0
        %2686 = vmatprep.subr.bf16.mxu0 0
        %2687 = vmatpush1.bf16.msra.mxu0 0
        %2688 = vmatprep.subr.bf16.mxu0 0
        %2689 = vmatpush1.bf16.msra.mxu0 0
        %2690 = vmatprep.subr.bf16.mxu0 0
        %2691 = vmatpush1.bf16.msra.mxu0 0
        %2692 = vmatprep.subr.bf16.mxu0 0
        %2693 = vmatpush1.bf16.msra.mxu0 0
        %2694 = vmatprep.subr.bf16.mxu0 0
        %2695 = vmatpush1.bf16.msra.mxu0 0
        %2696 = vmatprep.subr.bf16.mxu0 0
        %2697 = vmatpush1.bf16.msra.mxu0 0
        %2698 = vmatprep.mubr.bf16.mxu0 0
        %2699 = vmatmul.mubr.bf16.gmra.mrb[0].mxu0 %v1801
        %v2700 = vpop.f32.mrb[0].mxu0
        %v2701 = vadd.f32 %v2333, %v2700
        %v2702 = vpop.f32.mrb[0].mxu0
        %v2703 = vpop.f32.mrb[0].mxu0
        %v2704 = vadd.f32 %v2336, %v2703
        %v2705 = vpop.f32.mrb[0].mxu0
        %2706 = vmatprep.mubr.bf16.mxu0 0
        %2707 = vmatmul.mubr.bf16.gmra.mrb[0].mxu0 %v1804
        %v2708 = vpop.f32.mrb[0].mxu0
        %v2709 = vadd.f32 %v2341, %v2708
        %v2710 = vpop.f32.mrb[0].mxu0
        %v2711 = vpop.f32.mrb[0].mxu0
        %v2712 = vadd.f32 %v2344, %v2711
        %v2713 = vpop.f32.mrb[0].mxu0
        %2714 = vmatprep.mubr.bf16.mxu0 0
        %2715 = vmatmul.mubr.bf16.gmra.mrb[0].mxu0 %v1807
        %v2716 = vpop.f32.mrb[0].mxu0
        %v2717 = vadd.f32 %v2349, %v2716
        %v2718 = vpop.f32.mrb[0].mxu0
        %v2719 = vpop.f32.mrb[0].mxu0
        %v2720 = vadd.f32 %v2352, %v2719
        %v2721 = vpop.f32.mrb[0].mxu0
        %2722 = vmatprep.mubr.bf16.mxu0 0
        %2723 = vmatmul.mubr.bf16.gmra.mrb[0].mxu0 %v1810
        %v2724 = vpop.f32.mrb[0].mxu0
        %v2725 = vadd.f32 %v2357, %v2724
        %v2726 = vpop.f32.mrb[0].mxu0
        %v2727 = vpop.f32.mrb[0].mxu0
        %v2728 = vadd.f32 %v2360, %v2727
        %v2729 = vpop.f32.mrb[0].mxu0
        %2730 = vmatprep.mubr.bf16.mxu0 0
        %2731 = vmatmul.mubr.bf16.gmra.mrb[0].mxu0 %v1813
        %v2732 = vpop.f32.mrb[0].mxu0
        %v2733 = vadd.f32 %v2365, %v2732
        %v2734 = vpop.f32.mrb[0].mxu0
        %v2735 = vpop.f32.mrb[0].mxu0
        %v2736 = vadd.f32 %v2368, %v2735
        %v2737 = vpop.f32.mrb[0].mxu0
        %2738 = vmatprep.mubr.bf16.mxu0 0
        %2739 = vmatmul.mubr.bf16.gmra.mrb[0].mxu0 %v1816
        %v2740 = vpop.f32.mrb[0].mxu0
        %v2741 = vadd.f32 %v2373, %v2740
        %v2742 = vpop.f32.mrb[0].mxu0
        %v2743 = vpop.f32.mrb[0].mxu0
        %v2744 = vadd.f32 %v2376, %v2743
        %v2745 = vpop.f32.mrb[0].mxu0
        %2746 = vmatprep.mubr.bf16.mxu0 0
        %2747 = vmatmul.mubr.bf16.gmra.mrb[0].mxu0 %v1819
        %v2748 = vpop.f32.mrb[0].mxu0
        %v2749 = vadd.f32 %v2381, %v2748
        %v2750 = vpop.f32.mrb[0].mxu0
        %v2751 = vpop.f32.mrb[0].mxu0
        %v2752 = vadd.f32 %v2384, %v2751
        %v2753 = vpop.f32.mrb[0].mxu0
        %2754 = vmatprep.mubr.bf16.mxu0 0
        %2755 = vmatmul.mubr.bf16.gmra.mrb[0].mxu0 %v1822
        %v2756 = vpop.f32.mrb[0].mxu0
        %v2757 = vadd.f32 %v2389, %v2756
        %v2758 = vpop.f32.mrb[0].mxu0
        %v2759 = vpop.f32.mrb[0].mxu0
        %v2760 = vadd.f32 %v2392, %v2759
        %v2761 = vpop.f32.mrb[0].mxu0
        %2762 = vmatprep.mubr.bf16.mxu0 0
        %2763 = vmatmul.mubr.bf16.gmra.mrb[0].mxu0 %v1825
        %v2764 = vpop.f32.mrb[0].mxu0
        %v2765 = vadd.f32 %v2397, %v2764
        %v2766 = vpop.f32.mrb[0].mxu0
        %v2767 = vpop.f32.mrb[0].mxu0
        %v2768 = vadd.f32 %v2400, %v2767
        %v2769 = vpop.f32.mrb[0].mxu0
        %2770 = vmatprep.mubr.bf16.mxu0 0
        %2771 = vmatmul.mubr.bf16.gmra.mrb[0].mxu0 %v1828
        %v2772 = vpop.f32.mrb[0].mxu0
        %v2773 = vadd.f32 %v2405, %v2772
        %v2774 = vpop.f32.mrb[0].mxu0
        %v2775 = vpop.f32.mrb[0].mxu0
        %v2776 = vadd.f32 %v2408, %v2775
        %v2777 = vpop.f32.mrb[0].mxu0
        %2778 = vmatprep.mubr.bf16.mxu0 0
        %2779 = vmatmul.mubr.bf16.gmra.mrb[0].mxu0 %v1831
        %v2780 = vpop.f32.mrb[0].mxu0
        %v2781 = vadd.f32 %v2413, %v2780
        %v2782 = vpop.f32.mrb[0].mxu0
        %v2783 = vpop.f32.mrb[0].mxu0
        %v2784 = vadd.f32 %v2416, %v2783
        %v2785 = vpop.f32.mrb[0].mxu0
        %2786 = vmatprep.mubr.bf16.mxu0 0
        %2787 = vmatmul.mubr.bf16.gmra.mrb[0].mxu0 %v1834
        %v2788 = vpop.f32.mrb[0].mxu0
        %v2789 = vadd.f32 %v2421, %v2788
        %v2790 = vpop.f32.mrb[0].mxu0
        %v2791 = vpop.f32.mrb[0].mxu0
        %v2792 = vadd.f32 %v2424, %v2791
        %v2793 = vpop.f32.mrb[0].mxu0
        %2794 = vmatprep.mubr.bf16.mxu0 0
        %2795 = vmatmul.mubr.bf16.gmra.mrb[0].mxu0 %v1837
        %v2796 = vpop.f32.mrb[0].mxu0
        %v2797 = vadd.f32 %v2429, %v2796
        %v2798 = vpop.f32.mrb[0].mxu0
        %v2799 = vpop.f32.mrb[0].mxu0
        %v2800 = vadd.f32 %v2432, %v2799
        %v2801 = vpop.f32.mrb[0].mxu0
        %2802 = vmatprep.mubr.bf16.mxu0 0
        %2803 = vmatmul.mubr.bf16.gmra.mrb[0].mxu0 %v1840
        %v2804 = vpop.f32.mrb[0].mxu0
        %v2805 = vadd.f32 %v2437, %v2804
        %v2806 = vpop.f32.mrb[0].mxu0
        %v2807 = vpop.f32.mrb[0].mxu0
        %v2808 = vadd.f32 %v2440, %v2807
        %v2809 = vpop.f32.mrb[0].mxu0
        %2810 = vmatprep.mubr.bf16.mxu0 0
        %2811 = vmatmul.mubr.bf16.gmra.mrb[0].mxu0 %v1843
        %v2812 = vpop.f32.mrb[0].mxu0
        %v2813 = vadd.f32 %v2445, %v2812
        %v2814 = vpop.f32.mrb[0].mxu0
        %v2815 = vpop.f32.mrb[0].mxu0
        %v2816 = vadd.f32 %v2448, %v2815
        %v2817 = vpop.f32.mrb[0].mxu0
        %2818 = vmatprep.mubr.bf16.mxu0 0
        %2819 = vmatmul.mubr.bf16.gmra.mrb[0].mxu0 %v1846
        %v2820 = vpop.f32.mrb[0].mxu0
        %v2821 = vadd.f32 %v2453, %v2820
        %v2822 = vpop.f32.mrb[0].mxu0
        %v2823 = vpop.f32.mrb[0].mxu0
        %v2824 = vadd.f32 %v2456, %v2823
        %v2825 = vpop.f32.mrb[0].mxu0
        %2826 = vmatprep.mubr.bf16.mxu0 0
        %2827 = vmatmul.mubr.bf16.gmra.mrb[0].mxu0 %v1849
        %v2828 = vpop.f32.mrb[0].mxu0
        %v2829 = vadd.f32 %v2461, %v2828
        %v2830 = vpop.f32.mrb[0].mxu0
        %v2831 = vpop.f32.mrb[0].mxu0
        %v2832 = vadd.f32 %v2464, %v2831
        %v2833 = vpop.f32.mrb[0].mxu0
        %2834 = vmatprep.mubr.bf16.mxu0 0
        %2835 = vmatmul.mubr.bf16.gmra.mrb[0].mxu0 %v1852
        %v2836 = vpop.f32.mrb[0].mxu0
        %v2837 = vadd.f32 %v2469, %v2836
        %v2838 = vpop.f32.mrb[0].mxu0
        %v2839 = vpop.f32.mrb[0].mxu0
        %v2840 = vadd.f32 %v2472, %v2839
        %v2841 = vpop.f32.mrb[0].mxu0
        %2842 = vmatprep.mubr.bf16.mxu0 0
        %2843 = vmatmul.mubr.bf16.gmra.mrb[0].mxu0 %v1855
        %v2844 = vpop.f32.mrb[0].mxu0
        %v2845 = vadd.f32 %v2477, %v2844
        %v2846 = vpop.f32.mrb[0].mxu0
        %v2847 = vpop.f32.mrb[0].mxu0
        %v2848 = vadd.f32 %v2480, %v2847
        %v2849 = vpop.f32.mrb[0].mxu0
        %2850 = vmatprep.mubr.bf16.mxu0 0
        %2851 = vmatmul.mubr.bf16.gmra.mrb[0].mxu0 %v1858
        %v2852 = vpop.f32.mrb[0].mxu0
        %v2853 = vadd.f32 %v2485, %v2852
        %v2854 = vpop.f32.mrb[0].mxu0
        %v2855 = vpop.f32.mrb[0].mxu0
        %v2856 = vadd.f32 %v2488, %v2855
        %v2857 = vpop.f32.mrb[0].mxu0
        %2858 = vmatprep.mubr.bf16.mxu0 0
        %2859 = vmatmul.mubr.bf16.gmra.mrb[0].mxu0 %v1861
        %v2860 = vpop.f32.mrb[0].mxu0
        %v2861 = vadd.f32 %v2493, %v2860
        %v2862 = vpop.f32.mrb[0].mxu0
        %v2863 = vpop.f32.mrb[0].mxu0
        %v2864 = vadd.f32 %v2496, %v2863
        %v2865 = vpop.f32.mrb[0].mxu0
        %2866 = vmatprep.mubr.bf16.mxu0 0
        %2867 = vmatmul.mubr.bf16.gmra.mrb[0].mxu0 %v1864
        %v2868 = vpop.f32.mrb[0].mxu0
        %v2869 = vadd.f32 %v2501, %v2868
        %v2870 = vpop.f32.mrb[0].mxu0
        %v2871 = vpop.f32.mrb[0].mxu0
        %v2872 = vadd.f32 %v2504, %v2871
        %v2873 = vpop.f32.mrb[0].mxu0
        %2874 = vmatprep.mubr.bf16.mxu0 0
        %2875 = vmatmul.mubr.bf16.gmra.mrb[0].mxu0 %v1867
        %v2876 = vpop.f32.mrb[0].mxu0
        %v2877 = vadd.f32 %v2509, %v2876
        %v2878 = vpop.f32.mrb[0].mxu0
        %v2879 = vpop.f32.mrb[0].mxu0
        %v2880 = vadd.f32 %v2512, %v2879
        %v2881 = vpop.f32.mrb[0].mxu0
        %2882 = vmatprep.mubr.bf16.mxu0 0
        %2883 = vmatmul.mubr.bf16.gmra.mrb[0].mxu0 %v1870
        %v2884 = vpop.f32.mrb[0].mxu0
        %v2885 = vadd.f32 %v2517, %v2884
        %v2886 = vpop.f32.mrb[0].mxu0
        %v2887 = vpop.f32.mrb[0].mxu0
        %v2888 = vadd.f32 %v2520, %v2887
        %v2889 = vpop.f32.mrb[0].mxu0
        %2890 = vmatprep.mubr.bf16.mxu0 0
        %2891 = vmatmul.mubr.bf16.gmra.mrb[0].mxu0 %v1873
        %v2892 = vpop.f32.mrb[0].mxu0
        %v2893 = vadd.f32 %v2525, %v2892
        %v2894 = vpop.f32.mrb[0].mxu0
        %v2895 = vpop.f32.mrb[0].mxu0
        %v2896 = vadd.f32 %v2528, %v2895
        %v2897 = vpop.f32.mrb[0].mxu0
        %2898 = vmatprep.mubr.bf16.mxu0 0
        %2899 = vmatmul.mubr.bf16.gmra.mrb[0].mxu0 %v1876
        %v2900 = vpop.f32.mrb[0].mxu0
        %v2901 = vadd.f32 %v2533, %v2900
        %v2902 = vpop.f32.mrb[0].mxu0
        %v2903 = vpop.f32.mrb[0].mxu0
        %v2904 = vadd.f32 %v2536, %v2903
        %v2905 = vpop.f32.mrb[0].mxu0
        %2906 = vmatprep.mubr.bf16.mxu0 0
        %2907 = vmatmul.mubr.bf16.gmra.mrb[0].mxu0 %v1879
        %v2908 = vpop.f32.mrb[0].mxu0
        %v2909 = vadd.f32 %v2541, %v2908
        %v2910 = vpop.f32.mrb[0].mxu0
        %v2911 = vpop.f32.mrb[0].mxu0
        %v2912 = vadd.f32 %v2544, %v2911
        %v2913 = vpop.f32.mrb[0].mxu0
        %2914 = vmatprep.mubr.bf16.mxu0 0
        %2915 = vmatmul.mubr.bf16.gmra.mrb[0].mxu0 %v1882
        %v2916 = vpop.f32.mrb[0].mxu0
        %v2917 = vadd.f32 %v2549, %v2916
        %v2918 = vpop.f32.mrb[0].mxu0
        %v2919 = vpop.f32.mrb[0].mxu0
        %v2920 = vadd.f32 %v2552, %v2919
        %v2921 = vpop.f32.mrb[0].mxu0
        %2922 = vmatprep.mubr.bf16.mxu0 0
        %2923 = vmatmul.mubr.bf16.gmra.mrb[0].mxu0 %v1885
        %v2924 = vpop.f32.mrb[0].mxu0
        %v2925 = vadd.f32 %v2557, %v2924
        %v2926 = vpop.f32.mrb[0].mxu0
        %v2927 = vpop.f32.mrb[0].mxu0
        %v2928 = vadd.f32 %v2560, %v2927
        %v2929 = vpop.f32.mrb[0].mxu0
        %2930 = vmatprep.mubr.bf16.mxu0 0
        %2931 = vmatmul.mubr.bf16.gmra.mrb[0].mxu0 %v1888
        %v2932 = vpop.f32.mrb[0].mxu0
        %v2933 = vadd.f32 %v2565, %v2932
        %v2934 = vpop.f32.mrb[0].mxu0
        %v2935 = vpop.f32.mrb[0].mxu0
        %v2936 = vadd.f32 %v2568, %v2935
        %v2937 = vpop.f32.mrb[0].mxu0
        %2938 = vmatprep.mubr.bf16.mxu0 0
        %2939 = vmatmul.mubr.bf16.gmra.mrb[0].mxu0 %v1891
        %v2940 = vpop.f32.mrb[0].mxu0
        %v2941 = vadd.f32 %v2573, %v2940
        %v2942 = vpop.f32.mrb[0].mxu0
        %v2943 = vpop.f32.mrb[0].mxu0
        %v2944 = vadd.f32 %v2576, %v2943
        %v2945 = vpop.f32.mrb[0].mxu0
        %2946 = vmatprep.mubr.bf16.mxu0 0
        %2947 = vmatmul.mubr.bf16.gmra.mrb[0].mxu0 %v1894
        %v2948 = vpop.f32.mrb[0].mxu0
        %v2949 = vadd.f32 %v2581, %v2948
        %v2950 = vpop.f32.mrb[0].mxu0
        %v2951 = vpop.f32.mrb[0].mxu0
        %v2952 = vadd.f32 %v2584, %v2951
        %v2953 = vpop.f32.mrb[0].mxu0
        %2954 = vmatprep.mubr.bf16.mxu0 0
        %2955 = vmatmul.mubr.bf16.gmra.mrb[0].mxu0 %v1897
        %v2956 = vpop.f32.mrb[0].mxu0
        %v2957 = vadd.f32 %v2589, %v2956
        %v2958 = vpop.f32.mrb[0].mxu0
        %v2959 = vpop.f32.mrb[0].mxu0
        %v2960 = vadd.f32 %v2592, %v2959
        %v2961 = vpop.f32.mrb[0].mxu0
        %2962 = vmatprep.mubr.bf16.mxu0 0
        %2963 = vmatmul.mubr.bf16.gmra.mrb[0].mxu0 %v1900
        %v2964 = vpop.f32.mrb[0].mxu0
        %v2965 = vadd.f32 %v2597, %v2964
        %v2966 = vpop.f32.mrb[0].mxu0
        %v2967 = vpop.f32.mrb[0].mxu0
        %v2968 = vadd.f32 %v2600, %v2967
        %v2969 = vpop.f32.mrb[0].mxu0
        %2970 = vmatprep.mubr.bf16.mxu0 0
        %2971 = vmatmul.mubr.bf16.gmra.mrb[0].mxu0 %v1903
        %v2972 = vpop.f32.mrb[0].mxu0
        %v2973 = vadd.f32 %v2605, %v2972
        %v2974 = vpop.f32.mrb[0].mxu0
        %v2975 = vpop.f32.mrb[0].mxu0
        %v2976 = vadd.f32 %v2608, %v2975
        %v2977 = vpop.f32.mrb[0].mxu0
        %2978 = vmatprep.mubr.bf16.mxu0 0
        %2979 = vmatmul.mubr.bf16.gmra.mrb[0].mxu0 %v1906
        %v2980 = vpop.f32.mrb[0].mxu0
        %v2981 = vadd.f32 %v2613, %v2980
        %v2982 = vpop.f32.mrb[0].mxu0
        %v2983 = vpop.f32.mrb[0].mxu0
        %v2984 = vadd.f32 %v2616, %v2983
        %v2985 = vpop.f32.mrb[0].mxu0
        %2986 = vmatprep.mubr.bf16.mxu0 0
        %2987 = vmatmul.mubr.bf16.gmra.mrb[0].mxu0 %v1909
        %v2988 = vpop.f32.mrb[0].mxu0
        %v2989 = vadd.f32 %v2621, %v2988
        %v2990 = vpop.f32.mrb[0].mxu0
        %v2991 = vpop.f32.mrb[0].mxu0
        %v2992 = vadd.f32 %v2624, %v2991
        %v2993 = vpop.f32.mrb[0].mxu0
        %2994 = vmatprep.mubr.bf16.mxu0 0
        %2995 = vmatmul.mubr.bf16.gmra.mrb[0].mxu0 %v1912
        %v2996 = vpop.f32.mrb[0].mxu0
        %v2997 = vadd.f32 %v2629, %v2996
        %v2998 = vpop.f32.mrb[0].mxu0
        %v2999 = vpop.f32.mrb[0].mxu0
        %v3000 = vadd.f32 %v2632, %v2999
        %v3001 = vpop.f32.mrb[0].mxu0
        %3002 = vmatprep.mubr.bf16.mxu0 0
        %3003 = vmatmul.mubr.bf16.gmra.mrb[0].mxu0 %v1915
        %v3004 = vpop.f32.mrb[0].mxu0
        %v3005 = vadd.f32 %v2637, %v3004
        %v3006 = vpop.f32.mrb[0].mxu0
        %v3007 = vpop.f32.mrb[0].mxu0
        %v3008 = vadd.f32 %v2640, %v3007
        %v3009 = vpop.f32.mrb[0].mxu0
        %3010 = vmatprep.mubr.bf16.mxu0 0
        %3011 = vmatmul.mubr.bf16.gmra.mrb[0].mxu0 %v1918
        %v3012 = vpop.f32.mrb[0].mxu0
        %v3013 = vadd.f32 %v2645, %v3012
        %v3014 = vpop.f32.mrb[0].mxu0
        %v3015 = vpop.f32.mrb[0].mxu0
        %v3016 = vadd.f32 %v2648, %v3015
        %v3017 = vpop.f32.mrb[0].mxu0
        %3018 = vmatprep.mubr.bf16.mxu0 0
        %3019 = vmatmul.mubr.bf16.gmra.mrb[0].mxu0 %v1921
        %v3020 = vpop.f32.mrb[0].mxu0
        %v3021 = vadd.f32 %v2653, %v3020
        %v3022 = vpop.f32.mrb[0].mxu0
        %v3023 = vpop.f32.mrb[0].mxu0
        %v3024 = vadd.f32 %v2656, %v3023
        %v3025 = vpop.f32.mrb[0].mxu0
        %3026 = vmatprep.mubr.bf16.mxu0 0
        %3027 = vmatmul.mubr.bf16.gmra.mrb[0].mxu0 %v1924
        %v3028 = vpop.f32.mrb[0].mxu0
        %v3029 = vadd.f32 %v2661, %v3028
        %v3030 = vpop.f32.mrb[0].mxu0
        %v3031 = vpop.f32.mrb[0].mxu0
        %v3032 = vpop.f32.mrb[0].mxu0
        %3033 = vdwg.mxu0
        %v3034 = vmax.f32 %v2701, 0.0
        %v3035 = vmax.f32 %v2704, 0.0
        %v3036 = vmax.f32 %v2709, 0.0
        %v3037 = vmax.f32 %v2712, 0.0
        %v3038 = vmax.f32 %v2717, 0.0
        %v3039 = vmax.f32 %v2720, 0.0
        %v3040 = vmax.f32 %v2725, 0.0
        %v3041 = vmax.f32 %v2728, 0.0
        %v3042 = vmax.f32 %v2733, 0.0
        %v3043 = vmax.f32 %v2736, 0.0
        %v3044 = vmax.f32 %v2741, 0.0
        %v3045 = vmax.f32 %v2744, 0.0
        %v3046 = vmax.f32 %v2749, 0.0
        %v3047 = vmax.f32 %v2752, 0.0
        %v3048 = vmax.f32 %v2757, 0.0
        %v3049 = vmax.f32 %v2760, 0.0
        %v3050 = vmax.f32 %v2765, 0.0
        %v3051 = vmax.f32 %v2768, 0.0
        %v3052 = vmax.f32 %v2773, 0.0
        %v3053 = vmax.f32 %v2776, 0.0
        %v3054 = vmax.f32 %v2781, 0.0
        %v3055 = vmax.f32 %v2784, 0.0
        %v3056 = vmax.f32 %v2789, 0.0
        %v3057 = vmax.f32 %v2792, 0.0
        %v3058 = vmax.f32 %v2797, 0.0
        %v3059 = vmax.f32 %v2800, 0.0
        %v3060 = vmax.f32 %v2805, 0.0
        %v3061 = vmax.f32 %v2808, 0.0
        %v3062 = vmax.f32 %v2813, 0.0
        %v3063 = vmax.f32 %v2816, 0.0
        %v3064 = vmax.f32 %v2821, 0.0
        %v3065 = vmax.f32 %v2824, 0.0
        %v3066 = vmax.f32 %v2829, 0.0
        %v3067 = vmax.f32 %v2832, 0.0
        %v3068 = vmax.f32 %v2837, 0.0
        %v3069 = vmax.f32 %v2840, 0.0
        %v3070 = vmax.f32 %v2845, 0.0
        %v3071 = vmax.f32 %v2848, 0.0
        %v3072 = vmax.f32 %v2853, 0.0
        %v3073 = vmax.f32 %v2856, 0.0
        %v3074 = vmax.f32 %v2861, 0.0
        %v3075 = vmax.f32 %v2864, 0.0
        %v3076 = vmax.f32 %v2869, 0.0
        %v3077 = vmax.f32 %v2872, 0.0
        %v3078 = vmax.f32 %v2877, 0.0
        %v3079 = vmax.f32 %v2880, 0.0
        %v3080 = vmax.f32 %v2885, 0.0
        %v3081 = vmax.f32 %v2888, 0.0
        %v3082 = vmax.f32 %v2893, 0.0
        %v3083 = vmax.f32 %v2896, 0.0
        %v3084 = vmax.f32 %v2901, 0.0
        %v3085 = vmax.f32 %v2904, 0.0
        %v3086 = vmax.f32 %v2909, 0.0
        %v3087 = vmax.f32 %v2912, 0.0
        %v3088 = vmax.f32 %v2917, 0.0
        %v3089 = vmax.f32 %v2920, 0.0
        %v3090 = vmax.f32 %v2925, 0.0
        %v3091 = vmax.f32 %v2928, 0.0
        %v3092 = vmax.f32 %v2933, 0.0
        %v3093 = vmax.f32 %v2936, 0.0
        %v3094 = vmax.f32 %v2941, 0.0
        %v3095 = vmax.f32 %v2944, 0.0
        %v3096 = vmax.f32 %v2949, 0.0
        %v3097 = vmax.f32 %v2952, 0.0
        %v3098 = vmax.f32 %v2957, 0.0
        %v3099 = vmax.f32 %v2960, 0.0
        %v3100 = vmax.f32 %v2965, 0.0
        %v3101 = vmax.f32 %v2968, 0.0
        %v3102 = vmax.f32 %v2973, 0.0
        %v3103 = vmax.f32 %v2976, 0.0
        %v3104 = vmax.f32 %v2981, 0.0
        %v3105 = vmax.f32 %v2984, 0.0
        %v3106 = vmax.f32 %v2989, 0.0
        %v3107 = vmax.f32 %v2992, 0.0
        %v3108 = vmax.f32 %v2997, 0.0
        %v3109 = vmax.f32 %v3000, 0.0
        %v3110 = vmax.f32 %v3005, 0.0
        %v3111 = vmax.f32 %v3008, 0.0
        %v3112 = vmax.f32 %v3013, 0.0
        %v3113 = vmax.f32 %v3016, 0.0
        %v3114 = vmax.f32 %v3021, 0.0
        %v3115 = vmax.f32 %v3024, 0.0
        %v3116 = vmax.f32 %v3029, 0.0
        %v3117 = vpack.c.bf16 %v3035, %v3034
        %v3118 = vpack.c.bf16 %v3037, %v3036
        %v3119 = vpack.c.bf16 %v3039, %v3038
        %v3120 = vpack.c.bf16 %v3041, %v3040
        %v3121 = vpack.c.bf16 %v3043, %v3042
        %v3122 = vpack.c.bf16 %v3045, %v3044
        %v3123 = vpack.c.bf16 %v3047, %v3046
        %v3124 = vpack.c.bf16 %v3049, %v3048
        %v3125 = vpack.c.bf16 %v3051, %v3050
        %v3126 = vpack.c.bf16 %v3053, %v3052
        %v3127 = vpack.c.bf16 %v3055, %v3054
        %v3128 = vpack.c.bf16 %v3057, %v3056
        %v3129 = vpack.c.bf16 %v3059, %v3058
        %v3130 = vpack.c.bf16 %v3061, %v3060
        %v3131 = vpack.c.bf16 %v3063, %v3062
        %v3132 = vpack.c.bf16 %v3065, %v3064
        %v3133 = vpack.c.bf16 %v3067, %v3066
        %v3134 = vpack.c.bf16 %v3069, %v3068
        %v3135 = vpack.c.bf16 %v3071, %v3070
        %v3136 = vpack.c.bf16 %v3073, %v3072
        %v3137 = vpack.c.bf16 %v3075, %v3074
        %v3138 = vpack.c.bf16 %v3077, %v3076
        %v3139 = vpack.c.bf16 %v3079, %v3078
        %v3140 = vpack.c.bf16 %v3081, %v3080
        %v3141 = vpack.c.bf16 %v3083, %v3082
        %v3142 = vpack.c.bf16 %v3085, %v3084
        %v3143 = vpack.c.bf16 %v3087, %v3086
        %v3144 = vpack.c.bf16 %v3089, %v3088
        %v3145 = vpack.c.bf16 %v3091, %v3090
        %v3146 = vpack.c.bf16 %v3093, %v3092
        %v3147 = vpack.c.bf16 %v3095, %v3094
        %v3148 = vpack.c.bf16 %v3097, %v3096
        %v3149 = vpack.c.bf16 %v3099, %v3098
        %v3150 = vpack.c.bf16 %v3101, %v3100
        %v3151 = vpack.c.bf16 %v3103, %v3102
        %v3152 = vpack.c.bf16 %v3105, %v3104
        %v3153 = vpack.c.bf16 %v3107, %v3106
        %v3154 = vpack.c.bf16 %v3109, %v3108
        %v3155 = vpack.c.bf16 %v3111, %v3110
        %v3156 = vpack.c.bf16 %v3113, %v3112
        %v3157 = vpack.c.bf16 %v3115, %v3114
        %v3158 = vpack.c.bf16 %v3116, %v3116
        %v3201 = vunpack.c.l.b16 %v3117
        %v3202 = vunpack.c.h.b16 %v3117
        %v3203 = vunpack.c.l.b16 %v3118
        %v3204 = vunpack.c.h.b16 %v3118
        %v3205 = vunpack.c.l.b16 %v3119
        %v3206 = vunpack.c.h.b16 %v3119
        %v3207 = vunpack.c.l.b16 %v3120
        %v3208 = vunpack.c.h.b16 %v3120
        %v3209 = vunpack.c.l.b16 %v3121
        %v3210 = vunpack.c.h.b16 %v3121
        %v3211 = vunpack.c.l.b16 %v3122
        %v3212 = vunpack.c.h.b16 %v3122
        %v3213 = vunpack.c.l.b16 %v3123
        %v3214 = vunpack.c.h.b16 %v3123
        %v3215 = vunpack.c.l.b16 %v3124
        %v3216 = vunpack.c.h.b16 %v3124
        %v3217 = vunpack.c.l.b16 %v3125
        %v3218 = vunpack.c.h.b16 %v3125
        %v3219 = vunpack.c.l.b16 %v3126
        %v3220 = vunpack.c.h.b16 %v3126
        %v3221 = vunpack.c.l.b16 %v3127
        %v3222 = vunpack.c.h.b16 %v3127
        %v3223 = vunpack.c.l.b16 %v3128
        %v3224 = vunpack.c.h.b16 %v3128
        %v3225 = vunpack.c.l.b16 %v3129
        %v3226 = vunpack.c.h.b16 %v3129
        %v3227 = vunpack.c.l.b16 %v3130
        %v3228 = vunpack.c.h.b16 %v3130
        %v3229 = vunpack.c.l.b16 %v3131
        %v3230 = vunpack.c.h.b16 %v3131
        %v3231 = vunpack.c.l.b16 %v3132
        %v3232 = vunpack.c.h.b16 %v3132
        %v3233 = vunpack.c.l.b16 %v3133
        %v3234 = vunpack.c.h.b16 %v3133
        %v3235 = vunpack.c.l.b16 %v3134
        %v3236 = vunpack.c.h.b16 %v3134
        %v3237 = vunpack.c.l.b16 %v3135
        %v3238 = vunpack.c.h.b16 %v3135
        %v3239 = vunpack.c.l.b16 %v3136
        %v3240 = vunpack.c.h.b16 %v3136
        %v3241 = vunpack.c.l.b16 %v3137
        %v3242 = vunpack.c.h.b16 %v3137
        %v3243 = vunpack.c.l.b16 %v3138
        %v3244 = vunpack.c.h.b16 %v3138
        %v3245 = vunpack.c.l.b16 %v3139
        %v3246 = vunpack.c.h.b16 %v3139
        %v3247 = vunpack.c.l.b16 %v3140
        %v3248 = vunpack.c.h.b16 %v3140
        %v3249 = vunpack.c.l.b16 %v3141
        %v3250 = vunpack.c.h.b16 %v3141
        %v3251 = vunpack.c.l.b16 %v3142
        %v3252 = vunpack.c.h.b16 %v3142
        %v3253 = vunpack.c.l.b16 %v3143
        %v3254 = vunpack.c.h.b16 %v3143
        %v3255 = vunpack.c.l.b16 %v3144
        %v3256 = vunpack.c.h.b16 %v3144
        %v3257 = vunpack.c.l.b16 %v3145
        %v3258 = vunpack.c.h.b16 %v3145
        %v3259 = vunpack.c.l.b16 %v3146
        %v3260 = vunpack.c.h.b16 %v3146
        %v3261 = vunpack.c.l.b16 %v3147
        %v3262 = vunpack.c.h.b16 %v3147
        %v3263 = vunpack.c.l.b16 %v3148
        %v3264 = vunpack.c.h.b16 %v3148
        %v3265 = vunpack.c.l.b16 %v3149
        %v3266 = vunpack.c.h.b16 %v3149
        %v3267 = vunpack.c.l.b16 %v3150
        %v3268 = vunpack.c.h.b16 %v3150
        %v3269 = vunpack.c.l.b16 %v3151
        %v3270 = vunpack.c.h.b16 %v3151
        %v3271 = vunpack.c.l.b16 %v3152
        %v3272 = vunpack.c.h.b16 %v3152
        %v3273 = vunpack.c.l.b16 %v3153
        %v3274 = vunpack.c.h.b16 %v3153
        %v3275 = vunpack.c.l.b16 %v3154
        %v3276 = vunpack.c.h.b16 %v3154
        %v3277 = vunpack.c.l.b16 %v3155
        %v3278 = vunpack.c.h.b16 %v3155
        %v3279 = vunpack.c.l.b16 %v3156
        %v3280 = vunpack.c.h.b16 %v3156
        %v3281 = vunpack.c.l.b16 %v3157
        %v3282 = vunpack.c.h.b16 %v3157
        %v3283 = vunpack.c.l.b16 %v3158
        %v3284 = vpack.c.b16 %v3201, %v3201
        %v3285 = vpack.c.b16 %v3202, %v3202
        %v3286 = vpack.c.b16 %v3203, %v3203
        %v3287 = vpack.c.b16 %v3204, %v3204
        %v3288 = vpack.c.b16 %v3205, %v3205
        %v3289 = vpack.c.b16 %v3206, %v3206
        %v3290 = vpack.c.b16 %v3207, %v3207
        %v3291 = vpack.c.b16 %v3208, %v3208
        %v3292 = vpack.c.b16 %v3209, %v3209
        %v3293 = vpack.c.b16 %v3210, %v3210
        %v3294 = vpack.c.b16 %v3211, %v3211
        %v3295 = vpack.c.b16 %v3212, %v3212
        %v3296 = vpack.c.b16 %v3213, %v3213
        %v3297 = vpack.c.b16 %v3214, %v3214
        %v3298 = vpack.c.b16 %v3215, %v3215
        %v3299 = vpack.c.b16 %v3216, %v3216
        %v3300 = vpack.c.b16 %v3217, %v3217
        %v3301 = vpack.c.b16 %v3218, %v3218
        %v3302 = vpack.c.b16 %v3219, %v3219
        %v3303 = vpack.c.b16 %v3220, %v3220
        %v3304 = vpack.c.b16 %v3221, %v3221
        %v3305 = vpack.c.b16 %v3222, %v3222
        %v3306 = vpack.c.b16 %v3223, %v3223
        %v3307 = vpack.c.b16 %v3224, %v3224
        %v3308 = vpack.c.b16 %v3225, %v3225
        %v3309 = vpack.c.b16 %v3226, %v3226
        %v3310 = vpack.c.b16 %v3227, %v3227
        %v3311 = vpack.c.b16 %v3228, %v3228
        %v3312 = vpack.c.b16 %v3229, %v3229
        %v3313 = vpack.c.b16 %v3230, %v3230
        %v3314 = vpack.c.b16 %v3231, %v3231
        %v3315 = vpack.c.b16 %v3232, %v3232
        %v3316 = vpack.c.b16 %v3233, %v3233
        %v3317 = vpack.c.b16 %v3234, %v3234
        %v3318 = vpack.c.b16 %v3235, %v3235
        %v3319 = vpack.c.b16 %v3236, %v3236
        %v3320 = vpack.c.b16 %v3237, %v3237
        %v3321 = vpack.c.b16 %v3238, %v3238
        %v3322 = vpack.c.b16 %v3239, %v3239
        %v3323 = vpack.c.b16 %v3240, %v3240
        %v3324 = vpack.c.b16 %v3241, %v3241
        %v3325 = vpack.c.b16 %v3242, %v3242
        %v3326 = vpack.c.b16 %v3243, %v3243
        %v3327 = vpack.c.b16 %v3244, %v3244
        %v3328 = vpack.c.b16 %v3245, %v3245
        %v3329 = vpack.c.b16 %v3246, %v3246
        %v3330 = vpack.c.b16 %v3247, %v3247
        %v3331 = vpack.c.b16 %v3248, %v3248
        %v3332 = vpack.c.b16 %v3249, %v3249
        %v3333 = vpack.c.b16 %v3250, %v3250
        %v3334 = vpack.c.b16 %v3251, %v3251
        %v3335 = vpack.c.b16 %v3252, %v3252
        %v3336 = vpack.c.b16 %v3253, %v3253
        %v3337 = vpack.c.b16 %v3254, %v3254
        %v3338 = vpack.c.b16 %v3255, %v3255
        %v3339 = vpack.c.b16 %v3256, %v3256
        %v3340 = vpack.c.b16 %v3257, %v3257
        %v3341 = vpack.c.b16 %v3258, %v3258
        %v3342 = vpack.c.b16 %v3259, %v3259
        %v3343 = vpack.c.b16 %v3260, %v3260
        %v3344 = vpack.c.b16 %v3261, %v3261
        %v3345 = vpack.c.b16 %v3262, %v3262
        %v3346 = vpack.c.b16 %v3263, %v3263
        %v3347 = vpack.c.b16 %v3264, %v3264
        %v3348 = vpack.c.b16 %v3265, %v3265
        %v3349 = vpack.c.b16 %v3266, %v3266
        %v3350 = vpack.c.b16 %v3267, %v3267
        %v3351 = vpack.c.b16 %v3268, %v3268
        %v3352 = vpack.c.b16 %v3269, %v3269
        %v3353 = vpack.c.b16 %v3270, %v3270
        %v3354 = vpack.c.b16 %v3271, %v3271
        %v3355 = vpack.c.b16 %v3272, %v3272
        %v3356 = vpack.c.b16 %v3273, %v3273
        %v3357 = vpack.c.b16 %v3274, %v3274
        %v3358 = vpack.c.b16 %v3275, %v3275
        %v3359 = vpack.c.b16 %v3276, %v3276
        %v3360 = vpack.c.b16 %v3277, %v3277
        %v3361 = vpack.c.b16 %v3278, %v3278
        %v3362 = vpack.c.b16 %v3279, %v3279
        %v3363 = vpack.c.b16 %v3280, %v3280
        %v3364 = vpack.c.b16 %v3281, %v3281
        %v3365 = vpack.c.b16 %v3282, %v3282
        %v3366 = vpack.c.b16 %v3283, %v3283
        %3450 = vst [vmem:[%s177] sm:$0xf] %v3284
        %3451 = vst [vmem:[%s177 + $0x4] sm:$0xf] %v3285
        %3452 = vst [vmem:[%s177 + $0x8] sm:$0xf] %v3286
        %3453 = vst [vmem:[%s177 + $0xc] sm:$0xf] %v3287
        %3454 = vst [vmem:[%s177 + $0x10] sm:$0xf] %v3288
        %3455 = vst [vmem:[%s177 + $0x14] sm:$0xf] %v3289
        %3456 = vst [vmem:[%s177 + $0x18] sm:$0xf] %v3290
        %3457 = vst [vmem:[%s177 + $0x1c] sm:$0xf] %v3291
        %3458 = vst [vmem:[%s177 + $0x20] sm:$0xf] %v3292
        %3459 = vst [vmem:[%s177 + $0x24] sm:$0xf] %v3293
        %3460 = vst [vmem:[%s177 + $0x28] sm:$0xf] %v3294
        %3461 = vst [vmem:[%s177 + $0x2c] sm:$0xf] %v3295
        %3462 = vst [vmem:[%s177 + $0x30] sm:$0xf] %v3296
        %3463 = vst [vmem:[%s177 + $0x34] sm:$0xf] %v3297
        %3464 = vst [vmem:[%s177 + $0x38] sm:$0xf] %v3298
        %3465 = vst [vmem:[%s177 + $0x3c] sm:$0xf] %v3299
        %3466 = vst [vmem:[%s177 + $0x40] sm:$0xf] %v3300
        %3467 = vst [vmem:[%s177 + $0x44] sm:$0xf] %v3301
        %3468 = vst [vmem:[%s177 + $0x48] sm:$0xf] %v3302
        %3469 = vst [vmem:[%s177 + $0x4c] sm:$0xf] %v3303
        %3470 = vst [vmem:[%s177 + $0x50] sm:$0xf] %v3304
        %3471 = vst [vmem:[%s177 + $0x54] sm:$0xf] %v3305
        %3472 = vst [vmem:[%s177 + $0x58] sm:$0xf] %v3306
        %3473 = vst [vmem:[%s177 + $0x5c] sm:$0xf] %v3307
        %3474 = vst [vmem:[%s177 + $0x60] sm:$0xf] %v3308
        %3475 = vst [vmem:[%s177 + $0x64] sm:$0xf] %v3309
        %3476 = vst [vmem:[%s177 + $0x68] sm:$0xf] %v3310
        %3477 = vst [vmem:[%s177 + $0x6c] sm:$0xf] %v3311
        %3478 = vst [vmem:[%s177 + $0x70] sm:$0xf] %v3312
        %3479 = vst [vmem:[%s177 + $0x74] sm:$0xf] %v3313
        %3480 = vst [vmem:[%s177 + $0x78] sm:$0xf] %v3314
        %3481 = vst [vmem:[%s177 + $0x7c] sm:$0xf] %v3315
        %3482 = vst [vmem:[%s177 + $0x80] sm:$0xf] %v3316
        %3483 = vst [vmem:[%s177 + $0x84] sm:$0xf] %v3317
        %3484 = vst [vmem:[%s177 + $0x88] sm:$0xf] %v3318
        %3485 = vst [vmem:[%s177 + $0x8c] sm:$0xf] %v3319
        %3486 = vst [vmem:[%s177 + $0x90] sm:$0xf] %v3320
        %3487 = vst [vmem:[%s177 + $0x94] sm:$0xf] %v3321
        %3488 = vst [vmem:[%s177 + $0x98] sm:$0xf] %v3322
        %3489 = vst [vmem:[%s177 + $0x9c] sm:$0xf] %v3323
        %3490 = vst [vmem:[%s177 + $0xa0] sm:$0xf] %v3324
        %3491 = vst [vmem:[%s177 + $0xa4] sm:$0xf] %v3325
        %3492 = vst [vmem:[%s177 + $0xa8] sm:$0xf] %v3326
        %3493 = vst [vmem:[%s177 + $0xac] sm:$0xf] %v3327
        %3494 = vst [vmem:[%s177 + $0xb0] sm:$0xf] %v3328
        %3495 = vst [vmem:[%s177 + $0xb4] sm:$0xf] %v3329
        %3496 = vst [vmem:[%s177 + $0xb8] sm:$0xf] %v3330
        %3497 = vst [vmem:[%s177 + $0xbc] sm:$0xf] %v3331
        %3498 = vst [vmem:[%s177 + $0xc0] sm:$0xf] %v3332
        %3499 = vst [vmem:[%s177 + $0xc4] sm:$0xf] %v3333
        %3500 = vst [vmem:[%s177 + $0xc8] sm:$0xf] %v3334
        %3501 = vst [vmem:[%s177 + $0xcc] sm:$0xf] %v3335
        %3502 = vst [vmem:[%s177 + $0xd0] sm:$0xf] %v3336
        %3503 = vst [vmem:[%s177 + $0xd4] sm:$0xf] %v3337
        %3504 = vst [vmem:[%s177 + $0xd8] sm:$0xf] %v3338
        %3505 = vst [vmem:[%s177 + $0xdc] sm:$0xf] %v3339
        %3506 = vst [vmem:[%s177 + $0xe0] sm:$0xf] %v3340
        %3507 = vst [vmem:[%s177 + $0xe4] sm:$0xf] %v3341
        %3508 = vst [vmem:[%s177 + $0xe8] sm:$0xf] %v3342
        %3509 = vst [vmem:[%s177 + $0xec] sm:$0xf] %v3343
        %3510 = vst [vmem:[%s177 + $0xf0] sm:$0xf] %v3344
        %3511 = vst [vmem:[%s177 + $0xf4] sm:$0xf] %v3345
        %3512 = vst [vmem:[%s177 + $0xf8] sm:$0xf] %v3346
        %3513 = vst [vmem:[%s177 + $0xfc] sm:$0xf] %v3347
        %3514 = vst [vmem:[%s177 + $0x100] sm:$0xf] %v3348
        %3515 = vst [vmem:[%s177 + $0x104] sm:$0xf] %v3349
        %3516 = vst [vmem:[%s177 + $0x108] sm:$0xf] %v3350
        %3517 = vst [vmem:[%s177 + $0x10c] sm:$0xf] %v3351
        %3518 = vst [vmem:[%s177 + $0x110] sm:$0xf] %v3352
        %3519 = vst [vmem:[%s177 + $0x114] sm:$0xf] %v3353
        %3520 = vst [vmem:[%s177 + $0x118] sm:$0xf] %v3354
        %3521 = vst [vmem:[%s177 + $0x11c] sm:$0xf] %v3355
        %3522 = vst [vmem:[%s177 + $0x120] sm:$0xf] %v3356
        %3523 = vst [vmem:[%s177 + $0x124] sm:$0xf] %v3357
        %3524 = vst [vmem:[%s177 + $0x128] sm:$0xf] %v3358
        %3525 = vst [vmem:[%s177 + $0x12c] sm:$0xf] %v3359
        %3526 = vst [vmem:[%s177 + $0x130] sm:$0xf] %v3360
        %3527 = vst [vmem:[%s177 + $0x134] sm:$0xf] %v3361
        %3528 = vst [vmem:[%s177 + $0x138] sm:$0xf] %v3362
        %3529 = vst [vmem:[%s177 + $0x13c] sm:$0xf] %v3363
        %3530 = vst [vmem:[%s177 + $0x140] sm:$0xf] %v3364
        %3531 = vst [vmem:[%s177 + $0x144] sm:$0xf] %v3365
        %3532 = vst [vmem:[%s177 + $0x148] sm:$0xf] %v3366
        %s3533 = sand.u32 %s90, 1
        %s3534 = sand.u32 %s90, 1
        %s3535 = smul.addr %s3534, 332
        %s3536 = scalar_lea.vmem [#allocation2], %s3535
        // Predicated region
        $region33: #{pilotnet_forward.7} parent=31 // pred_check
          %p3537 = pneg %p100
        $region34: #{pilotnet_forward.7} parent=31 // pred_check_branch
          %3539 = sbr.rel (%p3537) target = $region36
        $region35: #{pilotnet_forward.7} parent=31 // pred_region
          %s3540 = smul.u32 83, %s14
          %s3541 = ssub.s32 165, %s3540
          %p3542 = scmp.lt.s32.totalorder %s3541, 83
          %s3543 = scalar_select %p3542, %s3541, 83
          %s3544 = smul.u32 64, %s3543
          %p3545 = scmp.ne.s32.totalorder 0, %s3544
          %s3546 = smul.addr %s3540, 4
          %s3547 = scalar_lea.vmem %s3, %s3546
          // Predicated region
          $region37: #{pilotnet_forward.7} parent=35 // pred_check
            %p3548 = pneg %p3545
          $region38: #{pilotnet_forward.7} parent=35 // pred_check_branch
            %3550 = sbr.rel (%p3548) target = $region40
          $region39: #{pilotnet_forward.7} parent=35 // pred_region
            // Predicated region
            $region41: #{pilotnet_forward.7} parent=39 // pred_check
              _
            $region42: #{pilotnet_forward.7} parent=39 // pred_check_branch
              %3552 = sbr.rel target = $region44
            $region43: #{pilotnet_forward.7} parent=39 // pred_region
              // Predicated region
              $region63: #{pilotnet_forward.7} parent=43 // pred_check
                _
              $region64: #{pilotnet_forward.7} parent=43 // pred_check_branch
                %3727 = sbr.rel (0) target = $region66
              $region65: #{pilotnet_forward.7} parent=43 // pred_region
                %s3729 = sshrl.u32 %s3543, 6
                // While loop
                $region67: #{pilotnet_forward.7} parent=65 // loop_pre_header
                  _
                $region68: #{pilotnet_forward.7} parent=65 // loop_header
                  %s3731 = sphi 0, %s3733
                  %p3732 = scmp.ge.s32.totalorder %s3731, %s3729
                  %s3736 = sphi 0, %s3869
                  %s3737 = sphi %s3536, %s3872
                  %s3738 = sphi %s3547, %s3873
                $region69: #{pilotnet_forward.7} parent=65 // loop_header_branch
                  %3735 = sbr.rel (%p3732) target = $region73
                $region70: #{pilotnet_forward.7} parent=65 // loop_body
                  %v3739 = vld [vmem:[%s3737] sm:$0xf]
                  %3740 = vst [vmem:[%s3738] sm:$0xf] %v3739
                  %v3741 = vld [vmem:[%s3737 + $0x4] sm:$0xf]
                  %3742 = vst [vmem:[%s3738 + $0x4] sm:$0xf] %v3741
                  %v3743 = vld [vmem:[%s3737 + $0x8] sm:$0xf]
                  %3744 = vst [vmem:[%s3738 + $0x8] sm:$0xf] %v3743
                  %v3745 = vld [vmem:[%s3737 + $0xc] sm:$0xf]
                  %3746 = vst [vmem:[%s3738 + $0xc] sm:$0xf] %v3745
                  %v3747 = vld [vmem:[%s3737 + $0x10] sm:$0xf]
                  %3748 = vst [vmem:[%s3738 + $0x10] sm:$0xf] %v3747
                  %v3749 = vld [vmem:[%s3737 + $0x14] sm:$0xf]
                  %3750 = vst [vmem:[%s3738 + $0x14] sm:$0xf] %v3749
                  %v3751 = vld [vmem:[%s3737 + $0x18] sm:$0xf]
                  %3752 = vst [vmem:[%s3738 + $0x18] sm:$0xf] %v3751
                  %v3753 = vld [vmem:[%s3737 + $0x1c] sm:$0xf]
                  %3754 = vst [vmem:[%s3738 + $0x1c] sm:$0xf] %v3753
                  %v3755 = vld [vmem:[%s3737 + $0x20] sm:$0xf]
                  %3756 = vst [vmem:[%s3738 + $0x20] sm:$0xf] %v3755
                  %v3757 = vld [vmem:[%s3737 + $0x24] sm:$0xf]
                  %3758 = vst [vmem:[%s3738 + $0x24] sm:$0xf] %v3757
                  %v3759 = vld [vmem:[%s3737 + $0x28] sm:$0xf]
                  %3760 = vst [vmem:[%s3738 + $0x28] sm:$0xf] %v3759
                  %v3761 = vld [vmem:[%s3737 + $0x2c] sm:$0xf]
                  %3762 = vst [vmem:[%s3738 + $0x2c] sm:$0xf] %v3761
                  %v3763 = vld [vmem:[%s3737 + $0x30] sm:$0xf]
                  %3764 = vst [vmem:[%s3738 + $0x30] sm:$0xf] %v3763
                  %v3765 = vld [vmem:[%s3737 + $0x34] sm:$0xf]
                  %3766 = vst [vmem:[%s3738 + $0x34] sm:$0xf] %v3765
                  %v3767 = vld [vmem:[%s3737 + $0x38] sm:$0xf]
                  %3768 = vst [vmem:[%s3738 + $0x38] sm:$0xf] %v3767
                  %v3769 = vld [vmem:[%s3737 + $0x3c] sm:$0xf]
                  %3770 = vst [vmem:[%s3738 + $0x3c] sm:$0xf] %v3769
                  %v3771 = vld [vmem:[%s3737 + $0x40] sm:$0xf]
                  %3772 = vst [vmem:[%s3738 + $0x40] sm:$0xf] %v3771
                  %v3773 = vld [vmem:[%s3737 + $0x44] sm:$0xf]
                  %3774 = vst [vmem:[%s3738 + $0x44] sm:$0xf] %v3773
                  %v3775 = vld [vmem:[%s3737 + $0x48] sm:$0xf]
                  %3776 = vst [vmem:[%s3738 + $0x48] sm:$0xf] %v3775
                  %v3777 = vld [vmem:[%s3737 + $0x4c] sm:$0xf]
                  %3778 = vst [vmem:[%s3738 + $0x4c] sm:$0xf] %v3777
                  %v3779 = vld [vmem:[%s3737 + $0x50] sm:$0xf]
                  %3780 = vst [vmem:[%s3738 + $0x50] sm:$0xf] %v3779
                  %v3781 = vld [vmem:[%s3737 + $0x54] sm:$0xf]
                  %3782 = vst [vmem:[%s3738 + $0x54] sm:$0xf] %v3781
                  %v3783 = vld [vmem:[%s3737 + $0x58] sm:$0xf]
                  %3784 = vst [vmem:[%s3738 + $0x58] sm:$0xf] %v3783
                  %v3785 = vld [vmem:[%s3737 + $0x5c] sm:$0xf]
                  %3786 = vst [vmem:[%s3738 + $0x5c] sm:$0xf] %v3785
                  %v3787 = vld [vmem:[%s3737 + $0x60] sm:$0xf]
                  %3788 = vst [vmem:[%s3738 + $0x60] sm:$0xf] %v3787
                  %v3789 = vld [vmem:[%s3737 + $0x64] sm:$0xf]
                  %3790 = vst [vmem:[%s3738 + $0x64] sm:$0xf] %v3789
                  %v3791 = vld [vmem:[%s3737 + $0x68] sm:$0xf]
                  %3792 = vst [vmem:[%s3738 + $0x68] sm:$0xf] %v3791
                  %v3793 = vld [vmem:[%s3737 + $0x6c] sm:$0xf]
                  %3794 = vst [vmem:[%s3738 + $0x6c] sm:$0xf] %v3793
                  %v3795 = vld [vmem:[%s3737 + $0x70] sm:$0xf]
                  %3796 = vst [vmem:[%s3738 + $0x70] sm:$0xf] %v3795
                  %v3797 = vld [vmem:[%s3737 + $0x74] sm:$0xf]
                  %3798 = vst [vmem:[%s3738 + $0x74] sm:$0xf] %v3797
                  %v3799 = vld [vmem:[%s3737 + $0x78] sm:$0xf]
                  %3800 = vst [vmem:[%s3738 + $0x78] sm:$0xf] %v3799
                  %v3801 = vld [vmem:[%s3737 + $0x7c] sm:$0xf]
                  %3802 = vst [vmem:[%s3738 + $0x7c] sm:$0xf] %v3801
                  %v3803 = vld [vmem:[%s3737 + $0x80] sm:$0xf]
                  %3804 = vst [vmem:[%s3738 + $0x80] sm:$0xf] %v3803
                  %v3805 = vld [vmem:[%s3737 + $0x84] sm:$0xf]
                  %3806 = vst [vmem:[%s3738 + $0x84] sm:$0xf] %v3805
                  %v3807 = vld [vmem:[%s3737 + $0x88] sm:$0xf]
                  %3808 = vst [vmem:[%s3738 + $0x88] sm:$0xf] %v3807
                  %v3809 = vld [vmem:[%s3737 + $0x8c] sm:$0xf]
                  %3810 = vst [vmem:[%s3738 + $0x8c] sm:$0xf] %v3809
                  %v3811 = vld [vmem:[%s3737 + $0x90] sm:$0xf]
                  %3812 = vst [vmem:[%s3738 + $0x90] sm:$0xf] %v3811
                  %v3813 = vld [vmem:[%s3737 + $0x94] sm:$0xf]
                  %3814 = vst [vmem:[%s3738 + $0x94] sm:$0xf] %v3813
                  %v3815 = vld [vmem:[%s3737 + $0x98] sm:$0xf]
                  %3816 = vst [vmem:[%s3738 + $0x98] sm:$0xf] %v3815
                  %v3817 = vld [vmem:[%s3737 + $0x9c] sm:$0xf]
                  %3818 = vst [vmem:[%s3738 + $0x9c] sm:$0xf] %v3817
                  %v3819 = vld [vmem:[%s3737 + $0xa0] sm:$0xf]
                  %3820 = vst [vmem:[%s3738 + $0xa0] sm:$0xf] %v3819
                  %v3821 = vld [vmem:[%s3737 + $0xa4] sm:$0xf]
                  %3822 = vst [vmem:[%s3738 + $0xa4] sm:$0xf] %v3821
                  %v3823 = vld [vmem:[%s3737 + $0xa8] sm:$0xf]
                  %3824 = vst [vmem:[%s3738 + $0xa8] sm:$0xf] %v3823
                  %v3825 = vld [vmem:[%s3737 + $0xac] sm:$0xf]
                  %3826 = vst [vmem:[%s3738 + $0xac] sm:$0xf] %v3825
                  %v3827 = vld [vmem:[%s3737 + $0xb0] sm:$0xf]
                  %3828 = vst [vmem:[%s3738 + $0xb0] sm:$0xf] %v3827
                  %v3829 = vld [vmem:[%s3737 + $0xb4] sm:$0xf]
                  %3830 = vst [vmem:[%s3738 + $0xb4] sm:$0xf] %v3829
                  %v3831 = vld [vmem:[%s3737 + $0xb8] sm:$0xf]
                  %3832 = vst [vmem:[%s3738 + $0xb8] sm:$0xf] %v3831
                  %v3833 = vld [vmem:[%s3737 + $0xbc] sm:$0xf]
                  %3834 = vst [vmem:[%s3738 + $0xbc] sm:$0xf] %v3833
                  %v3835 = vld [vmem:[%s3737 + $0xc0] sm:$0xf]
                  %3836 = vst [vmem:[%s3738 + $0xc0] sm:$0xf] %v3835
                  %v3837 = vld [vmem:[%s3737 + $0xc4] sm:$0xf]
                  %3838 = vst [vmem:[%s3738 + $0xc4] sm:$0xf] %v3837
                  %v3839 = vld [vmem:[%s3737 + $0xc8] sm:$0xf]
                  %3840 = vst [vmem:[%s3738 + $0xc8] sm:$0xf] %v3839
                  %v3841 = vld [vmem:[%s3737 + $0xcc] sm:$0xf]
                  %3842 = vst [vmem:[%s3738 + $0xcc] sm:$0xf] %v3841
                  %v3843 = vld [vmem:[%s3737 + $0xd0] sm:$0xf]
                  %3844 = vst [vmem:[%s3738 + $0xd0] sm:$0xf] %v3843
                  %v3845 = vld [vmem:[%s3737 + $0xd4] sm:$0xf]
                  %3846 = vst [vmem:[%s3738 + $0xd4] sm:$0xf] %v3845
                  %v3847 = vld [vmem:[%s3737 + $0xd8] sm:$0xf]
                  %3848 = vst [vmem:[%s3738 + $0xd8] sm:$0xf] %v3847
                  %v3849 = vld [vmem:[%s3737 + $0xdc] sm:$0xf]
                  %3850 = vst [vmem:[%s3738 + $0xdc] sm:$0xf] %v3849
                  %v3851 = vld [vmem:[%s3737 + $0xe0] sm:$0xf]
                  %3852 = vst [vmem:[%s3738 + $0xe0] sm:$0xf] %v3851
                  %v3853 = vld [vmem:[%s3737 + $0xe4] sm:$0xf]
                  %3854 = vst [vmem:[%s3738 + $0xe4] sm:$0xf] %v3853
                  %v3855 = vld [vmem:[%s3737 + $0xe8] sm:$0xf]
                  %3856 = vst [vmem:[%s3738 + $0xe8] sm:$0xf] %v3855
                  %v3857 = vld [vmem:[%s3737 + $0xec] sm:$0xf]
                  %3858 = vst [vmem:[%s3738 + $0xec] sm:$0xf] %v3857
                  %v3859 = vld [vmem:[%s3737 + $0xf0] sm:$0xf]
                  %3860 = vst [vmem:[%s3738 + $0xf0] sm:$0xf] %v3859
                  %v3861 = vld [vmem:[%s3737 + $0xf4] sm:$0xf]
                  %3862 = vst [vmem:[%s3738 + $0xf4] sm:$0xf] %v3861
                  %v3863 = vld [vmem:[%s3737 + $0xf8] sm:$0xf]
                  %3864 = vst [vmem:[%s3738 + $0xf8] sm:$0xf] %v3863
                  %v3865 = vld [vmem:[%s3737 + $0xfc] sm:$0xf]
                  %3866 = vst [vmem:[%s3738 + $0xfc] sm:$0xf] %v3865
                  %s3867 = sadd.s32 1, %s3736
                  %p3868 = scmp.ge.s32.totalorder %s3867, %s3729
                  %s3869 = scalar_select %p3868, 0, %s3867
                  %s3870 = smul.u32 %s3869, 256
                  %s3871 = smul.u32 %s3869, 256
                  %s3872 = scalar_lea.vmem %s3536, %s3870 [#allocation2]
                  %s3873 = scalar_lea.vmem %s3547, %s3871
                $region71: #{pilotnet_forward.7} parent=65 // loop_footer
                  %s3733 = sadd.s32 %s3731, 1
                $region72: #{pilotnet_forward.7} parent=65 // loop_footer_branch
                  %3730 = sbr.rel target = $region68
                $region73: #{pilotnet_forward.7} parent=65 // loop_exit
                  _
                %s3874 = sshrl.u32 %s3543, 6
                %s3875 = sand.u32 %s3543, 63
                %s3876 = smul.u32 %s3874, 64
                %s3877 = smul.u32 4, %s3876
                %s3878 = scalar_lea.vmem %s3536, %s3877 [#allocation2]
                %s3879 = smul.u32 4, %s3876
                %s3880 = scalar_lea.vmem %s3547, %s3879
                // While loop
                $region74: #{pilotnet_forward.7} parent=65 // loop_pre_header
                  _
                $region75: #{pilotnet_forward.7} parent=65 // loop_header
                  %s3882 = sphi 0, %s3884
                  %p3883 = scmp.ge.s32.totalorder %s3882, %s3875
                  %s3887 = sphi 0, %s3894
                  %s3888 = sphi %s3878, %s3897
                  %s3889 = sphi %s3880, %s3898
                $region76: #{pilotnet_forward.7} parent=65 // loop_header_branch
                  %3886 = sbr.rel (%p3883) target = $region80
                $region77: #{pilotnet_forward.7} parent=65 // loop_body
                  %v3890 = vld [vmem:[%s3888] sm:$0xf]
                  %3891 = vst [vmem:[%s3889] sm:$0xf] %v3890
                  %s3892 = sadd.s32 1, %s3887
                  %p3893 = scmp.ge.s32.totalorder %s3892, %s3875
                  %s3894 = scalar_select %p3893, 0, %s3892
                  %s3895 = smul.u32 %s3894, 4
                  %s3896 = smul.u32 %s3894, 4
                  %s3897 = scalar_lea.vmem %s3878, %s3895 [#allocation2]
                  %s3898 = scalar_lea.vmem %s3880, %s3896
                $region78: #{pilotnet_forward.7} parent=65 // loop_footer
                  %s3884 = sadd.s32 %s3882, 1
                $region79: #{pilotnet_forward.7} parent=65 // loop_footer_branch
                  %3881 = sbr.rel target = $region75
                $region80: #{pilotnet_forward.7} parent=65 // loop_exit
                  _
              $region66: #{pilotnet_forward.7} parent=43 // pred_fallthru
                _
            $region44: #{pilotnet_forward.7} parent=39 // pred_fallthru
              _
            // Predicated region
            $region45: #{pilotnet_forward.7} parent=39 // pred_check
              _
            $region46: #{pilotnet_forward.7} parent=39 // pred_check_branch
              %3554 = sbr.rel (0) target = $region48
            $region47: #{pilotnet_forward.7} parent=39 // pred_region
              %s3556 = sshrl.u32 %s3543, 6
              // While loop
              $region49: #{pilotnet_forward.7} parent=47 // loop_pre_header
                _
              $region50: #{pilotnet_forward.7} parent=47 // loop_header
                %s3558 = sphi 0, %s3560
                %p3559 = scmp.ge.s32.totalorder %s3558, %s3556
                %s3563 = sphi 0, %s3696
                %s3564 = sphi %s3536, %s3699
                %s3565 = sphi %s3547, %s3700
              $region51: #{pilotnet_forward.7} parent=47 // loop_header_branch
                %3562 = sbr.rel (%p3559) target = $region55
              $region52: #{pilotnet_forward.7} parent=47 // loop_body
                %v3566 = vld [vmem:[%s3564] sm:$0xf]
                %3567 = vst [vmem:[%s3565] sm:$0xf] %v3566
                %v3568 = vld [vmem:[%s3564 + $0x4] sm:$0xf]
                %3569 = vst [vmem:[%s3565 + $0x4] sm:$0xf] %v3568
                %v3570 = vld [vmem:[%s3564 + $0x8] sm:$0xf]
                %3571 = vst [vmem:[%s3565 + $0x8] sm:$0xf] %v3570
                %v3572 = vld [vmem:[%s3564 + $0xc] sm:$0xf]
                %3573 = vst [vmem:[%s3565 + $0xc] sm:$0xf] %v3572
                %v3574 = vld [vmem:[%s3564 + $0x10] sm:$0xf]
                %3575 = vst [vmem:[%s3565 + $0x10] sm:$0xf] %v3574
                %v3576 = vld [vmem:[%s3564 + $0x14] sm:$0xf]
                %3577 = vst [vmem:[%s3565 + $0x14] sm:$0xf] %v3576
                %v3578 = vld [vmem:[%s3564 + $0x18] sm:$0xf]
                %3579 = vst [vmem:[%s3565 + $0x18] sm:$0xf] %v3578
                %v3580 = vld [vmem:[%s3564 + $0x1c] sm:$0xf]
                %3581 = vst [vmem:[%s3565 + $0x1c] sm:$0xf] %v3580
                %v3582 = vld [vmem:[%s3564 + $0x20] sm:$0xf]
                %3583 = vst [vmem:[%s3565 + $0x20] sm:$0xf] %v3582
                %v3584 = vld [vmem:[%s3564 + $0x24] sm:$0xf]
                %3585 = vst [vmem:[%s3565 + $0x24] sm:$0xf] %v3584
                %v3586 = vld [vmem:[%s3564 + $0x28] sm:$0xf]
                %3587 = vst [vmem:[%s3565 + $0x28] sm:$0xf] %v3586
                %v3588 = vld [vmem:[%s3564 + $0x2c] sm:$0xf]
                %3589 = vst [vmem:[%s3565 + $0x2c] sm:$0xf] %v3588
                %v3590 = vld [vmem:[%s3564 + $0x30] sm:$0xf]
                %3591 = vst [vmem:[%s3565 + $0x30] sm:$0xf] %v3590
                %v3592 = vld [vmem:[%s3564 + $0x34] sm:$0xf]
                %3593 = vst [vmem:[%s3565 + $0x34] sm:$0xf] %v3592
                %v3594 = vld [vmem:[%s3564 + $0x38] sm:$0xf]
                %3595 = vst [vmem:[%s3565 + $0x38] sm:$0xf] %v3594
                %v3596 = vld [vmem:[%s3564 + $0x3c] sm:$0xf]
                %3597 = vst [vmem:[%s3565 + $0x3c] sm:$0xf] %v3596
                %v3598 = vld [vmem:[%s3564 + $0x40] sm:$0xf]
                %3599 = vst [vmem:[%s3565 + $0x40] sm:$0xf] %v3598
                %v3600 = vld [vmem:[%s3564 + $0x44] sm:$0xf]
                %3601 = vst [vmem:[%s3565 + $0x44] sm:$0xf] %v3600
                %v3602 = vld [vmem:[%s3564 + $0x48] sm:$0xf]
                %3603 = vst [vmem:[%s3565 + $0x48] sm:$0xf] %v3602
                %v3604 = vld [vmem:[%s3564 + $0x4c] sm:$0xf]
                %3605 = vst [vmem:[%s3565 + $0x4c] sm:$0xf] %v3604
                %v3606 = vld [vmem:[%s3564 + $0x50] sm:$0xf]
                %3607 = vst [vmem:[%s3565 + $0x50] sm:$0xf] %v3606
                %v3608 = vld [vmem:[%s3564 + $0x54] sm:$0xf]
                %3609 = vst [vmem:[%s3565 + $0x54] sm:$0xf] %v3608
                %v3610 = vld [vmem:[%s3564 + $0x58] sm:$0xf]
                %3611 = vst [vmem:[%s3565 + $0x58] sm:$0xf] %v3610
                %v3612 = vld [vmem:[%s3564 + $0x5c] sm:$0xf]
                %3613 = vst [vmem:[%s3565 + $0x5c] sm:$0xf] %v3612
                %v3614 = vld [vmem:[%s3564 + $0x60] sm:$0xf]
                %3615 = vst [vmem:[%s3565 + $0x60] sm:$0xf] %v3614
                %v3616 = vld [vmem:[%s3564 + $0x64] sm:$0xf]
                %3617 = vst [vmem:[%s3565 + $0x64] sm:$0xf] %v3616
                %v3618 = vld [vmem:[%s3564 + $0x68] sm:$0xf]
                %3619 = vst [vmem:[%s3565 + $0x68] sm:$0xf] %v3618
                %v3620 = vld [vmem:[%s3564 + $0x6c] sm:$0xf]
                %3621 = vst [vmem:[%s3565 + $0x6c] sm:$0xf] %v3620
                %v3622 = vld [vmem:[%s3564 + $0x70] sm:$0xf]
                %3623 = vst [vmem:[%s3565 + $0x70] sm:$0xf] %v3622
                %v3624 = vld [vmem:[%s3564 + $0x74] sm:$0xf]
                %3625 = vst [vmem:[%s3565 + $0x74] sm:$0xf] %v3624
                %v3626 = vld [vmem:[%s3564 + $0x78] sm:$0xf]
                %3627 = vst [vmem:[%s3565 + $0x78] sm:$0xf] %v3626
                %v3628 = vld [vmem:[%s3564 + $0x7c] sm:$0xf]
                %3629 = vst [vmem:[%s3565 + $0x7c] sm:$0xf] %v3628
                %v3630 = vld [vmem:[%s3564 + $0x80] sm:$0xf]
                %3631 = vst [vmem:[%s3565 + $0x80] sm:$0xf] %v3630
                %v3632 = vld [vmem:[%s3564 + $0x84] sm:$0xf]
                %3633 = vst [vmem:[%s3565 + $0x84] sm:$0xf] %v3632
                %v3634 = vld [vmem:[%s3564 + $0x88] sm:$0xf]
                %3635 = vst [vmem:[%s3565 + $0x88] sm:$0xf] %v3634
                %v3636 = vld [vmem:[%s3564 + $0x8c] sm:$0xf]
                %3637 = vst [vmem:[%s3565 + $0x8c] sm:$0xf] %v3636
                %v3638 = vld [vmem:[%s3564 + $0x90] sm:$0xf]
                %3639 = vst [vmem:[%s3565 + $0x90] sm:$0xf] %v3638
                %v3640 = vld [vmem:[%s3564 + $0x94] sm:$0xf]
                %3641 = vst [vmem:[%s3565 + $0x94] sm:$0xf] %v3640
                %v3642 = vld [vmem:[%s3564 + $0x98] sm:$0xf]
                %3643 = vst [vmem:[%s3565 + $0x98] sm:$0xf] %v3642
                %v3644 = vld [vmem:[%s3564 + $0x9c] sm:$0xf]
                %3645 = vst [vmem:[%s3565 + $0x9c] sm:$0xf] %v3644
                %v3646 = vld [vmem:[%s3564 + $0xa0] sm:$0xf]
                %3647 = vst [vmem:[%s3565 + $0xa0] sm:$0xf] %v3646
                %v3648 = vld [vmem:[%s3564 + $0xa4] sm:$0xf]
                %3649 = vst [vmem:[%s3565 + $0xa4] sm:$0xf] %v3648
                %v3650 = vld [vmem:[%s3564 + $0xa8] sm:$0xf]
                %3651 = vst [vmem:[%s3565 + $0xa8] sm:$0xf] %v3650
                %v3652 = vld [vmem:[%s3564 + $0xac] sm:$0xf]
                %3653 = vst [vmem:[%s3565 + $0xac] sm:$0xf] %v3652
                %v3654 = vld [vmem:[%s3564 + $0xb0] sm:$0xf]
                %3655 = vst [vmem:[%s3565 + $0xb0] sm:$0xf] %v3654
                %v3656 = vld [vmem:[%s3564 + $0xb4] sm:$0xf]
                %3657 = vst [vmem:[%s3565 + $0xb4] sm:$0xf] %v3656
                %v3658 = vld [vmem:[%s3564 + $0xb8] sm:$0xf]
                %3659 = vst [vmem:[%s3565 + $0xb8] sm:$0xf] %v3658
                %v3660 = vld [vmem:[%s3564 + $0xbc] sm:$0xf]
                %3661 = vst [vmem:[%s3565 + $0xbc] sm:$0xf] %v3660
                %v3662 = vld [vmem:[%s3564 + $0xc0] sm:$0xf]
                %3663 = vst [vmem:[%s3565 + $0xc0] sm:$0xf] %v3662
                %v3664 = vld [vmem:[%s3564 + $0xc4] sm:$0xf]
                %3665 = vst [vmem:[%s3565 + $0xc4] sm:$0xf] %v3664
                %v3666 = vld [vmem:[%s3564 + $0xc8] sm:$0xf]
                %3667 = vst [vmem:[%s3565 + $0xc8] sm:$0xf] %v3666
                %v3668 = vld [vmem:[%s3564 + $0xcc] sm:$0xf]
                %3669 = vst [vmem:[%s3565 + $0xcc] sm:$0xf] %v3668
                %v3670 = vld [vmem:[%s3564 + $0xd0] sm:$0xf]
                %3671 = vst [vmem:[%s3565 + $0xd0] sm:$0xf] %v3670
                %v3672 = vld [vmem:[%s3564 + $0xd4] sm:$0xf]
                %3673 = vst [vmem:[%s3565 + $0xd4] sm:$0xf] %v3672
                %v3674 = vld [vmem:[%s3564 + $0xd8] sm:$0xf]
                %3675 = vst [vmem:[%s3565 + $0xd8] sm:$0xf] %v3674
                %v3676 = vld [vmem:[%s3564 + $0xdc] sm:$0xf]
                %3677 = vst [vmem:[%s3565 + $0xdc] sm:$0xf] %v3676
                %v3678 = vld [vmem:[%s3564 + $0xe0] sm:$0xf]
                %3679 = vst [vmem:[%s3565 + $0xe0] sm:$0xf] %v3678
                %v3680 = vld [vmem:[%s3564 + $0xe4] sm:$0xf]
                %3681 = vst [vmem:[%s3565 + $0xe4] sm:$0xf] %v3680
                %v3682 = vld [vmem:[%s3564 + $0xe8] sm:$0xf]
                %3683 = vst [vmem:[%s3565 + $0xe8] sm:$0xf] %v3682
                %v3684 = vld [vmem:[%s3564 + $0xec] sm:$0xf]
                %3685 = vst [vmem:[%s3565 + $0xec] sm:$0xf] %v3684
                %v3686 = vld [vmem:[%s3564 + $0xf0] sm:$0xf]
                %3687 = vst [vmem:[%s3565 + $0xf0] sm:$0xf] %v3686
                %v3688 = vld [vmem:[%s3564 + $0xf4] sm:$0xf]
                %3689 = vst [vmem:[%s3565 + $0xf4] sm:$0xf] %v3688
                %v3690 = vld [vmem:[%s3564 + $0xf8] sm:$0xf]
                %3691 = vst [vmem:[%s3565 + $0xf8] sm:$0xf] %v3690
                %v3692 = vld [vmem:[%s3564 + $0xfc] sm:$0xf]
                %3693 = vst [vmem:[%s3565 + $0xfc] sm:$0xf] %v3692
                %s3694 = sadd.s32 1, %s3563
                %p3695 = scmp.ge.s32.totalorder %s3694, %s3556
                %s3696 = scalar_select %p3695, 0, %s3694
                %s3697 = smul.u32 %s3696, 256
                %s3698 = smul.u32 %s3696, 256
                %s3699 = scalar_lea.vmem %s3536, %s3697 [#allocation2]
                %s3700 = scalar_lea.vmem %s3547, %s3698
              $region53: #{pilotnet_forward.7} parent=47 // loop_footer
                %s3560 = sadd.s32 %s3558, 1
              $region54: #{pilotnet_forward.7} parent=47 // loop_footer_branch
                %3557 = sbr.rel target = $region50
              $region55: #{pilotnet_forward.7} parent=47 // loop_exit
                _
              %s3701 = sshrl.u32 %s3543, 6
              %s3702 = sand.u32 %s3543, 63
              %s3703 = smul.u32 %s3701, 64
              %s3704 = smul.u32 4, %s3703
              %s3705 = scalar_lea.vmem %s3536, %s3704 [#allocation2]
              %s3706 = smul.u32 4, %s3703
              %s3707 = scalar_lea.vmem %s3547, %s3706
              // While loop
              $region56: #{pilotnet_forward.7} parent=47 // loop_pre_header
                _
              $region57: #{pilotnet_forward.7} parent=47 // loop_header
                %s3709 = sphi 0, %s3711
                %p3710 = scmp.ge.s32.totalorder %s3709, %s3702
                %s3714 = sphi 0, %s3721
                %s3715 = sphi %s3705, %s3724
                %s3716 = sphi %s3707, %s3725
              $region58: #{pilotnet_forward.7} parent=47 // loop_header_branch
                %3713 = sbr.rel (%p3710) target = $region62
              $region59: #{pilotnet_forward.7} parent=47 // loop_body
                %v3717 = vld [vmem:[%s3715] sm:$0xf]
                %3718 = vst [vmem:[%s3716] sm:$0xf] %v3717
                %s3719 = sadd.s32 1, %s3714
                %p3720 = scmp.ge.s32.totalorder %s3719, %s3702
                %s3721 = scalar_select %p3720, 0, %s3719
                %s3722 = smul.u32 %s3721, 4
                %s3723 = smul.u32 %s3721, 4
                %s3724 = scalar_lea.vmem %s3705, %s3722 [#allocation2]
                %s3725 = scalar_lea.vmem %s3707, %s3723
              $region60: #{pilotnet_forward.7} parent=47 // loop_footer
                %s3711 = sadd.s32 %s3709, 1
              $region61: #{pilotnet_forward.7} parent=47 // loop_footer_branch
                %3708 = sbr.rel target = $region57
              $region62: #{pilotnet_forward.7} parent=47 // loop_exit
                _
            $region48: #{pilotnet_forward.7} parent=39 // pred_fallthru
              _
          $region40: #{pilotnet_forward.7} parent=35 // pred_fallthru
            _
          %3899 = vnop
        $region36: #{pilotnet_forward.7} parent=31 // pred_fallthru
          _
      $region32: #{pilotnet_forward.7} parent=5 // pred_fallthru
        _
      %p3900 = scmp.le.s32.totalorder 2, %s9
      // Predicated region
      $region81: #{pilotnet_forward.7} parent=5 // pred_check
        %p3901 = pneg %p3900
      $region82: #{pilotnet_forward.7} parent=5 // pred_check_branch
        %3903 = sbr.rel (%p3901) target = $region84
      $region83: #{pilotnet_forward.7} parent=5 // pred_region
        %s3904 = ssub.s32 %s9, 2
        // Predicated region
        $region85: #{pilotnet_forward.7} parent=83 // pred_check
          %p3905 = pneg %p106
        $region86: #{pilotnet_forward.7} parent=83 // pred_check_branch
          %3907 = sbr.rel (%p3905) target = $region88
        $region87: #{pilotnet_forward.7} parent=83 // pred_region
          %s3908 = sand.u32 %s91, 1
          %s3909 = sand.u32 %s91, 1
          %s3910 = smul.addr %s3909, 332
          %s3911 = scalar_lea.vmem [#allocation2], %s3910
        $region88: #{pilotnet_forward.7} parent=83 // pred_fallthru
          _
      $region84: #{pilotnet_forward.7} parent=5 // pred_fallthru
        _
    $region6: #{pilotnet_forward.7} parent=1 // loop_footer
      %s13 = sadd.s32 1, %s9
    $region7: #{pilotnet_forward.7} parent=1 // loop_footer_branch
      %8 = sbr.rel target = $region3
    $region8: #{pilotnet_forward.7} parent=1 // loop_exit
      _

// kernel: pilotnet_forward.8
$region0: #{pilotnet_forward.8}
  #allocation0 [shape = 'u32[]', space=smem, size = 0x4, offset = 0x4, fixed_abs, tag = 'smem constant byte address 0x4 - core index']
  #allocation1 [shape = 'u32[144,128]{1,0:T(1,128)}', space=vmem, size = 0x12000, scoped, tag = 'internal scratch']
  %s0 = inlined_call_operand.vmem [shape: bf16[220,900], index: 0, kind: input, shape index: {}]
  %s1 = inlined_call_operand.vmem [shape: bf16[900,128], index: 1, kind: input, shape index: {}]
  %s2 = inlined_call_operand.vmem [shape: f32[1,128], index: 2, kind: input, shape index: {}]
  %s3 = inlined_call_operand.vmem [shape: bf16[220,128], index: 3, kind: output, shape index: {}]
  %s4 = sld [smem:[#allocation0]]
  $region45: #{pilotnet_forward.8} parent=0
    _
  %s6 = ssub.s32 1, %s4
  %s7 = scalar_select 0, %s6, %s4
  loop: start=0, step=1, limit=4
  $region2: #{pilotnet_forward.8} parent=0 // loop_pre_header
    _
  $region3: #{pilotnet_forward.8} parent=0 // loop_header
    %s9 = sphi 0, %s13
    %p10 = scmp.ge.s32.totalorder %s9, 4
    %s19 = sphi 0, %s21
    %s22 = sphi 0, %s19
    %s23 = sphi 0, %s22
    %s39 = sphi 0, %s23
    %s43 = sphi 0, %s43
    %s45 = sphi 0, %s43
    %s46 = sphi 0, %s45
    %s60 = sphi 0, %s46
    %s64 = sphi 0, %s64
    %s66 = sphi 0, %s64
    %s67 = sphi 0, %s66
    %s81 = sphi 0, %s67
    %s87 = sphi 0, %s89
    %s90 = sphi 0, %s87
    %s91 = sphi 0, %s90
    %s107 = sphi 0, %s91
  $region4: #{pilotnet_forward.8} parent=0 // loop_header_branch
    %12 = sbr.rel (%p10) target = $region8
  $region5: #{pilotnet_forward.8} parent=0 // loop_body
    %s14 = ssub.s32 %s9, 1
    %s15 = ssub.s32 %s9, 2
    %s16 = sadd.s32 %s9, 1
    %s17 = ssub.s32 %s9, %s16
    %p18 = scmp.eq.s32.totalorder %s17, 0
    %s20 = sadd.s32 %s19, 1
    %s21 = scalar_select %p18, %s19, %s20
    %p24 = pneg %p18
    %p25 = scmp.eq.s32.totalorder %s9, 1
    %p26 = por %p24, %p25
    %p27 = scmp.ne.s32.totalorder %s19, %s22
    %p28 = scmp.eq.s32.totalorder %s9, 0
    %p29 = por %p27, %p28
    %p30 = scmp.ne.s32.totalorder %s19, %s22
    %p31 = scmp.eq.s32.totalorder %s14, 1
    %p32 = por %p30, %p31
    %p33 = scmp.ne.s32.totalorder %s22, %s23
    %p34 = scmp.eq.s32.totalorder %s14, 0
    %p35 = por %p33, %p34
    %p36 = scmp.ne.s32.totalorder %s22, %s23
    %p37 = scmp.eq.s32.totalorder %s15, 1
    %p38 = por %p36, %p37
    %p40 = scmp.ne.s32.totalorder %s23, %s39
    %p41 = scmp.eq.s32.totalorder %s15, 0
    %p42 = por %p40, %p41
    %s44 = sadd.s32 %s43, 1
    %p47 = scmp.eq.s32.totalorder %s9, 1
    %p48 = scmp.ne.s32.totalorder %s43, %s45
    %p49 = scmp.eq.s32.totalorder %s9, 0
    %p50 = por %p48, %p49
    %p51 = scmp.ne.s32.totalorder %s43, %s45
    %p52 = scmp.eq.s32.totalorder %s14, 1
    %p53 = por %p51, %p52
    %p54 = scmp.ne.s32.totalorder %s45, %s46
    %p55 = scmp.eq.s32.totalorder %s14, 0
    %p56 = por %p54, %p55
    %p57 = scmp.ne.s32.totalorder %s45, %s46
    %p58 = scmp.eq.s32.totalorder %s15, 1
    %p59 = por %p57, %p58
    %p61 = scmp.ne.s32.totalorder %s46, %s60
    %p62 = scmp.eq.s32.totalorder %s15, 0
    %p63 = por %p61, %p62
    %s65 = sadd.s32 %s64, 1
    %p68 = scmp.eq.s32.totalorder %s9, 1
    %p69 = scmp.ne.s32.totalorder %s64, %s66
    %p70 = scmp.eq.s32.totalorder %s9, 0
    %p71 = por %p69, %p70
    %p72 = scmp.ne.s32.totalorder %s64, %s66
    %p73 = scmp.eq.s32.totalorder %s14, 1
    %p74 = por %p72, %p73
    %p75 = scmp.ne.s32.totalorder %s66, %s67
    %p76 = scmp.eq.s32.totalorder %s14, 0
    %p77 = por %p75, %p76
    %p78 = scmp.ne.s32.totalorder %s66, %s67
    %p79 = scmp.eq.s32.totalorder %s15, 1
    %p80 = por %p78, %p79
    %p82 = scmp.ne.s32.totalorder %s67, %s81
    %p83 = scmp.eq.s32.totalorder %s15, 0
    %p84 = por %p82, %p83
    %s85 = ssub.s32 %s9, %s16
    %p86 = scmp.eq.s32.totalorder %s85, 0
    %s88 = sadd.s32 %s87, 1
    %s89 = scalar_select %p86, %s87, %s88
    %p92 = pneg %p86
    %p93 = scmp.eq.s32.totalorder %s9, 1
    %p94 = por %p92, %p93
    %p95 = scmp.ne.s32.totalorder %s87, %s90
    %p96 = scmp.eq.s32.totalorder %s9, 0
    %p97 = por %p95, %p96
    %p98 = scmp.ne.s32.totalorder %s87, %s90
    %p99 = scmp.eq.s32.totalorder %s14, 1
    %p100 = por %p98, %p99
    %p101 = scmp.ne.s32.totalorder %s90, %s91
    %p102 = scmp.eq.s32.totalorder %s14, 0
    %p103 = por %p101, %p102
    %p104 = scmp.ne.s32.totalorder %s90, %s91
    %p105 = scmp.eq.s32.totalorder %s15, 1
    %p106 = por %p104, %p105
    %p108 = scmp.ne.s32.totalorder %s91, %s107
    %p109 = scmp.eq.s32.totalorder %s15, 0
    %p110 = por %p108, %p109
    %p111 = scmp.le.s32.totalorder 1, %s9
    %p112 = scmp.lt.s32.totalorder %s9, 3
    %p113 = pnand %p111, %p112
    %p114 = pneg %p113
    // Predicated region
    $region9: #{pilotnet_forward.8} parent=5 // pred_check
      _
    $region10: #{pilotnet_forward.8} parent=5 // pred_check_branch
      %116 = sbr.rel (%p113) target = $region12
    $region11: #{pilotnet_forward.8} parent=5 // pred_region
      %s117 = ssub.s32 %s9, 1
      // Predicated region
      $region13: #{pilotnet_forward.8} parent=11 // pred_check
        %p118 = pneg %p56
      $region14: #{pilotnet_forward.8} parent=11 // pred_check_branch
        %120 = sbr.rel (%p118) target = $region16
      $region15: #{pilotnet_forward.8} parent=11 // pred_region
        _
      $region16: #{pilotnet_forward.8} parent=11 // pred_fallthru
        _
      // Predicated region
      $region17: #{pilotnet_forward.8} parent=11 // pred_check
        %p121 = pneg %p77
      $region18: #{pilotnet_forward.8} parent=11 // pred_check_branch
        %123 = sbr.rel (%p121) target = $region20
      $region19: #{pilotnet_forward.8} parent=11 // pred_region
        _
      $region20: #{pilotnet_forward.8} parent=11 // pred_fallthru
        _
    $region12: #{pilotnet_forward.8} parent=5 // pred_fallthru
      _
    %p124 = scmp.lt.s32.totalorder %s9, 2
    // Predicated region
    $region21: #{pilotnet_forward.8} parent=5 // pred_check
      %p125 = pneg %p124
    $region22: #{pilotnet_forward.8} parent=5 // pred_check_branch
      %127 = sbr.rel (%p125) target = $region24
    $region23: #{pilotnet_forward.8} parent=5 // pred_region
      // Predicated region
      $region25: #{pilotnet_forward.8} parent=23 // pred_check
        %p128 = pneg %p29
      $region26: #{pilotnet_forward.8} parent=23 // pred_check_branch
        %130 = sbr.rel (%p128) target = $region28
      $region27: #{pilotnet_forward.8} parent=23 // pred_region
        %s131 = smul.u32 14, %s9
        %p132 = scmp.lt.s32.totalorder %s131, 27
        %s133 = scalar_select %p132, %s131, 27
        %s134 = smul.addr %s133, 8
        %s135 = smul.addr %s134, 4
        %s136 = scalar_lea.vmem %s0, %s135
        %s137 = smul.u32 14, %s9
      $region28: #{pilotnet_forward.8} parent=23 // pred_fallthru
        _
    $region24: #{pilotnet_forward.8} parent=5 // pred_fallthru
      _
    %p138 = scmp.le.s32.totalorder 1, %s9
    %p139 = scmp.lt.s32.totalorder %s9, 3
    %p140 = pnand %p138, %p139
    %p141 = pneg %p140
    // Predicated region
    $region29: #{pilotnet_forward.8} parent=5 // pred_check
      _
    $region30: #{pilotnet_forward.8} parent=5 // pred_check_branch
      %143 = sbr.rel (%p140) target = $region32
    $region31: #{pilotnet_forward.8} parent=5 // pred_region
      %s144 = ssub.s32 %s9, 1
      %s145 = smul.u32 14, %s14
      %p146 = scmp.lt.s32.totalorder %s145, 27
      %s147 = scalar_select %p146, %s145, 27
      %s148 = smul.addr %s147, 8
      %s149 = smul.addr %s148, 4
      %s150 = scalar_lea.vmem %s0, %s149
      %p151 = pneg %p35
      %p152 = pneg %p32
      %p153 = pneg %p56
      %p154 = pneg %p53
      %p155 = pneg %p77
      %p156 = pneg %p74
      %p157 = pneg %p103
      %p158 = pneg %p100
      %s159 = smul.u32 14, %s14
      %p160 = scmp.lt.s32.totalorder %s159, 27
      %s161 = scalar_select %p160, %s159, 27
      %s162 = smul.addr %s161, 4
      %s163 = scalar_lea.vmem %s3, %s162
      %s164 = smul.u32 14, %s14
      %p165 = scmp.lt.s32.totalorder %s164, 27
      %s166 = scalar_select %p165, %s164, 27
      %s167 = smul.addr %s166, 8
      %s168 = smul.addr %s167, 4
      %s169 = scalar_lea.vmem %s0, %s168
      %s170 = smul.u32 14, %s14
      %s171 = smul.u32 14, %s14
      %p172 = scmp.lt.s32.totalorder %s171, 27
      %s173 = scalar_select %p172, %s171, 27
      %s174 = smul.addr %s173, 4
      %s175 = scalar_lea.vmem %s3, %s174
      %s176 = smul.u32 14, %s14
      %v178 = vld [vmem:[%s169] sm:$0xff]
      %v179 = vld [vmem:[%s169 + $0x8] sm:$0xff]
      %v180 = vld [vmem:[%s169 + $0x10] sm:$0xff]
      %v181 = vld [vmem:[%s169 + $0x18] sm:$0xff]
      %v182 = vld [vmem:[%s169 + $0x20] sm:$0xff]
      %v183 = vld [vmem:[%s169 + $0x28] sm:$0xff]
      %v184 = vld [vmem:[%s169 + $0x30] sm:$0xff]
      %v185 = vld [vmem:[%s169 + $0x38] sm:$0xff]
      %v186 = vld [vmem:[%s169 + $0x40] sm:$0xff]
      %v187 = vld [vmem:[%s169 + $0x48] sm:$0xff]
      %v188 = vld [vmem:[%s169 + $0x50] sm:$0xff]
      %v189 = vld [vmem:[%s169 + $0x58] sm:$0xff]
      %v190 = vld [vmem:[%s169 + $0x60] sm:$0xff]
      %v191 = vld [vmem:[%s169 + $0x68] sm:$0xff]
      %v192 = vld [vmem:[%s169 + $0x70] sm:$0xff]
      %v193 = vld [vmem:[%s169 + $0x78] sm:$0xff]
      %v194 = vld [vmem:[%s169 + $0x80] sm:$0xff]
      %v195 = vld [vmem:[%s169 + $0x88] sm:$0xff]
      %v196 = vld [vmem:[%s169 + $0x90] sm:$0xff]
      %v197 = vld [vmem:[%s169 + $0x98] sm:$0xff]
      %v198 = vld [vmem:[%s169 + $0xa0] sm:$0xff]
      %v199 = vld [vmem:[%s169 + $0xa8] sm:$0xff]
      %v200 = vld [vmem:[%s169 + $0xb0] sm:$0xff]
      %v201 = vld [vmem:[%s169 + $0xb8] sm:$0xff]
      %v202 = vld [vmem:[%s169 + $0xc0] sm:$0xff]
      %v203 = vld [vmem:[%s169 + $0xc8] sm:$0xff]
      %v204 = vld [vmem:[%s169 + $0xd0] sm:$0xff]
      %v205 = vld [vmem:[%s169 + $0xd8] sm:$0xff]
      %v206 = vld [vmem:[%s169 + $0xe0] sm:$0xff]
      %v207 = vld [vmem:[%s169 + $0xe8] sm:$0xff]
      %v208 = vld [vmem:[%s169 + $0xf0] sm:$0xff]
      %v209 = vld [vmem:[%s169 + $0xf8] sm:$0xff]
      %v210 = vld [vmem:[%s169 + $0x100] sm:$0xff]
      %v211 = vld [vmem:[%s169 + $0x108] sm:$0xff]
      %v212 = vld [vmem:[%s169 + $0x110] sm:$0xff]
      %v213 = vld [vmem:[%s169 + $0x118] sm:$0xff]
      %v214 = vld [vmem:[%s169 + $0x120] sm:$0xff]
      %v215 = vld [vmem:[%s169 + $0x128] sm:$0xff]
      %v216 = vld [vmem:[%s169 + $0x130] sm:$0xff]
      %v217 = vld [vmem:[%s169 + $0x138] sm:$0xff]
      %v218 = vld [vmem:[%s169 + $0x140] sm:$0xff]
      %v219 = vld [vmem:[%s169 + $0x148] sm:$0xff]
      %v220 = vld [vmem:[%s169 + $0x150] sm:$0xff]
      %v221 = vld [vmem:[%s169 + $0x158] sm:$0xff]
      %v222 = vld [vmem:[%s169 + $0x160] sm:$0xff]
      %v223 = vld [vmem:[%s169 + $0x168] sm:$0xff]
      %v224 = vld [vmem:[%s169 + $0x170] sm:$0xff]
      %v225 = vld [vmem:[%s169 + $0x178] sm:$0xff]
      %v226 = vld [vmem:[%s169 + $0x180] sm:$0xff]
      %v227 = vld [vmem:[%s169 + $0x188] sm:$0xff]
      %v228 = vld [vmem:[%s169 + $0x190] sm:$0xff]
      %v229 = vld [vmem:[%s169 + $0x198] sm:$0xff]
      %v230 = vld [vmem:[%s169 + $0x1a0] sm:$0xff]
      %v231 = vld [vmem:[%s169 + $0x1a8] sm:$0xff]
      %v232 = vld [vmem:[%s169 + $0x1b0] sm:$0xff]
      %v233 = vld [vmem:[%s169 + $0x1b8] sm:$0xff]
      %v234 = vld [vmem:[%s1] sm:$0xf]
      %v235 = vld [vmem:[%s1 + $0x4] sm:$0xf]
      %v236 = vld [vmem:[%s1 + $0x8] sm:$0xf]
      %v237 = vld [vmem:[%s1 + $0xc] sm:$0xf]
      %v238 = vld [vmem:[%s1 + $0x10] sm:$0xf]
      %v239 = vld [vmem:[%s1 + $0x14] sm:$0xf]
      %v240 = vld [vmem:[%s1 + $0x18] sm:$0xf]
      %v241 = vld [vmem:[%s1 + $0x1c] sm:$0xf]
      %v242 = vld [vmem:[%s1 + $0x20] sm:$0xf]
      %v243 = vld [vmem:[%s1 + $0x24] sm:$0xf]
      %v244 = vld [vmem:[%s1 + $0x28] sm:$0xf]
      %v245 = vld [vmem:[%s1 + $0x2c] sm:$0xf]
      %v246 = vld [vmem:[%s1 + $0x30] sm:$0xf]
      %v247 = vld [vmem:[%s1 + $0x34] sm:$0xf]
      %v248 = vld [vmem:[%s1 + $0x38] sm:$0xf]
      %v249 = vld [vmem:[%s1 + $0x3c] sm:$0xf]
      %v250 = vld [vmem:[%s1 + $0x40] sm:$0xf]
      %v251 = vld [vmem:[%s1 + $0x44] sm:$0xf]
      %v252 = vld [vmem:[%s1 + $0x48] sm:$0xf]
      %v253 = vld [vmem:[%s1 + $0x4c] sm:$0xf]
      %v254 = vld [vmem:[%s1 + $0x50] sm:$0xf]
      %v255 = vld [vmem:[%s1 + $0x54] sm:$0xf]
      %v256 = vld [vmem:[%s1 + $0x58] sm:$0xf]
      %v257 = vld [vmem:[%s1 + $0x5c] sm:$0xf]
      %v258 = vld [vmem:[%s1 + $0x60] sm:$0xf]
      %v259 = vld [vmem:[%s1 + $0x64] sm:$0xf]
      %v260 = vld [vmem:[%s1 + $0x68] sm:$0xf]
      %v261 = vld [vmem:[%s1 + $0x6c] sm:$0xf]
      %v262 = vld [vmem:[%s1 + $0x70] sm:$0xf]
      %v263 = vld [vmem:[%s1 + $0x74] sm:$0xf]
      %v264 = vld [vmem:[%s1 + $0x78] sm:$0xf]
      %v265 = vld [vmem:[%s1 + $0x7c] sm:$0xf]
      %v266 = vld [vmem:[%s1 + $0x80] sm:$0xf]
      %v267 = vld [vmem:[%s1 + $0x84] sm:$0xf]
      %v268 = vld [vmem:[%s1 + $0x88] sm:$0xf]
      %v269 = vld [vmem:[%s1 + $0x8c] sm:$0xf]
      %v270 = vld [vmem:[%s1 + $0x90] sm:$0xf]
      %v271 = vld [vmem:[%s1 + $0x94] sm:$0xf]
      %v272 = vld [vmem:[%s1 + $0x98] sm:$0xf]
      %v273 = vld [vmem:[%s1 + $0x9c] sm:$0xf]
      %v274 = vld [vmem:[%s1 + $0xa0] sm:$0xf]
      %v275 = vld [vmem:[%s1 + $0xa4] sm:$0xf]
      %v276 = vld [vmem:[%s1 + $0xa8] sm:$0xf]
      %v277 = vld [vmem:[%s1 + $0xac] sm:$0xf]
      %v278 = vld [vmem:[%s1 + $0xb0] sm:$0xf]
      %v279 = vld [vmem:[%s1 + $0xb4] sm:$0xf]
      %v280 = vld [vmem:[%s1 + $0xb8] sm:$0xf]
      %v281 = vld [vmem:[%s1 + $0xbc] sm:$0xf]
      %v282 = vld [vmem:[%s1 + $0xc0] sm:$0xf]
      %v283 = vld [vmem:[%s1 + $0xc4] sm:$0xf]
      %v284 = vld [vmem:[%s1 + $0xc8] sm:$0xf]
      %v285 = vld [vmem:[%s1 + $0xcc] sm:$0xf]
      %v286 = vld [vmem:[%s1 + $0xd0] sm:$0xf]
      %v287 = vld [vmem:[%s1 + $0xd4] sm:$0xf]
      %v288 = vld [vmem:[%s1 + $0xd8] sm:$0xf]
      %v289 = vld [vmem:[%s1 + $0xdc] sm:$0xf]
      %v290 = vld [vmem:[%s1 + $0xe0] sm:$0xf]
      %v291 = vld [vmem:[%s1 + $0xe4] sm:$0xf]
      %v292 = vld [vmem:[%s1 + $0xe8] sm:$0xf]
      %v293 = vld [vmem:[%s1 + $0xec] sm:$0xf]
      %v294 = vld [vmem:[%s1 + $0xf0] sm:$0xf]
      %v295 = vld [vmem:[%s1 + $0xf4] sm:$0xf]
      %v296 = vld [vmem:[%s1 + $0xf8] sm:$0xf]
      %v297 = vld [vmem:[%s1 + $0xfc] sm:$0xf]
      %v298 = vld [vmem:[%s1 + $0x100] sm:$0xf]
      %v299 = vld [vmem:[%s1 + $0x104] sm:$0xf]
      %v300 = vld [vmem:[%s1 + $0x108] sm:$0xf]
      %v301 = vld [vmem:[%s1 + $0x10c] sm:$0xf]
      %v302 = vld [vmem:[%s1 + $0x110] sm:$0xf]
      %v303 = vld [vmem:[%s1 + $0x114] sm:$0xf]
      %v304 = vld [vmem:[%s1 + $0x118] sm:$0xf]
      %v305 = vld [vmem:[%s1 + $0x11c] sm:$0xf]
      %v306 = vld [vmem:[%s1 + $0x120] sm:$0xf]
      %v307 = vld [vmem:[%s1 + $0x124] sm:$0xf]
      %v308 = vld [vmem:[%s1 + $0x128] sm:$0xf]
      %v309 = vld [vmem:[%s1 + $0x12c] sm:$0xf]
      %v310 = vld [vmem:[%s1 + $0x130] sm:$0xf]
      %v311 = vld [vmem:[%s1 + $0x134] sm:$0xf]
      %v312 = vld [vmem:[%s1 + $0x138] sm:$0xf]
      %v313 = vld [vmem:[%s1 + $0x13c] sm:$0xf]
      %v314 = vld [vmem:[%s1 + $0x140] sm:$0xf]
      %v315 = vld [vmem:[%s1 + $0x144] sm:$0xf]
      %v316 = vld [vmem:[%s1 + $0x148] sm:$0xf]
      %v317 = vld [vmem:[%s1 + $0x14c] sm:$0xf]
      %v318 = vld [vmem:[%s1 + $0x150] sm:$0xf]
      %v319 = vld [vmem:[%s1 + $0x154] sm:$0xf]
      %v320 = vld [vmem:[%s1 + $0x158] sm:$0xf]
      %v321 = vld [vmem:[%s1 + $0x15c] sm:$0xf]
      %v322 = vld [vmem:[%s1 + $0x160] sm:$0xf]
      %v323 = vld [vmem:[%s1 + $0x164] sm:$0xf]
      %v324 = vld [vmem:[%s1 + $0x168] sm:$0xf]
      %v325 = vld [vmem:[%s1 + $0x16c] sm:$0xf]
      %v326 = vld [vmem:[%s1 + $0x170] sm:$0xf]
      %v327 = vld [vmem:[%s1 + $0x174] sm:$0xf]
      %v328 = vld [vmem:[%s1 + $0x178] sm:$0xf]
      %v329 = vld [vmem:[%s1 + $0x17c] sm:$0xf]
      %v330 = vld [vmem:[%s1 + $0x180] sm:$0xf]
      %v331 = vld [vmem:[%s1 + $0x184] sm:$0xf]
      %v332 = vld [vmem:[%s1 + $0x188] sm:$0xf]
      %v333 = vld [vmem:[%s1 + $0x18c] sm:$0xf]
      %v334 = vld [vmem:[%s1 + $0x190] sm:$0xf]
      %v335 = vld [vmem:[%s1 + $0x194] sm:$0xf]
      %v336 = vld [vmem:[%s1 + $0x198] sm:$0xf]
      %v337 = vld [vmem:[%s1 + $0x19c] sm:$0xf]
      %v338 = vld [vmem:[%s1 + $0x1a0] sm:$0xf]
      %v339 = vld [vmem:[%s1 + $0x1a4] sm:$0xf]
      %v340 = vld [vmem:[%s1 + $0x1a8] sm:$0xf]
      %v341 = vld [vmem:[%s1 + $0x1ac] sm:$0xf]
      %v342 = vld [vmem:[%s1 + $0x1b0] sm:$0xf]
      %v343 = vld [vmem:[%s1 + $0x1b4] sm:$0xf]
      %v344 = vld [vmem:[%s1 + $0x1b8] sm:$0xf]
      %v345 = vld [vmem:[%s1 + $0x1bc] sm:$0xf]
      %v346 = vld [vmem:[%s1 + $0x1c0] sm:$0x3]
      %v347 = vld [vmem:[%s2] sm:$0x1]
      %v349 = vlaneseq
      %v350 = vshrl.u32 %v349, 7
      %v351 = vsub.s32 0, %v350
      %v352 = vrot.slane %v347, %v351
      %v410 = vunpack.c.l.b16 %v178
      %v411 = vunpack.c.h.b16 %v178
      %v412 = vunpack.c.l.b16 %v179
      %v413 = vunpack.c.h.b16 %v179
      %v414 = vunpack.c.l.b16 %v180
      %v415 = vunpack.c.h.b16 %v180
      %v416 = vunpack.c.l.b16 %v181
      %v417 = vunpack.c.h.b16 %v181
      %v418 = vunpack.c.l.b16 %v182
      %v419 = vunpack.c.h.b16 %v182
      %v420 = vunpack.c.l.b16 %v183
      %v421 = vunpack.c.h.b16 %v183
      %v422 = vunpack.c.l.b16 %v184
      %v423 = vunpack.c.h.b16 %v184
      %v424 = vunpack.c.l.b16 %v185
      %v425 = vunpack.c.h.b16 %v185
      %v426 = vunpack.c.l.b16 %v186
      %v427 = vunpack.c.h.b16 %v186
      %v428 = vunpack.c.l.b16 %v187
      %v429 = vunpack.c.h.b16 %v187
      %v430 = vunpack.c.l.b16 %v188
      %v431 = vunpack.c.h.b16 %v188
      %v432 = vunpack.c.l.b16 %v189
      %v433 = vunpack.c.h.b16 %v189
      %v434 = vunpack.c.l.b16 %v190
      %v435 = vunpack.c.h.b16 %v190
      %v436 = vunpack.c.l.b16 %v191
      %v437 = vunpack.c.h.b16 %v191
      %v438 = vunpack.c.l.b16 %v192
      %v439 = vunpack.c.h.b16 %v192
      %v440 = vunpack.c.l.b16 %v193
      %v441 = vunpack.c.h.b16 %v193
      %v442 = vunpack.c.l.b16 %v194
      %v443 = vunpack.c.h.b16 %v194
      %v444 = vunpack.c.l.b16 %v195
      %v445 = vunpack.c.h.b16 %v195
      %v446 = vunpack.c.l.b16 %v196
      %v447 = vunpack.c.h.b16 %v196
      %v448 = vunpack.c.l.b16 %v197
      %v449 = vunpack.c.h.b16 %v197
      %v450 = vunpack.c.l.b16 %v198
      %v451 = vunpack.c.h.b16 %v198
      %v452 = vunpack.c.l.b16 %v199
      %v453 = vunpack.c.h.b16 %v199
      %v454 = vunpack.c.l.b16 %v200
      %v455 = vunpack.c.h.b16 %v200
      %v456 = vunpack.c.l.b16 %v201
      %v457 = vunpack.c.h.b16 %v201
      %v458 = vunpack.c.l.b16 %v202
      %v459 = vunpack.c.h.b16 %v202
      %v460 = vunpack.c.l.b16 %v203
      %v461 = vunpack.c.h.b16 %v203
      %v462 = vunpack.c.l.b16 %v204
      %v463 = vunpack.c.h.b16 %v204
      %v464 = vunpack.c.l.b16 %v205
      %v465 = vunpack.c.h.b16 %v205
      %v466 = vunpack.c.l.b16 %v206
      %v467 = vunpack.c.h.b16 %v206
      %v468 = vunpack.c.l.b16 %v207
      %v469 = vunpack.c.h.b16 %v207
      %v470 = vunpack.c.l.b16 %v208
      %v471 = vunpack.c.h.b16 %v208
      %v472 = vunpack.c.l.b16 %v209
      %v473 = vunpack.c.h.b16 %v209
      %v474 = vunpack.c.l.b16 %v210
      %v475 = vunpack.c.h.b16 %v210
      %v476 = vunpack.c.l.b16 %v211
      %v477 = vunpack.c.h.b16 %v211
      %v478 = vunpack.c.l.b16 %v212
      %v479 = vunpack.c.h.b16 %v212
      %v480 = vunpack.c.l.b16 %v213
      %v481 = vunpack.c.h.b16 %v213
      %v482 = vunpack.c.l.b16 %v214
      %v483 = vunpack.c.h.b16 %v214
      %v484 = vunpack.c.l.b16 %v215
      %v485 = vunpack.c.h.b16 %v215
      %v486 = vunpack.c.l.b16 %v216
      %v487 = vunpack.c.h.b16 %v216
      %v488 = vunpack.c.l.b16 %v217
      %v489 = vunpack.c.h.b16 %v217
      %v490 = vunpack.c.l.b16 %v218
      %v491 = vunpack.c.h.b16 %v218
      %v492 = vunpack.c.l.b16 %v219
      %v493 = vunpack.c.h.b16 %v219
      %v494 = vunpack.c.l.b16 %v220
      %v495 = vunpack.c.h.b16 %v220
      %v496 = vunpack.c.l.b16 %v221
      %v497 = vunpack.c.h.b16 %v221
      %v498 = vunpack.c.l.b16 %v222
      %v499 = vunpack.c.h.b16 %v222
      %v500 = vunpack.c.l.b16 %v223
      %v501 = vunpack.c.h.b16 %v223
      %v502 = vunpack.c.l.b16 %v224
      %v503 = vunpack.c.h.b16 %v224
      %v504 = vunpack.c.l.b16 %v225
      %v505 = vunpack.c.h.b16 %v225
      %v506 = vunpack.c.l.b16 %v226
      %v507 = vunpack.c.h.b16 %v226
      %v508 = vunpack.c.l.b16 %v227
      %v509 = vunpack.c.h.b16 %v227
      %v510 = vunpack.c.l.b16 %v228
      %v511 = vunpack.c.h.b16 %v228
      %v512 = vunpack.c.l.b16 %v229
      %v513 = vunpack.c.h.b16 %v229
      %v514 = vunpack.c.l.b16 %v230
      %v515 = vunpack.c.h.b16 %v230
      %v516 = vunpack.c.l.b16 %v231
      %v517 = vunpack.c.h.b16 %v231
      %v518 = vunpack.c.l.b16 %v232
      %v519 = vunpack.c.h.b16 %v232
      %v520 = vunpack.c.l.b16 %v233
      %v521 = vunpack.c.h.b16 %v233
      %v522 = vpack.c.b16 %v418, %v410
      %v523 = vpack.c.b16 %v419, %v411
      %v524 = vpack.c.b16 %v420, %v412
      %v525 = vpack.c.b16 %v421, %v413
      %v526 = vpack.c.b16 %v422, %v414
      %v527 = vpack.c.b16 %v423, %v415
      %v528 = vpack.c.b16 %v424, %v416
      %v529 = vpack.c.b16 %v425, %v417
      %v530 = vpack.c.b16 %v434, %v426
      %v531 = vpack.c.b16 %v435, %v427
      %v532 = vpack.c.b16 %v436, %v428
      %v533 = vpack.c.b16 %v437, %v429
      %v534 = vpack.c.b16 %v438, %v430
      %v535 = vpack.c.b16 %v439, %v431
      %v536 = vpack.c.b16 %v440, %v432
      %v537 = vpack.c.b16 %v441, %v433
      %v538 = vpack.c.b16 %v450, %v442
      %v539 = vpack.c.b16 %v451, %v443
      %v540 = vpack.c.b16 %v452, %v444
      %v541 = vpack.c.b16 %v453, %v445
      %v542 = vpack.c.b16 %v454, %v446
      %v543 = vpack.c.b16 %v455, %v447
      %v544 = vpack.c.b16 %v456, %v448
      %v545 = vpack.c.b16 %v457, %v449
      %v546 = vpack.c.b16 %v466, %v458
      %v547 = vpack.c.b16 %v467, %v459
      %v548 = vpack.c.b16 %v468, %v460
      %v549 = vpack.c.b16 %v469, %v461
      %v550 = vpack.c.b16 %v470, %v462
      %v551 = vpack.c.b16 %v471, %v463
      %v552 = vpack.c.b16 %v472, %v464
      %v553 = vpack.c.b16 %v473, %v465
      %v554 = vpack.c.b16 %v482, %v474
      %v555 = vpack.c.b16 %v483, %v475
      %v556 = vpack.c.b16 %v484, %v476
      %v557 = vpack.c.b16 %v485, %v477
      %v558 = vpack.c.b16 %v486, %v478
      %v559 = vpack.c.b16 %v487, %v479
      %v560 = vpack.c.b16 %v488, %v480
      %v561 = vpack.c.b16 %v489, %v481
      %v562 = vpack.c.b16 %v498, %v490
      %v563 = vpack.c.b16 %v499, %v491
      %v564 = vpack.c.b16 %v500, %v492
      %v565 = vpack.c.b16 %v501, %v493
      %v566 = vpack.c.b16 %v502, %v494
      %v567 = vpack.c.b16 %v503, %v495
      %v568 = vpack.c.b16 %v504, %v496
      %v569 = vpack.c.b16 %v505, %v497
      %v570 = vpack.c.b16 %v514, %v506
      %v571 = vpack.c.b16 %v515, %v507
      %v572 = vpack.c.b16 %v516, %v508
      %v573 = vpack.c.b16 %v517, %v509
      %v574 = vpack.c.b16 %v518, %v510
      %v575 = vpack.c.b16 %v519, %v511
      %v576 = vpack.c.b16 %v520, %v512
      %v577 = vpack.c.b16 %v521, %v513
      %v740 = vunpack.c.l.b16 %v234
      %v741 = vunpack.c.l.b16 %v235
      %v742 = vunpack.c.l.b16 %v236
      %v743 = vunpack.c.l.b16 %v237
      %v744 = vunpack.c.l.b16 %v238
      %v745 = vunpack.c.l.b16 %v239
      %v746 = vunpack.c.l.b16 %v240
      %v747 = vunpack.c.l.b16 %v241
      %v748 = vunpack.c.l.b16 %v242
      %v749 = vunpack.c.l.b16 %v243
      %v750 = vunpack.c.l.b16 %v244
      %v751 = vunpack.c.l.b16 %v245
      %v752 = vunpack.c.l.b16 %v246
      %v753 = vunpack.c.l.b16 %v247
      %v754 = vunpack.c.l.b16 %v248
      %v755 = vunpack.c.l.b16 %v249
      %v756 = vunpack.c.l.b16 %v250
      %v757 = vunpack.c.l.b16 %v251
      %v758 = vunpack.c.l.b16 %v252
      %v759 = vunpack.c.l.b16 %v253
      %v760 = vunpack.c.l.b16 %v254
      %v761 = vunpack.c.l.b16 %v255
      %v762 = vunpack.c.l.b16 %v256
      %v763 = vunpack.c.l.b16 %v257
      %v764 = vunpack.c.l.b16 %v258
      %v765 = vunpack.c.l.b16 %v259
      %v766 = vunpack.c.l.b16 %v260
      %v767 = vunpack.c.l.b16 %v261
      %v768 = vunpack.c.l.b16 %v262
      %v769 = vunpack.c.l.b16 %v263
      %v770 = vunpack.c.l.b16 %v264
      %v771 = vunpack.c.l.b16 %v265
      %v772 = vunpack.c.l.b16 %v266
      %v773 = vunpack.c.l.b16 %v267
      %v774 = vunpack.c.l.b16 %v268
      %v775 = vunpack.c.l.b16 %v269
      %v776 = vunpack.c.l.b16 %v270
      %v777 = vunpack.c.l.b16 %v271
      %v778 = vunpack.c.l.b16 %v272
      %v779 = vunpack.c.l.b16 %v273
      %v780 = vunpack.c.l.b16 %v274
      %v781 = vunpack.c.l.b16 %v275
      %v782 = vunpack.c.l.b16 %v276
      %v783 = vunpack.c.l.b16 %v277
      %v784 = vunpack.c.l.b16 %v278
      %v785 = vunpack.c.l.b16 %v279
      %v786 = vunpack.c.l.b16 %v280
      %v787 = vunpack.c.l.b16 %v281
      %v788 = vunpack.c.l.b16 %v282
      %v789 = vunpack.c.l.b16 %v283
      %v790 = vunpack.c.l.b16 %v284
      %v791 = vunpack.c.l.b16 %v285
      %v792 = vunpack.c.l.b16 %v286
      %v793 = vunpack.c.l.b16 %v287
      %v794 = vunpack.c.l.b16 %v288
      %v795 = vunpack.c.l.b16 %v289
      %v796 = vunpack.c.l.b16 %v290
      %v797 = vunpack.c.l.b16 %v291
      %v798 = vunpack.c.l.b16 %v292
      %v799 = vunpack.c.l.b16 %v293
      %v800 = vunpack.c.l.b16 %v294
      %v801 = vunpack.c.l.b16 %v295
      %v802 = vunpack.c.l.b16 %v296
      %v803 = vunpack.c.l.b16 %v297
      %v804 = vunpack.c.l.b16 %v298
      %v805 = vunpack.c.l.b16 %v299
      %v806 = vunpack.c.l.b16 %v300
      %v807 = vunpack.c.l.b16 %v301
      %v808 = vunpack.c.l.b16 %v302
      %v809 = vunpack.c.l.b16 %v303
      %v810 = vunpack.c.l.b16 %v304
      %v811 = vunpack.c.l.b16 %v305
      %v812 = vunpack.c.l.b16 %v306
      %v813 = vunpack.c.l.b16 %v307
      %v814 = vunpack.c.l.b16 %v308
      %v815 = vunpack.c.l.b16 %v309
      %v816 = vunpack.c.l.b16 %v310
      %v817 = vunpack.c.l.b16 %v311
      %v818 = vunpack.c.l.b16 %v312
      %v819 = vunpack.c.l.b16 %v313
      %v820 = vunpack.c.l.b16 %v314
      %v821 = vunpack.c.l.b16 %v315
      %v822 = vunpack.c.l.b16 %v316
      %v823 = vunpack.c.l.b16 %v317
      %v824 = vunpack.c.l.b16 %v318
      %v825 = vunpack.c.l.b16 %v319
      %v826 = vunpack.c.l.b16 %v320
      %v827 = vunpack.c.l.b16 %v321
      %v828 = vunpack.c.l.b16 %v322
      %v829 = vunpack.c.l.b16 %v323
      %v830 = vunpack.c.l.b16 %v324
      %v831 = vunpack.c.l.b16 %v325
      %v832 = vunpack.c.l.b16 %v326
      %v833 = vunpack.c.l.b16 %v327
      %v834 = vunpack.c.l.b16 %v328
      %v835 = vunpack.c.l.b16 %v329
      %v836 = vunpack.c.l.b16 %v330
      %v837 = vunpack.c.l.b16 %v331
      %v838 = vunpack.c.l.b16 %v332
      %v839 = vunpack.c.l.b16 %v333
      %v840 = vunpack.c.l.b16 %v334
      %v841 = vunpack.c.l.b16 %v335
      %v842 = vunpack.c.l.b16 %v336
      %v843 = vunpack.c.l.b16 %v337
      %v844 = vunpack.c.l.b16 %v338
      %v845 = vunpack.c.l.b16 %v339
      %v846 = vunpack.c.l.b16 %v340
      %v847 = vunpack.c.l.b16 %v341
      %v848 = vunpack.c.l.b16 %v342
      %v849 = vunpack.c.l.b16 %v343
      %v850 = vunpack.c.l.b16 %v344
      %v851 = vunpack.c.l.b16 %v345
      %v852 = vunpack.c.l.b16 %v346
      %v853 = vpack.c.b16 %v741, %v740
      %v854 = vpack.c.b16 %v743, %v742
      %v855 = vpack.c.b16 %v745, %v744
      %v856 = vpack.c.b16 %v747, %v746
      %v857 = vpack.c.b16 %v749, %v748
      %v858 = vpack.c.b16 %v751, %v750
      %v859 = vpack.c.b16 %v753, %v752
      %v860 = vpack.c.b16 %v755, %v754
      %v861 = vpack.c.b16 %v757, %v756
      %v862 = vpack.c.b16 %v759, %v758
      %v863 = vpack.c.b16 %v761, %v760
      %v864 = vpack.c.b16 %v763, %v762
      %v865 = vpack.c.b16 %v765, %v764
      %v866 = vpack.c.b16 %v767, %v766
      %v867 = vpack.c.b16 %v769, %v768
      %v868 = vpack.c.b16 %v771, %v770
      %v869 = vpack.c.b16 %v773, %v772
      %v870 = vpack.c.b16 %v775, %v774
      %v871 = vpack.c.b16 %v777, %v776
      %v872 = vpack.c.b16 %v779, %v778
      %v873 = vpack.c.b16 %v781, %v780
      %v874 = vpack.c.b16 %v783, %v782
      %v875 = vpack.c.b16 %v785, %v784
      %v876 = vpack.c.b16 %v787, %v786
      %v877 = vpack.c.b16 %v789, %v788
      %v878 = vpack.c.b16 %v791, %v790
      %v879 = vpack.c.b16 %v793, %v792
      %v880 = vpack.c.b16 %v795, %v794
      %v881 = vpack.c.b16 %v797, %v796
      %v882 = vpack.c.b16 %v799, %v798
      %v883 = vpack.c.b16 %v801, %v800
      %v884 = vpack.c.b16 %v803, %v802
      %v885 = vpack.c.b16 %v805, %v804
      %v886 = vpack.c.b16 %v807, %v806
      %v887 = vpack.c.b16 %v809, %v808
      %v888 = vpack.c.b16 %v811, %v810
      %v889 = vpack.c.b16 %v813, %v812
      %v890 = vpack.c.b16 %v815, %v814
      %v891 = vpack.c.b16 %v817, %v816
      %v892 = vpack.c.b16 %v819, %v818
      %v893 = vpack.c.b16 %v821, %v820
      %v894 = vpack.c.b16 %v823, %v822
      %v895 = vpack.c.b16 %v825, %v824
      %v896 = vpack.c.b16 %v827, %v826
      %v897 = vpack.c.b16 %v829, %v828
      %v898 = vpack.c.b16 %v831, %v830
      %v899 = vpack.c.b16 %v833, %v832
      %v900 = vpack.c.b16 %v835, %v834
      %v901 = vpack.c.b16 %v837, %v836
      %v902 = vpack.c.b16 %v839, %v838
      %v903 = vpack.c.b16 %v841, %v840
      %v904 = vpack.c.b16 %v843, %v842
      %v905 = vpack.c.b16 %v845, %v844
      %v906 = vpack.c.b16 %v847, %v846
      %v907 = vpack.c.b16 %v849, %v848
      %v908 = vpack.c.b16 %v851, %v850
      %v909 = vpack.c.b16 %v852, %v852
      %vm966 = vcmask 31744
      %v968 = vsel %vm966, %v529, 0
      %v971 = vsel %vm966, %v537, 0
      %v974 = vsel %vm966, %v545, 0
      %v977 = vsel %vm966, %v553, 0
      %v980 = vsel %vm966, %v561, 0
      %v983 = vsel %vm966, %v569, 0
      %v986 = vsel %vm966, %v577, 0
      %vm988 = vcmask 1041408
      %v990 = vsel %vm988, %v909, 0
      %992 = vmatprep.subr.bf16.mxu0 0
      %993 = vmatpush1.bf16.msra.mxu0 %v853
      %994 = vmatprep.subr.bf16.mxu0 0
      %995 = vmatpush1.bf16.msra.mxu0 %v854
      %996 = vmatprep.subr.bf16.mxu0 0
      %997 = vmatpush1.bf16.msra.mxu0 %v855
      %998 = vmatprep.subr.bf16.mxu0 0
      %999 = vmatpush1.bf16.msra.mxu0 %v856
      %1000 = vmatprep.subr.bf16.mxu0 0
      %1001 = vmatpush1.bf16.msra.mxu0 %v857
      %1002 = vmatprep.subr.bf16.mxu0 0
      %1003 = vmatpush1.bf16.msra.mxu0 %v858
      %1004 = vmatprep.subr.bf16.mxu0 0
      %1005 = vmatpush1.bf16.msra.mxu0 %v859
      %1006 = vmatprep.subr.bf16.mxu0 0
      %1007 = vmatpush1.bf16.msra.mxu0 %v860
      %1008 = vmatprep.subr.bf16.mxu0 0
      %1009 = vmatpush1.bf16.msra.mxu0 %v861
      %1010 = vmatprep.subr.bf16.mxu0 0
      %1011 = vmatpush1.bf16.msra.mxu0 %v862
      %1012 = vmatprep.subr.bf16.mxu0 0
      %1013 = vmatpush1.bf16.msra.mxu0 %v863
      %1014 = vmatprep.subr.bf16.mxu0 0
      %1015 = vmatpush1.bf16.msra.mxu0 %v864
      %1016 = vmatprep.subr.bf16.mxu0 0
      %1017 = vmatpush1.bf16.msra.mxu0 %v865
      %1018 = vmatprep.subr.bf16.mxu0 0
      %1019 = vmatpush1.bf16.msra.mxu0 %v866
      %1020 = vmatprep.subr.bf16.mxu0 0
      %1021 = vmatpush1.bf16.msra.mxu0 %v867
      %1022 = vmatprep.subr.bf16.mxu0 0
      %1023 = vmatpush1.bf16.msra.mxu0 %v868
      %1024 = vmatprep.mubr.bf16.mxu0 %v523
      %1025 = vmatmul.mubr.bf16.gmra.mrb[0].mxu0 %v522
      %v1026 = vpop.f32.mrb[0].mxu0
      %v1027 = vadd.f32 %v352, %v1026
      %v1028 = vpop.f32.mrb[0].mxu0
      %v1029 = vpop.f32.mrb[0].mxu0
      %v1030 = vadd.f32 %v352, %v1029
      %v1031 = vpop.f32.mrb[0].mxu0
      %1032 = vmatprep.mubr.bf16.mxu0 %v531
      %1033 = vmatmul.mubr.bf16.gmra.mrb[0].mxu0 %v530
      %v1034 = vpop.f32.mrb[0].mxu0
      %v1035 = vadd.f32 %v352, %v1034
      %v1036 = vpop.f32.mrb[0].mxu0
      %v1037 = vpop.f32.mrb[0].mxu0
      %v1038 = vadd.f32 %v352, %v1037
      %v1039 = vpop.f32.mrb[0].mxu0
      %1040 = vmatprep.mubr.bf16.mxu0 %v539
      %1041 = vmatmul.mubr.bf16.gmra.mrb[0].mxu0 %v538
      %v1042 = vpop.f32.mrb[0].mxu0
      %v1043 = vadd.f32 %v352, %v1042
      %v1044 = vpop.f32.mrb[0].mxu0
      %v1045 = vpop.f32.mrb[0].mxu0
      %v1046 = vadd.f32 %v352, %v1045
      %v1047 = vpop.f32.mrb[0].mxu0
      %1048 = vmatprep.mubr.bf16.mxu0 %v547
      %1049 = vmatmul.mubr.bf16.gmra.mrb[0].mxu0 %v546
      %v1050 = vpop.f32.mrb[0].mxu0
      %v1051 = vadd.f32 %v352, %v1050
      %v1052 = vpop.f32.mrb[0].mxu0
      %v1053 = vpop.f32.mrb[0].mxu0
      %v1054 = vadd.f32 %v352, %v1053
      %v1055 = vpop.f32.mrb[0].mxu0
      %1056 = vmatprep.mubr.bf16.mxu0 %v555
      %1057 = vmatmul.mubr.bf16.gmra.mrb[0].mxu0 %v554
      %v1058 = vpop.f32.mrb[0].mxu0
      %v1059 = vadd.f32 %v352, %v1058
      %v1060 = vpop.f32.mrb[0].mxu0
      %v1061 = vpop.f32.mrb[0].mxu0
      %v1062 = vadd.f32 %v352, %v1061
      %v1063 = vpop.f32.mrb[0].mxu0
      %1064 = vmatprep.mubr.bf16.mxu0 %v563
      %1065 = vmatmul.mubr.bf16.gmra.mrb[0].mxu0 %v562
      %v1066 = vpop.f32.mrb[0].mxu0
      %v1067 = vadd.f32 %v352, %v1066
      %v1068 = vpop.f32.mrb[0].mxu0
      %v1069 = vpop.f32.mrb[0].mxu0
      %v1070 = vadd.f32 %v352, %v1069
      %v1071 = vpop.f32.mrb[0].mxu0
      %1072 = vmatprep.mubr.bf16.mxu0 %v571
      %1073 = vmatmul.mubr.bf16.gmra.mrb[0].mxu0 %v570
      %v1074 = vpop.f32.mrb[0].mxu0
      %v1075 = vadd.f32 %v352, %v1074
      %v1076 = vpop.f32.mrb[0].mxu0
      %v1077 = vpop.f32.mrb[0].mxu0
      %v1078 = vadd.f32 %v352, %v1077
      %v1079 = vpop.f32.mrb[0].mxu0
      %1080 = vdwg.mxu0
      %1081 = vmatprep.subr.bf16.mxu0 0
      %1082 = vmatpush1.bf16.msra.mxu0 %v869
      %1083 = vmatprep.subr.bf16.mxu0 0
      %1084 = vmatpush1.bf16.msra.mxu0 %v870
      %1085 = vmatprep.subr.bf16.mxu0 0
      %1086 = vmatpush1.bf16.msra.mxu0 %v871
      %1087 = vmatprep.subr.bf16.mxu0 0
      %1088 = vmatpush1.bf16.msra.mxu0 %v872
      %1089 = vmatprep.subr.bf16.mxu0 0
      %1090 = vmatpush1.bf16.msra.mxu0 %v873
      %1091 = vmatprep.subr.bf16.mxu0 0
      %1092 = vmatpush1.bf16.msra.mxu0 %v874
      %1093 = vmatprep.subr.bf16.mxu0 0
      %1094 = vmatpush1.bf16.msra.mxu0 %v875
      %1095 = vmatprep.subr.bf16.mxu0 0
      %1096 = vmatpush1.bf16.msra.mxu0 %v876
      %1097 = vmatprep.subr.bf16.mxu0 0
      %1098 = vmatpush1.bf16.msra.mxu0 %v877
      %1099 = vmatprep.subr.bf16.mxu0 0
      %1100 = vmatpush1.bf16.msra.mxu0 %v878
      %1101 = vmatprep.subr.bf16.mxu0 0
      %1102 = vmatpush1.bf16.msra.mxu0 %v879
      %1103 = vmatprep.subr.bf16.mxu0 0
      %1104 = vmatpush1.bf16.msra.mxu0 %v880
      %1105 = vmatprep.subr.bf16.mxu0 0
      %1106 = vmatpush1.bf16.msra.mxu0 %v881
      %1107 = vmatprep.subr.bf16.mxu0 0
      %1108 = vmatpush1.bf16.msra.mxu0 %v882
      %1109 = vmatprep.subr.bf16.mxu0 0
      %1110 = vmatpush1.bf16.msra.mxu0 %v883
      %1111 = vmatprep.subr.bf16.mxu0 0
      %1112 = vmatpush1.bf16.msra.mxu0 %v884
      %1113 = vmatprep.mubr.bf16.mxu0 %v525
      %1114 = vmatmul.mubr.bf16.gmra.mrb[0].mxu0 %v524
      %v1115 = vpop.f32.mrb[0].mxu0
      %v1116 = vadd.f32 %v1027, %v1115
      %v1117 = vpop.f32.mrb[0].mxu0
      %v1118 = vpop.f32.mrb[0].mxu0
      %v1119 = vadd.f32 %v1030, %v1118
      %v1120 = vpop.f32.mrb[0].mxu0
      %1121 = vmatprep.mubr.bf16.mxu0 %v533
      %1122 = vmatmul.mubr.bf16.gmra.mrb[0].mxu0 %v532
      %v1123 = vpop.f32.mrb[0].mxu0
      %v1124 = vadd.f32 %v1035, %v1123
      %v1125 = vpop.f32.mrb[0].mxu0
      %v1126 = vpop.f32.mrb[0].mxu0
      %v1127 = vadd.f32 %v1038, %v1126
      %v1128 = vpop.f32.mrb[0].mxu0
      %1129 = vmatprep.mubr.bf16.mxu0 %v541
      %1130 = vmatmul.mubr.bf16.gmra.mrb[0].mxu0 %v540
      %v1131 = vpop.f32.mrb[0].mxu0
      %v1132 = vadd.f32 %v1043, %v1131
      %v1133 = vpop.f32.mrb[0].mxu0
      %v1134 = vpop.f32.mrb[0].mxu0
      %v1135 = vadd.f32 %v1046, %v1134
      %v1136 = vpop.f32.mrb[0].mxu0
      %1137 = vmatprep.mubr.bf16.mxu0 %v549
      %1138 = vmatmul.mubr.bf16.gmra.mrb[0].mxu0 %v548
      %v1139 = vpop.f32.mrb[0].mxu0
      %v1140 = vadd.f32 %v1051, %v1139
      %v1141 = vpop.f32.mrb[0].mxu0
      %v1142 = vpop.f32.mrb[0].mxu0
      %v1143 = vadd.f32 %v1054, %v1142
      %v1144 = vpop.f32.mrb[0].mxu0
      %1145 = vmatprep.mubr.bf16.mxu0 %v557
      %1146 = vmatmul.mubr.bf16.gmra.mrb[0].mxu0 %v556
      %v1147 = vpop.f32.mrb[0].mxu0
      %v1148 = vadd.f32 %v1059, %v1147
      %v1149 = vpop.f32.mrb[0].mxu0
      %v1150 = vpop.f32.mrb[0].mxu0
      %v1151 = vadd.f32 %v1062, %v1150
      %v1152 = vpop.f32.mrb[0].mxu0
      %1153 = vmatprep.mubr.bf16.mxu0 %v565
      %1154 = vmatmul.mubr.bf16.gmra.mrb[0].mxu0 %v564
      %v1155 = vpop.f32.mrb[0].mxu0
      %v1156 = vadd.f32 %v1067, %v1155
      %v1157 = vpop.f32.mrb[0].mxu0
      %v1158 = vpop.f32.mrb[0].mxu0
      %v1159 = vadd.f32 %v1070, %v1158
      %v1160 = vpop.f32.mrb[0].mxu0
      %1161 = vmatprep.mubr.bf16.mxu0 %v573
      %1162 = vmatmul.mubr.bf16.gmra.mrb[0].mxu0 %v572
      %v1163 = vpop.f32.mrb[0].mxu0
      %v1164 = vadd.f32 %v1075, %v1163
      %v1165 = vpop.f32.mrb[0].mxu0
      %v1166 = vpop.f32.mrb[0].mxu0
      %v1167 = vadd.f32 %v1078, %v1166
      %v1168 = vpop.f32.mrb[0].mxu0
      %1169 = vdwg.mxu0
      %1170 = vmatprep.subr.bf16.mxu0 0
      %1171 = vmatpush1.bf16.msra.mxu0 %v885
      %1172 = vmatprep.subr.bf16.mxu0 0
      %1173 = vmatpush1.bf16.msra.mxu0 %v886
      %1174 = vmatprep.subr.bf16.mxu0 0
      %1175 = vmatpush1.bf16.msra.mxu0 %v887
      %1176 = vmatprep.subr.bf16.mxu0 0
      %1177 = vmatpush1.bf16.msra.mxu0 %v888
      %1178 = vmatprep.subr.bf16.mxu0 0
      %1179 = vmatpush1.bf16.msra.mxu0 %v889
      %1180 = vmatprep.subr.bf16.mxu0 0
      %1181 = vmatpush1.bf16.msra.mxu0 %v890
      %1182 = vmatprep.subr.bf16.mxu0 0
      %1183 = vmatpush1.bf16.msra.mxu0 %v891
      %1184 = vmatprep.subr.bf16.mxu0 0
      %1185 = vmatpush1.bf16.msra.mxu0 %v892
      %1186 = vmatprep.subr.bf16.mxu0 0
      %1187 = vmatpush1.bf16.msra.mxu0 %v893
      %1188 = vmatprep.subr.bf16.mxu0 0
      %1189 = vmatpush1.bf16.msra.mxu0 %v894
      %1190 = vmatprep.subr.bf16.mxu0 0
      %1191 = vmatpush1.bf16.msra.mxu0 %v895
      %1192 = vmatprep.subr.bf16.mxu0 0
      %1193 = vmatpush1.bf16.msra.mxu0 %v896
      %1194 = vmatprep.subr.bf16.mxu0 0
      %1195 = vmatpush1.bf16.msra.mxu0 %v897
      %1196 = vmatprep.subr.bf16.mxu0 0
      %1197 = vmatpush1.bf16.msra.mxu0 %v898
      %1198 = vmatprep.subr.bf16.mxu0 0
      %1199 = vmatpush1.bf16.msra.mxu0 %v899
      %1200 = vmatprep.subr.bf16.mxu0 0
      %1201 = vmatpush1.bf16.msra.mxu0 %v900
      %1202 = vmatprep.mubr.bf16.mxu0 %v527
      %1203 = vmatmul.mubr.bf16.gmra.mrb[0].mxu0 %v526
      %v1204 = vpop.f32.mrb[0].mxu0
      %v1205 = vadd.f32 %v1116, %v1204
      %v1206 = vpop.f32.mrb[0].mxu0
      %v1207 = vpop.f32.mrb[0].mxu0
      %v1208 = vadd.f32 %v1119, %v1207
      %v1209 = vpop.f32.mrb[0].mxu0
      %1210 = vmatprep.mubr.bf16.mxu0 %v535
      %1211 = vmatmul.mubr.bf16.gmra.mrb[0].mxu0 %v534
      %v1212 = vpop.f32.mrb[0].mxu0
      %v1213 = vadd.f32 %v1124, %v1212
      %v1214 = vpop.f32.mrb[0].mxu0
      %v1215 = vpop.f32.mrb[0].mxu0
      %v1216 = vadd.f32 %v1127, %v1215
      %v1217 = vpop.f32.mrb[0].mxu0
      %1218 = vmatprep.mubr.bf16.mxu0 %v543
      %1219 = vmatmul.mubr.bf16.gmra.mrb[0].mxu0 %v542
      %v1220 = vpop.f32.mrb[0].mxu0
      %v1221 = vadd.f32 %v1132, %v1220
      %v1222 = vpop.f32.mrb[0].mxu0
      %v1223 = vpop.f32.mrb[0].mxu0
      %v1224 = vadd.f32 %v1135, %v1223
      %v1225 = vpop.f32.mrb[0].mxu0
      %1226 = vmatprep.mubr.bf16.mxu0 %v551
      %1227 = vmatmul.mubr.bf16.gmra.mrb[0].mxu0 %v550
      %v1228 = vpop.f32.mrb[0].mxu0
      %v1229 = vadd.f32 %v1140, %v1228
      %v1230 = vpop.f32.mrb[0].mxu0
      %v1231 = vpop.f32.mrb[0].mxu0
      %v1232 = vadd.f32 %v1143, %v1231
      %v1233 = vpop.f32.mrb[0].mxu0
      %1234 = vmatprep.mubr.bf16.mxu0 %v559
      %1235 = vmatmul.mubr.bf16.gmra.mrb[0].mxu0 %v558
      %v1236 = vpop.f32.mrb[0].mxu0
      %v1237 = vadd.f32 %v1148, %v1236
      %v1238 = vpop.f32.mrb[0].mxu0
      %v1239 = vpop.f32.mrb[0].mxu0
      %v1240 = vadd.f32 %v1151, %v1239
      %v1241 = vpop.f32.mrb[0].mxu0
      %1242 = vmatprep.mubr.bf16.mxu0 %v567
      %1243 = vmatmul.mubr.bf16.gmra.mrb[0].mxu0 %v566
      %v1244 = vpop.f32.mrb[0].mxu0
      %v1245 = vadd.f32 %v1156, %v1244
      %v1246 = vpop.f32.mrb[0].mxu0
      %v1247 = vpop.f32.mrb[0].mxu0
      %v1248 = vadd.f32 %v1159, %v1247
      %v1249 = vpop.f32.mrb[0].mxu0
      %1250 = vmatprep.mubr.bf16.mxu0 %v575
      %1251 = vmatmul.mubr.bf16.gmra.mrb[0].mxu0 %v574
      %v1252 = vpop.f32.mrb[0].mxu0
      %v1253 = vadd.f32 %v1164, %v1252
      %v1254 = vpop.f32.mrb[0].mxu0
      %v1255 = vpop.f32.mrb[0].mxu0
      %v1256 = vadd.f32 %v1167, %v1255
      %v1257 = vpop.f32.mrb[0].mxu0
      %1258 = vdwg.mxu0
      %1259 = vmatprep.subr.bf16.mxu0 0
      %1260 = vmatpush1.bf16.msra.mxu0 %v901
      %1261 = vmatprep.subr.bf16.mxu0 0
      %1262 = vmatpush1.bf16.msra.mxu0 %v902
      %1263 = vmatprep.subr.bf16.mxu0 0
      %1264 = vmatpush1.bf16.msra.mxu0 %v903
      %1265 = vmatprep.subr.bf16.mxu0 0
      %1266 = vmatpush1.bf16.msra.mxu0 %v904
      %1267 = vmatprep.subr.bf16.mxu0 0
      %1268 = vmatpush1.bf16.msra.mxu0 %v905
      %1269 = vmatprep.subr.bf16.mxu0 0
      %1270 = vmatpush1.bf16.msra.mxu0 %v906
      %1271 = vmatprep.subr.bf16.mxu0 0
      %1272 = vmatpush1.bf16.msra.mxu0 %v907
      %1273 = vmatprep.subr.bf16.mxu0 0
      %1274 = vmatpush1.bf16.msra.mxu0 %v908
      %1275 = vmatprep.subr.bf16.mxu0 0
      %1276 = vmatpush1.bf16.msra.mxu0 %v990
      %1277 = vmatprep.subr.bf16.mxu0 0
      %1278 = vmatpush1.bf16.msra.mxu0 0
      %1279 = vmatprep.subr.bf16.mxu0 0
      %1280 = vmatpush1.bf16.msra.mxu0 0
      %1281 = vmatprep.subr.bf16.mxu0 0
      %1282 = vmatpush1.bf16.msra.mxu0 0
      %1283 = vmatprep.subr.bf16.mxu0 0
      %1284 = vmatpush1.bf16.msra.mxu0 0
      %1285 = vmatprep.subr.bf16.mxu0 0
      %1286 = vmatpush1.bf16.msra.mxu0 0
      %1287 = vmatprep.subr.bf16.mxu0 0
      %1288 = vmatpush1.bf16.msra.mxu0 0
      %1289 = vmatprep.subr.bf16.mxu0 0
      %1290 = vmatpush1.bf16.msra.mxu0 0
      %1291 = vmatprep.mubr.bf16.mxu0 %v968
      %1292 = vmatmul.mubr.bf16.gmra.mrb[0].mxu0 %v528
      %v1293 = vpop.f32.mrb[0].mxu0
      %v1294 = vadd.f32 %v1205, %v1293
      %v1295 = vpop.f32.mrb[0].mxu0
      %v1296 = vpop.f32.mrb[0].mxu0
      %v1297 = vadd.f32 %v1208, %v1296
      %v1298 = vpop.f32.mrb[0].mxu0
      %1299 = vmatprep.mubr.bf16.mxu0 %v971
      %1300 = vmatmul.mubr.bf16.gmra.mrb[0].mxu0 %v536
      %v1301 = vpop.f32.mrb[0].mxu0
      %v1302 = vadd.f32 %v1213, %v1301
      %v1303 = vpop.f32.mrb[0].mxu0
      %v1304 = vpop.f32.mrb[0].mxu0
      %v1305 = vadd.f32 %v1216, %v1304
      %v1306 = vpop.f32.mrb[0].mxu0
      %1307 = vmatprep.mubr.bf16.mxu0 %v974
      %1308 = vmatmul.mubr.bf16.gmra.mrb[0].mxu0 %v544
      %v1309 = vpop.f32.mrb[0].mxu0
      %v1310 = vadd.f32 %v1221, %v1309
      %v1311 = vpop.f32.mrb[0].mxu0
      %v1312 = vpop.f32.mrb[0].mxu0
      %v1313 = vadd.f32 %v1224, %v1312
      %v1314 = vpop.f32.mrb[0].mxu0
      %1315 = vmatprep.mubr.bf16.mxu0 %v977
      %1316 = vmatmul.mubr.bf16.gmra.mrb[0].mxu0 %v552
      %v1317 = vpop.f32.mrb[0].mxu0
      %v1318 = vadd.f32 %v1229, %v1317
      %v1319 = vpop.f32.mrb[0].mxu0
      %v1320 = vpop.f32.mrb[0].mxu0
      %v1321 = vadd.f32 %v1232, %v1320
      %v1322 = vpop.f32.mrb[0].mxu0
      %1323 = vmatprep.mubr.bf16.mxu0 %v980
      %1324 = vmatmul.mubr.bf16.gmra.mrb[0].mxu0 %v560
      %v1325 = vpop.f32.mrb[0].mxu0
      %v1326 = vadd.f32 %v1237, %v1325
      %v1327 = vpop.f32.mrb[0].mxu0
      %v1328 = vpop.f32.mrb[0].mxu0
      %v1329 = vadd.f32 %v1240, %v1328
      %v1330 = vpop.f32.mrb[0].mxu0
      %1331 = vmatprep.mubr.bf16.mxu0 %v983
      %1332 = vmatmul.mubr.bf16.gmra.mrb[0].mxu0 %v568
      %v1333 = vpop.f32.mrb[0].mxu0
      %v1334 = vadd.f32 %v1245, %v1333
      %v1335 = vpop.f32.mrb[0].mxu0
      %v1336 = vpop.f32.mrb[0].mxu0
      %v1337 = vadd.f32 %v1248, %v1336
      %v1338 = vpop.f32.mrb[0].mxu0
      %1339 = vmatprep.mubr.bf16.mxu0 %v986
      %1340 = vmatmul.mubr.bf16.gmra.mrb[0].mxu0 %v576
      %v1341 = vpop.f32.mrb[0].mxu0
      %v1342 = vadd.f32 %v1253, %v1341
      %v1343 = vpop.f32.mrb[0].mxu0
      %v1344 = vpop.f32.mrb[0].mxu0
      %v1345 = vadd.f32 %v1256, %v1344
      %v1346 = vpop.f32.mrb[0].mxu0
      %1347 = vdwg.mxu0
      %v1348 = vmax.f32 %v1294, 0.0
      %v1349 = vmax.f32 %v1297, 0.0
      %v1350 = vmax.f32 %v1302, 0.0
      %v1351 = vmax.f32 %v1305, 0.0
      %v1352 = vmax.f32 %v1310, 0.0
      %v1353 = vmax.f32 %v1313, 0.0
      %v1354 = vmax.f32 %v1318, 0.0
      %v1355 = vmax.f32 %v1321, 0.0
      %v1356 = vmax.f32 %v1326, 0.0
      %v1357 = vmax.f32 %v1329, 0.0
      %v1358 = vmax.f32 %v1334, 0.0
      %v1359 = vmax.f32 %v1337, 0.0
      %v1360 = vmax.f32 %v1342, 0.0
      %v1361 = vmax.f32 %v1345, 0.0
      %v1362 = vpack.c.bf16 %v1349, %v1348
      %v1363 = vpack.c.bf16 %v1351, %v1350
      %v1364 = vpack.c.bf16 %v1353, %v1352
      %v1365 = vpack.c.bf16 %v1355, %v1354
      %v1366 = vpack.c.bf16 %v1357, %v1356
      %v1367 = vpack.c.bf16 %v1359, %v1358
      %v1368 = vpack.c.bf16 %v1361, %v1360
      %v1376 = vunpack.c.l.b16 %v1362
      %v1377 = vunpack.c.h.b16 %v1362
      %v1378 = vunpack.c.l.b16 %v1363
      %v1379 = vunpack.c.h.b16 %v1363
      %v1380 = vunpack.c.l.b16 %v1364
      %v1381 = vunpack.c.h.b16 %v1364
      %v1382 = vunpack.c.l.b16 %v1365
      %v1383 = vunpack.c.h.b16 %v1365
      %v1384 = vunpack.c.l.b16 %v1366
      %v1385 = vunpack.c.h.b16 %v1366
      %v1386 = vunpack.c.l.b16 %v1367
      %v1387 = vunpack.c.h.b16 %v1367
      %v1388 = vunpack.c.l.b16 %v1368
      %v1389 = vunpack.c.h.b16 %v1368
      %v1390 = vpack.c.b16 %v1376, %v1376
      %v1391 = vpack.c.b16 %v1377, %v1377
      %v1392 = vpack.c.b16 %v1378, %v1378
      %v1393 = vpack.c.b16 %v1379, %v1379
      %v1394 = vpack.c.b16 %v1380, %v1380
      %v1395 = vpack.c.b16 %v1381, %v1381
      %v1396 = vpack.c.b16 %v1382, %v1382
      %v1397 = vpack.c.b16 %v1383, %v1383
      %v1398 = vpack.c.b16 %v1384, %v1384
      %v1399 = vpack.c.b16 %v1385, %v1385
      %v1400 = vpack.c.b16 %v1386, %v1386
      %v1401 = vpack.c.b16 %v1387, %v1387
      %v1402 = vpack.c.b16 %v1388, %v1388
      %v1403 = vpack.c.b16 %v1389, %v1389
      %1418 = vst [vmem:[%s175] sm:$0xf] %v1390
      %1419 = vst [vmem:[%s175 + $0x4] sm:$0xf] %v1391
      %1420 = vst [vmem:[%s175 + $0x8] sm:$0xf] %v1392
      %1421 = vst [vmem:[%s175 + $0xc] sm:$0xf] %v1393
      %1422 = vst [vmem:[%s175 + $0x10] sm:$0xf] %v1394
      %1423 = vst [vmem:[%s175 + $0x14] sm:$0xf] %v1395
      %1424 = vst [vmem:[%s175 + $0x18] sm:$0xf] %v1396
      %1425 = vst [vmem:[%s175 + $0x1c] sm:$0xf] %v1397
      %1426 = vst [vmem:[%s175 + $0x20] sm:$0xf] %v1398
      %1427 = vst [vmem:[%s175 + $0x24] sm:$0xf] %v1399
      %1428 = vst [vmem:[%s175 + $0x28] sm:$0xf] %v1400
      %1429 = vst [vmem:[%s175 + $0x2c] sm:$0xf] %v1401
      %1430 = vst [vmem:[%s175 + $0x30] sm:$0xf] %v1402
      %1431 = vst [vmem:[%s175 + $0x34] sm:$0xf] %v1403
      %s1432 = smul.u32 14, %s14
      %p1433 = scmp.lt.s32.totalorder %s1432, 27
      %s1434 = scalar_select %p1433, %s1432, 27
      %s1435 = smul.addr %s1434, 4
      %s1436 = scalar_lea.vmem %s3, %s1435
      // Predicated region
      $region33: #{pilotnet_forward.8} parent=31 // pred_check
        %p1437 = pneg %p100
      $region34: #{pilotnet_forward.8} parent=31 // pred_check_branch
        %1439 = sbr.rel (%p1437) target = $region36
      $region35: #{pilotnet_forward.8} parent=31 // pred_region
        %s1440 = smul.u32 14, %s14
      $region36: #{pilotnet_forward.8} parent=31 // pred_fallthru
        _
    $region32: #{pilotnet_forward.8} parent=5 // pred_fallthru
      _
    %p1441 = scmp.le.s32.totalorder 2, %s9
    // Predicated region
    $region37: #{pilotnet_forward.8} parent=5 // pred_check
      %p1442 = pneg %p1441
    $region38: #{pilotnet_forward.8} parent=5 // pred_check_branch
      %1444 = sbr.rel (%p1442) target = $region40
    $region39: #{pilotnet_forward.8} parent=5 // pred_region
      %s1445 = ssub.s32 %s9, 2
      // Predicated region
      $region41: #{pilotnet_forward.8} parent=39 // pred_check
        %p1446 = pneg %p106
      $region42: #{pilotnet_forward.8} parent=39 // pred_check_branch
        %1448 = sbr.rel (%p1446) target = $region44
      $region43: #{pilotnet_forward.8} parent=39 // pred_region
        %s1449 = smul.u32 14, %s15
        %p1450 = scmp.lt.s32.totalorder %s1449, 27
        %s1451 = scalar_select %p1450, %s1449, 27
        %s1452 = smul.addr %s1451, 4
        %s1453 = scalar_lea.vmem %s3, %s1452
      $region44: #{pilotnet_forward.8} parent=39 // pred_fallthru
        _
    $region40: #{pilotnet_forward.8} parent=5 // pred_fallthru
      _
  $region6: #{pilotnet_forward.8} parent=0 // loop_footer
    %s13 = sadd.s32 1, %s9
  $region7: #{pilotnet_forward.8} parent=0 // loop_footer_branch
    %8 = sbr.rel target = $region3
  $region8: #{pilotnet_forward.8} parent=0 // loop_exit
    _

// kernel: pilotnet_forward.9
$region0: #{pilotnet_forward.9}
  #allocation0 [shape = 'u32[]', space=smem, size = 0x4, offset = 0x4, fixed_abs, tag = 'smem constant byte address 0x4 - core index']
  #allocation1 [shape = 'u32[144,128]{1,0:T(1,128)}', space=vmem, size = 0x12000, scoped, tag = 'internal scratch']
  %s0 = inlined_call_operand.vmem [shape: bf16[120,432], index: 0, kind: input, shape index: {}]
  %s1 = inlined_call_operand.vmem [shape: bf16[432,128], index: 1, kind: input, shape index: {}]
  %s2 = inlined_call_operand.vmem [shape: f32[1,128], index: 2, kind: input, shape index: {}]
  %s3 = inlined_call_operand.vmem [shape: bf16[120,128], index: 3, kind: output, shape index: {}]
  %s4 = sld [smem:[#allocation0]]
  $region89: #{pilotnet_forward.9} parent=0
    _
  %s6 = ssub.s32 1, %s4
  %s7 = scalar_select 0, %s6, %s4
  $region1: #{pilotnet_forward.9} parent=0
    #allocation2 [shape = 'u8[32768]{0}', space=vmem, size = 0x8000, scoped, tag = 'output window, operand 0']
    loop: start=0, step=1, limit=4
    $region2: #{pilotnet_forward.9} parent=1 // loop_pre_header
      _
    $region3: #{pilotnet_forward.9} parent=1 // loop_header
      %s9 = sphi 0, %s13
      %p10 = scmp.ge.s32.totalorder %s9, 4
      %s19 = sphi 0, %s21
      %s22 = sphi 0, %s19
      %s23 = sphi 0, %s22
      %s39 = sphi 0, %s23
      %s43 = sphi 0, %s43
      %s45 = sphi 0, %s43
      %s46 = sphi 0, %s45
      %s60 = sphi 0, %s46
      %s64 = sphi 0, %s64
      %s66 = sphi 0, %s64
      %s67 = sphi 0, %s66
      %s81 = sphi 0, %s67
      %s87 = sphi 0, %s89
      %s90 = sphi 0, %s87
      %s91 = sphi 0, %s90
      %s107 = sphi 0, %s91
    $region4: #{pilotnet_forward.9} parent=1 // loop_header_branch
      %12 = sbr.rel (%p10) target = $region8
    $region5: #{pilotnet_forward.9} parent=1 // loop_body
      %s14 = ssub.s32 %s9, 1
      %s15 = ssub.s32 %s9, 2
      %s16 = sadd.s32 %s9, 1
      %s17 = ssub.s32 %s9, %s16
      %p18 = scmp.eq.s32.totalorder %s17, 0
      %s20 = sadd.s32 %s19, 1
      %s21 = scalar_select %p18, %s19, %s20
      %p24 = pneg %p18
      %p25 = scmp.eq.s32.totalorder %s9, 1
      %p26 = por %p24, %p25
      %p27 = scmp.ne.s32.totalorder %s19, %s22
      %p28 = scmp.eq.s32.totalorder %s9, 0
      %p29 = por %p27, %p28
      %p30 = scmp.ne.s32.totalorder %s19, %s22
      %p31 = scmp.eq.s32.totalorder %s14, 1
      %p32 = por %p30, %p31
      %p33 = scmp.ne.s32.totalorder %s22, %s23
      %p34 = scmp.eq.s32.totalorder %s14, 0
      %p35 = por %p33, %p34
      %p36 = scmp.ne.s32.totalorder %s22, %s23
      %p37 = scmp.eq.s32.totalorder %s15, 1
      %p38 = por %p36, %p37
      %p40 = scmp.ne.s32.totalorder %s23, %s39
      %p41 = scmp.eq.s32.totalorder %s15, 0
      %p42 = por %p40, %p41
      %s44 = sadd.s32 %s43, 1
      %p47 = scmp.eq.s32.totalorder %s9, 1
      %p48 = scmp.ne.s32.totalorder %s43, %s45
      %p49 = scmp.eq.s32.totalorder %s9, 0
      %p50 = por %p48, %p49
      %p51 = scmp.ne.s32.totalorder %s43, %s45
      %p52 = scmp.eq.s32.totalorder %s14, 1
      %p53 = por %p51, %p52
      %p54 = scmp.ne.s32.totalorder %s45, %s46
      %p55 = scmp.eq.s32.totalorder %s14, 0
      %p56 = por %p54, %p55
      %p57 = scmp.ne.s32.totalorder %s45, %s46
      %p58 = scmp.eq.s32.totalorder %s15, 1
      %p59 = por %p57, %p58
      %p61 = scmp.ne.s32.totalorder %s46, %s60
      %p62 = scmp.eq.s32.totalorder %s15, 0
      %p63 = por %p61, %p62
      %s65 = sadd.s32 %s64, 1
      %p68 = scmp.eq.s32.totalorder %s9, 1
      %p69 = scmp.ne.s32.totalorder %s64, %s66
      %p70 = scmp.eq.s32.totalorder %s9, 0
      %p71 = por %p69, %p70
      %p72 = scmp.ne.s32.totalorder %s64, %s66
      %p73 = scmp.eq.s32.totalorder %s14, 1
      %p74 = por %p72, %p73
      %p75 = scmp.ne.s32.totalorder %s66, %s67
      %p76 = scmp.eq.s32.totalorder %s14, 0
      %p77 = por %p75, %p76
      %p78 = scmp.ne.s32.totalorder %s66, %s67
      %p79 = scmp.eq.s32.totalorder %s15, 1
      %p80 = por %p78, %p79
      %p82 = scmp.ne.s32.totalorder %s67, %s81
      %p83 = scmp.eq.s32.totalorder %s15, 0
      %p84 = por %p82, %p83
      %s85 = ssub.s32 %s9, %s16
      %p86 = scmp.eq.s32.totalorder %s85, 0
      %s88 = sadd.s32 %s87, 1
      %s89 = scalar_select %p86, %s87, %s88
      %p92 = pneg %p86
      %p93 = scmp.eq.s32.totalorder %s9, 1
      %p94 = por %p92, %p93
      %p95 = scmp.ne.s32.totalorder %s87, %s90
      %p96 = scmp.eq.s32.totalorder %s9, 0
      %p97 = por %p95, %p96
      %p98 = scmp.ne.s32.totalorder %s87, %s90
      %p99 = scmp.eq.s32.totalorder %s14, 1
      %p100 = por %p98, %p99
      %p101 = scmp.ne.s32.totalorder %s90, %s91
      %p102 = scmp.eq.s32.totalorder %s14, 0
      %p103 = por %p101, %p102
      %p104 = scmp.ne.s32.totalorder %s90, %s91
      %p105 = scmp.eq.s32.totalorder %s15, 1
      %p106 = por %p104, %p105
      %p108 = scmp.ne.s32.totalorder %s91, %s107
      %p109 = scmp.eq.s32.totalorder %s15, 0
      %p110 = por %p108, %p109
      %p111 = scmp.le.s32.totalorder 1, %s9
      %p112 = scmp.lt.s32.totalorder %s9, 3
      %p113 = pnand %p111, %p112
      %p114 = pneg %p113
      // Predicated region
      $region9: #{pilotnet_forward.9} parent=5 // pred_check
        _
      $region10: #{pilotnet_forward.9} parent=5 // pred_check_branch
        %116 = sbr.rel (%p113) target = $region12
      $region11: #{pilotnet_forward.9} parent=5 // pred_region
        %s117 = ssub.s32 %s9, 1
        // Predicated region
        $region13: #{pilotnet_forward.9} parent=11 // pred_check
          %p118 = pneg %p56
        $region14: #{pilotnet_forward.9} parent=11 // pred_check_branch
          %120 = sbr.rel (%p118) target = $region16
        $region15: #{pilotnet_forward.9} parent=11 // pred_region
          _
        $region16: #{pilotnet_forward.9} parent=11 // pred_fallthru
          _
        // Predicated region
        $region17: #{pilotnet_forward.9} parent=11 // pred_check
          %p121 = pneg %p77
        $region18: #{pilotnet_forward.9} parent=11 // pred_check_branch
          %123 = sbr.rel (%p121) target = $region20
        $region19: #{pilotnet_forward.9} parent=11 // pred_region
          _
        $region20: #{pilotnet_forward.9} parent=11 // pred_fallthru
          _
      $region12: #{pilotnet_forward.9} parent=5 // pred_fallthru
        _
      %p124 = scmp.lt.s32.totalorder %s9, 2
      // Predicated region
      $region21: #{pilotnet_forward.9} parent=5 // pred_check
        %p125 = pneg %p124
      $region22: #{pilotnet_forward.9} parent=5 // pred_check_branch
        %127 = sbr.rel (%p125) target = $region24
      $region23: #{pilotnet_forward.9} parent=5 // pred_region
        // Predicated region
        $region25: #{pilotnet_forward.9} parent=23 // pred_check
          %p128 = pneg %p29
        $region26: #{pilotnet_forward.9} parent=23 // pred_check_branch
          %130 = sbr.rel (%p128) target = $region28
        $region27: #{pilotnet_forward.9} parent=23 // pred_region
          %s131 = smul.u32 8, %s9
          %s132 = ssub.s32 15, %s131
          %p133 = scmp.lt.s32.totalorder %s132, 8
          %s134 = scalar_select %p133, %s132, 8
          %s135 = smul.u32 64, %s134
          %s136 = smul.u32 %s135, 4
          %p137 = scmp.lt.s32.totalorder %s131, 14
          %s138 = scalar_select %p137, %s131, 14
          %s139 = smul.addr %s138, 4
          %s140 = smul.addr %s139, 4
          %s141 = scalar_lea.vmem %s0, %s140
          %s142 = smul.u32 8, %s9
          %s143 = ssub.s32 15, %s142
          %p144 = scmp.lt.s32.totalorder %s143, 8
          %s145 = scalar_select %p144, %s143, 8
          %s146 = smul.u32 64, %s145
          %s147 = smul.u32 %s146, 4
        $region28: #{pilotnet_forward.9} parent=23 // pred_fallthru
          _
      $region24: #{pilotnet_forward.9} parent=5 // pred_fallthru
        _
      %p148 = scmp.le.s32.totalorder 1, %s9
      %p149 = scmp.lt.s32.totalorder %s9, 3
      %p150 = pnand %p148, %p149
      %p151 = pneg %p150
      // Predicated region
      $region29: #{pilotnet_forward.9} parent=5 // pred_check
        _
      $region30: #{pilotnet_forward.9} parent=5 // pred_check_branch
        %153 = sbr.rel (%p150) target = $region32
      $region31: #{pilotnet_forward.9} parent=5 // pred_region
        %s154 = ssub.s32 %s9, 1
        %s155 = smul.u32 8, %s14
        %s156 = ssub.s32 15, %s155
        %p157 = scmp.lt.s32.totalorder %s156, 8
        %s158 = scalar_select %p157, %s156, 8
        %s159 = smul.u32 64, %s158
        %s160 = smul.u32 %s159, 4
        %p161 = scmp.lt.s32.totalorder %s155, 14
        %s162 = scalar_select %p161, %s155, 14
        %s163 = smul.addr %s162, 4
        %s164 = smul.addr %s163, 4
        %s165 = scalar_lea.vmem %s0, %s164
        %p166 = pneg %p35
        %p167 = pneg %p32
        %p168 = pneg %p56
        %p169 = pneg %p53
        %p170 = pneg %p77
        %p171 = pneg %p74
        %p172 = pneg %p103
        %p173 = pneg %p100
        %s174 = sand.u32 %s90, 1
        %s175 = sand.u32 %s90, 1
        %s176 = smul.addr %s175, 32
        %s177 = scalar_lea.vmem [#allocation2], %s176
        %s178 = smul.u32 8, %s14
        %s179 = ssub.s32 15, %s178
        %p180 = scmp.lt.s32.totalorder %s179, 8
        %s181 = scalar_select %p180, %s179, 8
        %s182 = smul.u32 64, %s181
        %s183 = smul.u32 %s182, 4
        %p184 = scmp.lt.s32.totalorder %s178, 14
        %s185 = scalar_select %p184, %s178, 14
        %s186 = smul.addr %s185, 4
        %s187 = smul.addr %s186, 4
        %s188 = scalar_lea.vmem %s0, %s187
        %s189 = smul.u32 8, %s14
        %s190 = ssub.s32 15, %s189
        %p191 = scmp.lt.s32.totalorder %s190, 8
        %s192 = scalar_select %p191, %s190, 8
        %s193 = smul.u32 64, %s192
        %s194 = smul.u32 %s193, 4
        %s195 = smul.u32 8, %s14
        %s196 = ssub.s32 15, %s195
        %p197 = scmp.lt.s32.totalorder %s196, 8
        %s198 = scalar_select %p197, %s196, 8
        %s199 = smul.u32 64, %s198
        %v201 = vld [vmem:[%s188] sm:$0xff]
        %v202 = vld [vmem:[%s188 + $0x8] sm:$0xff]
        %v203 = vld [vmem:[%s188 + $0x10] sm:$0xff]
        %v204 = vld [vmem:[%s188 + $0x18] sm:$0xff]
        %v205 = vld [vmem:[%s188 + $0x20] sm:$0xff]
        %v206 = vld [vmem:[%s188 + $0x28] sm:$0xff]
        %v207 = vld [vmem:[%s188 + $0x30] sm:$0xff]
        %v208 = vld [vmem:[%s188 + $0x38] sm:$0xff]
        %v209 = vld [vmem:[%s188 + $0x40] sm:$0xff]
        %v210 = vld [vmem:[%s188 + $0x48] sm:$0xff]
        %v211 = vld [vmem:[%s188 + $0x50] sm:$0xff]
        %v212 = vld [vmem:[%s188 + $0x58] sm:$0xff]
        %v213 = vld [vmem:[%s188 + $0x60] sm:$0xff]
        %v214 = vld [vmem:[%s188 + $0x68] sm:$0xff]
        %v215 = vld [vmem:[%s188 + $0x70] sm:$0xff]
        %v216 = vld [vmem:[%s188 + $0x78] sm:$0xff]
        %v217 = vld [vmem:[%s1] sm:$0xf]
        %v218 = vld [vmem:[%s1 + $0x4] sm:$0xf]
        %v219 = vld [vmem:[%s1 + $0x8] sm:$0xf]
        %v220 = vld [vmem:[%s1 + $0xc] sm:$0xf]
        %v221 = vld [vmem:[%s1 + $0x10] sm:$0xf]
        %v222 = vld [vmem:[%s1 + $0x14] sm:$0xf]
        %v223 = vld [vmem:[%s1 + $0x18] sm:$0xf]
        %v224 = vld [vmem:[%s1 + $0x1c] sm:$0xf]
        %v225 = vld [vmem:[%s1 + $0x20] sm:$0xf]
        %v226 = vld [vmem:[%s1 + $0x24] sm:$0xf]
        %v227 = vld [vmem:[%s1 + $0x28] sm:$0xf]
        %v228 = vld [vmem:[%s1 + $0x2c] sm:$0xf]
        %v229 = vld [vmem:[%s1 + $0x30] sm:$0xf]
        %v230 = vld [vmem:[%s1 + $0x34] sm:$0xf]
        %v231 = vld [vmem:[%s1 + $0x38] sm:$0xf]
        %v232 = vld [vmem:[%s1 + $0x3c] sm:$0xf]
        %v233 = vld [vmem:[%s1 + $0x40] sm:$0xf]
        %v234 = vld [vmem:[%s1 + $0x44] sm:$0xf]
        %v235 = vld [vmem:[%s1 + $0x48] sm:$0xf]
        %v236 = vld [vmem:[%s1 + $0x4c] sm:$0xf]
        %v237 = vld [vmem:[%s1 + $0x50] sm:$0xf]
        %v238 = vld [vmem:[%s1 + $0x54] sm:$0xf]
        %v239 = vld [vmem:[%s1 + $0x58] sm:$0xf]
        %v240 = vld [vmem:[%s1 + $0x5c] sm:$0xf]
        %v241 = vld [vmem:[%s1 + $0x60] sm:$0xf]
        %v242 = vld [vmem:[%s1 + $0x64] sm:$0xf]
        %v243 = vld [vmem:[%s1 + $0x68] sm:$0xf]
        %v244 = vld [vmem:[%s1 + $0x6c] sm:$0xf]
        %v245 = vld [vmem:[%s1 + $0x70] sm:$0xf]
        %v246 = vld [vmem:[%s1 + $0x74] sm:$0xf]
        %v247 = vld [vmem:[%s1 + $0x78] sm:$0xf]
        %v248 = vld [vmem:[%s1 + $0x7c] sm:$0xf]
        %v249 = vld [vmem:[%s1 + $0x80] sm:$0xf]
        %v250 = vld [vmem:[%s1 + $0x84] sm:$0xf]
        %v251 = vld [vmem:[%s1 + $0x88] sm:$0xf]
        %v252 = vld [vmem:[%s1 + $0x8c] sm:$0xf]
        %v253 = vld [vmem:[%s1 + $0x90] sm:$0xf]
        %v254 = vld [vmem:[%s1 + $0x94] sm:$0xf]
        %v255 = vld [vmem:[%s1 + $0x98] sm:$0xf]
        %v256 = vld [vmem:[%s1 + $0x9c] sm:$0xf]
        %v257 = vld [vmem:[%s1 + $0xa0] sm:$0xf]
        %v258 = vld [vmem:[%s1 + $0xa4] sm:$0xf]
        %v259 = vld [vmem:[%s1 + $0xa8] sm:$0xf]
        %v260 = vld [vmem:[%s1 + $0xac] sm:$0xf]
        %v261 = vld [vmem:[%s1 + $0xb0] sm:$0xf]
        %v262 = vld [vmem:[%s1 + $0xb4] sm:$0xf]
        %v263 = vld [vmem:[%s1 + $0xb8] sm:$0xf]
        %v264 = vld [vmem:[%s1 + $0xbc] sm:$0xf]
        %v265 = vld [vmem:[%s1 + $0xc0] sm:$0xf]
        %v266 = vld [vmem:[%s1 + $0xc4] sm:$0xf]
        %v267 = vld [vmem:[%s1 + $0xc8] sm:$0xf]
        %v268 = vld [vmem:[%s1 + $0xcc] sm:$0xf]
        %v269 = vld [vmem:[%s1 + $0xd0] sm:$0xf]
        %v270 = vld [vmem:[%s1 + $0xd4] sm:$0xf]
        %v271 = vld [vmem:[%s2] sm:$0x1]
        %v273 = vlaneseq
        %v274 = vshrl.u32 %v273, 7
        %v275 = vsub.s32 0, %v274
        %v276 = vrot.slane %v271, %v275
        %v294 = vunpack.c.l.b16 %v201
        %v295 = vunpack.c.h.b16 %v201
        %v296 = vunpack.c.l.b16 %v202
        %v297 = vunpack.c.h.b16 %v202
        %v298 = vunpack.c.l.b16 %v203
        %v299 = vunpack.c.h.b16 %v203
        %v300 = vunpack.c.l.b16 %v204
        %v301 = vunpack.c.h.b16 %v204
        %v302 = vunpack.c.l.b16 %v205
        %v303 = vunpack.c.h.b16 %v205
        %v304 = vunpack.c.l.b16 %v206
        %v305 = vunpack.c.h.b16 %v206
        %v306 = vunpack.c.l.b16 %v207
        %v307 = vunpack.c.h.b16 %v207
        %v308 = vunpack.c.l.b16 %v208
        %v309 = vunpack.c.h.b16 %v208
        %v310 = vunpack.c.l.b16 %v209
        %v311 = vunpack.c.h.b16 %v209
        %v312 = vunpack.c.l.b16 %v210
        %v313 = vunpack.c.h.b16 %v210
        %v314 = vunpack.c.l.b16 %v211
        %v315 = vunpack.c.h.b16 %v211
        %v316 = vunpack.c.l.b16 %v212
        %v317 = vunpack.c.h.b16 %v212
        %v318 = vunpack.c.l.b16 %v213
        %v319 = vunpack.c.h.b16 %v213
        %v320 = vunpack.c.l.b16 %v214
        %v321 = vunpack.c.h.b16 %v214
        %v322 = vunpack.c.l.b16 %v215
        %v323 = vunpack.c.h.b16 %v215
        %v324 = vunpack.c.l.b16 %v216
        %v325 = vunpack.c.h.b16 %v216
        %v326 = vpack.c.b16 %v298, %v294
        %v327 = vpack.c.b16 %v299, %v295
        %v328 = vpack.c.b16 %v300, %v296
        %v329 = vpack.c.b16 %v301, %v297
        %v330 = vpack.c.b16 %v306, %v302
        %v331 = vpack.c.b16 %v307, %v303
        %v332 = vpack.c.b16 %v308, %v304
        %v333 = vpack.c.b16 %v309, %v305
        %v334 = vpack.c.b16 %v314, %v310
        %v335 = vpack.c.b16 %v315, %v311
        %v336 = vpack.c.b16 %v316, %v312
        %v337 = vpack.c.b16 %v317, %v313
        %v338 = vpack.c.b16 %v322, %v318
        %v339 = vpack.c.b16 %v323, %v319
        %v340 = vpack.c.b16 %v324, %v320
        %v341 = vpack.c.b16 %v325, %v321
        %v408 = vunpack.c.l.b16 %v217
        %v409 = vunpack.c.l.b16 %v218
        %v410 = vunpack.c.l.b16 %v219
        %v411 = vunpack.c.l.b16 %v220
        %v412 = vunpack.c.l.b16 %v221
        %v413 = vunpack.c.l.b16 %v222
        %v414 = vunpack.c.l.b16 %v223
        %v415 = vunpack.c.l.b16 %v224
        %v416 = vunpack.c.l.b16 %v225
        %v417 = vunpack.c.l.b16 %v226
        %v418 = vunpack.c.l.b16 %v227
        %v419 = vunpack.c.l.b16 %v228
        %v420 = vunpack.c.l.b16 %v229
        %v421 = vunpack.c.l.b16 %v230
        %v422 = vunpack.c.l.b16 %v231
        %v423 = vunpack.c.l.b16 %v232
        %v424 = vunpack.c.l.b16 %v233
        %v425 = vunpack.c.l.b16 %v234
        %v426 = vunpack.c.l.b16 %v235
        %v427 = vunpack.c.l.b16 %v236
        %v428 = vunpack.c.l.b16 %v237
        %v429 = vunpack.c.l.b16 %v238
        %v430 = vunpack.c.l.b16 %v239
        %v431 = vunpack.c.l.b16 %v240
        %v432 = vunpack.c.l.b16 %v241
        %v433 = vunpack.c.l.b16 %v242
        %v434 = vunpack.c.l.b16 %v243
        %v435 = vunpack.c.l.b16 %v244
        %v436 = vunpack.c.l.b16 %v245
        %v437 = vunpack.c.l.b16 %v246
        %v438 = vunpack.c.l.b16 %v247
        %v439 = vunpack.c.l.b16 %v248
        %v440 = vunpack.c.l.b16 %v249
        %v441 = vunpack.c.l.b16 %v250
        %v442 = vunpack.c.l.b16 %v251
        %v443 = vunpack.c.l.b16 %v252
        %v444 = vunpack.c.l.b16 %v253
        %v445 = vunpack.c.l.b16 %v254
        %v446 = vunpack.c.l.b16 %v255
        %v447 = vunpack.c.l.b16 %v256
        %v448 = vunpack.c.l.b16 %v257
        %v449 = vunpack.c.l.b16 %v258
        %v450 = vunpack.c.l.b16 %v259
        %v451 = vunpack.c.l.b16 %v260
        %v452 = vunpack.c.l.b16 %v261
        %v453 = vunpack.c.l.b16 %v262
        %v454 = vunpack.c.l.b16 %v263
        %v455 = vunpack.c.l.b16 %v264
        %v456 = vunpack.c.l.b16 %v265
        %v457 = vunpack.c.l.b16 %v266
        %v458 = vunpack.c.l.b16 %v267
        %v459 = vunpack.c.l.b16 %v268
        %v460 = vunpack.c.l.b16 %v269
        %v461 = vunpack.c.l.b16 %v270
        %v462 = vpack.c.b16 %v409, %v408
        %v463 = vpack.c.b16 %v411, %v410
        %v464 = vpack.c.b16 %v413, %v412
        %v465 = vpack.c.b16 %v415, %v414
        %v466 = vpack.c.b16 %v417, %v416
        %v467 = vpack.c.b16 %v419, %v418
        %v468 = vpack.c.b16 %v421, %v420
        %v469 = vpack.c.b16 %v423, %v422
        %v470 = vpack.c.b16 %v425, %v424
        %v471 = vpack.c.b16 %v427, %v426
        %v472 = vpack.c.b16 %v429, %v428
        %v473 = vpack.c.b16 %v431, %v430
        %v474 = vpack.c.b16 %v433, %v432
        %v475 = vpack.c.b16 %v435, %v434
        %v476 = vpack.c.b16 %v437, %v436
        %v477 = vpack.c.b16 %v439, %v438
        %v478 = vpack.c.b16 %v441, %v440
        %v479 = vpack.c.b16 %v443, %v442
        %v480 = vpack.c.b16 %v445, %v444
        %v481 = vpack.c.b16 %v447, %v446
        %v482 = vpack.c.b16 %v449, %v448
        %v483 = vpack.c.b16 %v451, %v450
        %v484 = vpack.c.b16 %v453, %v452
        %v485 = vpack.c.b16 %v455, %v454
        %v486 = vpack.c.b16 %v457, %v456
        %v487 = vpack.c.b16 %v459, %v458
        %v488 = vpack.c.b16 %v461, %v460
        %vm516 = vcmask 392192
        %v518 = vsel %vm516, %v329, 0
        %v521 = vsel %vm516, %v333, 0
        %v524 = vsel %vm516, %v337, 0
        %v527 = vsel %vm516, %v341, 0
        %529 = vmatprep.subr.bf16.mxu0 0
        %530 = vmatpush1.bf16.msra.mxu0 %v462
        %531 = vmatprep.subr.bf16.mxu0 0
        %532 = vmatpush1.bf16.msra.mxu0 %v463
        %533 = vmatprep.subr.bf16.mxu0 0
        %534 = vmatpush1.bf16.msra.mxu0 %v464
        %535 = vmatprep.subr.bf16.mxu0 0
        %536 = vmatpush1.bf16.msra.mxu0 %v465
        %537 = vmatprep.subr.bf16.mxu0 0
        %538 = vmatpush1.bf16.msra.mxu0 %v466
        %539 = vmatprep.subr.bf16.mxu0 0
        %540 = vmatpush1.bf16.msra.mxu0 %v467
        %541 = vmatprep.subr.bf16.mxu0 0
        %542 = vmatpush1.bf16.msra.mxu0 %v468
        %543 = vmatprep.subr.bf16.mxu0 0
        %544 = vmatpush1.bf16.msra.mxu0 %v469
        %545 = vmatprep.subr.bf16.mxu0 0
        %546 = vmatpush1.bf16.msra.mxu0 %v470
        %547 = vmatprep.subr.bf16.mxu0 0
        %548 = vmatpush1.bf16.msra.mxu0 %v471
        %549 = vmatprep.subr.bf16.mxu0 0
        %550 = vmatpush1.bf16.msra.mxu0 %v472
        %551 = vmatprep.subr.bf16.mxu0 0
        %552 = vmatpush1.bf16.msra.mxu0 %v473
        %553 = vmatprep.subr.bf16.mxu0 0
        %554 = vmatpush1.bf16.msra.mxu0 %v474
        %555 = vmatprep.subr.bf16.mxu0 0
        %556 = vmatpush1.bf16.msra.mxu0 %v475
        %557 = vmatprep.subr.bf16.mxu0 0
        %558 = vmatpush1.bf16.msra.mxu0 %v476
        %559 = vmatprep.subr.bf16.mxu0 0
        %560 = vmatpush1.bf16.msra.mxu0 %v477
        %561 = vmatprep.mubr.bf16.mxu0 %v327
        %562 = vmatmul.mubr.bf16.gmra.mrb[0].mxu0 %v326
        %v563 = vpop.f32.mrb[0].mxu0
        %v564 = vadd.f32 %v276, %v563
        %v565 = vpop.f32.mrb[0].mxu0
        %v566 = vpop.f32.mrb[0].mxu0
        %v567 = vadd.f32 %v276, %v566
        %v568 = vpop.f32.mrb[0].mxu0
        %569 = vmatprep.mubr.bf16.mxu0 %v331
        %570 = vmatmul.mubr.bf16.gmra.mrb[0].mxu0 %v330
        %v571 = vpop.f32.mrb[0].mxu0
        %v572 = vadd.f32 %v276, %v571
        %v573 = vpop.f32.mrb[0].mxu0
        %v574 = vpop.f32.mrb[0].mxu0
        %v575 = vadd.f32 %v276, %v574
        %v576 = vpop.f32.mrb[0].mxu0
        %577 = vmatprep.mubr.bf16.mxu0 %v335
        %578 = vmatmul.mubr.bf16.gmra.mrb[0].mxu0 %v334
        %v579 = vpop.f32.mrb[0].mxu0
        %v580 = vadd.f32 %v276, %v579
        %v581 = vpop.f32.mrb[0].mxu0
        %v582 = vpop.f32.mrb[0].mxu0
        %v583 = vadd.f32 %v276, %v582
        %v584 = vpop.f32.mrb[0].mxu0
        %585 = vmatprep.mubr.bf16.mxu0 %v339
        %586 = vmatmul.mubr.bf16.gmra.mrb[0].mxu0 %v338
        %v587 = vpop.f32.mrb[0].mxu0
        %v588 = vadd.f32 %v276, %v587
        %v589 = vpop.f32.mrb[0].mxu0
        %v590 = vpop.f32.mrb[0].mxu0
        %v591 = vadd.f32 %v276, %v590
        %v592 = vpop.f32.mrb[0].mxu0
        %593 = vdwg.mxu0
        %594 = vmatprep.subr.bf16.mxu0 0
        %595 = vmatpush1.bf16.msra.mxu0 %v478
        %596 = vmatprep.subr.bf16.mxu0 0
        %597 = vmatpush1.bf16.msra.mxu0 %v479
        %598 = vmatprep.subr.bf16.mxu0 0
        %599 = vmatpush1.bf16.msra.mxu0 %v480
        %600 = vmatprep.subr.bf16.mxu0 0
        %601 = vmatpush1.bf16.msra.mxu0 %v481
        %602 = vmatprep.subr.bf16.mxu0 0
        %603 = vmatpush1.bf16.msra.mxu0 %v482
        %604 = vmatprep.subr.bf16.mxu0 0
        %605 = vmatpush1.bf16.msra.mxu0 %v483
        %606 = vmatprep.subr.bf16.mxu0 0
        %607 = vmatpush1.bf16.msra.mxu0 %v484
        %608 = vmatprep.subr.bf16.mxu0 0
        %609 = vmatpush1.bf16.msra.mxu0 %v485
        %610 = vmatprep.subr.bf16.mxu0 0
        %611 = vmatpush1.bf16.msra.mxu0 %v486
        %612 = vmatprep.subr.bf16.mxu0 0
        %613 = vmatpush1.bf16.msra.mxu0 %v487
        %614 = vmatprep.subr.bf16.mxu0 0
        %615 = vmatpush1.bf16.msra.mxu0 %v488
        %616 = vmatprep.subr.bf16.mxu0 0
        %617 = vmatpush1.bf16.msra.mxu0 0
        %618 = vmatprep.subr.bf16.mxu0 0
        %619 = vmatpush1.bf16.msra.mxu0 0
        %620 = vmatprep.subr.bf16.mxu0 0
        %621 = vmatpush1.bf16.msra.mxu0 0
        %622 = vmatprep.subr.bf16.mxu0 0
        %623 = vmatpush1.bf16.msra.mxu0 0
        %624 = vmatprep.subr.bf16.mxu0 0
        %625 = vmatpush1.bf16.msra.mxu0 0
        %626 = vmatprep.mubr.bf16.mxu0 %v518
        %627 = vmatmul.mubr.bf16.gmra.mrb[0].mxu0 %v328
        %v628 = vpop.f32.mrb[0].mxu0
        %v629 = vadd.f32 %v564, %v628
        %v630 = vpop.f32.mrb[0].mxu0
        %v631 = vpop.f32.mrb[0].mxu0
        %v632 = vadd.f32 %v567, %v631
        %v633 = vpop.f32.mrb[0].mxu0
        %634 = vmatprep.mubr.bf16.mxu0 %v521
        %635 = vmatmul.mubr.bf16.gmra.mrb[0].mxu0 %v332
        %v636 = vpop.f32.mrb[0].mxu0
        %v637 = vadd.f32 %v572, %v636
        %v638 = vpop.f32.mrb[0].mxu0
        %v639 = vpop.f32.mrb[0].mxu0
        %v640 = vadd.f32 %v575, %v639
        %v641 = vpop.f32.mrb[0].mxu0
        %642 = vmatprep.mubr.bf16.mxu0 %v524
        %643 = vmatmul.mubr.bf16.gmra.mrb[0].mxu0 %v336
        %v644 = vpop.f32.mrb[0].mxu0
        %v645 = vadd.f32 %v580, %v644
        %v646 = vpop.f32.mrb[0].mxu0
        %v647 = vpop.f32.mrb[0].mxu0
        %v648 = vadd.f32 %v583, %v647
        %v649 = vpop.f32.mrb[0].mxu0
        %650 = vmatprep.mubr.bf16.mxu0 %v527
        %651 = vmatmul.mubr.bf16.gmra.mrb[0].mxu0 %v340
        %v652 = vpop.f32.mrb[0].mxu0
        %v653 = vadd.f32 %v588, %v652
        %v654 = vpop.f32.mrb[0].mxu0
        %v655 = vpop.f32.mrb[0].mxu0
        %v656 = vadd.f32 %v591, %v655
        %v657 = vpop.f32.mrb[0].mxu0
        %658 = vdwg.mxu0
        %v659 = vmax.f32 %v629, 0.0
        %v660 = vmax.f32 %v632, 0.0
        %v661 = vmax.f32 %v637, 0.0
        %v662 = vmax.f32 %v640, 0.0
        %v663 = vmax.f32 %v645, 0.0
        %v664 = vmax.f32 %v648, 0.0
        %v665 = vmax.f32 %v653, 0.0
        %v666 = vmax.f32 %v656, 0.0
        %v667 = vpack.c.bf16 %v660, %v659
        %v668 = vpack.c.bf16 %v662, %v661
        %v669 = vpack.c.bf16 %v664, %v663
        %v670 = vpack.c.bf16 %v666, %v665
        %v675 = vunpack.c.l.b16 %v667
        %v676 = vunpack.c.h.b16 %v667
        %v677 = vunpack.c.l.b16 %v668
        %v678 = vunpack.c.h.b16 %v668
        %v679 = vunpack.c.l.b16 %v669
        %v680 = vunpack.c.h.b16 %v669
        %v681 = vunpack.c.l.b16 %v670
        %v682 = vunpack.c.h.b16 %v670
        %v683 = vpack.c.b16 %v675, %v675
        %v684 = vpack.c.b16 %v676, %v676
        %v685 = vpack.c.b16 %v677, %v677
        %v686 = vpack.c.b16 %v678, %v678
        %v687 = vpack.c.b16 %v679, %v679
        %v688 = vpack.c.b16 %v680, %v680
        %v689 = vpack.c.b16 %v681, %v681
        %v690 = vpack.c.b16 %v682, %v682
        %699 = vst [vmem:[%s177] sm:$0xf] %v683
        %700 = vst [vmem:[%s177 + $0x4] sm:$0xf] %v684
        %701 = vst [vmem:[%s177 + $0x8] sm:$0xf] %v685
        %702 = vst [vmem:[%s177 + $0xc] sm:$0xf] %v686
        %703 = vst [vmem:[%s177 + $0x10] sm:$0xf] %v687
        %704 = vst [vmem:[%s177 + $0x14] sm:$0xf] %v688
        %705 = vst [vmem:[%s177 + $0x18] sm:$0xf] %v689
        %706 = vst [vmem:[%s177 + $0x1c] sm:$0xf] %v690
        %s707 = sand.u32 %s90, 1
        %s708 = sand.u32 %s90, 1
        %s709 = smul.addr %s708, 32
        %s710 = scalar_lea.vmem [#allocation2], %s709
        // Predicated region
        $region33: #{pilotnet_forward.9} parent=31 // pred_check
          %p711 = pneg %p100
        $region34: #{pilotnet_forward.9} parent=31 // pred_check_branch
          %713 = sbr.rel (%p711) target = $region36
        $region35: #{pilotnet_forward.9} parent=31 // pred_region
          %s714 = smul.u32 8, %s14
          %s715 = ssub.s32 15, %s714
          %p716 = scmp.lt.s32.totalorder %s715, 8
          %s717 = scalar_select %p716, %s715, 8
          %s718 = smul.u32 64, %s717
          %p719 = scmp.ne.s32.totalorder 0, %s718
          %s720 = smul.addr %s714, 4
          %s721 = scalar_lea.vmem %s3, %s720
          // Predicated region
          $region37: #{pilotnet_forward.9} parent=35 // pred_check
            %p722 = pneg %p719
          $region38: #{pilotnet_forward.9} parent=35 // pred_check_branch
            %724 = sbr.rel (%p722) target = $region40
          $region39: #{pilotnet_forward.9} parent=35 // pred_region
            // Predicated region
            $region41: #{pilotnet_forward.9} parent=39 // pred_check
              _
            $region42: #{pilotnet_forward.9} parent=39 // pred_check_branch
              %726 = sbr.rel target = $region44
            $region43: #{pilotnet_forward.9} parent=39 // pred_region
              // Predicated region
              $region63: #{pilotnet_forward.9} parent=43 // pred_check
                _
              $region64: #{pilotnet_forward.9} parent=43 // pred_check_branch
                %789 = sbr.rel (0) target = $region66
              $region65: #{pilotnet_forward.9} parent=43 // pred_region
                %s791 = sshrl.u32 %s717, 3
                // While loop
                $region67: #{pilotnet_forward.9} parent=65 // loop_pre_header
                  _
                $region68: #{pilotnet_forward.9} parent=65 // loop_header
                  %s793 = sphi 0, %s795
                  %p794 = scmp.ge.s32.totalorder %s793, %s791
                  %s798 = sphi 0, %s819
                  %s799 = sphi %s710, %s822
                  %s800 = sphi %s721, %s823
                $region69: #{pilotnet_forward.9} parent=65 // loop_header_branch
                  %797 = sbr.rel (%p794) target = $region73
                $region70: #{pilotnet_forward.9} parent=65 // loop_body
                  %v801 = vld [vmem:[%s799] sm:$0xf]
                  %802 = vst [vmem:[%s800] sm:$0xf] %v801
                  %v803 = vld [vmem:[%s799 + $0x4] sm:$0xf]
                  %804 = vst [vmem:[%s800 + $0x4] sm:$0xf] %v803
                  %v805 = vld [vmem:[%s799 + $0x8] sm:$0xf]
                  %806 = vst [vmem:[%s800 + $0x8] sm:$0xf] %v805
                  %v807 = vld [vmem:[%s799 + $0xc] sm:$0xf]
                  %808 = vst [vmem:[%s800 + $0xc] sm:$0xf] %v807
                  %v809 = vld [vmem:[%s799 + $0x10] sm:$0xf]
                  %810 = vst [vmem:[%s800 + $0x10] sm:$0xf] %v809
                  %v811 = vld [vmem:[%s799 + $0x14] sm:$0xf]
                  %812 = vst [vmem:[%s800 + $0x14] sm:$0xf] %v811
                  %v813 = vld [vmem:[%s799 + $0x18] sm:$0xf]
                  %814 = vst [vmem:[%s800 + $0x18] sm:$0xf] %v813
                  %v815 = vld [vmem:[%s799 + $0x1c] sm:$0xf]
                  %816 = vst [vmem:[%s800 + $0x1c] sm:$0xf] %v815
                  %s817 = sadd.s32 1, %s798
                  %p818 = scmp.ge.s32.totalorder %s817, %s791
                  %s819 = scalar_select %p818, 0, %s817
                  %s820 = smul.u32 %s819, 32
                  %s821 = smul.u32 %s819, 32
                  %s822 = scalar_lea.vmem %s710, %s820 [#allocation2]
                  %s823 = scalar_lea.vmem %s721, %s821
                $region71: #{pilotnet_forward.9} parent=65 // loop_footer
                  %s795 = sadd.s32 %s793, 1
                $region72: #{pilotnet_forward.9} parent=65 // loop_footer_branch
                  %792 = sbr.rel target = $region68
                $region73: #{pilotnet_forward.9} parent=65 // loop_exit
                  _
                %s824 = sshrl.u32 %s717, 3
                %s825 = sand.u32 %s717, 7
                %s826 = smul.u32 %s824, 8
                %s827 = smul.u32 4, %s826
                %s828 = scalar_lea.vmem %s710, %s827 [#allocation2]
                %s829 = smul.u32 4, %s826
                %s830 = scalar_lea.vmem %s721, %s829
                // While loop
                $region74: #{pilotnet_forward.9} parent=65 // loop_pre_header
                  _
                $region75: #{pilotnet_forward.9} parent=65 // loop_header
                  %s832 = sphi 0, %s834
                  %p833 = scmp.ge.s32.totalorder %s832, %s825
                  %s837 = sphi 0, %s844
                  %s838 = sphi %s828, %s847
                  %s839 = sphi %s830, %s848
                $region76: #{pilotnet_forward.9} parent=65 // loop_header_branch
                  %836 = sbr.rel (%p833) target = $region80
                $region77: #{pilotnet_forward.9} parent=65 // loop_body
                  %v840 = vld [vmem:[%s838] sm:$0xf]
                  %841 = vst [vmem:[%s839] sm:$0xf] %v840
                  %s842 = sadd.s32 1, %s837
                  %p843 = scmp.ge.s32.totalorder %s842, %s825
                  %s844 = scalar_select %p843, 0, %s842
                  %s845 = smul.u32 %s844, 4
                  %s846 = smul.u32 %s844, 4
                  %s847 = scalar_lea.vmem %s828, %s845 [#allocation2]
                  %s848 = scalar_lea.vmem %s830, %s846
                $region78: #{pilotnet_forward.9} parent=65 // loop_footer
                  %s834 = sadd.s32 %s832, 1
                $region79: #{pilotnet_forward.9} parent=65 // loop_footer_branch
                  %831 = sbr.rel target = $region75
                $region80: #{pilotnet_forward.9} parent=65 // loop_exit
                  _
              $region66: #{pilotnet_forward.9} parent=43 // pred_fallthru
                _
            $region44: #{pilotnet_forward.9} parent=39 // pred_fallthru
              _
            // Predicated region
            $region45: #{pilotnet_forward.9} parent=39 // pred_check
              _
            $region46: #{pilotnet_forward.9} parent=39 // pred_check_branch
              %728 = sbr.rel (0) target = $region48
            $region47: #{pilotnet_forward.9} parent=39 // pred_region
              %s730 = sshrl.u32 %s717, 3
              // While loop
              $region49: #{pilotnet_forward.9} parent=47 // loop_pre_header
                _
              $region50: #{pilotnet_forward.9} parent=47 // loop_header
                %s732 = sphi 0, %s734
                %p733 = scmp.ge.s32.totalorder %s732, %s730
                %s737 = sphi 0, %s758
                %s738 = sphi %s710, %s761
                %s739 = sphi %s721, %s762
              $region51: #{pilotnet_forward.9} parent=47 // loop_header_branch
                %736 = sbr.rel (%p733) target = $region55
              $region52: #{pilotnet_forward.9} parent=47 // loop_body
                %v740 = vld [vmem:[%s738] sm:$0xf]
                %741 = vst [vmem:[%s739] sm:$0xf] %v740
                %v742 = vld [vmem:[%s738 + $0x4] sm:$0xf]
                %743 = vst [vmem:[%s739 + $0x4] sm:$0xf] %v742
                %v744 = vld [vmem:[%s738 + $0x8] sm:$0xf]
                %745 = vst [vmem:[%s739 + $0x8] sm:$0xf] %v744
                %v746 = vld [vmem:[%s738 + $0xc] sm:$0xf]
                %747 = vst [vmem:[%s739 + $0xc] sm:$0xf] %v746
                %v748 = vld [vmem:[%s738 + $0x10] sm:$0xf]
                %749 = vst [vmem:[%s739 + $0x10] sm:$0xf] %v748
                %v750 = vld [vmem:[%s738 + $0x14] sm:$0xf]
                %751 = vst [vmem:[%s739 + $0x14] sm:$0xf] %v750
                %v752 = vld [vmem:[%s738 + $0x18] sm:$0xf]
                %753 = vst [vmem:[%s739 + $0x18] sm:$0xf] %v752
                %v754 = vld [vmem:[%s738 + $0x1c] sm:$0xf]
                %755 = vst [vmem:[%s739 + $0x1c] sm:$0xf] %v754
                %s756 = sadd.s32 1, %s737
                %p757 = scmp.ge.s32.totalorder %s756, %s730
                %s758 = scalar_select %p757, 0, %s756
                %s759 = smul.u32 %s758, 32
                %s760 = smul.u32 %s758, 32
                %s761 = scalar_lea.vmem %s710, %s759 [#allocation2]
                %s762 = scalar_lea.vmem %s721, %s760
              $region53: #{pilotnet_forward.9} parent=47 // loop_footer
                %s734 = sadd.s32 %s732, 1
              $region54: #{pilotnet_forward.9} parent=47 // loop_footer_branch
                %731 = sbr.rel target = $region50
              $region55: #{pilotnet_forward.9} parent=47 // loop_exit
                _
              %s763 = sshrl.u32 %s717, 3
              %s764 = sand.u32 %s717, 7
              %s765 = smul.u32 %s763, 8
              %s766 = smul.u32 4, %s765
              %s767 = scalar_lea.vmem %s710, %s766 [#allocation2]
              %s768 = smul.u32 4, %s765
              %s769 = scalar_lea.vmem %s721, %s768
              // While loop
              $region56: #{pilotnet_forward.9} parent=47 // loop_pre_header
                _
              $region57: #{pilotnet_forward.9} parent=47 // loop_header
                %s771 = sphi 0, %s773
                %p772 = scmp.ge.s32.totalorder %s771, %s764
                %s776 = sphi 0, %s783
                %s777 = sphi %s767, %s786
                %s778 = sphi %s769, %s787
              $region58: #{pilotnet_forward.9} parent=47 // loop_header_branch
                %775 = sbr.rel (%p772) target = $region62
              $region59: #{pilotnet_forward.9} parent=47 // loop_body
                %v779 = vld [vmem:[%s777] sm:$0xf]
                %780 = vst [vmem:[%s778] sm:$0xf] %v779
                %s781 = sadd.s32 1, %s776
                %p782 = scmp.ge.s32.totalorder %s781, %s764
                %s783 = scalar_select %p782, 0, %s781
                %s784 = smul.u32 %s783, 4
                %s785 = smul.u32 %s783, 4
                %s786 = scalar_lea.vmem %s767, %s784 [#allocation2]
                %s787 = scalar_lea.vmem %s769, %s785
              $region60: #{pilotnet_forward.9} parent=47 // loop_footer
                %s773 = sadd.s32 %s771, 1
              $region61: #{pilotnet_forward.9} parent=47 // loop_footer_branch
                %770 = sbr.rel target = $region57
              $region62: #{pilotnet_forward.9} parent=47 // loop_exit
                _
            $region48: #{pilotnet_forward.9} parent=39 // pred_fallthru
              _
          $region40: #{pilotnet_forward.9} parent=35 // pred_fallthru
            _
          %849 = vnop
        $region36: #{pilotnet_forward.9} parent=31 // pred_fallthru
          _
      $region32: #{pilotnet_forward.9} parent=5 // pred_fallthru
        _
      %p850 = scmp.le.s32.totalorder 2, %s9
      // Predicated region
      $region81: #{pilotnet_forward.9} parent=5 // pred_check
        %p851 = pneg %p850
      $region82: #{pilotnet_forward.9} parent=5 // pred_check_branch
        %853 = sbr.rel (%p851) target = $region84
      $region83: #{pilotnet_forward.9} parent=5 // pred_region
        %s854 = ssub.s32 %s9, 2
        // Predicated region
        $region85: #{pilotnet_forward.9} parent=83 // pred_check
          %p855 = pneg %p106
        $region86: #{pilotnet_forward.9} parent=83 // pred_check_branch
          %857 = sbr.rel (%p855) target = $region88
        $region87: #{pilotnet_forward.9} parent=83 // pred_region
          %s858 = sand.u32 %s91, 1
          %s859 = sand.u32 %s91, 1
          %s860 = smul.addr %s859, 32
          %s861 = scalar_lea.vmem [#allocation2], %s860
        $region88: #{pilotnet_forward.9} parent=83 // pred_fallthru
          _
      $region84: #{pilotnet_forward.9} parent=5 // pred_fallthru
        _
    $region6: #{pilotnet_forward.9} parent=1 // loop_footer
      %s13 = sadd.s32 1, %s9
    $region7: #{pilotnet_forward.9} parent=1 // loop_footer_branch
      %8 = sbr.rel target = $region3
    $region8: #{pilotnet_forward.9} parent=1 // loop_exit
      _

// kernel: pilotnet_forward.10
$region0: #{pilotnet_forward.10}
  #allocation0 [shape = 'u32[]', space=smem, size = 0x4, offset = 0x4, fixed_abs, tag = 'smem constant byte address 0x4 - core index']
  #allocation1 [shape = 'u32[144,128]{1,0:T(1,128)}', space=vmem, size = 0x12000, scoped, tag = 'internal scratch']
  %s0 = inlined_call_operand.vmem [shape: bf16[36,576], index: 0, kind: input, shape index: {}]
  %s1 = inlined_call_operand.vmem [shape: bf16[576,128], index: 1, kind: input, shape index: {}]
  %s2 = inlined_call_operand.vmem [shape: f32[1,128], index: 2, kind: input, shape index: {}]
  %s3 = inlined_call_operand.vmem [shape: bf16[36,128], index: 3, kind: output, shape index: {}]
  %s4 = sld [smem:[#allocation0]]
  $region89: #{pilotnet_forward.10} parent=0
    _
  %s6 = ssub.s32 1, %s4
  %s7 = scalar_select 0, %s6, %s4
  $region1: #{pilotnet_forward.10} parent=0
    #allocation2 [shape = 'u8[12288]{0}', space=vmem, size = 0x3000, scoped, tag = 'output window, operand 0']
    loop: start=0, step=1, limit=4
    $region2: #{pilotnet_forward.10} parent=1 // loop_pre_header
      _
    $region3: #{pilotnet_forward.10} parent=1 // loop_header
      %s9 = sphi 0, %s13
      %p10 = scmp.ge.s32.totalorder %s9, 4
      %s19 = sphi 0, %s21
      %s22 = sphi 0, %s19
      %s23 = sphi 0, %s22
      %s39 = sphi 0, %s23
      %s43 = sphi 0, %s43
      %s45 = sphi 0, %s43
      %s46 = sphi 0, %s45
      %s60 = sphi 0, %s46
      %s64 = sphi 0, %s64
      %s66 = sphi 0, %s64
      %s67 = sphi 0, %s66
      %s81 = sphi 0, %s67
      %s87 = sphi 0, %s89
      %s90 = sphi 0, %s87
      %s91 = sphi 0, %s90
      %s107 = sphi 0, %s91
    $region4: #{pilotnet_forward.10} parent=1 // loop_header_branch
      %12 = sbr.rel (%p10) target = $region8
    $region5: #{pilotnet_forward.10} parent=1 // loop_body
      %s14 = ssub.s32 %s9, 1
      %s15 = ssub.s32 %s9, 2
      %s16 = sadd.s32 %s9, 1
      %s17 = ssub.s32 %s9, %s16
      %p18 = scmp.eq.s32.totalorder %s17, 0
      %s20 = sadd.s32 %s19, 1
      %s21 = scalar_select %p18, %s19, %s20
      %p24 = pneg %p18
      %p25 = scmp.eq.s32.totalorder %s9, 1
      %p26 = por %p24, %p25
      %p27 = scmp.ne.s32.totalorder %s19, %s22
      %p28 = scmp.eq.s32.totalorder %s9, 0
      %p29 = por %p27, %p28
      %p30 = scmp.ne.s32.totalorder %s19, %s22
      %p31 = scmp.eq.s32.totalorder %s14, 1
      %p32 = por %p30, %p31
      %p33 = scmp.ne.s32.totalorder %s22, %s23
      %p34 = scmp.eq.s32.totalorder %s14, 0
      %p35 = por %p33, %p34
      %p36 = scmp.ne.s32.totalorder %s22, %s23
      %p37 = scmp.eq.s32.totalorder %s15, 1
      %p38 = por %p36, %p37
      %p40 = scmp.ne.s32.totalorder %s23, %s39
      %p41 = scmp.eq.s32.totalorder %s15, 0
      %p42 = por %p40, %p41
      %s44 = sadd.s32 %s43, 1
      %p47 = scmp.eq.s32.totalorder %s9, 1
      %p48 = scmp.ne.s32.totalorder %s43, %s45
      %p49 = scmp.eq.s32.totalorder %s9, 0
      %p50 = por %p48, %p49
      %p51 = scmp.ne.s32.totalorder %s43, %s45
      %p52 = scmp.eq.s32.totalorder %s14, 1
      %p53 = por %p51, %p52
      %p54 = scmp.ne.s32.totalorder %s45, %s46
      %p55 = scmp.eq.s32.totalorder %s14, 0
      %p56 = por %p54, %p55
      %p57 = scmp.ne.s32.totalorder %s45, %s46
      %p58 = scmp.eq.s32.totalorder %s15, 1
      %p59 = por %p57, %p58
      %p61 = scmp.ne.s32.totalorder %s46, %s60
      %p62 = scmp.eq.s32.totalorder %s15, 0
      %p63 = por %p61, %p62
      %s65 = sadd.s32 %s64, 1
      %p68 = scmp.eq.s32.totalorder %s9, 1
      %p69 = scmp.ne.s32.totalorder %s64, %s66
      %p70 = scmp.eq.s32.totalorder %s9, 0
      %p71 = por %p69, %p70
      %p72 = scmp.ne.s32.totalorder %s64, %s66
      %p73 = scmp.eq.s32.totalorder %s14, 1
      %p74 = por %p72, %p73
      %p75 = scmp.ne.s32.totalorder %s66, %s67
      %p76 = scmp.eq.s32.totalorder %s14, 0
      %p77 = por %p75, %p76
      %p78 = scmp.ne.s32.totalorder %s66, %s67
      %p79 = scmp.eq.s32.totalorder %s15, 1
      %p80 = por %p78, %p79
      %p82 = scmp.ne.s32.totalorder %s67, %s81
      %p83 = scmp.eq.s32.totalorder %s15, 0
      %p84 = por %p82, %p83
      %s85 = ssub.s32 %s9, %s16
      %p86 = scmp.eq.s32.totalorder %s85, 0
      %s88 = sadd.s32 %s87, 1
      %s89 = scalar_select %p86, %s87, %s88
      %p92 = pneg %p86
      %p93 = scmp.eq.s32.totalorder %s9, 1
      %p94 = por %p92, %p93
      %p95 = scmp.ne.s32.totalorder %s87, %s90
      %p96 = scmp.eq.s32.totalorder %s9, 0
      %p97 = por %p95, %p96
      %p98 = scmp.ne.s32.totalorder %s87, %s90
      %p99 = scmp.eq.s32.totalorder %s14, 1
      %p100 = por %p98, %p99
      %p101 = scmp.ne.s32.totalorder %s90, %s91
      %p102 = scmp.eq.s32.totalorder %s14, 0
      %p103 = por %p101, %p102
      %p104 = scmp.ne.s32.totalorder %s90, %s91
      %p105 = scmp.eq.s32.totalorder %s15, 1
      %p106 = por %p104, %p105
      %p108 = scmp.ne.s32.totalorder %s91, %s107
      %p109 = scmp.eq.s32.totalorder %s15, 0
      %p110 = por %p108, %p109
      %p111 = scmp.le.s32.totalorder 1, %s9
      %p112 = scmp.lt.s32.totalorder %s9, 3
      %p113 = pnand %p111, %p112
      %p114 = pneg %p113
      // Predicated region
      $region9: #{pilotnet_forward.10} parent=5 // pred_check
        _
      $region10: #{pilotnet_forward.10} parent=5 // pred_check_branch
        %116 = sbr.rel (%p113) target = $region12
      $region11: #{pilotnet_forward.10} parent=5 // pred_region
        %s117 = ssub.s32 %s9, 1
        // Predicated region
        $region13: #{pilotnet_forward.10} parent=11 // pred_check
          %p118 = pneg %p56
        $region14: #{pilotnet_forward.10} parent=11 // pred_check_branch
          %120 = sbr.rel (%p118) target = $region16
        $region15: #{pilotnet_forward.10} parent=11 // pred_region
          _
        $region16: #{pilotnet_forward.10} parent=11 // pred_fallthru
          _
        // Predicated region
        $region17: #{pilotnet_forward.10} parent=11 // pred_check
          %p121 = pneg %p77
        $region18: #{pilotnet_forward.10} parent=11 // pred_check_branch
          %123 = sbr.rel (%p121) target = $region20
        $region19: #{pilotnet_forward.10} parent=11 // pred_region
          _
        $region20: #{pilotnet_forward.10} parent=11 // pred_fallthru
          _
      $region12: #{pilotnet_forward.10} parent=5 // pred_fallthru
        _
      %p124 = scmp.lt.s32.totalorder %s9, 2
      // Predicated region
      $region21: #{pilotnet_forward.10} parent=5 // pred_check
        %p125 = pneg %p124
      $region22: #{pilotnet_forward.10} parent=5 // pred_check_branch
        %127 = sbr.rel (%p125) target = $region24
      $region23: #{pilotnet_forward.10} parent=5 // pred_region
        // Predicated region
        $region25: #{pilotnet_forward.10} parent=23 // pred_check
          %p128 = pneg %p29
        $region26: #{pilotnet_forward.10} parent=23 // pred_check_branch
          %130 = sbr.rel (%p128) target = $region28
        $region27: #{pilotnet_forward.10} parent=23 // pred_region
          %s131 = smul.u32 3, %s9
          %s132 = ssub.s32 5, %s131
          %p133 = scmp.lt.s32.totalorder %s132, 3
          %s134 = scalar_select %p133, %s132, 3
          %s135 = smul.u32 64, %s134
          %s136 = smul.u32 %s135, 5
          %p137 = scmp.lt.s32.totalorder %s131, 4
          %s138 = scalar_select %p137, %s131, 4
          %s139 = smul.addr %s138, 5
          %s140 = smul.addr %s139, 4
          %s141 = scalar_lea.vmem %s0, %s140
          %s142 = smul.u32 3, %s9
          %s143 = ssub.s32 5, %s142
          %p144 = scmp.lt.s32.totalorder %s143, 3
          %s145 = scalar_select %p144, %s143, 3
          %s146 = smul.u32 64, %s145
          %s147 = smul.u32 %s146, 5
        $region28: #{pilotnet_forward.10} parent=23 // pred_fallthru
          _
      $region24: #{pilotnet_forward.10} parent=5 // pred_fallthru
        _
      %p148 = scmp.le.s32.totalorder 1, %s9
      %p149 = scmp.lt.s32.totalorder %s9, 3
      %p150 = pnand %p148, %p149
      %p151 = pneg %p150
      // Predicated region
      $region29: #{pilotnet_forward.10} parent=5 // pred_check
        _
      $region30: #{pilotnet_forward.10} parent=5 // pred_check_branch
        %153 = sbr.rel (%p150) target = $region32
      $region31: #{pilotnet_forward.10} parent=5 // pred_region
        %s154 = ssub.s32 %s9, 1
        %s155 = smul.u32 3, %s14
        %s156 = ssub.s32 5, %s155
        %p157 = scmp.lt.s32.totalorder %s156, 3
        %s158 = scalar_select %p157, %s156, 3
        %s159 = smul.u32 64, %s158
        %s160 = smul.u32 %s159, 5
        %p161 = scmp.lt.s32.totalorder %s155, 4
        %s162 = scalar_select %p161, %s155, 4
        %s163 = smul.addr %s162, 5
        %s164 = smul.addr %s163, 4
        %s165 = scalar_lea.vmem %s0, %s164
        %p166 = pneg %p35
        %p167 = pneg %p32
        %p168 = pneg %p56
        %p169 = pneg %p53
        %p170 = pneg %p77
        %p171 = pneg %p74
        %p172 = pneg %p103
        %p173 = pneg %p100
        %s174 = sand.u32 %s90, 1
        %s175 = sand.u32 %s90, 1
        %s176 = smul.addr %s175, 12
        %s177 = scalar_lea.vmem [#allocation2], %s176
        %s178 = smul.u32 3, %s14
        %s179 = ssub.s32 5, %s178
        %p180 = scmp.lt.s32.totalorder %s179, 3
        %s181 = scalar_select %p180, %s179, 3
        %s182 = smul.u32 64, %s181
        %s183 = smul.u32 %s182, 5
        %p184 = scmp.lt.s32.totalorder %s178, 4
        %s185 = scalar_select %p184, %s178, 4
        %s186 = smul.addr %s185, 5
        %s187 = smul.addr %s186, 4
        %s188 = scalar_lea.vmem %s0, %s187
        %s189 = smul.u32 3, %s14
        %s190 = ssub.s32 5, %s189
        %p191 = scmp.lt.s32.totalorder %s190, 3
        %s192 = scalar_select %p191, %s190, 3
        %s193 = smul.u32 64, %s192
        %s194 = smul.u32 %s193, 5
        %s195 = smul.u32 3, %s14
        %s196 = ssub.s32 5, %s195
        %p197 = scmp.lt.s32.totalorder %s196, 3
        %s198 = scalar_select %p197, %s196, 3
        %s199 = smul.u32 64, %s198
        %v201 = vld [vmem:[%s188] sm:$0xff]
        %v202 = vld [vmem:[%s188 + $0x8] sm:$0xff]
        %v203 = vld [vmem:[%s188 + $0x10] sm:$0xf]
        %v204 = vld [vmem:[%s188 + $0x14] sm:$0xff]
        %v205 = vld [vmem:[%s188 + $0x1c] sm:$0xff]
        %v206 = vld [vmem:[%s188 + $0x24] sm:$0xf]
        %v207 = vld [vmem:[%s188 + $0x28] sm:$0xff]
        %v208 = vld [vmem:[%s188 + $0x30] sm:$0xff]
        %v209 = vld [vmem:[%s188 + $0x38] sm:$0xf]
        %v210 = vld [vmem:[%s1] sm:$0xf]
        %v211 = vld [vmem:[%s1 + $0x4] sm:$0xf]
        %v212 = vld [vmem:[%s1 + $0x8] sm:$0xf]
        %v213 = vld [vmem:[%s1 + $0xc] sm:$0xf]
        %v214 = vld [vmem:[%s1 + $0x10] sm:$0xf]
        %v215 = vld [vmem:[%s1 + $0x14] sm:$0xf]
        %v216 = vld [vmem:[%s1 + $0x18] sm:$0xf]
        %v217 = vld [vmem:[%s1 + $0x1c] sm:$0xf]
        %v218 = vld [vmem:[%s1 + $0x20] sm:$0xf]
        %v219 = vld [vmem:[%s1 + $0x24] sm:$0xf]
        %v220 = vld [vmem:[%s1 + $0x28] sm:$0xf]
        %v221 = vld [vmem:[%s1 + $0x2c] sm:$0xf]
        %v222 = vld [vmem:[%s1 + $0x30] sm:$0xf]
        %v223 = vld [vmem:[%s1 + $0x34] sm:$0xf]
        %v224 = vld [vmem:[%s1 + $0x38] sm:$0xf]
        %v225 = vld [vmem:[%s1 + $0x3c] sm:$0xf]
        %v226 = vld [vmem:[%s1 + $0x40] sm:$0xf]
        %v227 = vld [vmem:[%s1 + $0x44] sm:$0xf]
        %v228 = vld [vmem:[%s1 + $0x48] sm:$0xf]
        %v229 = vld [vmem:[%s1 + $0x4c] sm:$0xf]
        %v230 = vld [vmem:[%s1 + $0x50] sm:$0xf]
        %v231 = vld [vmem:[%s1 + $0x54] sm:$0xf]
        %v232 = vld [vmem:[%s1 + $0x58] sm:$0xf]
        %v233 = vld [vmem:[%s1 + $0x5c] sm:$0xf]
        %v234 = vld [vmem:[%s1 + $0x60] sm:$0xf]
        %v235 = vld [vmem:[%s1 + $0x64] sm:$0xf]
        %v236 = vld [vmem:[%s1 + $0x68] sm:$0xf]
        %v237 = vld [vmem:[%s1 + $0x6c] sm:$0xf]
        %v238 = vld [vmem:[%s1 + $0x70] sm:$0xf]
        %v239 = vld [vmem:[%s1 + $0x74] sm:$0xf]
        %v240 = vld [vmem:[%s1 + $0x78] sm:$0xf]
        %v241 = vld [vmem:[%s1 + $0x7c] sm:$0xf]
        %v242 = vld [vmem:[%s1 + $0x80] sm:$0xf]
        %v243 = vld [vmem:[%s1 + $0x84] sm:$0xf]
        %v244 = vld [vmem:[%s1 + $0x88] sm:$0xf]
        %v245 = vld [vmem:[%s1 + $0x8c] sm:$0xf]
        %v246 = vld [vmem:[%s1 + $0x90] sm:$0xf]
        %v247 = vld [vmem:[%s1 + $0x94] sm:$0xf]
        %v248 = vld [vmem:[%s1 + $0x98] sm:$0xf]
        %v249 = vld [vmem:[%s1 + $0x9c] sm:$0xf]
        %v250 = vld [vmem:[%s1 + $0xa0] sm:$0xf]
        %v251 = vld [vmem:[%s1 + $0xa4] sm:$0xf]
        %v252 = vld [vmem:[%s1 + $0xa8] sm:$0xf]
        %v253 = vld [vmem:[%s1 + $0xac] sm:$0xf]
        %v254 = vld [vmem:[%s1 + $0xb0] sm:$0xf]
        %v255 = vld [vmem:[%s1 + $0xb4] sm:$0xf]
        %v256 = vld [vmem:[%s1 + $0xb8] sm:$0xf]
        %v257 = vld [vmem:[%s1 + $0xbc] sm:$0xf]
        %v258 = vld [vmem:[%s1 + $0xc0] sm:$0xf]
        %v259 = vld [vmem:[%s1 + $0xc4] sm:$0xf]
        %v260 = vld [vmem:[%s1 + $0xc8] sm:$0xf]
        %v261 = vld [vmem:[%s1 + $0xcc] sm:$0xf]
        %v262 = vld [vmem:[%s1 + $0xd0] sm:$0xf]
        %v263 = vld [vmem:[%s1 + $0xd4] sm:$0xf]
        %v264 = vld [vmem:[%s1 + $0xd8] sm:$0xf]
        %v265 = vld [vmem:[%s1 + $0xdc] sm:$0xf]
        %v266 = vld [vmem:[%s1 + $0xe0] sm:$0xf]
        %v267 = vld [vmem:[%s1 + $0xe4] sm:$0xf]
        %v268 = vld [vmem:[%s1 + $0xe8] sm:$0xf]
        %v269 = vld [vmem:[%s1 + $0xec] sm:$0xf]
        %v270 = vld [vmem:[%s1 + $0xf0] sm:$0xf]
        %v271 = vld [vmem:[%s1 + $0xf4] sm:$0xf]
        %v272 = vld [vmem:[%s1 + $0xf8] sm:$0xf]
        %v273 = vld [vmem:[%s1 + $0xfc] sm:$0xf]
        %v274 = vld [vmem:[%s1 + $0x100] sm:$0xf]
        %v275 = vld [vmem:[%s1 + $0x104] sm:$0xf]
        %v276 = vld [vmem:[%s1 + $0x108] sm:$0xf]
        %v277 = vld [vmem:[%s1 + $0x10c] sm:$0xf]
        %v278 = vld [vmem:[%s1 + $0x110] sm:$0xf]
        %v279 = vld [vmem:[%s1 + $0x114] sm:$0xf]
        %v280 = vld [vmem:[%s1 + $0x118] sm:$0xf]
        %v281 = vld [vmem:[%s1 + $0x11c] sm:$0xf]
        %v282 = vld [vmem:[%s2] sm:$0x1]
        %v284 = vlaneseq
        %v285 = vshrl.u32 %v284, 7
        %v286 = vsub.s32 0, %v285
        %v287 = vrot.slane %v282, %v286
        %v298 = vunpack.c.l.b16 %v201
        %v299 = vunpack.c.h.b16 %v201
        %v300 = vunpack.c.l.b16 %v202
        %v301 = vunpack.c.h.b16 %v202
        %v302 = vunpack.c.l.b16 %v203
        %v303 = vunpack.c.l.b16 %v204
        %v304 = vunpack.c.h.b16 %v204
        %v305 = vunpack.c.l.b16 %v205
        %v306 = vunpack.c.h.b16 %v205
        %v307 = vunpack.c.l.b16 %v206
        %v308 = vunpack.c.l.b16 %v207
        %v309 = vunpack.c.h.b16 %v207
        %v310 = vunpack.c.l.b16 %v208
        %v311 = vunpack.c.h.b16 %v208
        %v312 = vunpack.c.l.b16 %v209
        %v313 = vpack.c.b16 %v303, %v298
        %v314 = vpack.c.b16 %v304, %v299
        %v315 = vpack.c.b16 %v305, %v300
        %v316 = vpack.c.b16 %v306, %v301
        %v317 = vpack.c.b16 %v307, %v302
        %v318 = vpack.c.b16 %v308, %v308
        %v319 = vpack.c.b16 %v309, %v309
        %v320 = vpack.c.b16 %v310, %v310
        %v321 = vpack.c.b16 %v311, %v311
        %v322 = vpack.c.b16 %v312, %v312
        %v403 = vunpack.c.l.b16 %v210
        %v404 = vunpack.c.l.b16 %v211
        %v405 = vunpack.c.l.b16 %v212
        %v406 = vunpack.c.l.b16 %v213
        %v407 = vunpack.c.l.b16 %v214
        %v408 = vunpack.c.l.b16 %v215
        %v409 = vunpack.c.l.b16 %v216
        %v410 = vunpack.c.l.b16 %v217
        %v411 = vunpack.c.l.b16 %v218
        %v412 = vunpack.c.l.b16 %v219
        %v413 = vunpack.c.l.b16 %v220
        %v414 = vunpack.c.l.b16 %v221
        %v415 = vunpack.c.l.b16 %v222
        %v416 = vunpack.c.l.b16 %v223
        %v417 = vunpack.c.l.b16 %v224
        %v418 = vunpack.c.l.b16 %v225
        %v419 = vunpack.c.l.b16 %v226
        %v420 = vunpack.c.l.b16 %v227
        %v421 = vunpack.c.l.b16 %v228
        %v422 = vunpack.c.l.b16 %v229
        %v423 = vunpack.c.l.b16 %v230
        %v424 = vunpack.c.l.b16 %v231
        %v425 = vunpack.c.l.b16 %v232
        %v426 = vunpack.c.l.b16 %v233
        %v427 = vunpack.c.l.b16 %v234
        %v428 = vunpack.c.l.b16 %v235
        %v429 = vunpack.c.l.b16 %v236
        %v430 = vunpack.c.l.b16 %v237
        %v431 = vunpack.c.l.b16 %v238
        %v432 = vunpack.c.l.b16 %v239
        %v433 = vunpack.c.l.b16 %v240
        %v434 = vunpack.c.l.b16 %v241
        %v435 = vunpack.c.l.b16 %v242
        %v436 = vunpack.c.l.b16 %v243
        %v437 = vunpack.c.l.b16 %v244
        %v438 = vunpack.c.l.b16 %v245
        %v439 = vunpack.c.l.b16 %v246
        %v440 = vunpack.c.l.b16 %v247
        %v441 = vunpack.c.l.b16 %v248
        %v442 = vunpack.c.l.b16 %v249
        %v443 = vunpack.c.l.b16 %v250
        %v444 = vunpack.c.l.b16 %v251
        %v445 = vunpack.c.l.b16 %v252
        %v446 = vunpack.c.l.b16 %v253
        %v447 = vunpack.c.l.b16 %v254
        %v448 = vunpack.c.l.b16 %v255
        %v449 = vunpack.c.l.b16 %v256
        %v450 = vunpack.c.l.b16 %v257
        %v451 = vunpack.c.l.b16 %v258
        %v452 = vunpack.c.l.b16 %v259
        %v453 = vunpack.c.l.b16 %v260
        %v454 = vunpack.c.l.b16 %v261
        %v455 = vunpack.c.l.b16 %v262
        %v456 = vunpack.c.l.b16 %v263
        %v457 = vunpack.c.l.b16 %v264
        %v458 = vunpack.c.l.b16 %v265
        %v459 = vunpack.c.l.b16 %v266
        %v460 = vunpack.c.l.b16 %v267
        %v461 = vunpack.c.l.b16 %v268
        %v462 = vunpack.c.l.b16 %v269
        %v463 = vunpack.c.l.b16 %v270
        %v464 = vunpack.c.l.b16 %v271
        %v465 = vunpack.c.l.b16 %v272
        %v466 = vunpack.c.l.b16 %v273
        %v467 = vunpack.c.l.b16 %v274
        %v468 = vunpack.c.l.b16 %v275
        %v469 = vunpack.c.l.b16 %v276
        %v470 = vunpack.c.l.b16 %v277
        %v471 = vunpack.c.l.b16 %v278
        %v472 = vunpack.c.l.b16 %v279
        %v473 = vunpack.c.l.b16 %v280
        %v474 = vunpack.c.l.b16 %v281
        %v475 = vpack.c.b16 %v404, %v403
        %v476 = vpack.c.b16 %v406, %v405
        %v477 = vpack.c.b16 %v408, %v407
        %v478 = vpack.c.b16 %v410, %v409
        %v479 = vpack.c.b16 %v412, %v411
        %v480 = vpack.c.b16 %v414, %v413
        %v481 = vpack.c.b16 %v416, %v415
        %v482 = vpack.c.b16 %v418, %v417
        %v483 = vpack.c.b16 %v420, %v419
        %v484 = vpack.c.b16 %v422, %v421
        %v485 = vpack.c.b16 %v424, %v423
        %v486 = vpack.c.b16 %v426, %v425
        %v487 = vpack.c.b16 %v428, %v427
        %v488 = vpack.c.b16 %v430, %v429
        %v489 = vpack.c.b16 %v432, %v431
        %v490 = vpack.c.b16 %v434, %v433
        %v491 = vpack.c.b16 %v436, %v435
        %v492 = vpack.c.b16 %v438, %v437
        %v493 = vpack.c.b16 %v440, %v439
        %v494 = vpack.c.b16 %v442, %v441
        %v495 = vpack.c.b16 %v444, %v443
        %v496 = vpack.c.b16 %v446, %v445
        %v497 = vpack.c.b16 %v448, %v447
        %v498 = vpack.c.b16 %v450, %v449
        %v499 = vpack.c.b16 %v452, %v451
        %v500 = vpack.c.b16 %v454, %v453
        %v501 = vpack.c.b16 %v456, %v455
        %v502 = vpack.c.b16 %v458, %v457
        %v503 = vpack.c.b16 %v460, %v459
        %v504 = vpack.c.b16 %v462, %v461
        %v505 = vpack.c.b16 %v464, %v463
        %v506 = vpack.c.b16 %v466, %v465
        %v507 = vpack.c.b16 %v468, %v467
        %v508 = vpack.c.b16 %v470, %v469
        %v509 = vpack.c.b16 %v472, %v471
        %v510 = vpack.c.b16 %v474, %v473
        %vm547 = vcmask 523264
        %v549 = vsel %vm547, %v317, 0
        %v552 = vsel %vm547, %v322, 0
        %554 = vmatprep.subr.bf16.mxu0 0
        %555 = vmatpush1.bf16.msra.mxu0 %v475
        %556 = vmatprep.subr.bf16.mxu0 0
        %557 = vmatpush1.bf16.msra.mxu0 %v476
        %558 = vmatprep.subr.bf16.mxu0 0
        %559 = vmatpush1.bf16.msra.mxu0 %v477
        %560 = vmatprep.subr.bf16.mxu0 0
        %561 = vmatpush1.bf16.msra.mxu0 %v478
        %562 = vmatprep.subr.bf16.mxu0 0
        %563 = vmatpush1.bf16.msra.mxu0 %v479
        %564 = vmatprep.subr.bf16.mxu0 0
        %565 = vmatpush1.bf16.msra.mxu0 %v480
        %566 = vmatprep.subr.bf16.mxu0 0
        %567 = vmatpush1.bf16.msra.mxu0 %v481
        %568 = vmatprep.subr.bf16.mxu0 0
        %569 = vmatpush1.bf16.msra.mxu0 %v482
        %570 = vmatprep.subr.bf16.mxu0 0
        %571 = vmatpush1.bf16.msra.mxu0 %v483
        %572 = vmatprep.subr.bf16.mxu0 0
        %573 = vmatpush1.bf16.msra.mxu0 %v484
        %574 = vmatprep.subr.bf16.mxu0 0
        %575 = vmatpush1.bf16.msra.mxu0 %v485
        %576 = vmatprep.subr.bf16.mxu0 0
        %577 = vmatpush1.bf16.msra.mxu0 %v486
        %578 = vmatprep.subr.bf16.mxu0 0
        %579 = vmatpush1.bf16.msra.mxu0 %v487
        %580 = vmatprep.subr.bf16.mxu0 0
        %581 = vmatpush1.bf16.msra.mxu0 %v488
        %582 = vmatprep.subr.bf16.mxu0 0
        %583 = vmatpush1.bf16.msra.mxu0 %v489
        %584 = vmatprep.subr.bf16.mxu0 0
        %585 = vmatpush1.bf16.msra.mxu0 %v490
        %586 = vmatprep.mubr.bf16.mxu0 %v314
        %587 = vmatmul.mubr.bf16.gmra.mrb[0].mxu0 %v313
        %v588 = vpop.f32.mrb[0].mxu0
        %v589 = vadd.f32 %v287, %v588
        %v590 = vpop.f32.mrb[0].mxu0
        %v591 = vpop.f32.mrb[0].mxu0
        %v592 = vadd.f32 %v287, %v591
        %v593 = vpop.f32.mrb[0].mxu0
        %594 = vmatprep.mubr.bf16.mxu0 %v319
        %595 = vmatmul.mubr.bf16.gmra.mrb[0].mxu0 %v318
        %v596 = vpop.f32.mrb[0].mxu0
        %v597 = vadd.f32 %v287, %v596
        %v598 = vpop.f32.mrb[0].mxu0
        %v599 = vpop.f32.mrb[0].mxu0
        %v600 = vpop.f32.mrb[0].mxu0
        %601 = vdwg.mxu0
        %602 = vmatprep.subr.bf16.mxu0 0
        %603 = vmatpush1.bf16.msra.mxu0 %v491
        %604 = vmatprep.subr.bf16.mxu0 0
        %605 = vmatpush1.bf16.msra.mxu0 %v492
        %606 = vmatprep.subr.bf16.mxu0 0
        %607 = vmatpush1.bf16.msra.mxu0 %v493
        %608 = vmatprep.subr.bf16.mxu0 0
        %609 = vmatpush1.bf16.msra.mxu0 %v494
        %610 = vmatprep.subr.bf16.mxu0 0
        %611 = vmatpush1.bf16.msra.mxu0 %v495
        %612 = vmatprep.subr.bf16.mxu0 0
        %613 = vmatpush1.bf16.msra.mxu0 %v496
        %614 = vmatprep.subr.bf16.mxu0 0
        %615 = vmatpush1.bf16.msra.mxu0 %v497
        %616 = vmatprep.subr.bf16.mxu0 0
        %617 = vmatpush1.bf16.msra.mxu0 %v498
        %618 = vmatprep.subr.bf16.mxu0 0
        %619 = vmatpush1.bf16.msra.mxu0 %v499
        %620 = vmatprep.subr.bf16.mxu0 0
        %621 = vmatpush1.bf16.msra.mxu0 %v500
        %622 = vmatprep.subr.bf16.mxu0 0
        %623 = vmatpush1.bf16.msra.mxu0 %v501
        %624 = vmatprep.subr.bf16.mxu0 0
        %625 = vmatpush1.bf16.msra.mxu0 %v502
        %626 = vmatprep.subr.bf16.mxu0 0
        %627 = vmatpush1.bf16.msra.mxu0 %v503
        %628 = vmatprep.subr.bf16.mxu0 0
        %629 = vmatpush1.bf16.msra.mxu0 %v504
        %630 = vmatprep.subr.bf16.mxu0 0
        %631 = vmatpush1.bf16.msra.mxu0 %v505
        %632 = vmatprep.subr.bf16.mxu0 0
        %633 = vmatpush1.bf16.msra.mxu0 %v506
        %634 = vmatprep.mubr.bf16.mxu0 %v316
        %635 = vmatmul.mubr.bf16.gmra.mrb[0].mxu0 %v315
        %v636 = vpop.f32.mrb[0].mxu0
        %v637 = vadd.f32 %v589, %v636
        %v638 = vpop.f32.mrb[0].mxu0
        %v639 = vpop.f32.mrb[0].mxu0
        %v640 = vadd.f32 %v592, %v639
        %v641 = vpop.f32.mrb[0].mxu0
        %642 = vmatprep.mubr.bf16.mxu0 %v321
        %643 = vmatmul.mubr.bf16.gmra.mrb[0].mxu0 %v320
        %v644 = vpop.f32.mrb[0].mxu0
        %v645 = vadd.f32 %v597, %v644
        %v646 = vpop.f32.mrb[0].mxu0
        %v647 = vpop.f32.mrb[0].mxu0
        %v648 = vpop.f32.mrb[0].mxu0
        %649 = vdwg.mxu0
        %650 = vmatprep.subr.bf16.mxu0 0
        %651 = vmatpush1.bf16.msra.mxu0 %v507
        %652 = vmatprep.subr.bf16.mxu0 0
        %653 = vmatpush1.bf16.msra.mxu0 %v508
        %654 = vmatprep.subr.bf16.mxu0 0
        %655 = vmatpush1.bf16.msra.mxu0 %v509
        %656 = vmatprep.subr.bf16.mxu0 0
        %657 = vmatpush1.bf16.msra.mxu0 %v510
        %658 = vmatprep.subr.bf16.mxu0 0
        %659 = vmatpush1.bf16.msra.mxu0 0
        %660 = vmatprep.subr.bf16.mxu0 0
        %661 = vmatpush1.bf16.msra.mxu0 0
        %662 = vmatprep.subr.bf16.mxu0 0
        %663 = vmatpush1.bf16.msra.mxu0 0
        %664 = vmatprep.subr.bf16.mxu0 0
        %665 = vmatpush1.bf16.msra.mxu0 0
        %666 = vmatprep.subr.bf16.mxu0 0
        %667 = vmatpush1.bf16.msra.mxu0 0
        %668 = vmatprep.subr.bf16.mxu0 0
        %669 = vmatpush1.bf16.msra.mxu0 0
        %670 = vmatprep.subr.bf16.mxu0 0
        %671 = vmatpush1.bf16.msra.mxu0 0
        %672 = vmatprep.subr.bf16.mxu0 0
        %673 = vmatpush1.bf16.msra.mxu0 0
        %674 = vmatprep.subr.bf16.mxu0 0
        %675 = vmatpush1.bf16.msra.mxu0 0
        %676 = vmatprep.subr.bf16.mxu0 0
        %677 = vmatpush1.bf16.msra.mxu0 0
        %678 = vmatprep.subr.bf16.mxu0 0
        %679 = vmatpush1.bf16.msra.mxu0 0
        %680 = vmatprep.subr.bf16.mxu0 0
        %681 = vmatpush1.bf16.msra.mxu0 0
        %682 = vmatprep.mubr.bf16.mxu0 0
        %683 = vmatmul.mubr.bf16.gmra.mrb[0].mxu0 %v549
        %v684 = vpop.f32.mrb[0].mxu0
        %v685 = vadd.f32 %v637, %v684
        %v686 = vpop.f32.mrb[0].mxu0
        %v687 = vpop.f32.mrb[0].mxu0
        %v688 = vadd.f32 %v640, %v687
        %v689 = vpop.f32.mrb[0].mxu0
        %690 = vmatprep.mubr.bf16.mxu0 0
        %691 = vmatmul.mubr.bf16.gmra.mrb[0].mxu0 %v552
        %v692 = vpop.f32.mrb[0].mxu0
        %v693 = vadd.f32 %v645, %v692
        %v694 = vpop.f32.mrb[0].mxu0
        %v695 = vpop.f32.mrb[0].mxu0
        %v696 = vpop.f32.mrb[0].mxu0
        %697 = vdwg.mxu0
        %v698 = vmax.f32 %v685, 0.0
        %v699 = vmax.f32 %v688, 0.0
        %v700 = vmax.f32 %v693, 0.0
        %v701 = vpack.c.bf16 %v699, %v698
        %v702 = vpack.c.bf16 %v700, %v700
        %v705 = vunpack.c.l.b16 %v701
        %v706 = vunpack.c.h.b16 %v701
        %v707 = vunpack.c.l.b16 %v702
        %v708 = vpack.c.b16 %v705, %v705
        %v709 = vpack.c.b16 %v706, %v706
        %v710 = vpack.c.b16 %v707, %v707
        %714 = vst [vmem:[%s177] sm:$0xf] %v708
        %715 = vst [vmem:[%s177 + $0x4] sm:$0xf] %v709
        %716 = vst [vmem:[%s177 + $0x8] sm:$0xf] %v710
        %s717 = sand.u32 %s90, 1
        %s718 = sand.u32 %s90, 1
        %s719 = smul.addr %s718, 12
        %s720 = scalar_lea.vmem [#allocation2], %s719
        // Predicated region
        $region33: #{pilotnet_forward.10} parent=31 // pred_check
          %p721 = pneg %p100
        $region34: #{pilotnet_forward.10} parent=31 // pred_check_branch
          %723 = sbr.rel (%p721) target = $region36
        $region35: #{pilotnet_forward.10} parent=31 // pred_region
          %s724 = smul.u32 3, %s14
          %s725 = ssub.s32 5, %s724
          %p726 = scmp.lt.s32.totalorder %s725, 3
          %s727 = scalar_select %p726, %s725, 3
          %s728 = smul.u32 64, %s727
          %p729 = scmp.ne.s32.totalorder 0, %s728
          %s730 = smul.addr %s724, 4
          %s731 = scalar_lea.vmem %s3, %s730
          // Predicated region
          $region37: #{pilotnet_forward.10} parent=35 // pred_check
            %p732 = pneg %p729
          $region38: #{pilotnet_forward.10} parent=35 // pred_check_branch
            %734 = sbr.rel (%p732) target = $region40
          $region39: #{pilotnet_forward.10} parent=35 // pred_region
            // Predicated region
            $region41: #{pilotnet_forward.10} parent=39 // pred_check
              _
            $region42: #{pilotnet_forward.10} parent=39 // pred_check_branch
              %736 = sbr.rel target = $region44
            $region43: #{pilotnet_forward.10} parent=39 // pred_region
              // Predicated region
              $region63: #{pilotnet_forward.10} parent=43 // pred_check
                _
              $region64: #{pilotnet_forward.10} parent=43 // pred_check_branch
                %790 = sbr.rel (0) target = $region66
              $region65: #{pilotnet_forward.10} parent=43 // pred_region
                %s792 = sdiv.u32.pop %s727, 3
                %s793 = srem.u32.pop %s727, 3
                // While loop
                $region67: #{pilotnet_forward.10} parent=65 // loop_pre_header
                  _
                $region68: #{pilotnet_forward.10} parent=65 // loop_header
                  %s795 = sphi 0, %s797
                  %p796 = scmp.ge.s32.totalorder %s795, %s792
                  %s800 = sphi 0, %s811
                  %s801 = sphi %s720, %s814
                  %s802 = sphi %s731, %s815
                $region69: #{pilotnet_forward.10} parent=65 // loop_header_branch
                  %799 = sbr.rel (%p796) target = $region73
                $region70: #{pilotnet_forward.10} parent=65 // loop_body
                  %v803 = vld [vmem:[%s801] sm:$0xf]
                  %804 = vst [vmem:[%s802] sm:$0xf] %v803
                  %v805 = vld [vmem:[%s801 + $0x4] sm:$0xf]
                  %806 = vst [vmem:[%s802 + $0x4] sm:$0xf] %v805
                  %v807 = vld [vmem:[%s801 + $0x8] sm:$0xf]
                  %808 = vst [vmem:[%s802 + $0x8] sm:$0xf] %v807
                  %s809 = sadd.s32 1, %s800
                  %p810 = scmp.ge.s32.totalorder %s809, %s792
                  %s811 = scalar_select %p810, 0, %s809
                  %s812 = smul.u32 %s811, 12
                  %s813 = smul.u32 %s811, 12
                  %s814 = scalar_lea.vmem %s720, %s812 [#allocation2]
                  %s815 = scalar_lea.vmem %s731, %s813
                $region71: #{pilotnet_forward.10} parent=65 // loop_footer
                  %s797 = sadd.s32 %s795, 1
                $region72: #{pilotnet_forward.10} parent=65 // loop_footer_branch
                  %794 = sbr.rel target = $region68
                $region73: #{pilotnet_forward.10} parent=65 // loop_exit
                  _
                %s816 = sdiv.u32.pop %s727, 3
                %s817 = srem.u32.pop %s727, 3
                %s818 = smul.u32 %s816, 3
                %s819 = smul.u32 4, %s818
                %s820 = scalar_lea.vmem %s720, %s819 [#allocation2]
                %s821 = smul.u32 4, %s818
                %s822 = scalar_lea.vmem %s731, %s821
                // While loop
                $region74: #{pilotnet_forward.10} parent=65 // loop_pre_header
                  _
                $region75: #{pilotnet_forward.10} parent=65 // loop_header
                  %s824 = sphi 0, %s826
                  %p825 = scmp.ge.s32.totalorder %s824, %s817
                  %s829 = sphi 0, %s836
                  %s830 = sphi %s820, %s839
                  %s831 = sphi %s822, %s840
                $region76: #{pilotnet_forward.10} parent=65 // loop_header_branch
                  %828 = sbr.rel (%p825) target = $region80
                $region77: #{pilotnet_forward.10} parent=65 // loop_body
                  %v832 = vld [vmem:[%s830] sm:$0xf]
                  %833 = vst [vmem:[%s831] sm:$0xf] %v832
                  %s834 = sadd.s32 1, %s829
                  %p835 = scmp.ge.s32.totalorder %s834, %s817
                  %s836 = scalar_select %p835, 0, %s834
                  %s837 = smul.u32 %s836, 4
                  %s838 = smul.u32 %s836, 4
                  %s839 = scalar_lea.vmem %s820, %s837 [#allocation2]
                  %s840 = scalar_lea.vmem %s822, %s838
                $region78: #{pilotnet_forward.10} parent=65 // loop_footer
                  %s826 = sadd.s32 %s824, 1
                $region79: #{pilotnet_forward.10} parent=65 // loop_footer_branch
                  %823 = sbr.rel target = $region75
                $region80: #{pilotnet_forward.10} parent=65 // loop_exit
                  _
              $region66: #{pilotnet_forward.10} parent=43 // pred_fallthru
                _
            $region44: #{pilotnet_forward.10} parent=39 // pred_fallthru
              _
            // Predicated region
            $region45: #{pilotnet_forward.10} parent=39 // pred_check
              _
            $region46: #{pilotnet_forward.10} parent=39 // pred_check_branch
              %738 = sbr.rel (0) target = $region48
            $region47: #{pilotnet_forward.10} parent=39 // pred_region
              %s740 = sdiv.u32.pop %s727, 3
              %s741 = srem.u32.pop %s727, 3
              // While loop
              $region49: #{pilotnet_forward.10} parent=47 // loop_pre_header
                _
              $region50: #{pilotnet_forward.10} parent=47 // loop_header
                %s743 = sphi 0, %s745
                %p744 = scmp.ge.s32.totalorder %s743, %s740
                %s748 = sphi 0, %s759
                %s749 = sphi %s720, %s762
                %s750 = sphi %s731, %s763
              $region51: #{pilotnet_forward.10} parent=47 // loop_header_branch
                %747 = sbr.rel (%p744) target = $region55
              $region52: #{pilotnet_forward.10} parent=47 // loop_body
                %v751 = vld [vmem:[%s749] sm:$0xf]
                %752 = vst [vmem:[%s750] sm:$0xf] %v751
                %v753 = vld [vmem:[%s749 + $0x4] sm:$0xf]
                %754 = vst [vmem:[%s750 + $0x4] sm:$0xf] %v753
                %v755 = vld [vmem:[%s749 + $0x8] sm:$0xf]
                %756 = vst [vmem:[%s750 + $0x8] sm:$0xf] %v755
                %s757 = sadd.s32 1, %s748
                %p758 = scmp.ge.s32.totalorder %s757, %s740
                %s759 = scalar_select %p758, 0, %s757
                %s760 = smul.u32 %s759, 12
                %s761 = smul.u32 %s759, 12
                %s762 = scalar_lea.vmem %s720, %s760 [#allocation2]
                %s763 = scalar_lea.vmem %s731, %s761
              $region53: #{pilotnet_forward.10} parent=47 // loop_footer
                %s745 = sadd.s32 %s743, 1
              $region54: #{pilotnet_forward.10} parent=47 // loop_footer_branch
                %742 = sbr.rel target = $region50
              $region55: #{pilotnet_forward.10} parent=47 // loop_exit
                _
              %s764 = sdiv.u32.pop %s727, 3
              %s765 = srem.u32.pop %s727, 3
              %s766 = smul.u32 %s764, 3
              %s767 = smul.u32 4, %s766
              %s768 = scalar_lea.vmem %s720, %s767 [#allocation2]
              %s769 = smul.u32 4, %s766
              %s770 = scalar_lea.vmem %s731, %s769
              // While loop
              $region56: #{pilotnet_forward.10} parent=47 // loop_pre_header
                _
              $region57: #{pilotnet_forward.10} parent=47 // loop_header
                %s772 = sphi 0, %s774
                %p773 = scmp.ge.s32.totalorder %s772, %s765
                %s777 = sphi 0, %s784
                %s778 = sphi %s768, %s787
                %s779 = sphi %s770, %s788
              $region58: #{pilotnet_forward.10} parent=47 // loop_header_branch
                %776 = sbr.rel (%p773) target = $region62
              $region59: #{pilotnet_forward.10} parent=47 // loop_body
                %v780 = vld [vmem:[%s778] sm:$0xf]
                %781 = vst [vmem:[%s779] sm:$0xf] %v780
                %s782 = sadd.s32 1, %s777
                %p783 = scmp.ge.s32.totalorder %s782, %s765
                %s784 = scalar_select %p783, 0, %s782
                %s785 = smul.u32 %s784, 4
                %s786 = smul.u32 %s784, 4
                %s787 = scalar_lea.vmem %s768, %s785 [#allocation2]
                %s788 = scalar_lea.vmem %s770, %s786
              $region60: #{pilotnet_forward.10} parent=47 // loop_footer
                %s774 = sadd.s32 %s772, 1
              $region61: #{pilotnet_forward.10} parent=47 // loop_footer_branch
                %771 = sbr.rel target = $region57
              $region62: #{pilotnet_forward.10} parent=47 // loop_exit
                _
            $region48: #{pilotnet_forward.10} parent=39 // pred_fallthru
              _
          $region40: #{pilotnet_forward.10} parent=35 // pred_fallthru
            _
          %841 = vnop
        $region36: #{pilotnet_forward.10} parent=31 // pred_fallthru
          _
      $region32: #{pilotnet_forward.10} parent=5 // pred_fallthru
        _
      %p842 = scmp.le.s32.totalorder 2, %s9
      // Predicated region
      $region81: #{pilotnet_forward.10} parent=5 // pred_check
        %p843 = pneg %p842
      $region82: #{pilotnet_forward.10} parent=5 // pred_check_branch
        %845 = sbr.rel (%p843) target = $region84
      $region83: #{pilotnet_forward.10} parent=5 // pred_region
        %s846 = ssub.s32 %s9, 2
        // Predicated region
        $region85: #{pilotnet_forward.10} parent=83 // pred_check
          %p847 = pneg %p106
        $region86: #{pilotnet_forward.10} parent=83 // pred_check_branch
          %849 = sbr.rel (%p847) target = $region88
        $region87: #{pilotnet_forward.10} parent=83 // pred_region
          %s850 = sand.u32 %s91, 1
          %s851 = sand.u32 %s91, 1
          %s852 = smul.addr %s851, 12
          %s853 = scalar_lea.vmem [#allocation2], %s852
        $region88: #{pilotnet_forward.10} parent=83 // pred_fallthru
          _
      $region84: #{pilotnet_forward.10} parent=5 // pred_fallthru
        _
    $region6: #{pilotnet_forward.10} parent=1 // loop_footer
      %s13 = sadd.s32 1, %s9
    $region7: #{pilotnet_forward.10} parent=1 // loop_footer_branch
      %8 = sbr.rel target = $region3
    $region8: #{pilotnet_forward.10} parent=1 // loop_exit
      _

// kernel: pilotnet_forward.11
$region0: #{pilotnet_forward.11}
  #allocation0 [shape = 'u32[]', space=smem, size = 0x4, offset = 0x4, fixed_abs, tag = 'smem constant byte address 0x4 - core index']
  #allocation1 [shape = 'u32[144,128]{1,0:T(1,128)}', space=vmem, size = 0x12000, scoped, tag = 'internal scratch']
  %s0 = inlined_call_operand.vmem [shape: bf16[8,1152], index: 0, kind: input, shape index: {}]
  %s1 = inlined_call_operand.vmem [shape: bf16[1152,128], index: 1, kind: input, shape index: {}]
  %s2 = inlined_call_operand.vmem [shape: f32[1,128], index: 2, kind: input, shape index: {}]
  %s3 = inlined_call_operand.vmem [shape: bf16[128,128], index: 3, kind: input, shape index: {}]
  %s4 = inlined_call_operand.vmem [shape: f32[1,128], index: 4, kind: input, shape index: {}]
  %s5 = inlined_call_operand.vmem [shape: bf16[128,128], index: 5, kind: input, shape index: {}]
  %s6 = inlined_call_operand.vmem [shape: f32[1,128], index: 6, kind: input, shape index: {}]
  %s7 = inlined_call_operand.vmem [shape: bf16[128,128], index: 7, kind: input, shape index: {}]
  %s8 = inlined_call_operand.vmem [shape: f32[1,128], index: 8, kind: input, shape index: {}]
  %s9 = inlined_call_operand.vmem [shape: f32[8,128], index: 9, kind: output, shape index: {}]
  %s10 = sld [smem:[#allocation0]]
  $region46: #{pilotnet_forward.11} parent=0
    _
  %s12 = ssub.s32 1, %s10
  %s13 = scalar_select 0, %s12, %s10
  // Predicated region
  $region2: #{pilotnet_forward.11} parent=0 // pred_check
    _
  $region3: #{pilotnet_forward.11} parent=0 // pred_check_branch
    %15 = sbr.rel (0) target = $region5
  $region4: #{pilotnet_forward.11} parent=0 // pred_region
    _
  $region5: #{pilotnet_forward.11} parent=0 // pred_fallthru
    _
  // Predicated region
  $region6: #{pilotnet_forward.11} parent=0 // pred_check
    _
  $region7: #{pilotnet_forward.11} parent=0 // pred_check_branch
    %17 = sbr.rel (0) target = $region9
  $region8: #{pilotnet_forward.11} parent=0 // pred_region
    _
  $region9: #{pilotnet_forward.11} parent=0 // pred_fallthru
    _
  // Predicated region
  $region10: #{pilotnet_forward.11} parent=0 // pred_check
    _
  $region11: #{pilotnet_forward.11} parent=0 // pred_check_branch
    %19 = sbr.rel (0) target = $region13
  $region12: #{pilotnet_forward.11} parent=0 // pred_region
    _
  $region13: #{pilotnet_forward.11} parent=0 // pred_fallthru
    _
  // Predicated region
  $region14: #{pilotnet_forward.11} parent=0 // pred_check
    _
  $region15: #{pilotnet_forward.11} parent=0 // pred_check_branch
    %21 = sbr.rel (0) target = $region17
  $region16: #{pilotnet_forward.11} parent=0 // pred_region
    _
  $region17: #{pilotnet_forward.11} parent=0 // pred_fallthru
    _
  // Predicated region
  $region18: #{pilotnet_forward.11} parent=0 // pred_check
    _
  $region19: #{pilotnet_forward.11} parent=0 // pred_check_branch
    %23 = sbr.rel (0) target = $region21
  $region20: #{pilotnet_forward.11} parent=0 // pred_region
    _
  $region21: #{pilotnet_forward.11} parent=0 // pred_fallthru
    _
  // Predicated region
  $region22: #{pilotnet_forward.11} parent=0 // pred_check
    _
  $region23: #{pilotnet_forward.11} parent=0 // pred_check_branch
    %25 = sbr.rel (0) target = $region25
  $region24: #{pilotnet_forward.11} parent=0 // pred_region
    _
  $region25: #{pilotnet_forward.11} parent=0 // pred_fallthru
    _
  // Predicated region
  $region26: #{pilotnet_forward.11} parent=0 // pred_check
    _
  $region27: #{pilotnet_forward.11} parent=0 // pred_check_branch
    %27 = sbr.rel (0) target = $region29
  $region28: #{pilotnet_forward.11} parent=0 // pred_region
    _
  $region29: #{pilotnet_forward.11} parent=0 // pred_fallthru
    _
  // Predicated region
  $region30: #{pilotnet_forward.11} parent=0 // pred_check
    _
  $region31: #{pilotnet_forward.11} parent=0 // pred_check_branch
    %29 = sbr.rel (0) target = $region33
  $region32: #{pilotnet_forward.11} parent=0 // pred_region
    _
  $region33: #{pilotnet_forward.11} parent=0 // pred_fallthru
    _
  // Predicated region
  $region34: #{pilotnet_forward.11} parent=0 // pred_check
    _
  $region35: #{pilotnet_forward.11} parent=0 // pred_check_branch
    %31 = sbr.rel (0) target = $region37
  $region36: #{pilotnet_forward.11} parent=0 // pred_region
    _
  $region37: #{pilotnet_forward.11} parent=0 // pred_fallthru
    _
  %v33 = vld [vmem:[%s0] sm:$0xff]
  %v34 = vld [vmem:[%s0 + $0x8] sm:$0xff]
  %v35 = vld [vmem:[%s0 + $0x10] sm:$0xff]
  %v36 = vld [vmem:[%s0 + $0x18] sm:$0xff]
  %v37 = vld [vmem:[%s0 + $0x20] sm:$0xf]
  %v38 = vld [vmem:[%s1] sm:$0xf]
  %v39 = vld [vmem:[%s1 + $0x4] sm:$0xf]
  %v40 = vld [vmem:[%s1 + $0x8] sm:$0xf]
  %v41 = vld [vmem:[%s1 + $0xc] sm:$0xf]
  %v42 = vld [vmem:[%s1 + $0x10] sm:$0xf]
  %v43 = vld [vmem:[%s1 + $0x14] sm:$0xf]
  %v44 = vld [vmem:[%s1 + $0x18] sm:$0xf]
  %v45 = vld [vmem:[%s1 + $0x1c] sm:$0xf]
  %v46 = vld [vmem:[%s1 + $0x20] sm:$0xf]
  %v47 = vld [vmem:[%s1 + $0x24] sm:$0xf]
  %v48 = vld [vmem:[%s1 + $0x28] sm:$0xf]
  %v49 = vld [vmem:[%s1 + $0x2c] sm:$0xf]
  %v50 = vld [vmem:[%s1 + $0x30] sm:$0xf]
  %v51 = vld [vmem:[%s1 + $0x34] sm:$0xf]
  %v52 = vld [vmem:[%s1 + $0x38] sm:$0xf]
  %v53 = vld [vmem:[%s1 + $0x3c] sm:$0xf]
  %v54 = vld [vmem:[%s1 + $0x40] sm:$0xf]
  %v55 = vld [vmem:[%s1 + $0x44] sm:$0xf]
  %v56 = vld [vmem:[%s1 + $0x48] sm:$0xf]
  %v57 = vld [vmem:[%s1 + $0x4c] sm:$0xf]
  %v58 = vld [vmem:[%s1 + $0x50] sm:$0xf]
  %v59 = vld [vmem:[%s1 + $0x54] sm:$0xf]
  %v60 = vld [vmem:[%s1 + $0x58] sm:$0xf]
  %v61 = vld [vmem:[%s1 + $0x5c] sm:$0xf]
  %v62 = vld [vmem:[%s1 + $0x60] sm:$0xf]
  %v63 = vld [vmem:[%s1 + $0x64] sm:$0xf]
  %v64 = vld [vmem:[%s1 + $0x68] sm:$0xf]
  %v65 = vld [vmem:[%s1 + $0x6c] sm:$0xf]
  %v66 = vld [vmem:[%s1 + $0x70] sm:$0xf]
  %v67 = vld [vmem:[%s1 + $0x74] sm:$0xf]
  %v68 = vld [vmem:[%s1 + $0x78] sm:$0xf]
  %v69 = vld [vmem:[%s1 + $0x7c] sm:$0xf]
  %v70 = vld [vmem:[%s1 + $0x80] sm:$0xf]
  %v71 = vld [vmem:[%s1 + $0x84] sm:$0xf]
  %v72 = vld [vmem:[%s1 + $0x88] sm:$0xf]
  %v73 = vld [vmem:[%s1 + $0x8c] sm:$0xf]
  %v74 = vld [vmem:[%s1 + $0x90] sm:$0xf]
  %v75 = vld [vmem:[%s1 + $0x94] sm:$0xf]
  %v76 = vld [vmem:[%s1 + $0x98] sm:$0xf]
  %v77 = vld [vmem:[%s1 + $0x9c] sm:$0xf]
  %v78 = vld [vmem:[%s1 + $0xa0] sm:$0xf]
  %v79 = vld [vmem:[%s1 + $0xa4] sm:$0xf]
  %v80 = vld [vmem:[%s1 + $0xa8] sm:$0xf]
  %v81 = vld [vmem:[%s1 + $0xac] sm:$0xf]
  %v82 = vld [vmem:[%s1 + $0xb0] sm:$0xf]
  %v83 = vld [vmem:[%s1 + $0xb4] sm:$0xf]
  %v84 = vld [vmem:[%s1 + $0xb8] sm:$0xf]
  %v85 = vld [vmem:[%s1 + $0xbc] sm:$0xf]
  %v86 = vld [vmem:[%s1 + $0xc0] sm:$0xf]
  %v87 = vld [vmem:[%s1 + $0xc4] sm:$0xf]
  %v88 = vld [vmem:[%s1 + $0xc8] sm:$0xf]
  %v89 = vld [vmem:[%s1 + $0xcc] sm:$0xf]
  %v90 = vld [vmem:[%s1 + $0xd0] sm:$0xf]
  %v91 = vld [vmem:[%s1 + $0xd4] sm:$0xf]
  %v92 = vld [vmem:[%s1 + $0xd8] sm:$0xf]
  %v93 = vld [vmem:[%s1 + $0xdc] sm:$0xf]
  %v94 = vld [vmem:[%s1 + $0xe0] sm:$0xf]
  %v95 = vld [vmem:[%s1 + $0xe4] sm:$0xf]
  %v96 = vld [vmem:[%s1 + $0xe8] sm:$0xf]
  %v97 = vld [vmem:[%s1 + $0xec] sm:$0xf]
  %v98 = vld [vmem:[%s1 + $0xf0] sm:$0xf]
  %v99 = vld [vmem:[%s1 + $0xf4] sm:$0xf]
  %v100 = vld [vmem:[%s1 + $0xf8] sm:$0xf]
  %v101 = vld [vmem:[%s1 + $0xfc] sm:$0xf]
  %v102 = vld [vmem:[%s1 + $0x100] sm:$0xf]
  %v103 = vld [vmem:[%s1 + $0x104] sm:$0xf]
  %v104 = vld [vmem:[%s1 + $0x108] sm:$0xf]
  %v105 = vld [vmem:[%s1 + $0x10c] sm:$0xf]
  %v106 = vld [vmem:[%s1 + $0x110] sm:$0xf]
  %v107 = vld [vmem:[%s1 + $0x114] sm:$0xf]
  %v108 = vld [vmem:[%s1 + $0x118] sm:$0xf]
  %v109 = vld [vmem:[%s1 + $0x11c] sm:$0xf]
  %v110 = vld [vmem:[%s1 + $0x120] sm:$0xf]
  %v111 = vld [vmem:[%s1 + $0x124] sm:$0xf]
  %v112 = vld [vmem:[%s1 + $0x128] sm:$0xf]
  %v113 = vld [vmem:[%s1 + $0x12c] sm:$0xf]
  %v114 = vld [vmem:[%s1 + $0x130] sm:$0xf]
  %v115 = vld [vmem:[%s1 + $0x134] sm:$0xf]
  %v116 = vld [vmem:[%s1 + $0x138] sm:$0xf]
  %v117 = vld [vmem:[%s1 + $0x13c] sm:$0xf]
  %v118 = vld [vmem:[%s1 + $0x140] sm:$0xf]
  %v119 = vld [vmem:[%s1 + $0x144] sm:$0xf]
  %v120 = vld [vmem:[%s1 + $0x148] sm:$0xf]
  %v121 = vld [vmem:[%s1 + $0x14c] sm:$0xf]
  %v122 = vld [vmem:[%s1 + $0x150] sm:$0xf]
  %v123 = vld [vmem:[%s1 + $0x154] sm:$0xf]
  %v124 = vld [vmem:[%s1 + $0x158] sm:$0xf]
  %v125 = vld [vmem:[%s1 + $0x15c] sm:$0xf]
  %v126 = vld [vmem:[%s1 + $0x160] sm:$0xf]
  %v127 = vld [vmem:[%s1 + $0x164] sm:$0xf]
  %v128 = vld [vmem:[%s1 + $0x168] sm:$0xf]
  %v129 = vld [vmem:[%s1 + $0x16c] sm:$0xf]
  %v130 = vld [vmem:[%s1 + $0x170] sm:$0xf]
  %v131 = vld [vmem:[%s1 + $0x174] sm:$0xf]
  %v132 = vld [vmem:[%s1 + $0x178] sm:$0xf]
  %v133 = vld [vmem:[%s1 + $0x17c] sm:$0xf]
  %v134 = vld [vmem:[%s1 + $0x180] sm:$0xf]
  %v135 = vld [vmem:[%s1 + $0x184] sm:$0xf]
  %v136 = vld [vmem:[%s1 + $0x188] sm:$0xf]
  %v137 = vld [vmem:[%s1 + $0x18c] sm:$0xf]
  %v138 = vld [vmem:[%s1 + $0x190] sm:$0xf]
  %v139 = vld [vmem:[%s1 + $0x194] sm:$0xf]
  %v140 = vld [vmem:[%s1 + $0x198] sm:$0xf]
  %v141 = vld [vmem:[%s1 + $0x19c] sm:$0xf]
  %v142 = vld [vmem:[%s1 + $0x1a0] sm:$0xf]
  %v143 = vld [vmem:[%s1 + $0x1a4] sm:$0xf]
  %v144 = vld [vmem:[%s1 + $0x1a8] sm:$0xf]
  %v145 = vld [vmem:[%s1 + $0x1ac] sm:$0xf]
  %v146 = vld [vmem:[%s1 + $0x1b0] sm:$0xf]
  %v147 = vld [vmem:[%s1 + $0x1b4] sm:$0xf]
  %v148 = vld [vmem:[%s1 + $0x1b8] sm:$0xf]
  %v149 = vld [vmem:[%s1 + $0x1bc] sm:$0xf]
  %v150 = vld [vmem:[%s1 + $0x1c0] sm:$0xf]
  %v151 = vld [vmem:[%s1 + $0x1c4] sm:$0xf]
  %v152 = vld [vmem:[%s1 + $0x1c8] sm:$0xf]
  %v153 = vld [vmem:[%s1 + $0x1cc] sm:$0xf]
  %v154 = vld [vmem:[%s1 + $0x1d0] sm:$0xf]
  %v155 = vld [vmem:[%s1 + $0x1d4] sm:$0xf]
  %v156 = vld [vmem:[%s1 + $0x1d8] sm:$0xf]
  %v157 = vld [vmem:[%s1 + $0x1dc] sm:$0xf]
  %v158 = vld [vmem:[%s1 + $0x1e0] sm:$0xf]
  %v159 = vld [vmem:[%s1 + $0x1e4] sm:$0xf]
  %v160 = vld [vmem:[%s1 + $0x1e8] sm:$0xf]
  %v161 = vld [vmem:[%s1 + $0x1ec] sm:$0xf]
  %v162 = vld [vmem:[%s1 + $0x1f0] sm:$0xf]
  %v163 = vld [vmem:[%s1 + $0x1f4] sm:$0xf]
  %v164 = vld [vmem:[%s1 + $0x1f8] sm:$0xf]
  %v165 = vld [vmem:[%s1 + $0x1fc] sm:$0xf]
  %v166 = vld [vmem:[%s1 + $0x200] sm:$0xf]
  %v167 = vld [vmem:[%s1 + $0x204] sm:$0xf]
  %v168 = vld [vmem:[%s1 + $0x208] sm:$0xf]
  %v169 = vld [vmem:[%s1 + $0x20c] sm:$0xf]
  %v170 = vld [vmem:[%s1 + $0x210] sm:$0xf]
  %v171 = vld [vmem:[%s1 + $0x214] sm:$0xf]
  %v172 = vld [vmem:[%s1 + $0x218] sm:$0xf]
  %v173 = vld [vmem:[%s1 + $0x21c] sm:$0xf]
  %v174 = vld [vmem:[%s1 + $0x220] sm:$0xf]
  %v175 = vld [vmem:[%s1 + $0x224] sm:$0xf]
  %v176 = vld [vmem:[%s1 + $0x228] sm:$0xf]
  %v177 = vld [vmem:[%s1 + $0x22c] sm:$0xf]
  %v178 = vld [vmem:[%s1 + $0x230] sm:$0xf]
  %v179 = vld [vmem:[%s1 + $0x234] sm:$0xf]
  %v180 = vld [vmem:[%s1 + $0x238] sm:$0xf]
  %v181 = vld [vmem:[%s1 + $0x23c] sm:$0xf]
  %v182 = vld [vmem:[%s2] sm:$0x1]
  %v184 = vlaneseq
  %v185 = vshrl.u32 %v184, 7
  %v186 = vsub.s32 0, %v185
  %v187 = vrot.slane %v182, %v186
  %v194 = vunpack.c.l.b16 %v33
  %v195 = vunpack.c.h.b16 %v33
  %v196 = vunpack.c.l.b16 %v34
  %v197 = vunpack.c.h.b16 %v34
  %v198 = vunpack.c.l.b16 %v35
  %v199 = vunpack.c.h.b16 %v35
  %v200 = vunpack.c.l.b16 %v36
  %v201 = vunpack.c.h.b16 %v36
  %v202 = vunpack.c.l.b16 %v37
  %v203 = vpack.c.b16 %v194, %v194
  %v204 = vpack.c.b16 %v195, %v195
  %v205 = vpack.c.b16 %v196, %v196
  %v206 = vpack.c.b16 %v197, %v197
  %v207 = vpack.c.b16 %v198, %v198
  %v208 = vpack.c.b16 %v199, %v199
  %v209 = vpack.c.b16 %v200, %v200
  %v210 = vpack.c.b16 %v201, %v201
  %v211 = vpack.c.b16 %v202, %v202
  %v365 = vunpack.c.l.b16 %v38
  %v366 = vunpack.c.l.b16 %v39
  %v367 = vunpack.c.l.b16 %v40
  %v368 = vunpack.c.l.b16 %v41
  %v369 = vunpack.c.l.b16 %v42
  %v370 = vunpack.c.l.b16 %v43
  %v371 = vunpack.c.l.b16 %v44
  %v372 = vunpack.c.l.b16 %v45
  %v373 = vunpack.c.l.b16 %v46
  %v374 = vunpack.c.l.b16 %v47
  %v375 = vunpack.c.l.b16 %v48
  %v376 = vunpack.c.l.b16 %v49
  %v377 = vunpack.c.l.b16 %v50
  %v378 = vunpack.c.l.b16 %v51
  %v379 = vunpack.c.l.b16 %v52
  %v380 = vunpack.c.l.b16 %v53
  %v381 = vunpack.c.l.b16 %v54
  %v382 = vunpack.c.l.b16 %v55
  %v383 = vunpack.c.l.b16 %v56
  %v384 = vunpack.c.l.b16 %v57
  %v385 = vunpack.c.l.b16 %v58
  %v386 = vunpack.c.l.b16 %v59
  %v387 = vunpack.c.l.b16 %v60
  %v388 = vunpack.c.l.b16 %v61
  %v389 = vunpack.c.l.b16 %v62
  %v390 = vunpack.c.l.b16 %v63
  %v391 = vunpack.c.l.b16 %v64
  %v392 = vunpack.c.l.b16 %v65
  %v393 = vunpack.c.l.b16 %v66
  %v394 = vunpack.c.l.b16 %v67
  %v395 = vunpack.c.l.b16 %v68
  %v396 = vunpack.c.l.b16 %v69
  %v397 = vunpack.c.l.b16 %v70
  %v398 = vunpack.c.l.b16 %v71
  %v399 = vunpack.c.l.b16 %v72
  %v400 = vunpack.c.l.b16 %v73
  %v401 = vunpack.c.l.b16 %v74
  %v402 = vunpack.c.l.b16 %v75
  %v403 = vunpack.c.l.b16 %v76
  %v404 = vunpack.c.l.b16 %v77
  %v405 = vunpack.c.l.b16 %v78
  %v406 = vunpack.c.l.b16 %v79
  %v407 = vunpack.c.l.b16 %v80
  %v408 = vunpack.c.l.b16 %v81
  %v409 = vunpack.c.l.b16 %v82
  %v410 = vunpack.c.l.b16 %v83
  %v411 = vunpack.c.l.b16 %v84
  %v412 = vunpack.c.l.b16 %v85
  %v413 = vunpack.c.l.b16 %v86
  %v414 = vunpack.c.l.b16 %v87
  %v415 = vunpack.c.l.b16 %v88
  %v416 = vunpack.c.l.b16 %v89
  %v417 = vunpack.c.l.b16 %v90
  %v418 = vunpack.c.l.b16 %v91
  %v419 = vunpack.c.l.b16 %v92
  %v420 = vunpack.c.l.b16 %v93
  %v421 = vunpack.c.l.b16 %v94
  %v422 = vunpack.c.l.b16 %v95
  %v423 = vunpack.c.l.b16 %v96
  %v424 = vunpack.c.l.b16 %v97
  %v425 = vunpack.c.l.b16 %v98
  %v426 = vunpack.c.l.b16 %v99
  %v427 = vunpack.c.l.b16 %v100
  %v428 = vunpack.c.l.b16 %v101
  %v429 = vunpack.c.l.b16 %v102
  %v430 = vunpack.c.l.b16 %v103
  %v431 = vunpack.c.l.b16 %v104
  %v432 = vunpack.c.l.b16 %v105
  %v433 = vunpack.c.l.b16 %v106
  %v434 = vunpack.c.l.b16 %v107
  %v435 = vunpack.c.l.b16 %v108
  %v436 = vunpack.c.l.b16 %v109
  %v437 = vunpack.c.l.b16 %v110
  %v438 = vunpack.c.l.b16 %v111
  %v439 = vunpack.c.l.b16 %v112
  %v440 = vunpack.c.l.b16 %v113
  %v441 = vunpack.c.l.b16 %v114
  %v442 = vunpack.c.l.b16 %v115
  %v443 = vunpack.c.l.b16 %v116
  %v444 = vunpack.c.l.b16 %v117
  %v445 = vunpack.c.l.b16 %v118
  %v446 = vunpack.c.l.b16 %v119
  %v447 = vunpack.c.l.b16 %v120
  %v448 = vunpack.c.l.b16 %v121
  %v449 = vunpack.c.l.b16 %v122
  %v450 = vunpack.c.l.b16 %v123
  %v451 = vunpack.c.l.b16 %v124
  %v452 = vunpack.c.l.b16 %v125
  %v453 = vunpack.c.l.b16 %v126
  %v454 = vunpack.c.l.b16 %v127
  %v455 = vunpack.c.l.b16 %v128
  %v456 = vunpack.c.l.b16 %v129
  %v457 = vunpack.c.l.b16 %v130
  %v458 = vunpack.c.l.b16 %v131
  %v459 = vunpack.c.l.b16 %v132
  %v460 = vunpack.c.l.b16 %v133
  %v461 = vunpack.c.l.b16 %v134
  %v462 = vunpack.c.l.b16 %v135
  %v463 = vunpack.c.l.b16 %v136
  %v464 = vunpack.c.l.b16 %v137
  %v465 = vunpack.c.l.b16 %v138
  %v466 = vunpack.c.l.b16 %v139
  %v467 = vunpack.c.l.b16 %v140
  %v468 = vunpack.c.l.b16 %v141
  %v469 = vunpack.c.l.b16 %v142
  %v470 = vunpack.c.l.b16 %v143
  %v471 = vunpack.c.l.b16 %v144
  %v472 = vunpack.c.l.b16 %v145
  %v473 = vunpack.c.l.b16 %v146
  %v474 = vunpack.c.l.b16 %v147
  %v475 = vunpack.c.l.b16 %v148
  %v476 = vunpack.c.l.b16 %v149
  %v477 = vunpack.c.l.b16 %v150
  %v478 = vunpack.c.l.b16 %v151
  %v479 = vunpack.c.l.b16 %v152
  %v480 = vunpack.c.l.b16 %v153
  %v481 = vunpack.c.l.b16 %v154
  %v482 = vunpack.c.l.b16 %v155
  %v483 = vunpack.c.l.b16 %v156
  %v484 = vunpack.c.l.b16 %v157
  %v485 = vunpack.c.l.b16 %v158
  %v486 = vunpack.c.l.b16 %v159
  %v487 = vunpack.c.l.b16 %v160
  %v488 = vunpack.c.l.b16 %v161
  %v489 = vunpack.c.l.b16 %v162
  %v490 = vunpack.c.l.b16 %v163
  %v491 = vunpack.c.l.b16 %v164
  %v492 = vunpack.c.l.b16 %v165
  %v493 = vunpack.c.l.b16 %v166
  %v494 = vunpack.c.l.b16 %v167
  %v495 = vunpack.c.l.b16 %v168
  %v496 = vunpack.c.l.b16 %v169
  %v497 = vunpack.c.l.b16 %v170
  %v498 = vunpack.c.l.b16 %v171
  %v499 = vunpack.c.l.b16 %v172
  %v500 = vunpack.c.l.b16 %v173
  %v501 = vunpack.c.l.b16 %v174
  %v502 = vunpack.c.l.b16 %v175
  %v503 = vunpack.c.l.b16 %v176
  %v504 = vunpack.c.l.b16 %v177
  %v505 = vunpack.c.l.b16 %v178
  %v506 = vunpack.c.l.b16 %v179
  %v507 = vunpack.c.l.b16 %v180
  %v508 = vunpack.c.l.b16 %v181
  %v509 = vpack.c.b16 %v366, %v365
  %v510 = vpack.c.b16 %v368, %v367
  %v511 = vpack.c.b16 %v370, %v369
  %v512 = vpack.c.b16 %v372, %v371
  %v513 = vpack.c.b16 %v374, %v373
  %v514 = vpack.c.b16 %v376, %v375
  %v515 = vpack.c.b16 %v378, %v377
  %v516 = vpack.c.b16 %v380, %v379
  %v517 = vpack.c.b16 %v382, %v381
  %v518 = vpack.c.b16 %v384, %v383
  %v519 = vpack.c.b16 %v386, %v385
  %v520 = vpack.c.b16 %v388, %v387
  %v521 = vpack.c.b16 %v390, %v389
  %v522 = vpack.c.b16 %v392, %v391
  %v523 = vpack.c.b16 %v394, %v393
  %v524 = vpack.c.b16 %v396, %v395
  %v525 = vpack.c.b16 %v398, %v397
  %v526 = vpack.c.b16 %v400, %v399
  %v527 = vpack.c.b16 %v402, %v401
  %v528 = vpack.c.b16 %v404, %v403
  %v529 = vpack.c.b16 %v406, %v405
  %v530 = vpack.c.b16 %v408, %v407
  %v531 = vpack.c.b16 %v410, %v409
  %v532 = vpack.c.b16 %v412, %v411
  %v533 = vpack.c.b16 %v414, %v413
  %v534 = vpack.c.b16 %v416, %v415
  %v535 = vpack.c.b16 %v418, %v417
  %v536 = vpack.c.b16 %v420, %v419
  %v537 = vpack.c.b16 %v422, %v421
  %v538 = vpack.c.b16 %v424, %v423
  %v539 = vpack.c.b16 %v426, %v425
  %v540 = vpack.c.b16 %v428, %v427
  %v541 = vpack.c.b16 %v430, %v429
  %v542 = vpack.c.b16 %v432, %v431
  %v543 = vpack.c.b16 %v434, %v433
  %v544 = vpack.c.b16 %v436, %v435
  %v545 = vpack.c.b16 %v438, %v437
  %v546 = vpack.c.b16 %v440, %v439
  %v547 = vpack.c.b16 %v442, %v441
  %v548 = vpack.c.b16 %v444, %v443
  %v549 = vpack.c.b16 %v446, %v445
  %v550 = vpack.c.b16 %v448, %v447
  %v551 = vpack.c.b16 %v450, %v449
  %v552 = vpack.c.b16 %v452, %v451
  %v553 = vpack.c.b16 %v454, %v453
  %v554 = vpack.c.b16 %v456, %v455
  %v555 = vpack.c.b16 %v458, %v457
  %v556 = vpack.c.b16 %v460, %v459
  %v557 = vpack.c.b16 %v462, %v461
  %v558 = vpack.c.b16 %v464, %v463
  %v559 = vpack.c.b16 %v466, %v465
  %v560 = vpack.c.b16 %v468, %v467
  %v561 = vpack.c.b16 %v470, %v469
  %v562 = vpack.c.b16 %v472, %v471
  %v563 = vpack.c.b16 %v474, %v473
  %v564 = vpack.c.b16 %v476, %v475
  %v565 = vpack.c.b16 %v478, %v477
  %v566 = vpack.c.b16 %v480, %v479
  %v567 = vpack.c.b16 %v482, %v481
  %v568 = vpack.c.b16 %v484, %v483
  %v569 = vpack.c.b16 %v486, %v485
  %v570 = vpack.c.b16 %v488, %v487
  %v571 = vpack.c.b16 %v490, %v489
  %v572 = vpack.c.b16 %v492, %v491
  %v573 = vpack.c.b16 %v494, %v493
  %v574 = vpack.c.b16 %v496, %v495
  %v575 = vpack.c.b16 %v498, %v497
  %v576 = vpack.c.b16 %v500, %v499
  %v577 = vpack.c.b16 %v502, %v501
  %v578 = vpack.c.b16 %v504, %v503
  %v579 = vpack.c.b16 %v506, %v505
  %v580 = vpack.c.b16 %v508, %v507
  %653 = vmatprep.subr.bf16.mxu0 0
  %654 = vmatpush1.bf16.msra.mxu0 %v509
  %655 = vmatprep.subr.bf16.mxu0 0
  %656 = vmatpush1.bf16.msra.mxu0 %v510
  %657 = vmatprep.subr.bf16.mxu0 0
  %658 = vmatpush1.bf16.msra.mxu0 %v511
  %659 = vmatprep.subr.bf16.mxu0 0
  %660 = vmatpush1.bf16.msra.mxu0 %v512
  %661 = vmatprep.subr.bf16.mxu0 0
  %662 = vmatpush1.bf16.msra.mxu0 %v513
  %663 = vmatprep.subr.bf16.mxu0 0
  %664 = vmatpush1.bf16.msra.mxu0 %v514
  %665 = vmatprep.subr.bf16.mxu0 0
  %666 = vmatpush1.bf16.msra.mxu0 %v515
  %667 = vmatprep.subr.bf16.mxu0 0
  %668 = vmatpush1.bf16.msra.mxu0 %v516
  %669 = vmatprep.subr.bf16.mxu0 0
  %670 = vmatpush1.bf16.msra.mxu0 %v517
  %671 = vmatprep.subr.bf16.mxu0 0
  %672 = vmatpush1.bf16.msra.mxu0 %v518
  %673 = vmatprep.subr.bf16.mxu0 0
  %674 = vmatpush1.bf16.msra.mxu0 %v519
  %675 = vmatprep.subr.bf16.mxu0 0
  %676 = vmatpush1.bf16.msra.mxu0 %v520
  %677 = vmatprep.subr.bf16.mxu0 0
  %678 = vmatpush1.bf16.msra.mxu0 %v521
  %679 = vmatprep.subr.bf16.mxu0 0
  %680 = vmatpush1.bf16.msra.mxu0 %v522
  %681 = vmatprep.subr.bf16.mxu0 0
  %682 = vmatpush1.bf16.msra.mxu0 %v523
  %683 = vmatprep.subr.bf16.mxu0 0
  %684 = vmatpush1.bf16.msra.mxu0 %v524
  %685 = vmatprep.mubr.bf16.mxu0 %v204
  %686 = vmatmul.mubr.bf16.gmra.mrb[0].mxu0 %v203
  %v687 = vpop.f32.mrb[0].mxu0
  %v688 = vadd.f32 %v187, %v687
  %v689 = vpop.f32.mrb[0].mxu0
  %v690 = vpop.f32.mrb[0].mxu0
  %v691 = vpop.f32.mrb[0].mxu0
  %692 = vdwg.mxu0
  %693 = vmatprep.subr.bf16.mxu0 0
  %694 = vmatpush1.bf16.msra.mxu0 %v525
  %695 = vmatprep.subr.bf16.mxu0 0
  %696 = vmatpush1.bf16.msra.mxu0 %v526
  %697 = vmatprep.subr.bf16.mxu0 0
  %698 = vmatpush1.bf16.msra.mxu0 %v527
  %699 = vmatprep.subr.bf16.mxu0 0
  %700 = vmatpush1.bf16.msra.mxu0 %v528
  %701 = vmatprep.subr.bf16.mxu0 0
  %702 = vmatpush1.bf16.msra.mxu0 %v529
  %703 = vmatprep.subr.bf16.mxu0 0
  %704 = vmatpush1.bf16.msra.mxu0 %v530
  %705 = vmatprep.subr.bf16.mxu0 0
  %706 = vmatpush1.bf16.msra.mxu0 %v531
  %707 = vmatprep.subr.bf16.mxu0 0
  %708 = vmatpush1.bf16.msra.mxu0 %v532
  %709 = vmatprep.subr.bf16.mxu0 0
  %710 = vmatpush1.bf16.msra.mxu0 %v533
  %711 = vmatprep.subr.bf16.mxu0 0
  %712 = vmatpush1.bf16.msra.mxu0 %v534
  %713 = vmatprep.subr.bf16.mxu0 0
  %714 = vmatpush1.bf16.msra.mxu0 %v535
  %715 = vmatprep.subr.bf16.mxu0 0
  %716 = vmatpush1.bf16.msra.mxu0 %v536
  %717 = vmatprep.subr.bf16.mxu0 0
  %718 = vmatpush1.bf16.msra.mxu0 %v537
  %719 = vmatprep.subr.bf16.mxu0 0
  %720 = vmatpush1.bf16.msra.mxu0 %v538
  %721 = vmatprep.subr.bf16.mxu0 0
  %722 = vmatpush1.bf16.msra.mxu0 %v539
  %723 = vmatprep.subr.bf16.mxu0 0
  %724 = vmatpush1.bf16.msra.mxu0 %v540
  %725 = vmatprep.mubr.bf16.mxu0 %v206
  %726 = vmatmul.mubr.bf16.gmra.mrb[0].mxu0 %v205
  %v727 = vpop.f32.mrb[0].mxu0
  %v728 = vadd.f32 %v688, %v727
  %v729 = vpop.f32.mrb[0].mxu0
  %v730 = vpop.f32.mrb[0].mxu0
  %v731 = vpop.f32.mrb[0].mxu0
  %732 = vdwg.mxu0
  %733 = vmatprep.subr.bf16.mxu0 0
  %734 = vmatpush1.bf16.msra.mxu0 %v541
  %735 = vmatprep.subr.bf16.mxu0 0
  %736 = vmatpush1.bf16.msra.mxu0 %v542
  %737 = vmatprep.subr.bf16.mxu0 0
  %738 = vmatpush1.bf16.msra.mxu0 %v543
  %739 = vmatprep.subr.bf16.mxu0 0
  %740 = vmatpush1.bf16.msra.mxu0 %v544
  %741 = vmatprep.subr.bf16.mxu0 0
  %742 = vmatpush1.bf16.msra.mxu0 %v545
  %743 = vmatprep.subr.bf16.mxu0 0
  %744 = vmatpush1.bf16.msra.mxu0 %v546
  %745 = vmatprep.subr.bf16.mxu0 0
  %746 = vmatpush1.bf16.msra.mxu0 %v547
  %747 = vmatprep.subr.bf16.mxu0 0
  %748 = vmatpush1.bf16.msra.mxu0 %v548
  %749 = vmatprep.subr.bf16.mxu0 0
  %750 = vmatpush1.bf16.msra.mxu0 %v549
  %751 = vmatprep.subr.bf16.mxu0 0
  %752 = vmatpush1.bf16.msra.mxu0 %v550
  %753 = vmatprep.subr.bf16.mxu0 0
  %754 = vmatpush1.bf16.msra.mxu0 %v551
  %755 = vmatprep.subr.bf16.mxu0 0
  %756 = vmatpush1.bf16.msra.mxu0 %v552
  %757 = vmatprep.subr.bf16.mxu0 0
  %758 = vmatpush1.bf16.msra.mxu0 %v553
  %759 = vmatprep.subr.bf16.mxu0 0
  %760 = vmatpush1.bf16.msra.mxu0 %v554
  %761 = vmatprep.subr.bf16.mxu0 0
  %762 = vmatpush1.bf16.msra.mxu0 %v555
  %763 = vmatprep.subr.bf16.mxu0 0
  %764 = vmatpush1.bf16.msra.mxu0 %v556
  %765 = vmatprep.mubr.bf16.mxu0 %v208
  %766 = vmatmul.mubr.bf16.gmra.mrb[0].mxu0 %v207
  %v767 = vpop.f32.mrb[0].mxu0
  %v768 = vadd.f32 %v728, %v767
  %v769 = vpop.f32.mrb[0].mxu0
  %v770 = vpop.f32.mrb[0].mxu0
  %v771 = vpop.f32.mrb[0].mxu0
  %772 = vdwg.mxu0
  %773 = vmatprep.subr.bf16.mxu0 0
  %774 = vmatpush1.bf16.msra.mxu0 %v557
  %775 = vmatprep.subr.bf16.mxu0 0
  %776 = vmatpush1.bf16.msra.mxu0 %v558
  %777 = vmatprep.subr.bf16.mxu0 0
  %778 = vmatpush1.bf16.msra.mxu0 %v559
  %779 = vmatprep.subr.bf16.mxu0 0
  %780 = vmatpush1.bf16.msra.mxu0 %v560
  %781 = vmatprep.subr.bf16.mxu0 0
  %782 = vmatpush1.bf16.msra.mxu0 %v561
  %783 = vmatprep.subr.bf16.mxu0 0
  %784 = vmatpush1.bf16.msra.mxu0 %v562
  %785 = vmatprep.subr.bf16.mxu0 0
  %786 = vmatpush1.bf16.msra.mxu0 %v563
  %787 = vmatprep.subr.bf16.mxu0 0
  %788 = vmatpush1.bf16.msra.mxu0 %v564
  %789 = vmatprep.subr.bf16.mxu0 0
  %790 = vmatpush1.bf16.msra.mxu0 %v565
  %791 = vmatprep.subr.bf16.mxu0 0
  %792 = vmatpush1.bf16.msra.mxu0 %v566
  %793 = vmatprep.subr.bf16.mxu0 0
  %794 = vmatpush1.bf16.msra.mxu0 %v567
  %795 = vmatprep.subr.bf16.mxu0 0
  %796 = vmatpush1.bf16.msra.mxu0 %v568
  %797 = vmatprep.subr.bf16.mxu0 0
  %798 = vmatpush1.bf16.msra.mxu0 %v569
  %799 = vmatprep.subr.bf16.mxu0 0
  %800 = vmatpush1.bf16.msra.mxu0 %v570
  %801 = vmatprep.subr.bf16.mxu0 0
  %802 = vmatpush1.bf16.msra.mxu0 %v571
  %803 = vmatprep.subr.bf16.mxu0 0
  %804 = vmatpush1.bf16.msra.mxu0 %v572
  %805 = vmatprep.mubr.bf16.mxu0 %v210
  %806 = vmatmul.mubr.bf16.gmra.mrb[0].mxu0 %v209
  %v807 = vpop.f32.mrb[0].mxu0
  %v808 = vadd.f32 %v768, %v807
  %v809 = vpop.f32.mrb[0].mxu0
  %v810 = vpop.f32.mrb[0].mxu0
  %v811 = vpop.f32.mrb[0].mxu0
  %812 = vdwg.mxu0
  %813 = vmatprep.subr.bf16.mxu0 0
  %814 = vmatpush1.bf16.msra.mxu0 %v573
  %815 = vmatprep.subr.bf16.mxu0 0
  %816 = vmatpush1.bf16.msra.mxu0 %v574
  %817 = vmatprep.subr.bf16.mxu0 0
  %818 = vmatpush1.bf16.msra.mxu0 %v575
  %819 = vmatprep.subr.bf16.mxu0 0
  %820 = vmatpush1.bf16.msra.mxu0 %v576
  %821 = vmatprep.subr.bf16.mxu0 0
  %822 = vmatpush1.bf16.msra.mxu0 %v577
  %823 = vmatprep.subr.bf16.mxu0 0
  %824 = vmatpush1.bf16.msra.mxu0 %v578
  %825 = vmatprep.subr.bf16.mxu0 0
  %826 = vmatpush1.bf16.msra.mxu0 %v579
  %827 = vmatprep.subr.bf16.mxu0 0
  %828 = vmatpush1.bf16.msra.mxu0 %v580
  %829 = vmatprep.subr.bf16.mxu0 0
  %830 = vmatpush1.bf16.msra.mxu0 0
  %831 = vmatprep.subr.bf16.mxu0 0
  %832 = vmatpush1.bf16.msra.mxu0 0
  %833 = vmatprep.subr.bf16.mxu0 0
  %834 = vmatpush1.bf16.msra.mxu0 0
  %835 = vmatprep.subr.bf16.mxu0 0
  %836 = vmatpush1.bf16.msra.mxu0 0
  %837 = vmatprep.subr.bf16.mxu0 0
  %838 = vmatpush1.bf16.msra.mxu0 0
  %839 = vmatprep.subr.bf16.mxu0 0
  %840 = vmatpush1.bf16.msra.mxu0 0
  %841 = vmatprep.subr.bf16.mxu0 0
  %842 = vmatpush1.bf16.msra.mxu0 0
  %843 = vmatprep.subr.bf16.mxu0 0
  %844 = vmatpush1.bf16.msra.mxu0 0
  %845 = vmatprep.mubr.bf16.mxu0 0
  %846 = vmatmul.mubr.bf16.gmra.mrb[0].mxu0 %v211
  %v847 = vpop.f32.mrb[0].mxu0
  %v848 = vadd.f32 %v808, %v847
  %v849 = vpop.f32.mrb[0].mxu0
  %v850 = vpop.f32.mrb[0].mxu0
  %v851 = vpop.f32.mrb[0].mxu0
  %852 = vdwg.mxu0
  %v853 = vmax.f32 %v848, 0.0
  %v854 = vpack.c.bf16 %v853, %v853
  %v855 = vld [vmem:[%s3] sm:$0xf]
  %v856 = vld [vmem:[%s3 + $0x4] sm:$0xf]
  %v857 = vld [vmem:[%s3 + $0x8] sm:$0xf]
  %v858 = vld [vmem:[%s3 + $0xc] sm:$0xf]
  %v859 = vld [vmem:[%s3 + $0x10] sm:$0xf]
  %v860 = vld [vmem:[%s3 + $0x14] sm:$0xf]
  %v861 = vld [vmem:[%s3 + $0x18] sm:$0xf]
  %v862 = vld [vmem:[%s3 + $0x1c] sm:$0xf]
  %v863 = vld [vmem:[%s3 + $0x20] sm:$0xf]
  %v864 = vld [vmem:[%s3 + $0x24] sm:$0xf]
  %v865 = vld [vmem:[%s3 + $0x28] sm:$0xf]
  %v866 = vld [vmem:[%s3 + $0x2c] sm:$0xf]
  %v867 = vld [vmem:[%s3 + $0x30] sm:$0xf]
  %v868 = vld [vmem:[%s3 + $0x34] sm:$0xf]
  %v869 = vld [vmem:[%s3 + $0x38] sm:$0xf]
  %v870 = vld [vmem:[%s3 + $0x3c] sm:$0xf]
  %v871 = vld [vmem:[%s4] sm:$0x1]
  %v873 = vlaneseq
  %v874 = vshrl.u32 %v873, 7
  %v875 = vsub.s32 0, %v874
  %v876 = vrot.slane %v871, %v875
  %v894 = vunpack.c.l.b16 %v855
  %v895 = vunpack.c.l.b16 %v856
  %v896 = vunpack.c.l.b16 %v857
  %v897 = vunpack.c.l.b16 %v858
  %v898 = vunpack.c.l.b16 %v859
  %v899 = vunpack.c.l.b16 %v860
  %v900 = vunpack.c.l.b16 %v861
  %v901 = vunpack.c.l.b16 %v862
  %v902 = vunpack.c.l.b16 %v863
  %v903 = vunpack.c.l.b16 %v864
  %v904 = vunpack.c.l.b16 %v865
  %v905 = vunpack.c.l.b16 %v866
  %v906 = vunpack.c.l.b16 %v867
  %v907 = vunpack.c.l.b16 %v868
  %v908 = vunpack.c.l.b16 %v869
  %v909 = vunpack.c.l.b16 %v870
  %v910 = vpack.c.b16 %v895, %v894
  %v911 = vpack.c.b16 %v897, %v896
  %v912 = vpack.c.b16 %v899, %v898
  %v913 = vpack.c.b16 %v901, %v900
  %v914 = vpack.c.b16 %v903, %v902
  %v915 = vpack.c.b16 %v905, %v904
  %v916 = vpack.c.b16 %v907, %v906
  %v917 = vpack.c.b16 %v909, %v908
  %926 = vmatprep.subr.bf16.mxu0 0
  %927 = vmatpush1.bf16.msra.mxu0 %v910
  %928 = vmatprep.subr.bf16.mxu0 0
  %929 = vmatpush1.bf16.msra.mxu0 %v911
  %930 = vmatprep.subr.bf16.mxu0 0
  %931 = vmatpush1.bf16.msra.mxu0 %v912
  %932 = vmatprep.subr.bf16.mxu0 0
  %933 = vmatpush1.bf16.msra.mxu0 %v913
  %934 = vmatprep.subr.bf16.mxu0 0
  %935 = vmatpush1.bf16.msra.mxu0 %v914
  %936 = vmatprep.subr.bf16.mxu0 0
  %937 = vmatpush1.bf16.msra.mxu0 %v915
  %938 = vmatprep.subr.bf16.mxu0 0
  %939 = vmatpush1.bf16.msra.mxu0 %v916
  %940 = vmatprep.subr.bf16.mxu0 0
  %941 = vmatpush1.bf16.msra.mxu0 %v917
  %942 = vmatprep.subr.bf16.mxu0 0
  %943 = vmatpush1.bf16.msra.mxu0 0
  %944 = vmatprep.subr.bf16.mxu0 0
  %945 = vmatpush1.bf16.msra.mxu0 0
  %946 = vmatprep.subr.bf16.mxu0 0
  %947 = vmatpush1.bf16.msra.mxu0 0
  %948 = vmatprep.subr.bf16.mxu0 0
  %949 = vmatpush1.bf16.msra.mxu0 0
  %950 = vmatprep.subr.bf16.mxu0 0
  %951 = vmatpush1.bf16.msra.mxu0 0
  %952 = vmatprep.subr.bf16.mxu0 0
  %953 = vmatpush1.bf16.msra.mxu0 0
  %954 = vmatprep.subr.bf16.mxu0 0
  %955 = vmatpush1.bf16.msra.mxu0 0
  %956 = vmatprep.subr.bf16.mxu0 0
  %957 = vmatpush1.bf16.msra.mxu0 0
  %958 = vmatprep.mubr.bf16.mxu0 0
  %959 = vmatmul.mubr.bf16.gmra.mrb[0].mxu0 %v854
  %v960 = vpop.f32.mrb[0].mxu0
  %v961 = vadd.f32 %v876, %v960
  %v962 = vpop.f32.mrb[0].mxu0
  %v963 = vpop.f32.mrb[0].mxu0
  %v964 = vpop.f32.mrb[0].mxu0
  %965 = vdwg.mxu0
  %v966 = vmax.f32 %v961, 0.0
  %v967 = vpack.c.bf16 %v966, %v966
  %v968 = vld [vmem:[%s5] sm:$0xf]
  %v969 = vld [vmem:[%s5 + $0x4] sm:$0xf]
  %v970 = vld [vmem:[%s5 + $0x8] sm:$0xf]
  %v971 = vld [vmem:[%s5 + $0xc] sm:$0xf]
  %v972 = vld [vmem:[%s5 + $0x10] sm:$0xf]
  %v973 = vld [vmem:[%s5 + $0x14] sm:$0xf]
  %v974 = vld [vmem:[%s5 + $0x18] sm:$0xf]
  %v975 = vld [vmem:[%s5 + $0x1c] sm:$0xf]
  %v976 = vld [vmem:[%s5 + $0x20] sm:$0xf]
  %v977 = vld [vmem:[%s5 + $0x24] sm:$0xf]
  %v978 = vld [vmem:[%s5 + $0x28] sm:$0xf]
  %v979 = vld [vmem:[%s5 + $0x2c] sm:$0xf]
  %v980 = vld [vmem:[%s5 + $0x30] sm:$0xf]
  %v981 = vld [vmem:[%s5 + $0x34] sm:$0xf]
  %v982 = vld [vmem:[%s5 + $0x38] sm:$0xf]
  %v983 = vld [vmem:[%s5 + $0x3c] sm:$0xf]
  %v984 = vld [vmem:[%s6] sm:$0x1]
  %v986 = vlaneseq
  %v987 = vshrl.u32 %v986, 7
  %v988 = vsub.s32 0, %v987
  %v989 = vrot.slane %v984, %v988
  %v1007 = vunpack.c.l.b16 %v968
  %v1008 = vunpack.c.l.b16 %v969
  %v1009 = vunpack.c.l.b16 %v970
  %v1010 = vunpack.c.l.b16 %v971
  %v1011 = vunpack.c.l.b16 %v972
  %v1012 = vunpack.c.l.b16 %v973
  %v1013 = vunpack.c.l.b16 %v974
  %v1014 = vunpack.c.l.b16 %v975
  %v1015 = vunpack.c.l.b16 %v976
  %v1016 = vunpack.c.l.b16 %v977
  %v1017 = vunpack.c.l.b16 %v978
  %v1018 = vunpack.c.l.b16 %v979
  %v1019 = vunpack.c.l.b16 %v980
  %v1020 = vunpack.c.l.b16 %v981
  %v1021 = vunpack.c.l.b16 %v982
  %v1022 = vunpack.c.l.b16 %v983
  %v1023 = vpack.c.b16 %v1008, %v1007
  %v1024 = vpack.c.b16 %v1010, %v1009
  %v1025 = vpack.c.b16 %v1012, %v1011
  %v1026 = vpack.c.b16 %v1014, %v1013
  %v1027 = vpack.c.b16 %v1016, %v1015
  %v1028 = vpack.c.b16 %v1018, %v1017
  %v1029 = vpack.c.b16 %v1020, %v1019
  %v1030 = vpack.c.b16 %v1022, %v1021
  %1039 = vmatprep.subr.bf16.mxu0 0
  %1040 = vmatpush1.bf16.msra.mxu0 %v1023
  %1041 = vmatprep.subr.bf16.mxu0 0
  %1042 = vmatpush1.bf16.msra.mxu0 %v1024
  %1043 = vmatprep.subr.bf16.mxu0 0
  %1044 = vmatpush1.bf16.msra.mxu0 %v1025
  %1045 = vmatprep.subr.bf16.mxu0 0
  %1046 = vmatpush1.bf16.msra.mxu0 %v1026
  %1047 = vmatprep.subr.bf16.mxu0 0
  %1048 = vmatpush1.bf16.msra.mxu0 %v1027
  %1049 = vmatprep.subr.bf16.mxu0 0
  %1050 = vmatpush1.bf16.msra.mxu0 %v1028
  %1051 = vmatprep.subr.bf16.mxu0 0
  %1052 = vmatpush1.bf16.msra.mxu0 %v1029
  %1053 = vmatprep.subr.bf16.mxu0 0
  %1054 = vmatpush1.bf16.msra.mxu0 %v1030
  %1055 = vmatprep.subr.bf16.mxu0 0
  %1056 = vmatpush1.bf16.msra.mxu0 0
  %1057 = vmatprep.subr.bf16.mxu0 0
  %1058 = vmatpush1.bf16.msra.mxu0 0
  %1059 = vmatprep.subr.bf16.mxu0 0
  %1060 = vmatpush1.bf16.msra.mxu0 0
  %1061 = vmatprep.subr.bf16.mxu0 0
  %1062 = vmatpush1.bf16.msra.mxu0 0
  %1063 = vmatprep.subr.bf16.mxu0 0
  %1064 = vmatpush1.bf16.msra.mxu0 0
  %1065 = vmatprep.subr.bf16.mxu0 0
  %1066 = vmatpush1.bf16.msra.mxu0 0
  %1067 = vmatprep.subr.bf16.mxu0 0
  %1068 = vmatpush1.bf16.msra.mxu0 0
  %1069 = vmatprep.subr.bf16.mxu0 0
  %1070 = vmatpush1.bf16.msra.mxu0 0
  %1071 = vmatprep.mubr.bf16.mxu0 0
  %1072 = vmatmul.mubr.bf16.gmra.mrb[0].mxu0 %v967
  %v1073 = vpop.f32.mrb[0].mxu0
  %v1074 = vadd.f32 %v989, %v1073
  %v1075 = vpop.f32.mrb[0].mxu0
  %v1076 = vpop.f32.mrb[0].mxu0
  %v1077 = vpop.f32.mrb[0].mxu0
  %1078 = vdwg.mxu0
  %v1079 = vmax.f32 %v1074, 0.0
  %v1080 = vpack.c.bf16 %v1079, %v1079
  %v1081 = vld [vmem:[%s7] sm:$0xf]
  %v1082 = vld [vmem:[%s7 + $0x4] sm:$0xf]
  %v1083 = vld [vmem:[%s7 + $0x8] sm:$0xf]
  %v1084 = vld [vmem:[%s7 + $0xc] sm:$0xf]
  %v1085 = vld [vmem:[%s7 + $0x10] sm:$0xf]
  %v1086 = vld [vmem:[%s7 + $0x14] sm:$0xf]
  %v1087 = vld [vmem:[%s7 + $0x18] sm:$0xf]
  %v1088 = vld [vmem:[%s7 + $0x1c] sm:$0xf]
  %v1089 = vld [vmem:[%s7 + $0x20] sm:$0xf]
  %v1090 = vld [vmem:[%s7 + $0x24] sm:$0xf]
  %v1091 = vld [vmem:[%s7 + $0x28] sm:$0xf]
  %v1092 = vld [vmem:[%s7 + $0x2c] sm:$0xf]
  %v1093 = vld [vmem:[%s7 + $0x30] sm:$0xf]
  %v1094 = vld [vmem:[%s7 + $0x34] sm:$0xf]
  %v1095 = vld [vmem:[%s7 + $0x38] sm:$0xf]
  %v1096 = vld [vmem:[%s7 + $0x3c] sm:$0xf]
  %v1097 = vld [vmem:[%s8] sm:$0x1]
  %v1099 = vlaneseq
  %v1100 = vshrl.u32 %v1099, 7
  %v1101 = vsub.s32 0, %v1100
  %v1102 = vrot.slane %v1097, %v1101
  %v1120 = vunpack.c.l.b16 %v1081
  %v1121 = vunpack.c.l.b16 %v1082
  %v1122 = vunpack.c.l.b16 %v1083
  %v1123 = vunpack.c.l.b16 %v1084
  %v1124 = vunpack.c.l.b16 %v1085
  %v1125 = vunpack.c.l.b16 %v1086
  %v1126 = vunpack.c.l.b16 %v1087
  %v1127 = vunpack.c.l.b16 %v1088
  %v1128 = vunpack.c.l.b16 %v1089
  %v1129 = vunpack.c.l.b16 %v1090
  %v1130 = vunpack.c.l.b16 %v1091
  %v1131 = vunpack.c.l.b16 %v1092
  %v1132 = vunpack.c.l.b16 %v1093
  %v1133 = vunpack.c.l.b16 %v1094
  %v1134 = vunpack.c.l.b16 %v1095
  %v1135 = vunpack.c.l.b16 %v1096
  %v1136 = vpack.c.b16 %v1121, %v1120
  %v1137 = vpack.c.b16 %v1123, %v1122
  %v1138 = vpack.c.b16 %v1125, %v1124
  %v1139 = vpack.c.b16 %v1127, %v1126
  %v1140 = vpack.c.b16 %v1129, %v1128
  %v1141 = vpack.c.b16 %v1131, %v1130
  %v1142 = vpack.c.b16 %v1133, %v1132
  %v1143 = vpack.c.b16 %v1135, %v1134
  %1152 = vmatprep.subr.bf16.mxu0 0
  %1153 = vmatpush1.bf16.msra.mxu0 %v1136
  %1154 = vmatprep.subr.bf16.mxu0 0
  %1155 = vmatpush1.bf16.msra.mxu0 %v1137
  %1156 = vmatprep.subr.bf16.mxu0 0
  %1157 = vmatpush1.bf16.msra.mxu0 %v1138
  %1158 = vmatprep.subr.bf16.mxu0 0
  %1159 = vmatpush1.bf16.msra.mxu0 %v1139
  %1160 = vmatprep.subr.bf16.mxu0 0
  %1161 = vmatpush1.bf16.msra.mxu0 %v1140
  %1162 = vmatprep.subr.bf16.mxu0 0
  %1163 = vmatpush1.bf16.msra.mxu0 %v1141
  %1164 = vmatprep.subr.bf16.mxu0 0
  %1165 = vmatpush1.bf16.msra.mxu0 %v1142
  %1166 = vmatprep.subr.bf16.mxu0 0
  %1167 = vmatpush1.bf16.msra.mxu0 %v1143
  %1168 = vmatprep.subr.bf16.mxu0 0
  %1169 = vmatpush1.bf16.msra.mxu0 0
  %1170 = vmatprep.subr.bf16.mxu0 0
  %1171 = vmatpush1.bf16.msra.mxu0 0
  %1172 = vmatprep.subr.bf16.mxu0 0
  %1173 = vmatpush1.bf16.msra.mxu0 0
  %1174 = vmatprep.subr.bf16.mxu0 0
  %1175 = vmatpush1.bf16.msra.mxu0 0
  %1176 = vmatprep.subr.bf16.mxu0 0
  %1177 = vmatpush1.bf16.msra.mxu0 0
  %1178 = vmatprep.subr.bf16.mxu0 0
  %1179 = vmatpush1.bf16.msra.mxu0 0
  %1180 = vmatprep.subr.bf16.mxu0 0
  %1181 = vmatpush1.bf16.msra.mxu0 0
  %1182 = vmatprep.subr.bf16.mxu0 0
  %1183 = vmatpush1.bf16.msra.mxu0 0
  %1184 = vmatprep.mubr.bf16.mxu0 0
  %1185 = vmatmul.mubr.bf16.gmra.mrb[0].mxu0 %v1080
  %v1186 = vpop.f32.mrb[0].mxu0
  %v1187 = vadd.f32 %v1102, %v1186
  %v1188 = vpop.f32.mrb[0].mxu0
  %v1189 = vpop.f32.mrb[0].mxu0
  %v1190 = vpop.f32.mrb[0].mxu0
  %1191 = vdwg.mxu0
  %1192 = vst [vmem:[%s9] sm:$0xff] %v1187
  // Predicated region
  $region38: #{pilotnet_forward.11} parent=0 // pred_check
    _
  $region39: #{pilotnet_forward.11} parent=0 // pred_check_branch
    %1194 = sbr.rel (0) target = $region41
  $region40: #{pilotnet_forward.11} parent=0 // pred_region
    _
  $region41: #{pilotnet_forward.11} parent=0 // pred_fallthru
    _
  // Predicated region
  $region42: #{pilotnet_forward.11} parent=0 // pred_check
    _
  $region43: #{pilotnet_forward.11} parent=0 // pred_check_branch
    %1196 = sbr.rel (0) target = $region45
  $region44: #{pilotnet_forward.11} parent=0 // pred_region
    _
  $region45: #{pilotnet_forward.11} parent=0 // pred_fallthru
    _

</llo_original>
